<compile_context>
chip_gen: v7x
topology: tpu7x:2x2x1
jax: 0.10.0
libtpu: 0.0.40
codegen_flags: <defaults>
</compile_context>

<pallas_src>
import jax
import jax.numpy as jnp
from jax.experimental import pallas as pl
from jax.experimental.pallas import tpu as pltpu

N = 64        # particles
DIM = 3       # spatial dimension
HID = 32      # hidden width
RADIUS = 0.5
DT = 0.01
CHUNK = 16    # receiver rows per grid step  (N // CHUNK grid steps, "parallel")
NODE_F = 8    # packed node-feature width  [vel(3), pos(3), t, 1]
EDGE_F = 8    # packed edge-feature width  [rel(3), dist, 1, 0, 0, 0]


def _sim_kernel(nodes_ref, pos8_ref,              # [N, 8], [N, 8]
                wn_ref, we_ref,                   # packed [8, HID] encoders
                wmh_ref, bm_ref, wme_ref,         # message weights
                wuh_ref, wua_ref, bu_ref,         # update weights
                wd_ref, bd_ref,                   # decoder weights
                acc_ref, newpos_ref):             # [CHUNK, DIM] output blocks
    c = pl.program_id(0)
    row0 = pl.multiple_of(c * CHUNK, CHUNK)

    nodes = nodes_ref[...]                        # [N, 8]
    pos8 = pos8_ref[...]                          # [N, 8] (pos in lanes 0-2, rest 0)

    # ---- node encoder (all nodes; fused [N,8]@[8,HID]) -------------------------
    h = jnp.maximum(
        jnp.dot(nodes, wn_ref[...], preferred_element_type=jnp.float32), 0.0)   # [N, HID]
    # node-side message term + message bias (broadcast over receivers later)
    hjb = jnp.dot(h, wmh_ref[...], preferred_element_type=jnp.float32) + bm_ref[...]

    # ---- receiver chunk --------------------------------------------------------
    nodes_c = nodes_ref[pl.ds(row0, CHUNK), :]    # [C, 8]
    pos8_c = pos8_ref[pl.ds(row0, CHUNK), :]      # [C, 8]
    vel_c = nodes_c[:, 0:DIM]                     # [C, 3]
    pos_c = pos8_c[:, 0:DIM]                      # [C, 3]
    h_c = jnp.maximum(
        jnp.dot(nodes_c, wn_ref[...], preferred_element_type=jnp.float32), 0.0)  # [C, HID]

    # ---- radius graph (chunk rows i vs all j); gate on dist^2 -------------------
    rel8 = pos8[None, :, :] - pos8_c[:, None, :]          # [C, N, 8]; rel in lanes 0-2
    dist2 = jnp.sum(rel8 * rel8, axis=-1)                 # [C, N]
    jj = jax.lax.broadcasted_iota(jnp.int32, (CHUNK, N), 1)
    ii = jax.lax.broadcasted_iota(jnp.int32, (CHUNK, N), 0) + row0
    mask = jnp.logical_and(dist2 < RADIUS * RADIUS, ii != jj).astype(jnp.float32)
    dist = jnp.sqrt(dist2 + 1e-12)                        # [C, N] (feature only)

    # ---- edge encoder: feature [rel, dist, 1, 0,0,0] @ packed [8, HID] ----------
    lane = jax.lax.broadcasted_iota(jnp.int32, (1, 1, EDGE_F), 2)
    one_hot_dist = (lane == DIM).astype(jnp.float32)          # lane 3
    one_hot_ones = (lane == DIM + 1).astype(jnp.float32)      # lane 4
    ef = rel8 + dist[:, :, None] * one_hot_dist + one_hot_ones    # [C, N, 8]
    e = jnp.maximum(
        jnp.dot(ef.reshape(CHUNK * N, EDGE_F), we_ref[...],
                preferred_element_type=jnp.float32), 0.0)         # [C*N, HID]

    # ---- message passing ---------------------------------------------------------
    em = jnp.dot(e, wme_ref[...], preferred_element_type=jnp.float32)   # [C*N, HID]
    msg = jnp.maximum(em.reshape(CHUNK, N, HID) + hjb[None, :, :], 0.0)  # [C, N, HID]
    agg = jnp.sum(mask[:, :, None] * msg, axis=1)                        # [C, HID]

    # ---- node update + decoder ---------------------------------------------------
    h2 = jnp.dot(h_c, wuh_ref[...], preferred_element_type=jnp.float32)
    h2 = h2 + jnp.dot(agg, wua_ref[...], preferred_element_type=jnp.float32)
    h2 = jnp.maximum(h2 + bu_ref[...], 0.0)                              # [C, HID]

    acc = jnp.dot(h2, wd_ref[...], preferred_element_type=jnp.float32) + bd_ref[...]

    acc_ref[...] = acc
    newpos_ref[...] = pos_c + DT * vel_c + (0.5 * DT * DT) * acc


def init_params(key):
    ks = jax.random.split(key, 12)
    s = 0.1
    return dict(
        wn_v=s * jax.random.normal(ks[0], (DIM, HID), jnp.float32),
        wn_p=s * jax.random.normal(ks[1], (DIM, HID), jnp.float32),
        wn_t=s * jax.random.normal(ks[2], (1, HID), jnp.float32),
        bn=jnp.zeros((1, HID), jnp.float32),
        we_r=s * jax.random.normal(ks[3], (DIM, HID), jnp.float32),
        we_d=s * jax.random.normal(ks[4], (1, HID), jnp.float32),
        be=jnp.zeros((1, HID), jnp.float32),
        wmh=s * jax.random.normal(ks[5], (HID, HID), jnp.float32),
        wme=s * jax.random.normal(ks[6], (HID, HID), jnp.float32),
        bm=jnp.zeros((1, HID), jnp.float32),
        wu_h=s * jax.random.normal(ks[7], (HID, HID), jnp.float32),
        wu_a=s * jax.random.normal(ks[8], (HID, HID), jnp.float32),
        bu=jnp.zeros((1, HID), jnp.float32),
        wd=s * jax.random.normal(ks[9], (HID, DIM), jnp.float32),
        bd=jnp.zeros((1, DIM), jnp.float32),
    )


def _pack_weights(params):
    # Node encoder: rows [wn_v(3); wn_p(3); wn_t(1); bn(1)] -> [8, HID]
    w_node = jnp.concatenate(
        [params["wn_v"], params["wn_p"], params["wn_t"], params["bn"]], axis=0)
    # Edge encoder: rows [we_r(3); we_d(1); be(1); zeros(3)] -> [8, HID]
    w_edge = jnp.concatenate(
        [params["we_r"], params["we_d"], params["be"],
         jnp.zeros((EDGE_F - DIM - 2, HID), jnp.float32)], axis=0)
    return w_node, w_edge


@jax.jit
def simulator_forward(step, pos, vel, params):
    """Simulator.forward(graph_data=(pos, vel), step) -> Prediction(acc, next_pos)."""
    t = jnp.asarray(step, jnp.float32) * DT
    ones = jnp.ones((N, 1), jnp.float32)
    # Packed node feature block [vel, pos, t, 1] and lane-padded positions.
    nodes8 = jnp.concatenate([vel, pos, t * ones, ones], axis=1)                # [N, 8]
    pos8 = jnp.concatenate([pos, jnp.zeros((N, NODE_F - DIM), jnp.float32)], axis=1)

    w_node, w_edge = _pack_weights(params)
    args = (nodes8, pos8, w_node, w_edge,
            params["wmh"], params["bm"], params["wme"],
            params["wu_h"], params["wu_a"], params["bu"],
            params["wd"], params["bd"])

    def full_spec(a):
        shp = a.shape
        return pl.BlockSpec(shp, lambda c, _s=shp: (0,) * len(_s))

    return pl.pallas_call(
        _sim_kernel,
        out_shape=(jax.ShapeDtypeStruct((N, DIM), jnp.float32),
                   jax.ShapeDtypeStruct((N, DIM), jnp.float32)),
        grid=(N // CHUNK,),
        in_specs=[full_spec(a) for a in args],
        out_specs=(pl.BlockSpec((CHUNK, DIM), lambda c: (c, 0)),
                   pl.BlockSpec((CHUNK, DIM), lambda c: (c, 0))),
        compiler_params=pltpu.CompilerParams(dimension_semantics=("parallel",)),
    )(*args)


def simulator_forward_ref(step, pos, vel, params):
    """Pure-JAX reference (same math as the kernel) for correctness checking."""
    t = jnp.float32(step) * DT
    rel = pos[None, :, :] - pos[:, None, :]
    dist2 = jnp.sum(rel * rel, axis=-1, keepdims=True)
    dist = jnp.sqrt(dist2 + 1e-12)
    ii = jnp.arange(N)[:, None]
    jj = jnp.arange(N)[None, :]
    mask = (jnp.logical_and(dist2[..., 0] < RADIUS * RADIUS, ii != jj)
            ).astype(jnp.float32)[..., None]

    h = jnp.maximum(vel @ params["wn_v"] + pos @ params["wn_p"]
                    + t * params["wn_t"] + params["bn"], 0.0)
    e = jnp.maximum(jnp.einsum("ijd,dh->ijh", rel, params["we_r"])
                    + dist * params["we_d"] + params["be"], 0.0)
    msg = jnp.maximum((h @ params["wmh"])[None, :, :]
                      + jnp.einsum("ijh,hk->ijk", e, params["wme"])
                      + params["bm"], 0.0)
    agg = jnp.sum(mask * msg, axis=1)
    h2 = jnp.maximum(h @ params["wu_h"] + agg @ params["wu_a"] + params["bu"], 0.0)
    acc = h2 @ params["wd"] + params["bd"]
    return acc, pos + DT * vel + 0.5 * DT * DT * acc


if __name__ == "__main__":
    key = jax.random.PRNGKey(0)
    kpos, kvel, kparam = jax.random.split(key, 3)
    pos = jax.random.uniform(kpos, (N, DIM), jnp.float32)       # particles in unit box
    vel = 0.1 * jax.random.normal(kvel, (N, DIM), jnp.float32)
    params = init_params(kparam)
    step = 3

    acc, next_pos = simulator_forward(step, pos, vel, params)
    jax.block_until_ready((acc, next_pos))

    acc_ref, next_pos_ref = simulator_forward_ref(step, pos, vel, params)
    assert jnp.allclose(acc, acc_ref, atol=1e-4, rtol=1e-4)
    assert jnp.allclose(next_pos, next_pos_ref, atol=1e-4, rtol=1e-4)

    # TODO(synk): `Simulator.rollout` (autoregressive loop over time_sequence with
    # graph_generator.evolve) is host-level control flow; the right port is to move
    # the time loop inside the kernel (grid axis over steps with VMEM-resident
    # weights + input_output_aliases carrying pos/vel), not to re-launch this
    # single-step kernel per step.
    print("KERNEL_OK")
</pallas_src>

<mosaic_0001>
module attributes {stable_mosaic.version = 11 : i64} {
  func.func @_sim_kernel(%arg0: i32, %arg1: memref<64x8xf32, #tpu.memory_space<vmem>>, %arg2: memref<64x8xf32, #tpu.memory_space<vmem>>, %arg3: memref<8x32xf32, #tpu.memory_space<vmem>>, %arg4: memref<8x32xf32, #tpu.memory_space<vmem>>, %arg5: memref<32x32xf32, #tpu.memory_space<vmem>>, %arg6: memref<1x32xf32, #tpu.memory_space<vmem>>, %arg7: memref<32x32xf32, #tpu.memory_space<vmem>>, %arg8: memref<32x32xf32, #tpu.memory_space<vmem>>, %arg9: memref<32x32xf32, #tpu.memory_space<vmem>>, %arg10: memref<1x32xf32, #tpu.memory_space<vmem>>, %arg11: memref<32x3xf32, #tpu.memory_space<vmem>>, %arg12: memref<1x3xf32, #tpu.memory_space<vmem>>, %arg13: memref<16x3xf32, #tpu.memory_space<vmem>>, %arg14: memref<16x3xf32, #tpu.memory_space<vmem>>) attributes {dimension_semantics = [#tpu.dimension_semantics<parallel>], iteration_bounds = array<i64: 4>, scalar_prefetch = 0 : i64, scratch_operands = 0 : i64, tpu.core_type = #tpu.core_type<tc>, window_params = [{pipeline_mode = #tpu.pipeline_mode<synchronous>, transform_indices = @transform_0, window_bounds = array<i64: 64, 8>}, {pipeline_mode = #tpu.pipeline_mode<synchronous>, transform_indices = @transform_1, window_bounds = array<i64: 64, 8>}, {pipeline_mode = #tpu.pipeline_mode<synchronous>, transform_indices = @transform_2, window_bounds = array<i64: 8, 32>}, {pipeline_mode = #tpu.pipeline_mode<synchronous>, transform_indices = @transform_3, window_bounds = array<i64: 8, 32>}, {pipeline_mode = #tpu.pipeline_mode<synchronous>, transform_indices = @transform_4, window_bounds = array<i64: 32, 32>}, {pipeline_mode = #tpu.pipeline_mode<synchronous>, transform_indices = @transform_5, window_bounds = array<i64: 1, 32>}, {pipeline_mode = #tpu.pipeline_mode<synchronous>, transform_indices = @transform_6, window_bounds = array<i64: 32, 32>}, {pipeline_mode = #tpu.pipeline_mode<synchronous>, transform_indices = @transform_7, window_bounds = array<i64: 32, 32>}, {pipeline_mode = #tpu.pipeline_mode<synchronous>, transform_indices = @transform_8, window_bounds = array<i64: 32, 32>}, {pipeline_mode = #tpu.pipeline_mode<synchronous>, transform_indices = @transform_9, window_bounds = array<i64: 1, 32>}, {pipeline_mode = #tpu.pipeline_mode<synchronous>, transform_indices = @transform_10, window_bounds = array<i64: 32, 3>}, {pipeline_mode = #tpu.pipeline_mode<synchronous>, transform_indices = @transform_11, window_bounds = array<i64: 1, 3>}, {transform_indices = @transform_12, window_bounds = array<i64: 16, 3>}, {transform_indices = @transform_13, window_bounds = array<i64: 16, 3>}]} {
    %c16_i32 = arith.constant 16 : i32
    %0 = arith.muli %arg0, %c16_i32 : i32
    %1 = tpu.assume_multiple %0, 16 : i32
    %c0 = arith.constant 0 : index
    %c0_0 = arith.constant 0 : index
    %2 = vector.load %arg1[%c0, %c0_0] : memref<64x8xf32, #tpu.memory_space<vmem>>, vector<64x8xf32>
    %c0_1 = arith.constant 0 : index
    %c0_2 = arith.constant 0 : index
    %3 = vector.load %arg2[%c0_1, %c0_2] : memref<64x8xf32, #tpu.memory_space<vmem>>, vector<64x8xf32>
    %c0_3 = arith.constant 0 : index
    %c0_4 = arith.constant 0 : index
    %4 = vector.load %arg3[%c0_3, %c0_4] : memref<8x32xf32, #tpu.memory_space<vmem>>, vector<8x32xf32>
    %cst = arith.constant dense<0.000000e+00> : vector<64x32xf32>
    %5 = tpu.matmul %2, %4, %cst {dimension_numbers = #tpu.dot_dimension_numbers<[1], [0], [0], [1], [0, 0, 1, 1], [], []>} : vector<64x8xf32>, vector<8x32xf32>, vector<64x32xf32> -> vector<64x32xf32>
    %cst_5 = arith.constant 0.000000e+00 : f32
    %6 = vector.broadcast %cst_5 : f32 to vector<64x32xf32>
    %7 = arith.maximumf %5, %6 : vector<64x32xf32>
    %c0_6 = arith.constant 0 : index
    %c0_7 = arith.constant 0 : index
    %8 = vector.load %arg5[%c0_6, %c0_7] : memref<32x32xf32, #tpu.memory_space<vmem>>, vector<32x32xf32>
    %cst_8 = arith.constant dense<0.000000e+00> : vector<64x32xf32>
    %9 = tpu.matmul %7, %8, %cst_8 {dimension_numbers = #tpu.dot_dimension_numbers<[1], [0], [0], [1], [0, 0, 1, 1], [], []>} : vector<64x32xf32>, vector<32x32xf32>, vector<64x32xf32> -> vector<64x32xf32>
    %c0_9 = arith.constant 0 : index
    %c0_10 = arith.constant 0 : index
    %10 = vector.load %arg6[%c0_9, %c0_10] : memref<1x32xf32, #tpu.memory_space<vmem>>, vector<1x32xf32>
    %11 = vector.broadcast %10 : vector<1x32xf32> to vector<64x32xf32>
    %12 = arith.addf %9, %11 : vector<64x32xf32>
    %13 = arith.index_cast %1 : i32 to index
    %c0_11 = arith.constant 0 : index
    %14 = vector.load %arg1[%13, %c0_11] : memref<64x8xf32, #tpu.memory_space<vmem>>, vector<16x8xf32>
    %15 = arith.index_cast %1 : i32 to index
    %c0_12 = arith.constant 0 : index
    %16 = vector.load %arg2[%15, %c0_12] : memref<64x8xf32, #tpu.memory_space<vmem>>, vector<16x8xf32>
    %17 = vector.extract_strided_slice %14 {offsets = [0, 0], sizes = [16, 3], strides = [1, 1]} : vector<16x8xf32> to vector<16x3xf32>
    %18 = vector.extract_strided_slice %16 {offsets = [0, 0], sizes = [16, 3], strides = [1, 1]} : vector<16x8xf32> to vector<16x3xf32>
    %c0_13 = arith.constant 0 : index
    %c0_14 = arith.constant 0 : index
    %19 = vector.load %arg3[%c0_13, %c0_14] : memref<8x32xf32, #tpu.memory_space<vmem>>, vector<8x32xf32>
    %cst_15 = arith.constant dense<0.000000e+00> : vector<16x32xf32>
    %20 = tpu.matmul %14, %19, %cst_15 {dimension_numbers = #tpu.dot_dimension_numbers<[1], [0], [0], [1], [0, 0, 1, 1], [], []>} : vector<16x8xf32>, vector<8x32xf32>, vector<16x32xf32> -> vector<16x32xf32>
    %cst_16 = arith.constant 0.000000e+00 : f32
    %21 = vector.broadcast %cst_16 : f32 to vector<16x32xf32>
    %22 = arith.maximumf %20, %21 : vector<16x32xf32>
    %23 = vector.shape_cast %3 : vector<64x8xf32> to vector<1x64x8xf32>
    %24 = vector.shape_cast %16 : vector<16x8xf32> to vector<16x1x8xf32>
    %25 = vector.broadcast %23 : vector<1x64x8xf32> to vector<16x64x8xf32>
    %26 = vector.broadcast %24 : vector<16x1x8xf32> to vector<16x64x8xf32>
    %27 = arith.subf %25, %26 : vector<16x64x8xf32>
    %28 = arith.mulf %27, %27 : vector<16x64x8xf32>
    %cst_17 = arith.constant dense<0.000000e+00> : vector<16x64xf32>
    %29 = vector.multi_reduction <add>, %28, %cst_17 [2] : vector<16x64x8xf32> to vector<16x64xf32>
    %30 = tpu.iota {dimensions = array<i32: 1>} : vector<16x64xi32>
    %31 = tpu.iota {dimensions = array<i32: 0>} : vector<16x64xi32>
    %32 = vector.broadcast %1 : i32 to vector<16x64xi32>
    %33 = arith.addi %31, %32 : vector<16x64xi32>
    %cst_18 = arith.constant 2.500000e-01 : f32
    %34 = vector.broadcast %cst_18 : f32 to vector<16x64xf32>
    %35 = arith.cmpf olt, %29, %34 : vector<16x64xf32>
    %36 = arith.cmpi ne, %33, %30 : vector<16x64xi32>
    %37 = arith.andi %35, %36 : vector<16x64xi1>
    %38 = arith.extui %37 : vector<16x64xi1> to vector<16x64xi32>
    %39 = arith.sitofp %38 : vector<16x64xi32> to vector<16x64xf32>
    %cst_19 = arith.constant 9.99999996E-13 : f32
    %40 = vector.broadcast %cst_19 : f32 to vector<16x64xf32>
    %41 = arith.addf %29, %40 : vector<16x64xf32>
    %42 = math.sqrt %41 : vector<16x64xf32>
    %43 = tpu.iota {dimensions = array<i32: 2>} : vector<1x1x8xi32>
    %c3_i32 = arith.constant 3 : i32
    %44 = vector.broadcast %c3_i32 : i32 to vector<1x1x8xi32>
    %45 = arith.cmpi eq, %43, %44 : vector<1x1x8xi32>
    %46 = arith.extui %45 : vector<1x1x8xi1> to vector<1x1x8xi32>
    %47 = arith.sitofp %46 : vector<1x1x8xi32> to vector<1x1x8xf32>
    %c4_i32 = arith.constant 4 : i32
    %48 = vector.broadcast %c4_i32 : i32 to vector<1x1x8xi32>
    %49 = arith.cmpi eq, %43, %48 : vector<1x1x8xi32>
    %50 = arith.extui %49 : vector<1x1x8xi1> to vector<1x1x8xi32>
    %51 = arith.sitofp %50 : vector<1x1x8xi32> to vector<1x1x8xf32>
    %52 = vector.shape_cast %42 : vector<16x64xf32> to vector<16x64x1xf32>
    %53 = vector.broadcast %52 : vector<16x64x1xf32> to vector<16x64x8xf32>
    %54 = vector.broadcast %47 : vector<1x1x8xf32> to vector<16x64x8xf32>
    %55 = arith.mulf %53, %54 : vector<16x64x8xf32>
    %56 = arith.addf %27, %55 : vector<16x64x8xf32>
    %57 = vector.broadcast %51 : vector<1x1x8xf32> to vector<16x64x8xf32>
    %58 = arith.addf %56, %57 : vector<16x64x8xf32>
    %59 = vector.shape_cast %58 : vector<16x64x8xf32> to vector<1024x8xf32>
    %c0_20 = arith.constant 0 : index
    %c0_21 = arith.constant 0 : index
    %60 = vector.load %arg4[%c0_20, %c0_21] : memref<8x32xf32, #tpu.memory_space<vmem>>, vector<8x32xf32>
    %cst_22 = arith.constant dense<0.000000e+00> : vector<1024x32xf32>
    %61 = tpu.matmul %59, %60, %cst_22 {dimension_numbers = #tpu.dot_dimension_numbers<[1], [0], [0], [1], [0, 0, 1, 1], [], []>} : vector<1024x8xf32>, vector<8x32xf32>, vector<1024x32xf32> -> vector<1024x32xf32>
    %cst_23 = arith.constant 0.000000e+00 : f32
    %62 = vector.broadcast %cst_23 : f32 to vector<1024x32xf32>
    %63 = arith.maximumf %61, %62 : vector<1024x32xf32>
    %c0_24 = arith.constant 0 : index
    %c0_25 = arith.constant 0 : index
    %64 = vector.load %arg7[%c0_24, %c0_25] : memref<32x32xf32, #tpu.memory_space<vmem>>, vector<32x32xf32>
    %cst_26 = arith.constant dense<0.000000e+00> : vector<1024x32xf32>
    %65 = tpu.matmul %63, %64, %cst_26 {dimension_numbers = #tpu.dot_dimension_numbers<[1], [0], [0], [1], [0, 0, 1, 1], [], []>} : vector<1024x32xf32>, vector<32x32xf32>, vector<1024x32xf32> -> vector<1024x32xf32>
    %66 = vector.shape_cast %65 : vector<1024x32xf32> to vector<16x64x32xf32>
    %67 = vector.shape_cast %12 : vector<64x32xf32> to vector<1x64x32xf32>
    %68 = vector.broadcast %67 : vector<1x64x32xf32> to vector<16x64x32xf32>
    %69 = arith.addf %66, %68 : vector<16x64x32xf32>
    %cst_27 = arith.constant 0.000000e+00 : f32
    %70 = vector.broadcast %cst_27 : f32 to vector<16x64x32xf32>
    %71 = arith.maximumf %69, %70 : vector<16x64x32xf32>
    %72 = vector.shape_cast %39 : vector<16x64xf32> to vector<16x64x1xf32>
    %73 = vector.broadcast %72 : vector<16x64x1xf32> to vector<16x64x32xf32>
    %74 = arith.mulf %73, %71 : vector<16x64x32xf32>
    %cst_28 = arith.constant dense<0.000000e+00> : vector<16x32xf32>
    %75 = vector.multi_reduction <add>, %74, %cst_28 [1] : vector<16x64x32xf32> to vector<16x32xf32>
    %c0_29 = arith.constant 0 : index
    %c0_30 = arith.constant 0 : index
    %76 = vector.load %arg8[%c0_29, %c0_30] : memref<32x32xf32, #tpu.memory_space<vmem>>, vector<32x32xf32>
    %cst_31 = arith.constant dense<0.000000e+00> : vector<16x32xf32>
    %77 = tpu.matmul %22, %76, %cst_31 {dimension_numbers = #tpu.dot_dimension_numbers<[1], [0], [0], [1], [0, 0, 1, 1], [], []>} : vector<16x32xf32>, vector<32x32xf32>, vector<16x32xf32> -> vector<16x32xf32>
    %c0_32 = arith.constant 0 : index
    %c0_33 = arith.constant 0 : index
    %78 = vector.load %arg9[%c0_32, %c0_33] : memref<32x32xf32, #tpu.memory_space<vmem>>, vector<32x32xf32>
    %cst_34 = arith.constant dense<0.000000e+00> : vector<16x32xf32>
    %79 = tpu.matmul %75, %78, %cst_34 {dimension_numbers = #tpu.dot_dimension_numbers<[1], [0], [0], [1], [0, 0, 1, 1], [], []>} : vector<16x32xf32>, vector<32x32xf32>, vector<16x32xf32> -> vector<16x32xf32>
    %80 = arith.addf %77, %79 : vector<16x32xf32>
    %c0_35 = arith.constant 0 : index
    %c0_36 = arith.constant 0 : index
    %81 = vector.load %arg10[%c0_35, %c0_36] : memref<1x32xf32, #tpu.memory_space<vmem>>, vector<1x32xf32>
    %82 = vector.broadcast %81 : vector<1x32xf32> to vector<16x32xf32>
    %83 = arith.addf %80, %82 : vector<16x32xf32>
    %cst_37 = arith.constant 0.000000e+00 : f32
    %84 = vector.broadcast %cst_37 : f32 to vector<16x32xf32>
    %85 = arith.maximumf %83, %84 : vector<16x32xf32>
    %c0_38 = arith.constant 0 : index
    %c0_39 = arith.constant 0 : index
    %86 = vector.load %arg11[%c0_38, %c0_39] : memref<32x3xf32, #tpu.memory_space<vmem>>, vector<32x3xf32>
    %cst_40 = arith.constant dense<0.000000e+00> : vector<16x3xf32>
    %87 = tpu.matmul %85, %86, %cst_40 {dimension_numbers = #tpu.dot_dimension_numbers<[1], [0], [0], [1], [0, 0, 1, 1], [], []>} : vector<16x32xf32>, vector<32x3xf32>, vector<16x3xf32> -> vector<16x3xf32>
    %c0_41 = arith.constant 0 : index
    %c0_42 = arith.constant 0 : index
    %88 = vector.load %arg12[%c0_41, %c0_42] : memref<1x3xf32, #tpu.memory_space<vmem>>, vector<1x3xf32>
    %89 = vector.broadcast %88 : vector<1x3xf32> to vector<16x3xf32>
    %90 = arith.addf %87, %89 : vector<16x3xf32>
    %c0_43 = arith.constant 0 : index
    %c0_44 = arith.constant 0 : index
    %91 = vector.load %arg13[%c0_43, %c0_44] : memref<16x3xf32, #tpu.memory_space<vmem>>, vector<16x3xf32>
    tpu.vector_store %arg13[%c0_43, %c0_44], %90 {strides = array<i32>} : memref<16x3xf32, #tpu.memory_space<vmem>>, vector<16x3xf32>,
    %cst_45 = arith.constant 0.00999999977 : f32
    %92 = vector.broadcast %cst_45 : f32 to vector<16x3xf32>
    %93 = arith.mulf %92, %17 : vector<16x3xf32>
    %94 = arith.addf %18, %93 : vector<16x3xf32>
    %cst_46 = arith.constant 5.000000e-05 : f32
    %95 = vector.broadcast %cst_46 : f32 to vector<16x3xf32>
    %96 = arith.mulf %95, %90 : vector<16x3xf32>
    %97 = arith.addf %94, %96 : vector<16x3xf32>
    %c0_47 = arith.constant 0 : index
    %c0_48 = arith.constant 0 : index
    %98 = vector.load %arg14[%c0_47, %c0_48] : memref<16x3xf32, #tpu.memory_space<vmem>>, vector<16x3xf32>
    tpu.vector_store %arg14[%c0_47, %c0_48], %97 {strides = array<i32>} : memref<16x3xf32, #tpu.memory_space<vmem>>, vector<16x3xf32>,
    return
  }
  func.func @transform_0(%arg0: i32) -> (i32, i32) {
    %c0_i32 = arith.constant 0 : i32
    %c0_i32_0 = arith.constant 0 : i32
    %c0_i32_1 = arith.constant 0 : i32
    return %c0_i32, %c0_i32_0 : i32, i32
  }
  func.func @transform_1(%arg0: i32) -> (i32, i32) {
    %c0_i32 = arith.constant 0 : i32
    %c0_i32_0 = arith.constant 0 : i32
    %c0_i32_1 = arith.constant 0 : i32
    return %c0_i32, %c0_i32_0 : i32, i32
  }
  func.func @transform_2(%arg0: i32) -> (i32, i32) {
    %c0_i32 = arith.constant 0 : i32
    %c0_i32_0 = arith.constant 0 : i32
    %c0_i32_1 = arith.constant 0 : i32
    return %c0_i32, %c0_i32_0 : i32, i32
  }
  func.func @transform_3(%arg0: i32) -> (i32, i32) {
    %c0_i32 = arith.constant 0 : i32
    %c0_i32_0 = arith.constant 0 : i32
    %c0_i32_1 = arith.constant 0 : i32
    return %c0_i32, %c0_i32_0 : i32, i32
  }
  func.func @transform_4(%arg0: i32) -> (i32, i32) {
    %c0_i32 = arith.constant 0 : i32
    %c0_i32_0 = arith.constant 0 : i32
    %c0_i32_1 = arith.constant 0 : i32
    return %c0_i32, %c0_i32_0 : i32, i32
  }
  func.func @transform_5(%arg0: i32) -> (i32, i32) {
    %c0_i32 = arith.constant 0 : i32
    %c0_i32_0 = arith.constant 0 : i32
    %c0_i32_1 = arith.constant 0 : i32
    return %c0_i32, %c0_i32_0 : i32, i32
  }
  func.func @transform_6(%arg0: i32) -> (i32, i32) {
    %c0_i32 = arith.constant 0 : i32
    %c0_i32_0 = arith.constant 0 : i32
    %c0_i32_1 = arith.constant 0 : i32
    return %c0_i32, %c0_i32_0 : i32, i32
  }
  func.func @transform_7(%arg0: i32) -> (i32, i32) {
    %c0_i32 = arith.constant 0 : i32
    %c0_i32_0 = arith.constant 0 : i32
    %c0_i32_1 = arith.constant 0 : i32
    return %c0_i32, %c0_i32_0 : i32, i32
  }
  func.func @transform_8(%arg0: i32) -> (i32, i32) {
    %c0_i32 = arith.constant 0 : i32
    %c0_i32_0 = arith.constant 0 : i32
    %c0_i32_1 = arith.constant 0 : i32
    return %c0_i32, %c0_i32_0 : i32, i32
  }
  func.func @transform_9(%arg0: i32) -> (i32, i32) {
    %c0_i32 = arith.constant 0 : i32
    %c0_i32_0 = arith.constant 0 : i32
    %c0_i32_1 = arith.constant 0 : i32
    return %c0_i32, %c0_i32_0 : i32, i32
  }
  func.func @transform_10(%arg0: i32) -> (i32, i32) {
    %c0_i32 = arith.constant 0 : i32
    %c0_i32_0 = arith.constant 0 : i32
    %c0_i32_1 = arith.constant 0 : i32
    return %c0_i32, %c0_i32_0 : i32, i32
  }
  func.func @transform_11(%arg0: i32) -> (i32, i32) {
    %c0_i32 = arith.constant 0 : i32
    %c0_i32_0 = arith.constant 0 : i32
    %c0_i32_1 = arith.constant 0 : i32
    return %c0_i32, %c0_i32_0 : i32, i32
  }
  func.func @transform_12(%arg0: i32) -> (i32, i32) {
    %c0_i32 = arith.constant 0 : i32
    %c0_i32_0 = arith.constant 0 : i32
    return %arg0, %c0_i32 : i32, i32
  }
  func.func @transform_13(%arg0: i32) -> (i32, i32) {
    %c0_i32 = arith.constant 0 : i32
    %c0_i32_0 = arith.constant 0 : i32
    return %arg0, %c0_i32 : i32, i32
  }
}

</mosaic_0001>

<llo_original>
// kernel: simulator_forward.1
$region0: #{simulator_forward.1}
  #allocation0 [shape = 'u32[]', space=smem, size = 0x4, offset = 0x4, fixed_abs, tag = 'smem constant byte address 0x4 - core index']
  #allocation1 [shape = 'u32[144,128]{1,0:T(1,128)}', space=vmem, size = 0x12000, scoped, tag = 'internal scratch']
  %s0 = inlined_call_operand.vmem [shape: f32[64,8], index: 0, kind: input, shape index: {}]
  %s1 = inlined_call_operand.vmem [shape: f32[64,8], index: 1, kind: input, shape index: {}]
  %s2 = inlined_call_operand.vmem [shape: f32[8,32], index: 2, kind: input, shape index: {}]
  %s3 = inlined_call_operand.vmem [shape: f32[8,32], index: 3, kind: input, shape index: {}]
  %s4 = inlined_call_operand.vmem [shape: f32[32,32], index: 4, kind: input, shape index: {}]
  %s5 = inlined_call_operand.vmem [shape: f32[1,32], index: 5, kind: input, shape index: {}]
  %s6 = inlined_call_operand.vmem [shape: f32[32,32], index: 6, kind: input, shape index: {}]
  %s7 = inlined_call_operand.vmem [shape: f32[32,32], index: 7, kind: input, shape index: {}]
  %s8 = inlined_call_operand.vmem [shape: f32[32,32], index: 8, kind: input, shape index: {}]
  %s9 = inlined_call_operand.vmem [shape: f32[1,32], index: 9, kind: input, shape index: {}]
  %s10 = inlined_call_operand.vmem [shape: f32[32,3], index: 10, kind: input, shape index: {}]
  %s11 = inlined_call_operand.vmem [shape: f32[1,3], index: 11, kind: input, shape index: {}]
  %s12 = inlined_call_operand.vmem [shape: f32[64,3], index: 12, kind: output, shape index: {0}]
  %s13 = inlined_call_operand.vmem [shape: f32[64,3], index: 13, kind: output, shape index: {1}]
  %14 = xla_tuple %s12, %s13
  %s15 = sld [smem:[#allocation0]]
  $region89: #{simulator_forward.1} parent=0
    _
  %s17 = ssub.s32 1, %s15
  %s18 = scalar_select 0, %s17, %s15
  loop: start=0, step=1, limit=6
  $region2: #{simulator_forward.1} parent=0 // loop_pre_header
    _
  $region3: #{simulator_forward.1} parent=0 // loop_header
    %s20 = sphi 0, %s24
    %p21 = scmp.ge.s32.totalorder %s20, 6
    %s28 = sphi 0, %s28
    %s30 = sphi 0, %s28
    %s31 = sphi 0, %s30
    %s45 = sphi 0, %s31
    %s49 = sphi 0, %s49
    %s51 = sphi 0, %s49
    %s52 = sphi 0, %s51
    %s66 = sphi 0, %s52
    %s70 = sphi 0, %s70
    %s72 = sphi 0, %s70
    %s73 = sphi 0, %s72
    %s87 = sphi 0, %s73
    %s91 = sphi 0, %s91
    %s93 = sphi 0, %s91
    %s94 = sphi 0, %s93
    %s108 = sphi 0, %s94
    %s112 = sphi 0, %s112
    %s114 = sphi 0, %s112
    %s115 = sphi 0, %s114
    %s129 = sphi 0, %s115
    %s133 = sphi 0, %s133
    %s135 = sphi 0, %s133
    %s136 = sphi 0, %s135
    %s150 = sphi 0, %s136
    %s154 = sphi 0, %s154
    %s156 = sphi 0, %s154
    %s157 = sphi 0, %s156
    %s171 = sphi 0, %s157
    %s175 = sphi 0, %s175
    %s177 = sphi 0, %s175
    %s178 = sphi 0, %s177
    %s192 = sphi 0, %s178
    %s196 = sphi 0, %s196
    %s198 = sphi 0, %s196
    %s199 = sphi 0, %s198
    %s213 = sphi 0, %s199
    %s217 = sphi 0, %s217
    %s219 = sphi 0, %s217
    %s220 = sphi 0, %s219
    %s234 = sphi 0, %s220
    %s238 = sphi 0, %s238
    %s240 = sphi 0, %s238
    %s241 = sphi 0, %s240
    %s255 = sphi 0, %s241
    %s259 = sphi 0, %s259
    %s261 = sphi 0, %s259
    %s262 = sphi 0, %s261
    %s276 = sphi 0, %s262
    %s282 = sphi 0, %s284
    %s285 = sphi 0, %s282
    %s286 = sphi 0, %s285
    %s302 = sphi 0, %s286
    %s308 = sphi 0, %s310
    %s311 = sphi 0, %s308
    %s312 = sphi 0, %s311
    %s328 = sphi 0, %s312
  $region4: #{simulator_forward.1} parent=0 // loop_header_branch
    %23 = sbr.rel (%p21) target = $region8
  $region5: #{simulator_forward.1} parent=0 // loop_body
    %s25 = ssub.s32 %s20, 1
    %s26 = ssub.s32 %s20, 2
    %s27 = sadd.s32 %s20, 1
    %s29 = sadd.s32 %s28, 1
    %p32 = scmp.eq.s32.totalorder %s20, 3
    %p33 = scmp.ne.s32.totalorder %s28, %s30
    %p34 = scmp.eq.s32.totalorder %s20, 0
    %p35 = por %p33, %p34
    %p36 = scmp.ne.s32.totalorder %s28, %s30
    %p37 = scmp.eq.s32.totalorder %s25, 3
    %p38 = por %p36, %p37
    %p39 = scmp.ne.s32.totalorder %s30, %s31
    %p40 = scmp.eq.s32.totalorder %s25, 0
    %p41 = por %p39, %p40
    %p42 = scmp.ne.s32.totalorder %s30, %s31
    %p43 = scmp.eq.s32.totalorder %s26, 3
    %p44 = por %p42, %p43
    %p46 = scmp.ne.s32.totalorder %s31, %s45
    %p47 = scmp.eq.s32.totalorder %s26, 0
    %p48 = por %p46, %p47
    %s50 = sadd.s32 %s49, 1
    %p53 = scmp.eq.s32.totalorder %s20, 3
    %p54 = scmp.ne.s32.totalorder %s49, %s51
    %p55 = scmp.eq.s32.totalorder %s20, 0
    %p56 = por %p54, %p55
    %p57 = scmp.ne.s32.totalorder %s49, %s51
    %p58 = scmp.eq.s32.totalorder %s25, 3
    %p59 = por %p57, %p58
    %p60 = scmp.ne.s32.totalorder %s51, %s52
    %p61 = scmp.eq.s32.totalorder %s25, 0
    %p62 = por %p60, %p61
    %p63 = scmp.ne.s32.totalorder %s51, %s52
    %p64 = scmp.eq.s32.totalorder %s26, 3
    %p65 = por %p63, %p64
    %p67 = scmp.ne.s32.totalorder %s52, %s66
    %p68 = scmp.eq.s32.totalorder %s26, 0
    %p69 = por %p67, %p68
    %s71 = sadd.s32 %s70, 1
    %p74 = scmp.eq.s32.totalorder %s20, 3
    %p75 = scmp.ne.s32.totalorder %s70, %s72
    %p76 = scmp.eq.s32.totalorder %s20, 0
    %p77 = por %p75, %p76
    %p78 = scmp.ne.s32.totalorder %s70, %s72
    %p79 = scmp.eq.s32.totalorder %s25, 3
    %p80 = por %p78, %p79
    %p81 = scmp.ne.s32.totalorder %s72, %s73
    %p82 = scmp.eq.s32.totalorder %s25, 0
    %p83 = por %p81, %p82
    %p84 = scmp.ne.s32.totalorder %s72, %s73
    %p85 = scmp.eq.s32.totalorder %s26, 3
    %p86 = por %p84, %p85
    %p88 = scmp.ne.s32.totalorder %s73, %s87
    %p89 = scmp.eq.s32.totalorder %s26, 0
    %p90 = por %p88, %p89
    %s92 = sadd.s32 %s91, 1
    %p95 = scmp.eq.s32.totalorder %s20, 3
    %p96 = scmp.ne.s32.totalorder %s91, %s93
    %p97 = scmp.eq.s32.totalorder %s20, 0
    %p98 = por %p96, %p97
    %p99 = scmp.ne.s32.totalorder %s91, %s93
    %p100 = scmp.eq.s32.totalorder %s25, 3
    %p101 = por %p99, %p100
    %p102 = scmp.ne.s32.totalorder %s93, %s94
    %p103 = scmp.eq.s32.totalorder %s25, 0
    %p104 = por %p102, %p103
    %p105 = scmp.ne.s32.totalorder %s93, %s94
    %p106 = scmp.eq.s32.totalorder %s26, 3
    %p107 = por %p105, %p106
    %p109 = scmp.ne.s32.totalorder %s94, %s108
    %p110 = scmp.eq.s32.totalorder %s26, 0
    %p111 = por %p109, %p110
    %s113 = sadd.s32 %s112, 1
    %p116 = scmp.eq.s32.totalorder %s20, 3
    %p117 = scmp.ne.s32.totalorder %s112, %s114
    %p118 = scmp.eq.s32.totalorder %s20, 0
    %p119 = por %p117, %p118
    %p120 = scmp.ne.s32.totalorder %s112, %s114
    %p121 = scmp.eq.s32.totalorder %s25, 3
    %p122 = por %p120, %p121
    %p123 = scmp.ne.s32.totalorder %s114, %s115
    %p124 = scmp.eq.s32.totalorder %s25, 0
    %p125 = por %p123, %p124
    %p126 = scmp.ne.s32.totalorder %s114, %s115
    %p127 = scmp.eq.s32.totalorder %s26, 3
    %p128 = por %p126, %p127
    %p130 = scmp.ne.s32.totalorder %s115, %s129
    %p131 = scmp.eq.s32.totalorder %s26, 0
    %p132 = por %p130, %p131
    %s134 = sadd.s32 %s133, 1
    %p137 = scmp.eq.s32.totalorder %s20, 3
    %p138 = scmp.ne.s32.totalorder %s133, %s135
    %p139 = scmp.eq.s32.totalorder %s20, 0
    %p140 = por %p138, %p139
    %p141 = scmp.ne.s32.totalorder %s133, %s135
    %p142 = scmp.eq.s32.totalorder %s25, 3
    %p143 = por %p141, %p142
    %p144 = scmp.ne.s32.totalorder %s135, %s136
    %p145 = scmp.eq.s32.totalorder %s25, 0
    %p146 = por %p144, %p145
    %p147 = scmp.ne.s32.totalorder %s135, %s136
    %p148 = scmp.eq.s32.totalorder %s26, 3
    %p149 = por %p147, %p148
    %p151 = scmp.ne.s32.totalorder %s136, %s150
    %p152 = scmp.eq.s32.totalorder %s26, 0
    %p153 = por %p151, %p152
    %s155 = sadd.s32 %s154, 1
    %p158 = scmp.eq.s32.totalorder %s20, 3
    %p159 = scmp.ne.s32.totalorder %s154, %s156
    %p160 = scmp.eq.s32.totalorder %s20, 0
    %p161 = por %p159, %p160
    %p162 = scmp.ne.s32.totalorder %s154, %s156
    %p163 = scmp.eq.s32.totalorder %s25, 3
    %p164 = por %p162, %p163
    %p165 = scmp.ne.s32.totalorder %s156, %s157
    %p166 = scmp.eq.s32.totalorder %s25, 0
    %p167 = por %p165, %p166
    %p168 = scmp.ne.s32.totalorder %s156, %s157
    %p169 = scmp.eq.s32.totalorder %s26, 3
    %p170 = por %p168, %p169
    %p172 = scmp.ne.s32.totalorder %s157, %s171
    %p173 = scmp.eq.s32.totalorder %s26, 0
    %p174 = por %p172, %p173
    %s176 = sadd.s32 %s175, 1
    %p179 = scmp.eq.s32.totalorder %s20, 3
    %p180 = scmp.ne.s32.totalorder %s175, %s177
    %p181 = scmp.eq.s32.totalorder %s20, 0
    %p182 = por %p180, %p181
    %p183 = scmp.ne.s32.totalorder %s175, %s177
    %p184 = scmp.eq.s32.totalorder %s25, 3
    %p185 = por %p183, %p184
    %p186 = scmp.ne.s32.totalorder %s177, %s178
    %p187 = scmp.eq.s32.totalorder %s25, 0
    %p188 = por %p186, %p187
    %p189 = scmp.ne.s32.totalorder %s177, %s178
    %p190 = scmp.eq.s32.totalorder %s26, 3
    %p191 = por %p189, %p190
    %p193 = scmp.ne.s32.totalorder %s178, %s192
    %p194 = scmp.eq.s32.totalorder %s26, 0
    %p195 = por %p193, %p194
    %s197 = sadd.s32 %s196, 1
    %p200 = scmp.eq.s32.totalorder %s20, 3
    %p201 = scmp.ne.s32.totalorder %s196, %s198
    %p202 = scmp.eq.s32.totalorder %s20, 0
    %p203 = por %p201, %p202
    %p204 = scmp.ne.s32.totalorder %s196, %s198
    %p205 = scmp.eq.s32.totalorder %s25, 3
    %p206 = por %p204, %p205
    %p207 = scmp.ne.s32.totalorder %s198, %s199
    %p208 = scmp.eq.s32.totalorder %s25, 0
    %p209 = por %p207, %p208
    %p210 = scmp.ne.s32.totalorder %s198, %s199
    %p211 = scmp.eq.s32.totalorder %s26, 3
    %p212 = por %p210, %p211
    %p214 = scmp.ne.s32.totalorder %s199, %s213
    %p215 = scmp.eq.s32.totalorder %s26, 0
    %p216 = por %p214, %p215
    %s218 = sadd.s32 %s217, 1
    %p221 = scmp.eq.s32.totalorder %s20, 3
    %p222 = scmp.ne.s32.totalorder %s217, %s219
    %p223 = scmp.eq.s32.totalorder %s20, 0
    %p224 = por %p222, %p223
    %p225 = scmp.ne.s32.totalorder %s217, %s219
    %p226 = scmp.eq.s32.totalorder %s25, 3
    %p227 = por %p225, %p226
    %p228 = scmp.ne.s32.totalorder %s219, %s220
    %p229 = scmp.eq.s32.totalorder %s25, 0
    %p230 = por %p228, %p229
    %p231 = scmp.ne.s32.totalorder %s219, %s220
    %p232 = scmp.eq.s32.totalorder %s26, 3
    %p233 = por %p231, %p232
    %p235 = scmp.ne.s32.totalorder %s220, %s234
    %p236 = scmp.eq.s32.totalorder %s26, 0
    %p237 = por %p235, %p236
    %s239 = sadd.s32 %s238, 1
    %p242 = scmp.eq.s32.totalorder %s20, 3
    %p243 = scmp.ne.s32.totalorder %s238, %s240
    %p244 = scmp.eq.s32.totalorder %s20, 0
    %p245 = por %p243, %p244
    %p246 = scmp.ne.s32.totalorder %s238, %s240
    %p247 = scmp.eq.s32.totalorder %s25, 3
    %p248 = por %p246, %p247
    %p249 = scmp.ne.s32.totalorder %s240, %s241
    %p250 = scmp.eq.s32.totalorder %s25, 0
    %p251 = por %p249, %p250
    %p252 = scmp.ne.s32.totalorder %s240, %s241
    %p253 = scmp.eq.s32.totalorder %s26, 3
    %p254 = por %p252, %p253
    %p256 = scmp.ne.s32.totalorder %s241, %s255
    %p257 = scmp.eq.s32.totalorder %s26, 0
    %p258 = por %p256, %p257
    %s260 = sadd.s32 %s259, 1
    %p263 = scmp.eq.s32.totalorder %s20, 3
    %p264 = scmp.ne.s32.totalorder %s259, %s261
    %p265 = scmp.eq.s32.totalorder %s20, 0
    %p266 = por %p264, %p265
    %p267 = scmp.ne.s32.totalorder %s259, %s261
    %p268 = scmp.eq.s32.totalorder %s25, 3
    %p269 = por %p267, %p268
    %p270 = scmp.ne.s32.totalorder %s261, %s262
    %p271 = scmp.eq.s32.totalorder %s25, 0
    %p272 = por %p270, %p271
    %p273 = scmp.ne.s32.totalorder %s261, %s262
    %p274 = scmp.eq.s32.totalorder %s26, 3
    %p275 = por %p273, %p274
    %p277 = scmp.ne.s32.totalorder %s262, %s276
    %p278 = scmp.eq.s32.totalorder %s26, 0
    %p279 = por %p277, %p278
    %s280 = ssub.s32 %s20, %s27
    %p281 = scmp.eq.s32.totalorder %s280, 0
    %s283 = sadd.s32 %s282, 1
    %s284 = scalar_select %p281, %s282, %s283
    %p287 = pneg %p281
    %p288 = scmp.eq.s32.totalorder %s20, 3
    %p289 = por %p287, %p288
    %p290 = scmp.ne.s32.totalorder %s282, %s285
    %p291 = scmp.eq.s32.totalorder %s20, 0
    %p292 = por %p290, %p291
    %p293 = scmp.ne.s32.totalorder %s282, %s285
    %p294 = scmp.eq.s32.totalorder %s25, 3
    %p295 = por %p293, %p294
    %p296 = scmp.ne.s32.totalorder %s285, %s286
    %p297 = scmp.eq.s32.totalorder %s25, 0
    %p298 = por %p296, %p297
    %p299 = scmp.ne.s32.totalorder %s285, %s286
    %p300 = scmp.eq.s32.totalorder %s26, 3
    %p301 = por %p299, %p300
    %p303 = scmp.ne.s32.totalorder %s286, %s302
    %p304 = scmp.eq.s32.totalorder %s26, 0
    %p305 = por %p303, %p304
    %s306 = ssub.s32 %s20, %s27
    %p307 = scmp.eq.s32.totalorder %s306, 0
    %s309 = sadd.s32 %s308, 1
    %s310 = scalar_select %p307, %s308, %s309
    %p313 = pneg %p307
    %p314 = scmp.eq.s32.totalorder %s20, 3
    %p315 = por %p313, %p314
    %p316 = scmp.ne.s32.totalorder %s308, %s311
    %p317 = scmp.eq.s32.totalorder %s20, 0
    %p318 = por %p316, %p317
    %p319 = scmp.ne.s32.totalorder %s308, %s311
    %p320 = scmp.eq.s32.totalorder %s25, 3
    %p321 = por %p319, %p320
    %p322 = scmp.ne.s32.totalorder %s311, %s312
    %p323 = scmp.eq.s32.totalorder %s25, 0
    %p324 = por %p322, %p323
    %p325 = scmp.ne.s32.totalorder %s311, %s312
    %p326 = scmp.eq.s32.totalorder %s26, 3
    %p327 = por %p325, %p326
    %p329 = scmp.ne.s32.totalorder %s312, %s328
    %p330 = scmp.eq.s32.totalorder %s26, 0
    %p331 = por %p329, %p330
    %p332 = scmp.le.s32.totalorder 1, %s20
    %p333 = scmp.lt.s32.totalorder %s20, 5
    %p334 = pnand %p332, %p333
    %p335 = pneg %p334
    // Predicated region
    $region9: #{simulator_forward.1} parent=5 // pred_check
      _
    $region10: #{simulator_forward.1} parent=5 // pred_check_branch
      %337 = sbr.rel (%p334) target = $region12
    $region11: #{simulator_forward.1} parent=5 // pred_region
      %s338 = ssub.s32 %s20, 1
      // Predicated region
      $region13: #{simulator_forward.1} parent=11 // pred_check
        %p339 = pneg %p41
      $region14: #{simulator_forward.1} parent=11 // pred_check_branch
        %341 = sbr.rel (%p339) target = $region16
      $region15: #{simulator_forward.1} parent=11 // pred_region
        _
      $region16: #{simulator_forward.1} parent=11 // pred_fallthru
        _
      // Predicated region
      $region17: #{simulator_forward.1} parent=11 // pred_check
        %p342 = pneg %p62
      $region18: #{simulator_forward.1} parent=11 // pred_check_branch
        %344 = sbr.rel (%p342) target = $region20
      $region19: #{simulator_forward.1} parent=11 // pred_region
        _
      $region20: #{simulator_forward.1} parent=11 // pred_fallthru
        _
      // Predicated region
      $region21: #{simulator_forward.1} parent=11 // pred_check
        %p345 = pneg %p83
      $region22: #{simulator_forward.1} parent=11 // pred_check_branch
        %347 = sbr.rel (%p345) target = $region24
      $region23: #{simulator_forward.1} parent=11 // pred_region
        _
      $region24: #{simulator_forward.1} parent=11 // pred_fallthru
        _
      // Predicated region
      $region25: #{simulator_forward.1} parent=11 // pred_check
        %p348 = pneg %p104
      $region26: #{simulator_forward.1} parent=11 // pred_check_branch
        %350 = sbr.rel (%p348) target = $region28
      $region27: #{simulator_forward.1} parent=11 // pred_region
        _
      $region28: #{simulator_forward.1} parent=11 // pred_fallthru
        _
      // Predicated region
      $region29: #{simulator_forward.1} parent=11 // pred_check
        %p351 = pneg %p125
      $region30: #{simulator_forward.1} parent=11 // pred_check_branch
        %353 = sbr.rel (%p351) target = $region32
      $region31: #{simulator_forward.1} parent=11 // pred_region
        _
      $region32: #{simulator_forward.1} parent=11 // pred_fallthru
        _
      // Predicated region
      $region33: #{simulator_forward.1} parent=11 // pred_check
        %p354 = pneg %p146
      $region34: #{simulator_forward.1} parent=11 // pred_check_branch
        %356 = sbr.rel (%p354) target = $region36
      $region35: #{simulator_forward.1} parent=11 // pred_region
        _
      $region36: #{simulator_forward.1} parent=11 // pred_fallthru
        _
      // Predicated region
      $region37: #{simulator_forward.1} parent=11 // pred_check
        %p357 = pneg %p167
      $region38: #{simulator_forward.1} parent=11 // pred_check_branch
        %359 = sbr.rel (%p357) target = $region40
      $region39: #{simulator_forward.1} parent=11 // pred_region
        _
      $region40: #{simulator_forward.1} parent=11 // pred_fallthru
        _
      // Predicated region
      $region41: #{simulator_forward.1} parent=11 // pred_check
        %p360 = pneg %p188
      $region42: #{simulator_forward.1} parent=11 // pred_check_branch
        %362 = sbr.rel (%p360) target = $region44
      $region43: #{simulator_forward.1} parent=11 // pred_region
        _
      $region44: #{simulator_forward.1} parent=11 // pred_fallthru
        _
      // Predicated region
      $region45: #{simulator_forward.1} parent=11 // pred_check
        %p363 = pneg %p209
      $region46: #{simulator_forward.1} parent=11 // pred_check_branch
        %365 = sbr.rel (%p363) target = $region48
      $region47: #{simulator_forward.1} parent=11 // pred_region
        _
      $region48: #{simulator_forward.1} parent=11 // pred_fallthru
        _
      // Predicated region
      $region49: #{simulator_forward.1} parent=11 // pred_check
        %p366 = pneg %p230
      $region50: #{simulator_forward.1} parent=11 // pred_check_branch
        %368 = sbr.rel (%p366) target = $region52
      $region51: #{simulator_forward.1} parent=11 // pred_region
        _
      $region52: #{simulator_forward.1} parent=11 // pred_fallthru
        _
      // Predicated region
      $region53: #{simulator_forward.1} parent=11 // pred_check
        %p369 = pneg %p251
      $region54: #{simulator_forward.1} parent=11 // pred_check_branch
        %371 = sbr.rel (%p369) target = $region56
      $region55: #{simulator_forward.1} parent=11 // pred_region
        _
      $region56: #{simulator_forward.1} parent=11 // pred_fallthru
        _
      // Predicated region
      $region57: #{simulator_forward.1} parent=11 // pred_check
        %p372 = pneg %p272
      $region58: #{simulator_forward.1} parent=11 // pred_check_branch
        %374 = sbr.rel (%p372) target = $region60
      $region59: #{simulator_forward.1} parent=11 // pred_region
        _
      $region60: #{simulator_forward.1} parent=11 // pred_fallthru
        _
    $region12: #{simulator_forward.1} parent=5 // pred_fallthru
      _
    %p375 = scmp.lt.s32.totalorder %s20, 4
    // Predicated region
    $region61: #{simulator_forward.1} parent=5 // pred_check
      %p376 = pneg %p375
    $region62: #{simulator_forward.1} parent=5 // pred_check_branch
      %378 = sbr.rel (%p376) target = $region64
    $region63: #{simulator_forward.1} parent=5 // pred_region
      _
    $region64: #{simulator_forward.1} parent=5 // pred_fallthru
      _
    %p379 = scmp.le.s32.totalorder 1, %s20
    %p380 = scmp.lt.s32.totalorder %s20, 5
    %p381 = pnand %p379, %p380
    %p382 = pneg %p381
    // Predicated region
    $region65: #{simulator_forward.1} parent=5 // pred_check
      _
    $region66: #{simulator_forward.1} parent=5 // pred_check_branch
      %384 = sbr.rel (%p381) target = $region68
    $region67: #{simulator_forward.1} parent=5 // pred_region
      %s385 = ssub.s32 %s20, 1
      %p386 = pneg %p41
      %p387 = pneg %p38
      %p388 = pneg %p62
      %p389 = pneg %p59
      %p390 = pneg %p83
      %p391 = pneg %p80
      %p392 = pneg %p104
      %p393 = pneg %p101
      %p394 = pneg %p125
      %p395 = pneg %p122
      %p396 = pneg %p146
      %p397 = pneg %p143
      %p398 = pneg %p167
      %p399 = pneg %p164
      %p400 = pneg %p188
      %p401 = pneg %p185
      %p402 = pneg %p209
      %p403 = pneg %p206
      %p404 = pneg %p230
      %p405 = pneg %p227
      %p406 = pneg %p251
      %p407 = pneg %p248
      %p408 = pneg %p272
      %p409 = pneg %p269
      %p410 = pneg %p298
      %p411 = pneg %p295
      %s412 = smul.u32 2, %s25
      %p413 = scmp.lt.s32.totalorder %s412, 7
      %s414 = scalar_select %p413, %s412, 7
      %s415 = smul.addr %s414, 8
      %s416 = scalar_lea.vmem %s12, %s415
      %p417 = pneg %p324
      %p418 = pneg %p321
      %s419 = smul.u32 2, %s25
      %p420 = scmp.lt.s32.totalorder %s419, 7
      %s421 = scalar_select %p420, %s419, 7
      %s422 = smul.addr %s421, 8
      %s423 = scalar_lea.vmem %s13, %s422
      %s424 = smul.u32 2, %s25
      %p425 = scmp.lt.s32.totalorder %s424, 7
      %s426 = scalar_select %p425, %s424, 7
      %s427 = smul.addr %s426, 8
      %s428 = scalar_lea.vmem %s12, %s427
      %s429 = smul.u32 2, %s25
      %s430 = smul.u32 2, %s25
      %p431 = scmp.lt.s32.totalorder %s430, 7
      %s432 = scalar_select %p431, %s430, 7
      %s433 = smul.addr %s432, 8
      %s434 = scalar_lea.vmem %s13, %s433
      %s435 = smul.u32 2, %s25
      %s436 = smul.u32 %s25, 16
      %v437 = vld [vmem:[%s0] sm:$0xff]
      %v438 = vld [vmem:[%s0 + $0x8] sm:$0xff]
      %v439 = vld [vmem:[%s0 + $0x10] sm:$0xff]
      %v440 = vld [vmem:[%s0 + $0x18] sm:$0xff]
      %v441 = vld [vmem:[%s0 + $0x20] sm:$0xff]
      %v442 = vld [vmem:[%s0 + $0x28] sm:$0xff]
      %v443 = vld [vmem:[%s0 + $0x30] sm:$0xff]
      %v444 = vld [vmem:[%s0 + $0x38] sm:$0xff]
      %v445 = vld [vmem:[%s1] sm:$0xff]
      %v446 = vld [vmem:[%s1 + $0x8] sm:$0xff]
      %v447 = vld [vmem:[%s1 + $0x10] sm:$0xff]
      %v448 = vld [vmem:[%s1 + $0x18] sm:$0xff]
      %v449 = vld [vmem:[%s1 + $0x20] sm:$0xff]
      %v450 = vld [vmem:[%s1 + $0x28] sm:$0xff]
      %v451 = vld [vmem:[%s1 + $0x30] sm:$0xff]
      %v452 = vld [vmem:[%s1 + $0x38] sm:$0xff]
      %v453 = vld [vmem:[%s2] sm:$0xff]
      %vm454 = vcmask 64512
      %v456 = vsel %vm454, %v437, 0
      %v459 = vsel %vm454, %v438, 0
      %v462 = vsel %vm454, %v439, 0
      %v465 = vsel %vm454, %v440, 0
      %v468 = vsel %vm454, %v441, 0
      %v471 = vsel %vm454, %v442, 0
      %v474 = vsel %vm454, %v443, 0
      %v477 = vsel %vm454, %v444, 0
      %479 = vmatprep.subr.mxu0 0.0
      %480 = vmatpush1.msra.mxu0 %v453
      %481 = vmatprep.subr.mxu0 0.0
      %482 = vmatpush1.msra.mxu0 0.0
      %483 = vmatprep.subr.mxu0 0.0
      %484 = vmatpush1.msra.mxu0 0.0
      %485 = vmatprep.subr.mxu0 0.0
      %486 = vmatpush1.msra.mxu0 0.0
      %487 = vmatprep.subr.mxu0 0.0
      %488 = vmatpush1.msra.mxu0 0.0
      %489 = vmatprep.subr.mxu0 0.0
      %490 = vmatpush1.msra.mxu0 0.0
      %491 = vmatprep.subr.mxu0 0.0
      %492 = vmatpush1.msra.mxu0 0.0
      %493 = vmatprep.subr.mxu0 0.0
      %494 = vmatpush1.msra.mxu0 0.0
      %495 = vmatprep.subr.mxu0 0.0
      %496 = vmatpush1.msra.mxu0 0.0
      %497 = vmatprep.subr.mxu0 0.0
      %498 = vmatpush1.msra.mxu0 0.0
      %499 = vmatprep.subr.mxu0 0.0
      %500 = vmatpush1.msra.mxu0 0.0
      %501 = vmatprep.subr.mxu0 0.0
      %502 = vmatpush1.msra.mxu0 0.0
      %503 = vmatprep.subr.mxu0 0.0
      %504 = vmatpush1.msra.mxu0 0.0
      %505 = vmatprep.subr.mxu0 0.0
      %506 = vmatpush1.msra.mxu0 0.0
      %507 = vmatprep.subr.mxu0 0.0
      %508 = vmatpush1.msra.mxu0 0.0
      %509 = vmatprep.subr.mxu0 0.0
      %510 = vmatpush1.msra.mxu0 0.0
      %511 = vmatprep.subr.mxu0 0.0
      %512 = vmatpush1.msra.mxu0 0.0
      %513 = vmatprep.subr.mxu0 0.0
      %514 = vmatpush1.msra.mxu0 0.0
      %515 = vmatprep.subr.mxu0 0.0
      %516 = vmatpush1.msra.mxu0 0.0
      %517 = vmatprep.subr.mxu0 0.0
      %518 = vmatpush1.msra.mxu0 0.0
      %519 = vmatprep.subr.mxu0 0.0
      %520 = vmatpush1.msra.mxu0 0.0
      %521 = vmatprep.subr.mxu0 0.0
      %522 = vmatpush1.msra.mxu0 0.0
      %523 = vmatprep.subr.mxu0 0.0
      %524 = vmatpush1.msra.mxu0 0.0
      %525 = vmatprep.subr.mxu0 0.0
      %526 = vmatpush1.msra.mxu0 0.0
      %527 = vmatprep.subr.mxu0 0.0
      %528 = vmatpush1.msra.mxu0 0.0
      %529 = vmatprep.subr.mxu0 0.0
      %530 = vmatpush1.msra.mxu0 0.0
      %531 = vmatprep.subr.mxu0 0.0
      %532 = vmatpush1.msra.mxu0 0.0
      %533 = vmatprep.subr.mxu0 0.0
      %534 = vmatpush1.msra.mxu0 0.0
      %535 = vmatprep.subr.mxu0 0.0
      %536 = vmatpush1.msra.mxu0 0.0
      %537 = vmatprep.subr.mxu0 0.0
      %538 = vmatpush1.msra.mxu0 0.0
      %539 = vmatprep.subr.mxu0 0.0
      %540 = vmatpush1.msra.mxu0 0.0
      %541 = vmatprep.subr.mxu0 0.0
      %542 = vmatpush1.msra.mxu0 0.0
      %543 = vmatprep.mubr.f32.mxu0 0.0
      %544 = vmatmul.mubr.f32.gmra.mrb[0].mxu0 %v456
      %v545 = vpop.f32.mrb[0].mxu0
      %v546 = vadd.f32 0.0, %v545
      %v547 = vpop.f32.mrb[0].mxu0
      %548 = vmatprep.mubr.f32.mxu0 0.0
      %549 = vmatmul.mubr.f32.gmra.mrb[0].mxu0 %v459
      %v550 = vpop.f32.mrb[0].mxu0
      %v551 = vadd.f32 0.0, %v550
      %v552 = vpop.f32.mrb[0].mxu0
      %553 = vmatprep.mubr.f32.mxu0 0.0
      %554 = vmatmul.mubr.f32.gmra.mrb[0].mxu0 %v462
      %v555 = vpop.f32.mrb[0].mxu0
      %v556 = vadd.f32 0.0, %v555
      %v557 = vpop.f32.mrb[0].mxu0
      %558 = vmatprep.mubr.f32.mxu0 0.0
      %559 = vmatmul.mubr.f32.gmra.mrb[0].mxu0 %v465
      %v560 = vpop.f32.mrb[0].mxu0
      %v561 = vadd.f32 0.0, %v560
      %v562 = vpop.f32.mrb[0].mxu0
      %563 = vmatprep.mubr.f32.mxu0 0.0
      %564 = vmatmul.mubr.f32.gmra.mrb[0].mxu0 %v468
      %v565 = vpop.f32.mrb[0].mxu0
      %v566 = vadd.f32 0.0, %v565
      %v567 = vpop.f32.mrb[0].mxu0
      %568 = vmatprep.mubr.f32.mxu0 0.0
      %569 = vmatmul.mubr.f32.gmra.mrb[0].mxu0 %v471
      %v570 = vpop.f32.mrb[0].mxu0
      %v571 = vadd.f32 0.0, %v570
      %v572 = vpop.f32.mrb[0].mxu0
      %573 = vmatprep.mubr.f32.mxu0 0.0
      %574 = vmatmul.mubr.f32.gmra.mrb[0].mxu0 %v474
      %v575 = vpop.f32.mrb[0].mxu0
      %v576 = vadd.f32 0.0, %v575
      %v577 = vpop.f32.mrb[0].mxu0
      %578 = vmatprep.mubr.f32.mxu0 0.0
      %579 = vmatmul.mubr.f32.gmra.mrb[0].mxu0 %v477
      %v580 = vpop.f32.mrb[0].mxu0
      %v581 = vadd.f32 0.0, %v580
      %v582 = vpop.f32.mrb[0].mxu0
      %583 = vdwg.mxu0
      %v584 = vmax.f32 %v546, 0.0
      %v585 = vmax.f32 %v551, 0.0
      %v586 = vmax.f32 %v556, 0.0
      %v587 = vmax.f32 %v561, 0.0
      %v588 = vmax.f32 %v566, 0.0
      %v589 = vmax.f32 %v571, 0.0
      %v590 = vmax.f32 %v576, 0.0
      %v591 = vmax.f32 %v581, 0.0
      %v592 = vld [vmem:[%s4] sm:$0xff]
      %v593 = vld [vmem:[%s4 + $0x8] sm:$0xff]
      %v594 = vld [vmem:[%s4 + $0x10] sm:$0xff]
      %v595 = vld [vmem:[%s4 + $0x18] sm:$0xff]
      %v596 = vld [vmem:[%s5] sm:$0x1]
      %v598 = vlaneseq
      %v599 = vshrl.u32 %v598, 7
      %v600 = vsub.s32 0, %v599
      %v601 = vrot.slane %v596, %v600
      %vm603 = vcmask 261120
      %v605 = vsel %vm603, %v584, 0
      %v608 = vsel %vm603, %v585, 0
      %v611 = vsel %vm603, %v586, 0
      %v614 = vsel %vm603, %v587, 0
      %v617 = vsel %vm603, %v588, 0
      %v620 = vsel %vm603, %v589, 0
      %v623 = vsel %vm603, %v590, 0
      %v626 = vsel %vm603, %v591, 0
      %628 = vmatprep.subr.mxu0 0.0
      %629 = vmatpush1.msra.mxu0 %v592
      %630 = vmatprep.subr.mxu0 0.0
      %631 = vmatpush1.msra.mxu0 %v593
      %632 = vmatprep.subr.mxu0 0.0
      %633 = vmatpush1.msra.mxu0 %v594
      %634 = vmatprep.subr.mxu0 0.0
      %635 = vmatpush1.msra.mxu0 %v595
      %636 = vmatprep.subr.mxu0 0.0
      %637 = vmatpush1.msra.mxu0 0.0
      %638 = vmatprep.subr.mxu0 0.0
      %639 = vmatpush1.msra.mxu0 0.0
      %640 = vmatprep.subr.mxu0 0.0
      %641 = vmatpush1.msra.mxu0 0.0
      %642 = vmatprep.subr.mxu0 0.0
      %643 = vmatpush1.msra.mxu0 0.0
      %644 = vmatprep.subr.mxu0 0.0
      %645 = vmatpush1.msra.mxu0 0.0
      %646 = vmatprep.subr.mxu0 0.0
      %647 = vmatpush1.msra.mxu0 0.0
      %648 = vmatprep.subr.mxu0 0.0
      %649 = vmatpush1.msra.mxu0 0.0
      %650 = vmatprep.subr.mxu0 0.0
      %651 = vmatpush1.msra.mxu0 0.0
      %652 = vmatprep.subr.mxu0 0.0
      %653 = vmatpush1.msra.mxu0 0.0
      %654 = vmatprep.subr.mxu0 0.0
      %655 = vmatpush1.msra.mxu0 0.0
      %656 = vmatprep.subr.mxu0 0.0
      %657 = vmatpush1.msra.mxu0 0.0
      %658 = vmatprep.subr.mxu0 0.0
      %659 = vmatpush1.msra.mxu0 0.0
      %660 = vmatprep.subr.mxu0 0.0
      %661 = vmatpush1.msra.mxu0 0.0
      %662 = vmatprep.subr.mxu0 0.0
      %663 = vmatpush1.msra.mxu0 0.0
      %664 = vmatprep.subr.mxu0 0.0
      %665 = vmatpush1.msra.mxu0 0.0
      %666 = vmatprep.subr.mxu0 0.0
      %667 = vmatpush1.msra.mxu0 0.0
      %668 = vmatprep.subr.mxu0 0.0
      %669 = vmatpush1.msra.mxu0 0.0
      %670 = vmatprep.subr.mxu0 0.0
      %671 = vmatpush1.msra.mxu0 0.0
      %672 = vmatprep.subr.mxu0 0.0
      %673 = vmatpush1.msra.mxu0 0.0
      %674 = vmatprep.subr.mxu0 0.0
      %675 = vmatpush1.msra.mxu0 0.0
      %676 = vmatprep.subr.mxu0 0.0
      %677 = vmatpush1.msra.mxu0 0.0
      %678 = vmatprep.subr.mxu0 0.0
      %679 = vmatpush1.msra.mxu0 0.0
      %680 = vmatprep.subr.mxu0 0.0
      %681 = vmatpush1.msra.mxu0 0.0
      %682 = vmatprep.subr.mxu0 0.0
      %683 = vmatpush1.msra.mxu0 0.0
      %684 = vmatprep.subr.mxu0 0.0
      %685 = vmatpush1.msra.mxu0 0.0
      %686 = vmatprep.subr.mxu0 0.0
      %687 = vmatpush1.msra.mxu0 0.0
      %688 = vmatprep.subr.mxu0 0.0
      %689 = vmatpush1.msra.mxu0 0.0
      %690 = vmatprep.subr.mxu0 0.0
      %691 = vmatpush1.msra.mxu0 0.0
      %692 = vmatprep.mubr.f32.mxu0 0.0
      %693 = vmatmul.mubr.f32.gmra.mrb[0].mxu0 %v605
      %v694 = vpop.f32.mrb[0].mxu0
      %v695 = vadd.f32 %v601, %v694
      %v696 = vpop.f32.mrb[0].mxu0
      %697 = vmatprep.mubr.f32.mxu0 0.0
      %698 = vmatmul.mubr.f32.gmra.mrb[0].mxu0 %v608
      %v699 = vpop.f32.mrb[0].mxu0
      %v700 = vadd.f32 %v601, %v699
      %v701 = vpop.f32.mrb[0].mxu0
      %702 = vmatprep.mubr.f32.mxu0 0.0
      %703 = vmatmul.mubr.f32.gmra.mrb[0].mxu0 %v611
      %v704 = vpop.f32.mrb[0].mxu0
      %v705 = vadd.f32 %v601, %v704
      %v706 = vpop.f32.mrb[0].mxu0
      %707 = vmatprep.mubr.f32.mxu0 0.0
      %708 = vmatmul.mubr.f32.gmra.mrb[0].mxu0 %v614
      %v709 = vpop.f32.mrb[0].mxu0
      %v710 = vadd.f32 %v601, %v709
      %v711 = vpop.f32.mrb[0].mxu0
      %712 = vmatprep.mubr.f32.mxu0 0.0
      %713 = vmatmul.mubr.f32.gmra.mrb[0].mxu0 %v617
      %v714 = vpop.f32.mrb[0].mxu0
      %v715 = vadd.f32 %v601, %v714
      %v716 = vpop.f32.mrb[0].mxu0
      %717 = vmatprep.mubr.f32.mxu0 0.0
      %718 = vmatmul.mubr.f32.gmra.mrb[0].mxu0 %v620
      %v719 = vpop.f32.mrb[0].mxu0
      %v720 = vadd.f32 %v601, %v719
      %v721 = vpop.f32.mrb[0].mxu0
      %722 = vmatprep.mubr.f32.mxu0 0.0
      %723 = vmatmul.mubr.f32.gmra.mrb[0].mxu0 %v623
      %v724 = vpop.f32.mrb[0].mxu0
      %v725 = vadd.f32 %v601, %v724
      %v726 = vpop.f32.mrb[0].mxu0
      %727 = vmatprep.mubr.f32.mxu0 0.0
      %728 = vmatmul.mubr.f32.gmra.mrb[0].mxu0 %v626
      %v729 = vpop.f32.mrb[0].mxu0
      %v730 = vadd.f32 %v601, %v729
      %v731 = vpop.f32.mrb[0].mxu0
      %732 = vdwg.mxu0
      %s733 = scalar_lea.vmem %s0, %s436
      %v734 = vld [vmem:[%s733] sm:$0xff]
      %v735 = vld [vmem:[%s733 + $0x8] sm:$0xff]
      %s736 = scalar_lea.vmem %s1, %s436
      %v737 = vld [vmem:[%s736] sm:$0xff]
      %v738 = vld [vmem:[%s736 + $0x8] sm:$0xff]
      %v740 = vsel %vm454, %v734, 0
      %v743 = vsel %vm454, %v735, 0
      %745 = vmatprep.subr.mxu0 0.0
      %746 = vmatpush1.msra.mxu0 %v453
      %747 = vmatprep.subr.mxu0 0.0
      %748 = vmatpush1.msra.mxu0 0.0
      %749 = vmatprep.subr.mxu0 0.0
      %750 = vmatpush1.msra.mxu0 0.0
      %751 = vmatprep.subr.mxu0 0.0
      %752 = vmatpush1.msra.mxu0 0.0
      %753 = vmatprep.subr.mxu0 0.0
      %754 = vmatpush1.msra.mxu0 0.0
      %755 = vmatprep.subr.mxu0 0.0
      %756 = vmatpush1.msra.mxu0 0.0
      %757 = vmatprep.subr.mxu0 0.0
      %758 = vmatpush1.msra.mxu0 0.0
      %759 = vmatprep.subr.mxu0 0.0
      %760 = vmatpush1.msra.mxu0 0.0
      %761 = vmatprep.subr.mxu0 0.0
      %762 = vmatpush1.msra.mxu0 0.0
      %763 = vmatprep.subr.mxu0 0.0
      %764 = vmatpush1.msra.mxu0 0.0
      %765 = vmatprep.subr.mxu0 0.0
      %766 = vmatpush1.msra.mxu0 0.0
      %767 = vmatprep.subr.mxu0 0.0
      %768 = vmatpush1.msra.mxu0 0.0
      %769 = vmatprep.subr.mxu0 0.0
      %770 = vmatpush1.msra.mxu0 0.0
      %771 = vmatprep.subr.mxu0 0.0
      %772 = vmatpush1.msra.mxu0 0.0
      %773 = vmatprep.subr.mxu0 0.0
      %774 = vmatpush1.msra.mxu0 0.0
      %775 = vmatprep.subr.mxu0 0.0
      %776 = vmatpush1.msra.mxu0 0.0
      %777 = vmatprep.subr.mxu0 0.0
      %778 = vmatpush1.msra.mxu0 0.0
      %779 = vmatprep.subr.mxu0 0.0
      %780 = vmatpush1.msra.mxu0 0.0
      %781 = vmatprep.subr.mxu0 0.0
      %782 = vmatpush1.msra.mxu0 0.0
      %783 = vmatprep.subr.mxu0 0.0
      %784 = vmatpush1.msra.mxu0 0.0
      %785 = vmatprep.subr.mxu0 0.0
      %786 = vmatpush1.msra.mxu0 0.0
      %787 = vmatprep.subr.mxu0 0.0
      %788 = vmatpush1.msra.mxu0 0.0
      %789 = vmatprep.subr.mxu0 0.0
      %790 = vmatpush1.msra.mxu0 0.0
      %791 = vmatprep.subr.mxu0 0.0
      %792 = vmatpush1.msra.mxu0 0.0
      %793 = vmatprep.subr.mxu0 0.0
      %794 = vmatpush1.msra.mxu0 0.0
      %795 = vmatprep.subr.mxu0 0.0
      %796 = vmatpush1.msra.mxu0 0.0
      %797 = vmatprep.subr.mxu0 0.0
      %798 = vmatpush1.msra.mxu0 0.0
      %799 = vmatprep.subr.mxu0 0.0
      %800 = vmatpush1.msra.mxu0 0.0
      %801 = vmatprep.subr.mxu0 0.0
      %802 = vmatpush1.msra.mxu0 0.0
      %803 = vmatprep.subr.mxu0 0.0
      %804 = vmatpush1.msra.mxu0 0.0
      %805 = vmatprep.subr.mxu0 0.0
      %806 = vmatpush1.msra.mxu0 0.0
      %807 = vmatprep.subr.mxu0 0.0
      %808 = vmatpush1.msra.mxu0 0.0
      %809 = vmatprep.mubr.f32.mxu0 0.0
      %810 = vmatmul.mubr.f32.gmra.mrb[0].mxu0 %v740
      %v811 = vpop.f32.mrb[0].mxu0
      %v812 = vadd.f32 0.0, %v811
      %v813 = vpop.f32.mrb[0].mxu0
      %814 = vmatprep.mubr.f32.mxu0 0.0
      %815 = vmatmul.mubr.f32.gmra.mrb[0].mxu0 %v743
      %v816 = vpop.f32.mrb[0].mxu0
      %v817 = vadd.f32 0.0, %v816
      %v818 = vpop.f32.mrb[0].mxu0
      %819 = vdwg.mxu0
      %v820 = vmax.f32 %v812, 0.0
      %v821 = vmax.f32 %v817, 0.0
      %v824 = vcombine.high %v737, %v737
      %v826 = vunpack.c.l.s4 1966171168
      %v827 = vunpack.c.0.s8 %v826
      %v828 = vlaneseq
      %v829 = vshrl.u32 %v828, 7
      %v830 = vsub.s32 %v827, %v829
      %v831 = vrot.slane %v737, %v830
      %v833 = vunpack.c.l.s4 1966171168
      %v834 = vunpack.c.0.s8 %v833
      %v835 = vlaneseq
      %v836 = vshrl.u32 %v835, 7
      %v837 = vsub.s32 %v834, %v836
      %v838 = vrot.slane %v824, %v837
      %v839 = vcombine.high %v831, %v831
      %v840 = vcombine.high %v838, %v838
      %v842 = vunpack.c.l.s4 1966171168
      %v843 = vunpack.c.0.s8 %v842
      %v844 = vlaneseq
      %v845 = vshrl.u32 %v844, 7
      %v846 = vsub.s32 %v843, %v845
      %v847 = vrot.slane %v831, %v846
      %v849 = vunpack.c.l.s4 1966171168
      %v850 = vunpack.c.0.s8 %v849
      %v851 = vlaneseq
      %v852 = vshrl.u32 %v851, 7
      %v853 = vsub.s32 %v850, %v852
      %v854 = vrot.slane %v838, %v853
      %v856 = vunpack.c.l.s4 1966171168
      %v857 = vunpack.c.0.s8 %v856
      %v858 = vlaneseq
      %v859 = vshrl.u32 %v858, 7
      %v860 = vsub.s32 %v857, %v859
      %v861 = vrot.slane %v839, %v860
      %v863 = vunpack.c.l.s4 1966171168
      %v864 = vunpack.c.0.s8 %v863
      %v865 = vlaneseq
      %v866 = vshrl.u32 %v865, 7
      %v867 = vsub.s32 %v864, %v866
      %v868 = vrot.slane %v840, %v867
      %v869 = vcombine.high %v847, %v847
      %v870 = vcombine.high %v854, %v854
      %v871 = vcombine.high %v861, %v861
      %v872 = vcombine.high %v868, %v868
      %v873 = vcombine.high %v738, %v738
      %v875 = vunpack.c.l.s4 1966171168
      %v876 = vunpack.c.0.s8 %v875
      %v877 = vlaneseq
      %v878 = vshrl.u32 %v877, 7
      %v879 = vsub.s32 %v876, %v878
      %v880 = vrot.slane %v738, %v879
      %v882 = vunpack.c.l.s4 1966171168
      %v883 = vunpack.c.0.s8 %v882
      %v884 = vlaneseq
      %v885 = vshrl.u32 %v884, 7
      %v886 = vsub.s32 %v883, %v885
      %v887 = vrot.slane %v873, %v886
      %v888 = vcombine.high %v880, %v880
      %v889 = vcombine.high %v887, %v887
      %v891 = vunpack.c.l.s4 1966171168
      %v892 = vunpack.c.0.s8 %v891
      %v893 = vlaneseq
      %v894 = vshrl.u32 %v893, 7
      %v895 = vsub.s32 %v892, %v894
      %v896 = vrot.slane %v880, %v895
      %v898 = vunpack.c.l.s4 1966171168
      %v899 = vunpack.c.0.s8 %v898
      %v900 = vlaneseq
      %v901 = vshrl.u32 %v900, 7
      %v902 = vsub.s32 %v899, %v901
      %v903 = vrot.slane %v887, %v902
      %v905 = vunpack.c.l.s4 1966171168
      %v906 = vunpack.c.0.s8 %v905
      %v907 = vlaneseq
      %v908 = vshrl.u32 %v907, 7
      %v909 = vsub.s32 %v906, %v908
      %v910 = vrot.slane %v888, %v909
      %v912 = vunpack.c.l.s4 1966171168
      %v913 = vunpack.c.0.s8 %v912
      %v914 = vlaneseq
      %v915 = vshrl.u32 %v914, 7
      %v916 = vsub.s32 %v913, %v915
      %v917 = vrot.slane %v889, %v916
      %v918 = vcombine.high %v896, %v896
      %v919 = vcombine.high %v903, %v903
      %v920 = vcombine.high %v910, %v910
      %v921 = vcombine.high %v917, %v917
      %v922 = vlaneseq
      %v923 = vshrl.u32 %v922, 7
      %v924 = vsub.s32 0, %v923
      %v925 = vrot.slane %v847, %v924
      %v926 = vlaneseq
      %v927 = vshrl.u32 %v926, 7
      %v928 = vsub.s32 0, %v927
      %v929 = vrot.slane %v861, %v928
      %v930 = vlaneseq
      %v931 = vshrl.u32 %v930, 7
      %v932 = vsub.s32 0, %v931
      %v933 = vrot.slane %v869, %v932
      %v934 = vlaneseq
      %v935 = vshrl.u32 %v934, 7
      %v936 = vsub.s32 0, %v935
      %v937 = vrot.slane %v871, %v936
      %v938 = vlaneseq
      %v939 = vshrl.u32 %v938, 7
      %v940 = vsub.s32 0, %v939
      %v941 = vrot.slane %v854, %v940
      %v942 = vlaneseq
      %v943 = vshrl.u32 %v942, 7
      %v944 = vsub.s32 0, %v943
      %v945 = vrot.slane %v868, %v944
      %v946 = vlaneseq
      %v947 = vshrl.u32 %v946, 7
      %v948 = vsub.s32 0, %v947
      %v949 = vrot.slane %v870, %v948
      %v950 = vlaneseq
      %v951 = vshrl.u32 %v950, 7
      %v952 = vsub.s32 0, %v951
      %v953 = vrot.slane %v872, %v952
      %v954 = vlaneseq
      %v955 = vshrl.u32 %v954, 7
      %v956 = vsub.s32 0, %v955
      %v957 = vrot.slane %v896, %v956
      %v958 = vlaneseq
      %v959 = vshrl.u32 %v958, 7
      %v960 = vsub.s32 0, %v959
      %v961 = vrot.slane %v910, %v960
      %v962 = vlaneseq
      %v963 = vshrl.u32 %v962, 7
      %v964 = vsub.s32 0, %v963
      %v965 = vrot.slane %v918, %v964
      %v966 = vlaneseq
      %v967 = vshrl.u32 %v966, 7
      %v968 = vsub.s32 0, %v967
      %v969 = vrot.slane %v920, %v968
      %v970 = vlaneseq
      %v971 = vshrl.u32 %v970, 7
      %v972 = vsub.s32 0, %v971
      %v973 = vrot.slane %v903, %v972
      %v974 = vlaneseq
      %v975 = vshrl.u32 %v974, 7
      %v976 = vsub.s32 0, %v975
      %v977 = vrot.slane %v917, %v976
      %v978 = vlaneseq
      %v979 = vshrl.u32 %v978, 7
      %v980 = vsub.s32 0, %v979
      %v981 = vrot.slane %v919, %v980
      %v982 = vlaneseq
      %v983 = vshrl.u32 %v982, 7
      %v984 = vsub.s32 0, %v983
      %v985 = vrot.slane %v921, %v984
      %v1002 = vsub.f32 %v445, %v925
      %v1003 = vsub.f32 %v446, %v925
      %v1004 = vsub.f32 %v447, %v925
      %v1005 = vsub.f32 %v448, %v925
      %v1006 = vsub.f32 %v449, %v925
      %v1007 = vsub.f32 %v450, %v925
      %v1008 = vsub.f32 %v451, %v925
      %v1009 = vsub.f32 %v452, %v925
      %v1010 = vsub.f32 %v445, %v929
      %v1011 = vsub.f32 %v446, %v929
      %v1012 = vsub.f32 %v447, %v929
      %v1013 = vsub.f32 %v448, %v929
      %v1014 = vsub.f32 %v449, %v929
      %v1015 = vsub.f32 %v450, %v929
      %v1016 = vsub.f32 %v451, %v929
      %v1017 = vsub.f32 %v452, %v929
      %v1018 = vsub.f32 %v445, %v933
      %v1019 = vsub.f32 %v446, %v933
      %v1020 = vsub.f32 %v447, %v933
      %v1021 = vsub.f32 %v448, %v933
      %v1022 = vsub.f32 %v449, %v933
      %v1023 = vsub.f32 %v450, %v933
      %v1024 = vsub.f32 %v451, %v933
      %v1025 = vsub.f32 %v452, %v933
      %v1026 = vsub.f32 %v445, %v937
      %v1027 = vsub.f32 %v446, %v937
      %v1028 = vsub.f32 %v447, %v937
      %v1029 = vsub.f32 %v448, %v937
      %v1030 = vsub.f32 %v449, %v937
      %v1031 = vsub.f32 %v450, %v937
      %v1032 = vsub.f32 %v451, %v937
      %v1033 = vsub.f32 %v452, %v937
      %v1034 = vsub.f32 %v445, %v941
      %v1035 = vsub.f32 %v446, %v941
      %v1036 = vsub.f32 %v447, %v941
      %v1037 = vsub.f32 %v448, %v941
      %v1038 = vsub.f32 %v449, %v941
      %v1039 = vsub.f32 %v450, %v941
      %v1040 = vsub.f32 %v451, %v941
      %v1041 = vsub.f32 %v452, %v941
      %v1042 = vsub.f32 %v445, %v945
      %v1043 = vsub.f32 %v446, %v945
      %v1044 = vsub.f32 %v447, %v945
      %v1045 = vsub.f32 %v448, %v945
      %v1046 = vsub.f32 %v449, %v945
      %v1047 = vsub.f32 %v450, %v945
      %v1048 = vsub.f32 %v451, %v945
      %v1049 = vsub.f32 %v452, %v945
      %v1050 = vsub.f32 %v445, %v949
      %v1051 = vsub.f32 %v446, %v949
      %v1052 = vsub.f32 %v447, %v949
      %v1053 = vsub.f32 %v448, %v949
      %v1054 = vsub.f32 %v449, %v949
      %v1055 = vsub.f32 %v450, %v949
      %v1056 = vsub.f32 %v451, %v949
      %v1057 = vsub.f32 %v452, %v949
      %v1058 = vsub.f32 %v445, %v953
      %v1059 = vsub.f32 %v446, %v953
      %v1060 = vsub.f32 %v447, %v953
      %v1061 = vsub.f32 %v448, %v953
      %v1062 = vsub.f32 %v449, %v953
      %v1063 = vsub.f32 %v450, %v953
      %v1064 = vsub.f32 %v451, %v953
      %v1065 = vsub.f32 %v452, %v953
      %v1066 = vsub.f32 %v445, %v957
      %v1067 = vsub.f32 %v446, %v957
      %v1068 = vsub.f32 %v447, %v957
      %v1069 = vsub.f32 %v448, %v957
      %v1070 = vsub.f32 %v449, %v957
      %v1071 = vsub.f32 %v450, %v957
      %v1072 = vsub.f32 %v451, %v957
      %v1073 = vsub.f32 %v452, %v957
      %v1074 = vsub.f32 %v445, %v961
      %v1075 = vsub.f32 %v446, %v961
      %v1076 = vsub.f32 %v447, %v961
      %v1077 = vsub.f32 %v448, %v961
      %v1078 = vsub.f32 %v449, %v961
      %v1079 = vsub.f32 %v450, %v961
      %v1080 = vsub.f32 %v451, %v961
      %v1081 = vsub.f32 %v452, %v961
      %v1082 = vsub.f32 %v445, %v965
      %v1083 = vsub.f32 %v446, %v965
      %v1084 = vsub.f32 %v447, %v965
      %v1085 = vsub.f32 %v448, %v965
      %v1086 = vsub.f32 %v449, %v965
      %v1087 = vsub.f32 %v450, %v965
      %v1088 = vsub.f32 %v451, %v965
      %v1089 = vsub.f32 %v452, %v965
      %v1090 = vsub.f32 %v445, %v969
      %v1091 = vsub.f32 %v446, %v969
      %v1092 = vsub.f32 %v447, %v969
      %v1093 = vsub.f32 %v448, %v969
      %v1094 = vsub.f32 %v449, %v969
      %v1095 = vsub.f32 %v450, %v969
      %v1096 = vsub.f32 %v451, %v969
      %v1097 = vsub.f32 %v452, %v969
      %v1098 = vsub.f32 %v445, %v973
      %v1099 = vsub.f32 %v446, %v973
      %v1100 = vsub.f32 %v447, %v973
      %v1101 = vsub.f32 %v448, %v973
      %v1102 = vsub.f32 %v449, %v973
      %v1103 = vsub.f32 %v450, %v973
      %v1104 = vsub.f32 %v451, %v973
      %v1105 = vsub.f32 %v452, %v973
      %v1106 = vsub.f32 %v445, %v977
      %v1107 = vsub.f32 %v446, %v977
      %v1108 = vsub.f32 %v447, %v977
      %v1109 = vsub.f32 %v448, %v977
      %v1110 = vsub.f32 %v449, %v977
      %v1111 = vsub.f32 %v450, %v977
      %v1112 = vsub.f32 %v451, %v977
      %v1113 = vsub.f32 %v452, %v977
      %v1114 = vsub.f32 %v445, %v981
      %v1115 = vsub.f32 %v446, %v981
      %v1116 = vsub.f32 %v447, %v981
      %v1117 = vsub.f32 %v448, %v981
      %v1118 = vsub.f32 %v449, %v981
      %v1119 = vsub.f32 %v450, %v981
      %v1120 = vsub.f32 %v451, %v981
      %v1121 = vsub.f32 %v452, %v981
      %v1122 = vsub.f32 %v445, %v985
      %v1123 = vsub.f32 %v446, %v985
      %v1124 = vsub.f32 %v447, %v985
      %v1125 = vsub.f32 %v448, %v985
      %v1126 = vsub.f32 %v449, %v985
      %v1127 = vsub.f32 %v450, %v985
      %v1128 = vsub.f32 %v451, %v985
      %v1129 = vsub.f32 %v452, %v985
      %v1130 = vmul.f32 %v1002, %v1002
      %v1131 = vmul.f32 %v1003, %v1003
      %v1132 = vmul.f32 %v1004, %v1004
      %v1133 = vmul.f32 %v1005, %v1005
      %v1134 = vmul.f32 %v1006, %v1006
      %v1135 = vmul.f32 %v1007, %v1007
      %v1136 = vmul.f32 %v1008, %v1008
      %v1137 = vmul.f32 %v1009, %v1009
      %v1138 = vmul.f32 %v1010, %v1010
      %v1139 = vmul.f32 %v1011, %v1011
      %v1140 = vmul.f32 %v1012, %v1012
      %v1141 = vmul.f32 %v1013, %v1013
      %v1142 = vmul.f32 %v1014, %v1014
      %v1143 = vmul.f32 %v1015, %v1015
      %v1144 = vmul.f32 %v1016, %v1016
      %v1145 = vmul.f32 %v1017, %v1017
      %v1146 = vmul.f32 %v1018, %v1018
      %v1147 = vmul.f32 %v1019, %v1019
      %v1148 = vmul.f32 %v1020, %v1020
      %v1149 = vmul.f32 %v1021, %v1021
      %v1150 = vmul.f32 %v1022, %v1022
      %v1151 = vmul.f32 %v1023, %v1023
      %v1152 = vmul.f32 %v1024, %v1024
      %v1153 = vmul.f32 %v1025, %v1025
      %v1154 = vmul.f32 %v1026, %v1026
      %v1155 = vmul.f32 %v1027, %v1027
      %v1156 = vmul.f32 %v1028, %v1028
      %v1157 = vmul.f32 %v1029, %v1029
      %v1158 = vmul.f32 %v1030, %v1030
      %v1159 = vmul.f32 %v1031, %v1031
      %v1160 = vmul.f32 %v1032, %v1032
      %v1161 = vmul.f32 %v1033, %v1033
      %v1162 = vmul.f32 %v1034, %v1034
      %v1163 = vmul.f32 %v1035, %v1035
      %v1164 = vmul.f32 %v1036, %v1036
      %v1165 = vmul.f32 %v1037, %v1037
      %v1166 = vmul.f32 %v1038, %v1038
      %v1167 = vmul.f32 %v1039, %v1039
      %v1168 = vmul.f32 %v1040, %v1040
      %v1169 = vmul.f32 %v1041, %v1041
      %v1170 = vmul.f32 %v1042, %v1042
      %v1171 = vmul.f32 %v1043, %v1043
      %v1172 = vmul.f32 %v1044, %v1044
      %v1173 = vmul.f32 %v1045, %v1045
      %v1174 = vmul.f32 %v1046, %v1046
      %v1175 = vmul.f32 %v1047, %v1047
      %v1176 = vmul.f32 %v1048, %v1048
      %v1177 = vmul.f32 %v1049, %v1049
      %v1178 = vmul.f32 %v1050, %v1050
      %v1179 = vmul.f32 %v1051, %v1051
      %v1180 = vmul.f32 %v1052, %v1052
      %v1181 = vmul.f32 %v1053, %v1053
      %v1182 = vmul.f32 %v1054, %v1054
      %v1183 = vmul.f32 %v1055, %v1055
      %v1184 = vmul.f32 %v1056, %v1056
      %v1185 = vmul.f32 %v1057, %v1057
      %v1186 = vmul.f32 %v1058, %v1058
      %v1187 = vmul.f32 %v1059, %v1059
      %v1188 = vmul.f32 %v1060, %v1060
      %v1189 = vmul.f32 %v1061, %v1061
      %v1190 = vmul.f32 %v1062, %v1062
      %v1191 = vmul.f32 %v1063, %v1063
      %v1192 = vmul.f32 %v1064, %v1064
      %v1193 = vmul.f32 %v1065, %v1065
      %v1194 = vmul.f32 %v1066, %v1066
      %v1195 = vmul.f32 %v1067, %v1067
      %v1196 = vmul.f32 %v1068, %v1068
      %v1197 = vmul.f32 %v1069, %v1069
      %v1198 = vmul.f32 %v1070, %v1070
      %v1199 = vmul.f32 %v1071, %v1071
      %v1200 = vmul.f32 %v1072, %v1072
      %v1201 = vmul.f32 %v1073, %v1073
      %v1202 = vmul.f32 %v1074, %v1074
      %v1203 = vmul.f32 %v1075, %v1075
      %v1204 = vmul.f32 %v1076, %v1076
      %v1205 = vmul.f32 %v1077, %v1077
      %v1206 = vmul.f32 %v1078, %v1078
      %v1207 = vmul.f32 %v1079, %v1079
      %v1208 = vmul.f32 %v1080, %v1080
      %v1209 = vmul.f32 %v1081, %v1081
      %v1210 = vmul.f32 %v1082, %v1082
      %v1211 = vmul.f32 %v1083, %v1083
      %v1212 = vmul.f32 %v1084, %v1084
      %v1213 = vmul.f32 %v1085, %v1085
      %v1214 = vmul.f32 %v1086, %v1086
      %v1215 = vmul.f32 %v1087, %v1087
      %v1216 = vmul.f32 %v1088, %v1088
      %v1217 = vmul.f32 %v1089, %v1089
      %v1218 = vmul.f32 %v1090, %v1090
      %v1219 = vmul.f32 %v1091, %v1091
      %v1220 = vmul.f32 %v1092, %v1092
      %v1221 = vmul.f32 %v1093, %v1093
      %v1222 = vmul.f32 %v1094, %v1094
      %v1223 = vmul.f32 %v1095, %v1095
      %v1224 = vmul.f32 %v1096, %v1096
      %v1225 = vmul.f32 %v1097, %v1097
      %v1226 = vmul.f32 %v1098, %v1098
      %v1227 = vmul.f32 %v1099, %v1099
      %v1228 = vmul.f32 %v1100, %v1100
      %v1229 = vmul.f32 %v1101, %v1101
      %v1230 = vmul.f32 %v1102, %v1102
      %v1231 = vmul.f32 %v1103, %v1103
      %v1232 = vmul.f32 %v1104, %v1104
      %v1233 = vmul.f32 %v1105, %v1105
      %v1234 = vmul.f32 %v1106, %v1106
      %v1235 = vmul.f32 %v1107, %v1107
      %v1236 = vmul.f32 %v1108, %v1108
      %v1237 = vmul.f32 %v1109, %v1109
      %v1238 = vmul.f32 %v1110, %v1110
      %v1239 = vmul.f32 %v1111, %v1111
      %v1240 = vmul.f32 %v1112, %v1112
      %v1241 = vmul.f32 %v1113, %v1113
      %v1242 = vmul.f32 %v1114, %v1114
      %v1243 = vmul.f32 %v1115, %v1115
      %v1244 = vmul.f32 %v1116, %v1116
      %v1245 = vmul.f32 %v1117, %v1117
      %v1246 = vmul.f32 %v1118, %v1118
      %v1247 = vmul.f32 %v1119, %v1119
      %v1248 = vmul.f32 %v1120, %v1120
      %v1249 = vmul.f32 %v1121, %v1121
      %v1250 = vmul.f32 %v1122, %v1122
      %v1251 = vmul.f32 %v1123, %v1123
      %v1252 = vmul.f32 %v1124, %v1124
      %v1253 = vmul.f32 %v1125, %v1125
      %v1254 = vmul.f32 %v1126, %v1126
      %v1255 = vmul.f32 %v1127, %v1127
      %v1256 = vmul.f32 %v1128, %v1128
      %v1257 = vmul.f32 %v1129, %v1129
      %v1258 = vsel %vm454, %v1130, 0.0
      %1259 = vadd.xlane.f32.xlu0 %v1258
      %v1260 = vpop.xlane.xlu0 %1259
      %v1261 = vsel %vm454, %v1131, 0.0
      %1262 = vadd.xlane.f32.xlu0 %v1261
      %v1263 = vpop.xlane.xlu0 %1262
      %v1264 = vsel %vm454, %v1132, 0.0
      %1265 = vadd.xlane.f32.xlu0 %v1264
      %v1266 = vpop.xlane.xlu0 %1265
      %v1267 = vsel %vm454, %v1133, 0.0
      %1268 = vadd.xlane.f32.xlu0 %v1267
      %v1269 = vpop.xlane.xlu0 %1268
      %v1270 = vsel %vm454, %v1134, 0.0
      %1271 = vadd.xlane.f32.xlu0 %v1270
      %v1272 = vpop.xlane.xlu0 %1271
      %v1273 = vsel %vm454, %v1135, 0.0
      %1274 = vadd.xlane.f32.xlu0 %v1273
      %v1275 = vpop.xlane.xlu0 %1274
      %v1276 = vsel %vm454, %v1136, 0.0
      %1277 = vadd.xlane.f32.xlu0 %v1276
      %v1278 = vpop.xlane.xlu0 %1277
      %v1279 = vsel %vm454, %v1137, 0.0
      %1280 = vadd.xlane.f32.xlu0 %v1279
      %v1281 = vpop.xlane.xlu0 %1280
      %v1282 = vsel %vm454, %v1138, 0.0
      %1283 = vadd.xlane.f32.xlu0 %v1282
      %v1284 = vpop.xlane.xlu0 %1283
      %v1285 = vsel %vm454, %v1139, 0.0
      %1286 = vadd.xlane.f32.xlu0 %v1285
      %v1287 = vpop.xlane.xlu0 %1286
      %v1288 = vsel %vm454, %v1140, 0.0
      %1289 = vadd.xlane.f32.xlu0 %v1288
      %v1290 = vpop.xlane.xlu0 %1289
      %v1291 = vsel %vm454, %v1141, 0.0
      %1292 = vadd.xlane.f32.xlu0 %v1291
      %v1293 = vpop.xlane.xlu0 %1292
      %v1294 = vsel %vm454, %v1142, 0.0
      %1295 = vadd.xlane.f32.xlu0 %v1294
      %v1296 = vpop.xlane.xlu0 %1295
      %v1297 = vsel %vm454, %v1143, 0.0
      %1298 = vadd.xlane.f32.xlu0 %v1297
      %v1299 = vpop.xlane.xlu0 %1298
      %v1300 = vsel %vm454, %v1144, 0.0
      %1301 = vadd.xlane.f32.xlu0 %v1300
      %v1302 = vpop.xlane.xlu0 %1301
      %v1303 = vsel %vm454, %v1145, 0.0
      %1304 = vadd.xlane.f32.xlu0 %v1303
      %v1305 = vpop.xlane.xlu0 %1304
      %v1306 = vsel %vm454, %v1146, 0.0
      %1307 = vadd.xlane.f32.xlu0 %v1306
      %v1308 = vpop.xlane.xlu0 %1307
      %v1309 = vsel %vm454, %v1147, 0.0
      %1310 = vadd.xlane.f32.xlu0 %v1309
      %v1311 = vpop.xlane.xlu0 %1310
      %v1312 = vsel %vm454, %v1148, 0.0
      %1313 = vadd.xlane.f32.xlu0 %v1312
      %v1314 = vpop.xlane.xlu0 %1313
      %v1315 = vsel %vm454, %v1149, 0.0
      %1316 = vadd.xlane.f32.xlu0 %v1315
      %v1317 = vpop.xlane.xlu0 %1316
      %v1318 = vsel %vm454, %v1150, 0.0
      %1319 = vadd.xlane.f32.xlu0 %v1318
      %v1320 = vpop.xlane.xlu0 %1319
      %v1321 = vsel %vm454, %v1151, 0.0
      %1322 = vadd.xlane.f32.xlu0 %v1321
      %v1323 = vpop.xlane.xlu0 %1322
      %v1324 = vsel %vm454, %v1152, 0.0
      %1325 = vadd.xlane.f32.xlu0 %v1324
      %v1326 = vpop.xlane.xlu0 %1325
      %v1327 = vsel %vm454, %v1153, 0.0
      %1328 = vadd.xlane.f32.xlu0 %v1327
      %v1329 = vpop.xlane.xlu0 %1328
      %v1330 = vsel %vm454, %v1154, 0.0
      %1331 = vadd.xlane.f32.xlu0 %v1330
      %v1332 = vpop.xlane.xlu0 %1331
      %v1333 = vsel %vm454, %v1155, 0.0
      %1334 = vadd.xlane.f32.xlu0 %v1333
      %v1335 = vpop.xlane.xlu0 %1334
      %v1336 = vsel %vm454, %v1156, 0.0
      %1337 = vadd.xlane.f32.xlu0 %v1336
      %v1338 = vpop.xlane.xlu0 %1337
      %v1339 = vsel %vm454, %v1157, 0.0
      %1340 = vadd.xlane.f32.xlu0 %v1339
      %v1341 = vpop.xlane.xlu0 %1340
      %v1342 = vsel %vm454, %v1158, 0.0
      %1343 = vadd.xlane.f32.xlu0 %v1342
      %v1344 = vpop.xlane.xlu0 %1343
      %v1345 = vsel %vm454, %v1159, 0.0
      %1346 = vadd.xlane.f32.xlu0 %v1345
      %v1347 = vpop.xlane.xlu0 %1346
      %v1348 = vsel %vm454, %v1160, 0.0
      %1349 = vadd.xlane.f32.xlu0 %v1348
      %v1350 = vpop.xlane.xlu0 %1349
      %v1351 = vsel %vm454, %v1161, 0.0
      %1352 = vadd.xlane.f32.xlu0 %v1351
      %v1353 = vpop.xlane.xlu0 %1352
      %v1354 = vsel %vm454, %v1162, 0.0
      %1355 = vadd.xlane.f32.xlu0 %v1354
      %v1356 = vpop.xlane.xlu0 %1355
      %v1357 = vsel %vm454, %v1163, 0.0
      %1358 = vadd.xlane.f32.xlu0 %v1357
      %v1359 = vpop.xlane.xlu0 %1358
      %v1360 = vsel %vm454, %v1164, 0.0
      %1361 = vadd.xlane.f32.xlu0 %v1360
      %v1362 = vpop.xlane.xlu0 %1361
      %v1363 = vsel %vm454, %v1165, 0.0
      %1364 = vadd.xlane.f32.xlu0 %v1363
      %v1365 = vpop.xlane.xlu0 %1364
      %v1366 = vsel %vm454, %v1166, 0.0
      %1367 = vadd.xlane.f32.xlu0 %v1366
      %v1368 = vpop.xlane.xlu0 %1367
      %v1369 = vsel %vm454, %v1167, 0.0
      %1370 = vadd.xlane.f32.xlu0 %v1369
      %v1371 = vpop.xlane.xlu0 %1370
      %v1372 = vsel %vm454, %v1168, 0.0
      %1373 = vadd.xlane.f32.xlu0 %v1372
      %v1374 = vpop.xlane.xlu0 %1373
      %v1375 = vsel %vm454, %v1169, 0.0
      %1376 = vadd.xlane.f32.xlu0 %v1375
      %v1377 = vpop.xlane.xlu0 %1376
      %v1378 = vsel %vm454, %v1170, 0.0
      %1379 = vadd.xlane.f32.xlu0 %v1378
      %v1380 = vpop.xlane.xlu0 %1379
      %v1381 = vsel %vm454, %v1171, 0.0
      %1382 = vadd.xlane.f32.xlu0 %v1381
      %v1383 = vpop.xlane.xlu0 %1382
      %v1384 = vsel %vm454, %v1172, 0.0
      %1385 = vadd.xlane.f32.xlu0 %v1384
      %v1386 = vpop.xlane.xlu0 %1385
      %v1387 = vsel %vm454, %v1173, 0.0
      %1388 = vadd.xlane.f32.xlu0 %v1387
      %v1389 = vpop.xlane.xlu0 %1388
      %v1390 = vsel %vm454, %v1174, 0.0
      %1391 = vadd.xlane.f32.xlu0 %v1390
      %v1392 = vpop.xlane.xlu0 %1391
      %v1393 = vsel %vm454, %v1175, 0.0
      %1394 = vadd.xlane.f32.xlu0 %v1393
      %v1395 = vpop.xlane.xlu0 %1394
      %v1396 = vsel %vm454, %v1176, 0.0
      %1397 = vadd.xlane.f32.xlu0 %v1396
      %v1398 = vpop.xlane.xlu0 %1397
      %v1399 = vsel %vm454, %v1177, 0.0
      %1400 = vadd.xlane.f32.xlu0 %v1399
      %v1401 = vpop.xlane.xlu0 %1400
      %v1402 = vsel %vm454, %v1178, 0.0
      %1403 = vadd.xlane.f32.xlu0 %v1402
      %v1404 = vpop.xlane.xlu0 %1403
      %v1405 = vsel %vm454, %v1179, 0.0
      %1406 = vadd.xlane.f32.xlu0 %v1405
      %v1407 = vpop.xlane.xlu0 %1406
      %v1408 = vsel %vm454, %v1180, 0.0
      %1409 = vadd.xlane.f32.xlu0 %v1408
      %v1410 = vpop.xlane.xlu0 %1409
      %v1411 = vsel %vm454, %v1181, 0.0
      %1412 = vadd.xlane.f32.xlu0 %v1411
      %v1413 = vpop.xlane.xlu0 %1412
      %v1414 = vsel %vm454, %v1182, 0.0
      %1415 = vadd.xlane.f32.xlu0 %v1414
      %v1416 = vpop.xlane.xlu0 %1415
      %v1417 = vsel %vm454, %v1183, 0.0
      %1418 = vadd.xlane.f32.xlu0 %v1417
      %v1419 = vpop.xlane.xlu0 %1418
      %v1420 = vsel %vm454, %v1184, 0.0
      %1421 = vadd.xlane.f32.xlu0 %v1420
      %v1422 = vpop.xlane.xlu0 %1421
      %v1423 = vsel %vm454, %v1185, 0.0
      %1424 = vadd.xlane.f32.xlu0 %v1423
      %v1425 = vpop.xlane.xlu0 %1424
      %v1426 = vsel %vm454, %v1186, 0.0
      %1427 = vadd.xlane.f32.xlu0 %v1426
      %v1428 = vpop.xlane.xlu0 %1427
      %v1429 = vsel %vm454, %v1187, 0.0
      %1430 = vadd.xlane.f32.xlu0 %v1429
      %v1431 = vpop.xlane.xlu0 %1430
      %v1432 = vsel %vm454, %v1188, 0.0
      %1433 = vadd.xlane.f32.xlu0 %v1432
      %v1434 = vpop.xlane.xlu0 %1433
      %v1435 = vsel %vm454, %v1189, 0.0
      %1436 = vadd.xlane.f32.xlu0 %v1435
      %v1437 = vpop.xlane.xlu0 %1436
      %v1438 = vsel %vm454, %v1190, 0.0
      %1439 = vadd.xlane.f32.xlu0 %v1438
      %v1440 = vpop.xlane.xlu0 %1439
      %v1441 = vsel %vm454, %v1191, 0.0
      %1442 = vadd.xlane.f32.xlu0 %v1441
      %v1443 = vpop.xlane.xlu0 %1442
      %v1444 = vsel %vm454, %v1192, 0.0
      %1445 = vadd.xlane.f32.xlu0 %v1444
      %v1446 = vpop.xlane.xlu0 %1445
      %v1447 = vsel %vm454, %v1193, 0.0
      %1448 = vadd.xlane.f32.xlu0 %v1447
      %v1449 = vpop.xlane.xlu0 %1448
      %v1450 = vsel %vm454, %v1194, 0.0
      %1451 = vadd.xlane.f32.xlu0 %v1450
      %v1452 = vpop.xlane.xlu0 %1451
      %v1453 = vsel %vm454, %v1195, 0.0
      %1454 = vadd.xlane.f32.xlu0 %v1453
      %v1455 = vpop.xlane.xlu0 %1454
      %v1456 = vsel %vm454, %v1196, 0.0
      %1457 = vadd.xlane.f32.xlu0 %v1456
      %v1458 = vpop.xlane.xlu0 %1457
      %v1459 = vsel %vm454, %v1197, 0.0
      %1460 = vadd.xlane.f32.xlu0 %v1459
      %v1461 = vpop.xlane.xlu0 %1460
      %v1462 = vsel %vm454, %v1198, 0.0
      %1463 = vadd.xlane.f32.xlu0 %v1462
      %v1464 = vpop.xlane.xlu0 %1463
      %v1465 = vsel %vm454, %v1199, 0.0
      %1466 = vadd.xlane.f32.xlu0 %v1465
      %v1467 = vpop.xlane.xlu0 %1466
      %v1468 = vsel %vm454, %v1200, 0.0
      %1469 = vadd.xlane.f32.xlu0 %v1468
      %v1470 = vpop.xlane.xlu0 %1469
      %v1471 = vsel %vm454, %v1201, 0.0
      %1472 = vadd.xlane.f32.xlu0 %v1471
      %v1473 = vpop.xlane.xlu0 %1472
      %v1474 = vsel %vm454, %v1202, 0.0
      %1475 = vadd.xlane.f32.xlu0 %v1474
      %v1476 = vpop.xlane.xlu0 %1475
      %v1477 = vsel %vm454, %v1203, 0.0
      %1478 = vadd.xlane.f32.xlu0 %v1477
      %v1479 = vpop.xlane.xlu0 %1478
      %v1480 = vsel %vm454, %v1204, 0.0
      %1481 = vadd.xlane.f32.xlu0 %v1480
      %v1482 = vpop.xlane.xlu0 %1481
      %v1483 = vsel %vm454, %v1205, 0.0
      %1484 = vadd.xlane.f32.xlu0 %v1483
      %v1485 = vpop.xlane.xlu0 %1484
      %v1486 = vsel %vm454, %v1206, 0.0
      %1487 = vadd.xlane.f32.xlu0 %v1486
      %v1488 = vpop.xlane.xlu0 %1487
      %v1489 = vsel %vm454, %v1207, 0.0
      %1490 = vadd.xlane.f32.xlu0 %v1489
      %v1491 = vpop.xlane.xlu0 %1490
      %v1492 = vsel %vm454, %v1208, 0.0
      %1493 = vadd.xlane.f32.xlu0 %v1492
      %v1494 = vpop.xlane.xlu0 %1493
      %v1495 = vsel %vm454, %v1209, 0.0
      %1496 = vadd.xlane.f32.xlu0 %v1495
      %v1497 = vpop.xlane.xlu0 %1496
      %v1498 = vsel %vm454, %v1210, 0.0
      %1499 = vadd.xlane.f32.xlu0 %v1498
      %v1500 = vpop.xlane.xlu0 %1499
      %v1501 = vsel %vm454, %v1211, 0.0
      %1502 = vadd.xlane.f32.xlu0 %v1501
      %v1503 = vpop.xlane.xlu0 %1502
      %v1504 = vsel %vm454, %v1212, 0.0
      %1505 = vadd.xlane.f32.xlu0 %v1504
      %v1506 = vpop.xlane.xlu0 %1505
      %v1507 = vsel %vm454, %v1213, 0.0
      %1508 = vadd.xlane.f32.xlu0 %v1507
      %v1509 = vpop.xlane.xlu0 %1508
      %v1510 = vsel %vm454, %v1214, 0.0
      %1511 = vadd.xlane.f32.xlu0 %v1510
      %v1512 = vpop.xlane.xlu0 %1511
      %v1513 = vsel %vm454, %v1215, 0.0
      %1514 = vadd.xlane.f32.xlu0 %v1513
      %v1515 = vpop.xlane.xlu0 %1514
      %v1516 = vsel %vm454, %v1216, 0.0
      %1517 = vadd.xlane.f32.xlu0 %v1516
      %v1518 = vpop.xlane.xlu0 %1517
      %v1519 = vsel %vm454, %v1217, 0.0
      %1520 = vadd.xlane.f32.xlu0 %v1519
      %v1521 = vpop.xlane.xlu0 %1520
      %v1522 = vsel %vm454, %v1218, 0.0
      %1523 = vadd.xlane.f32.xlu0 %v1522
      %v1524 = vpop.xlane.xlu0 %1523
      %v1525 = vsel %vm454, %v1219, 0.0
      %1526 = vadd.xlane.f32.xlu0 %v1525
      %v1527 = vpop.xlane.xlu0 %1526
      %v1528 = vsel %vm454, %v1220, 0.0
      %1529 = vadd.xlane.f32.xlu0 %v1528
      %v1530 = vpop.xlane.xlu0 %1529
      %v1531 = vsel %vm454, %v1221, 0.0
      %1532 = vadd.xlane.f32.xlu0 %v1531
      %v1533 = vpop.xlane.xlu0 %1532
      %v1534 = vsel %vm454, %v1222, 0.0
      %1535 = vadd.xlane.f32.xlu0 %v1534
      %v1536 = vpop.xlane.xlu0 %1535
      %v1537 = vsel %vm454, %v1223, 0.0
      %1538 = vadd.xlane.f32.xlu0 %v1537
      %v1539 = vpop.xlane.xlu0 %1538
      %v1540 = vsel %vm454, %v1224, 0.0
      %1541 = vadd.xlane.f32.xlu0 %v1540
      %v1542 = vpop.xlane.xlu0 %1541
      %v1543 = vsel %vm454, %v1225, 0.0
      %1544 = vadd.xlane.f32.xlu0 %v1543
      %v1545 = vpop.xlane.xlu0 %1544
      %v1546 = vsel %vm454, %v1226, 0.0
      %1547 = vadd.xlane.f32.xlu0 %v1546
      %v1548 = vpop.xlane.xlu0 %1547
      %v1549 = vsel %vm454, %v1227, 0.0
      %1550 = vadd.xlane.f32.xlu0 %v1549
      %v1551 = vpop.xlane.xlu0 %1550
      %v1552 = vsel %vm454, %v1228, 0.0
      %1553 = vadd.xlane.f32.xlu0 %v1552
      %v1554 = vpop.xlane.xlu0 %1553
      %v1555 = vsel %vm454, %v1229, 0.0
      %1556 = vadd.xlane.f32.xlu0 %v1555
      %v1557 = vpop.xlane.xlu0 %1556
      %v1558 = vsel %vm454, %v1230, 0.0
      %1559 = vadd.xlane.f32.xlu0 %v1558
      %v1560 = vpop.xlane.xlu0 %1559
      %v1561 = vsel %vm454, %v1231, 0.0
      %1562 = vadd.xlane.f32.xlu0 %v1561
      %v1563 = vpop.xlane.xlu0 %1562
      %v1564 = vsel %vm454, %v1232, 0.0
      %1565 = vadd.xlane.f32.xlu0 %v1564
      %v1566 = vpop.xlane.xlu0 %1565
      %v1567 = vsel %vm454, %v1233, 0.0
      %1568 = vadd.xlane.f32.xlu0 %v1567
      %v1569 = vpop.xlane.xlu0 %1568
      %v1570 = vsel %vm454, %v1234, 0.0
      %1571 = vadd.xlane.f32.xlu0 %v1570
      %v1572 = vpop.xlane.xlu0 %1571
      %v1573 = vsel %vm454, %v1235, 0.0
      %1574 = vadd.xlane.f32.xlu0 %v1573
      %v1575 = vpop.xlane.xlu0 %1574
      %v1576 = vsel %vm454, %v1236, 0.0
      %1577 = vadd.xlane.f32.xlu0 %v1576
      %v1578 = vpop.xlane.xlu0 %1577
      %v1579 = vsel %vm454, %v1237, 0.0
      %1580 = vadd.xlane.f32.xlu0 %v1579
      %v1581 = vpop.xlane.xlu0 %1580
      %v1582 = vsel %vm454, %v1238, 0.0
      %1583 = vadd.xlane.f32.xlu0 %v1582
      %v1584 = vpop.xlane.xlu0 %1583
      %v1585 = vsel %vm454, %v1239, 0.0
      %1586 = vadd.xlane.f32.xlu0 %v1585
      %v1587 = vpop.xlane.xlu0 %1586
      %v1588 = vsel %vm454, %v1240, 0.0
      %1589 = vadd.xlane.f32.xlu0 %v1588
      %v1590 = vpop.xlane.xlu0 %1589
      %v1591 = vsel %vm454, %v1241, 0.0
      %1592 = vadd.xlane.f32.xlu0 %v1591
      %v1593 = vpop.xlane.xlu0 %1592
      %v1594 = vsel %vm454, %v1242, 0.0
      %1595 = vadd.xlane.f32.xlu0 %v1594
      %v1596 = vpop.xlane.xlu0 %1595
      %v1597 = vsel %vm454, %v1243, 0.0
      %1598 = vadd.xlane.f32.xlu0 %v1597
      %v1599 = vpop.xlane.xlu0 %1598
      %v1600 = vsel %vm454, %v1244, 0.0
      %1601 = vadd.xlane.f32.xlu0 %v1600
      %v1602 = vpop.xlane.xlu0 %1601
      %v1603 = vsel %vm454, %v1245, 0.0
      %1604 = vadd.xlane.f32.xlu0 %v1603
      %v1605 = vpop.xlane.xlu0 %1604
      %v1606 = vsel %vm454, %v1246, 0.0
      %1607 = vadd.xlane.f32.xlu0 %v1606
      %v1608 = vpop.xlane.xlu0 %1607
      %v1609 = vsel %vm454, %v1247, 0.0
      %1610 = vadd.xlane.f32.xlu0 %v1609
      %v1611 = vpop.xlane.xlu0 %1610
      %v1612 = vsel %vm454, %v1248, 0.0
      %1613 = vadd.xlane.f32.xlu0 %v1612
      %v1614 = vpop.xlane.xlu0 %1613
      %v1615 = vsel %vm454, %v1249, 0.0
      %1616 = vadd.xlane.f32.xlu0 %v1615
      %v1617 = vpop.xlane.xlu0 %1616
      %v1618 = vsel %vm454, %v1250, 0.0
      %1619 = vadd.xlane.f32.xlu0 %v1618
      %v1620 = vpop.xlane.xlu0 %1619
      %v1621 = vsel %vm454, %v1251, 0.0
      %1622 = vadd.xlane.f32.xlu0 %v1621
      %v1623 = vpop.xlane.xlu0 %1622
      %v1624 = vsel %vm454, %v1252, 0.0
      %1625 = vadd.xlane.f32.xlu0 %v1624
      %v1626 = vpop.xlane.xlu0 %1625
      %v1627 = vsel %vm454, %v1253, 0.0
      %1628 = vadd.xlane.f32.xlu0 %v1627
      %v1629 = vpop.xlane.xlu0 %1628
      %v1630 = vsel %vm454, %v1254, 0.0
      %1631 = vadd.xlane.f32.xlu0 %v1630
      %v1632 = vpop.xlane.xlu0 %1631
      %v1633 = vsel %vm454, %v1255, 0.0
      %1634 = vadd.xlane.f32.xlu0 %v1633
      %v1635 = vpop.xlane.xlu0 %1634
      %v1636 = vsel %vm454, %v1256, 0.0
      %1637 = vadd.xlane.f32.xlu0 %v1636
      %v1638 = vpop.xlane.xlu0 %1637
      %v1639 = vsel %vm454, %v1257, 0.0
      %1640 = vadd.xlane.f32.xlu0 %v1639
      %v1641 = vpop.xlane.xlu0 %1640
      %v1642 = vlaneseq
      %v1643 = vand.u32 %v1642, 127
      %v1644 = vlaneseq
      %v1645 = vshrl.u32 %v1644, 7
      %v1646 = vadd.s32 %v1645, 8
      %v1647 = vstv %s436
      %v1648 = vadd.s32 %v1645, %v1647
      %v1649 = vadd.s32 %v1646, %v1647
      %vm1650 = vcmp.lt.f32.partialorder %v1260, 0.25
      %vm1651 = vcmp.lt.f32.partialorder %v1263, 0.25
      %vm1652 = vcmp.lt.f32.partialorder %v1266, 0.25
      %vm1653 = vcmp.lt.f32.partialorder %v1269, 0.25
      %vm1654 = vcmp.lt.f32.partialorder %v1272, 0.25
      %vm1655 = vcmp.lt.f32.partialorder %v1275, 0.25
      %vm1656 = vcmp.lt.f32.partialorder %v1278, 0.25
      %vm1657 = vcmp.lt.f32.partialorder %v1281, 0.25
      %vm1658 = vcmp.lt.f32.partialorder %v1284, 0.25
      %vm1659 = vcmp.lt.f32.partialorder %v1287, 0.25
      %vm1660 = vcmp.lt.f32.partialorder %v1290, 0.25
      %vm1661 = vcmp.lt.f32.partialorder %v1293, 0.25
      %vm1662 = vcmp.lt.f32.partialorder %v1296, 0.25
      %vm1663 = vcmp.lt.f32.partialorder %v1299, 0.25
      %vm1664 = vcmp.lt.f32.partialorder %v1302, 0.25
      %vm1665 = vcmp.lt.f32.partialorder %v1305, 0.25
      %vm1666 = vcmp.lt.f32.partialorder %v1308, 0.25
      %vm1667 = vcmp.lt.f32.partialorder %v1311, 0.25
      %vm1668 = vcmp.lt.f32.partialorder %v1314, 0.25
      %vm1669 = vcmp.lt.f32.partialorder %v1317, 0.25
      %vm1670 = vcmp.lt.f32.partialorder %v1320, 0.25
      %vm1671 = vcmp.lt.f32.partialorder %v1323, 0.25
      %vm1672 = vcmp.lt.f32.partialorder %v1326, 0.25
      %vm1673 = vcmp.lt.f32.partialorder %v1329, 0.25
      %vm1674 = vcmp.lt.f32.partialorder %v1332, 0.25
      %vm1675 = vcmp.lt.f32.partialorder %v1335, 0.25
      %vm1676 = vcmp.lt.f32.partialorder %v1338, 0.25
      %vm1677 = vcmp.lt.f32.partialorder %v1341, 0.25
      %vm1678 = vcmp.lt.f32.partialorder %v1344, 0.25
      %vm1679 = vcmp.lt.f32.partialorder %v1347, 0.25
      %vm1680 = vcmp.lt.f32.partialorder %v1350, 0.25
      %vm1681 = vcmp.lt.f32.partialorder %v1353, 0.25
      %vm1682 = vcmp.lt.f32.partialorder %v1356, 0.25
      %vm1683 = vcmp.lt.f32.partialorder %v1359, 0.25
      %vm1684 = vcmp.lt.f32.partialorder %v1362, 0.25
      %vm1685 = vcmp.lt.f32.partialorder %v1365, 0.25
      %vm1686 = vcmp.lt.f32.partialorder %v1368, 0.25
      %vm1687 = vcmp.lt.f32.partialorder %v1371, 0.25
      %vm1688 = vcmp.lt.f32.partialorder %v1374, 0.25
      %vm1689 = vcmp.lt.f32.partialorder %v1377, 0.25
      %vm1690 = vcmp.lt.f32.partialorder %v1380, 0.25
      %vm1691 = vcmp.lt.f32.partialorder %v1383, 0.25
      %vm1692 = vcmp.lt.f32.partialorder %v1386, 0.25
      %vm1693 = vcmp.lt.f32.partialorder %v1389, 0.25
      %vm1694 = vcmp.lt.f32.partialorder %v1392, 0.25
      %vm1695 = vcmp.lt.f32.partialorder %v1395, 0.25
      %vm1696 = vcmp.lt.f32.partialorder %v1398, 0.25
      %vm1697 = vcmp.lt.f32.partialorder %v1401, 0.25
      %vm1698 = vcmp.lt.f32.partialorder %v1404, 0.25
      %vm1699 = vcmp.lt.f32.partialorder %v1407, 0.25
      %vm1700 = vcmp.lt.f32.partialorder %v1410, 0.25
      %vm1701 = vcmp.lt.f32.partialorder %v1413, 0.25
      %vm1702 = vcmp.lt.f32.partialorder %v1416, 0.25
      %vm1703 = vcmp.lt.f32.partialorder %v1419, 0.25
      %vm1704 = vcmp.lt.f32.partialorder %v1422, 0.25
      %vm1705 = vcmp.lt.f32.partialorder %v1425, 0.25
      %vm1706 = vcmp.lt.f32.partialorder %v1428, 0.25
      %vm1707 = vcmp.lt.f32.partialorder %v1431, 0.25
      %vm1708 = vcmp.lt.f32.partialorder %v1434, 0.25
      %vm1709 = vcmp.lt.f32.partialorder %v1437, 0.25
      %vm1710 = vcmp.lt.f32.partialorder %v1440, 0.25
      %vm1711 = vcmp.lt.f32.partialorder %v1443, 0.25
      %vm1712 = vcmp.lt.f32.partialorder %v1446, 0.25
      %vm1713 = vcmp.lt.f32.partialorder %v1449, 0.25
      %vm1714 = vcmp.lt.f32.partialorder %v1452, 0.25
      %vm1715 = vcmp.lt.f32.partialorder %v1455, 0.25
      %vm1716 = vcmp.lt.f32.partialorder %v1458, 0.25
      %vm1717 = vcmp.lt.f32.partialorder %v1461, 0.25
      %vm1718 = vcmp.lt.f32.partialorder %v1464, 0.25
      %vm1719 = vcmp.lt.f32.partialorder %v1467, 0.25
      %vm1720 = vcmp.lt.f32.partialorder %v1470, 0.25
      %vm1721 = vcmp.lt.f32.partialorder %v1473, 0.25
      %vm1722 = vcmp.lt.f32.partialorder %v1476, 0.25
      %vm1723 = vcmp.lt.f32.partialorder %v1479, 0.25
      %vm1724 = vcmp.lt.f32.partialorder %v1482, 0.25
      %vm1725 = vcmp.lt.f32.partialorder %v1485, 0.25
      %vm1726 = vcmp.lt.f32.partialorder %v1488, 0.25
      %vm1727 = vcmp.lt.f32.partialorder %v1491, 0.25
      %vm1728 = vcmp.lt.f32.partialorder %v1494, 0.25
      %vm1729 = vcmp.lt.f32.partialorder %v1497, 0.25
      %vm1730 = vcmp.lt.f32.partialorder %v1500, 0.25
      %vm1731 = vcmp.lt.f32.partialorder %v1503, 0.25
      %vm1732 = vcmp.lt.f32.partialorder %v1506, 0.25
      %vm1733 = vcmp.lt.f32.partialorder %v1509, 0.25
      %vm1734 = vcmp.lt.f32.partialorder %v1512, 0.25
      %vm1735 = vcmp.lt.f32.partialorder %v1515, 0.25
      %vm1736 = vcmp.lt.f32.partialorder %v1518, 0.25
      %vm1737 = vcmp.lt.f32.partialorder %v1521, 0.25
      %vm1738 = vcmp.lt.f32.partialorder %v1524, 0.25
      %vm1739 = vcmp.lt.f32.partialorder %v1527, 0.25
      %vm1740 = vcmp.lt.f32.partialorder %v1530, 0.25
      %vm1741 = vcmp.lt.f32.partialorder %v1533, 0.25
      %vm1742 = vcmp.lt.f32.partialorder %v1536, 0.25
      %vm1743 = vcmp.lt.f32.partialorder %v1539, 0.25
      %vm1744 = vcmp.lt.f32.partialorder %v1542, 0.25
      %vm1745 = vcmp.lt.f32.partialorder %v1545, 0.25
      %vm1746 = vcmp.lt.f32.partialorder %v1548, 0.25
      %vm1747 = vcmp.lt.f32.partialorder %v1551, 0.25
      %vm1748 = vcmp.lt.f32.partialorder %v1554, 0.25
      %vm1749 = vcmp.lt.f32.partialorder %v1557, 0.25
      %vm1750 = vcmp.lt.f32.partialorder %v1560, 0.25
      %vm1751 = vcmp.lt.f32.partialorder %v1563, 0.25
      %vm1752 = vcmp.lt.f32.partialorder %v1566, 0.25
      %vm1753 = vcmp.lt.f32.partialorder %v1569, 0.25
      %vm1754 = vcmp.lt.f32.partialorder %v1572, 0.25
      %vm1755 = vcmp.lt.f32.partialorder %v1575, 0.25
      %vm1756 = vcmp.lt.f32.partialorder %v1578, 0.25
      %vm1757 = vcmp.lt.f32.partialorder %v1581, 0.25
      %vm1758 = vcmp.lt.f32.partialorder %v1584, 0.25
      %vm1759 = vcmp.lt.f32.partialorder %v1587, 0.25
      %vm1760 = vcmp.lt.f32.partialorder %v1590, 0.25
      %vm1761 = vcmp.lt.f32.partialorder %v1593, 0.25
      %vm1762 = vcmp.lt.f32.partialorder %v1596, 0.25
      %vm1763 = vcmp.lt.f32.partialorder %v1599, 0.25
      %vm1764 = vcmp.lt.f32.partialorder %v1602, 0.25
      %vm1765 = vcmp.lt.f32.partialorder %v1605, 0.25
      %vm1766 = vcmp.lt.f32.partialorder %v1608, 0.25
      %vm1767 = vcmp.lt.f32.partialorder %v1611, 0.25
      %vm1768 = vcmp.lt.f32.partialorder %v1614, 0.25
      %vm1769 = vcmp.lt.f32.partialorder %v1617, 0.25
      %vm1770 = vcmp.lt.f32.partialorder %v1620, 0.25
      %vm1771 = vcmp.lt.f32.partialorder %v1623, 0.25
      %vm1772 = vcmp.lt.f32.partialorder %v1626, 0.25
      %vm1773 = vcmp.lt.f32.partialorder %v1629, 0.25
      %vm1774 = vcmp.lt.f32.partialorder %v1632, 0.25
      %vm1775 = vcmp.lt.f32.partialorder %v1635, 0.25
      %vm1776 = vcmp.lt.f32.partialorder %v1638, 0.25
      %vm1777 = vcmp.lt.f32.partialorder %v1641, 0.25
      %vm1778 = vcmp.ne.s32.totalorder %v1648, %v1643
      %vm1779 = vcmp.ne.s32.totalorder %v1649, %v1643
      %v1780 = vsel %vm1778, 1, 0
      %v1781 = vsel %vm1779, 1, 0
      %v1782 = vlaneseq
      %v1783 = vshrl.u32 %v1782, 7
      %v1784 = vsub.s32 0, %v1783
      %v1785 = vrot.slane %v1780, %v1784
      %1787 = vbcast.lane.b32.xlu0 %v1785, 256
      %v1788 = vpop.permute.xlu0 %1787
      %s1790 = sor.u32 256, 8
      %1791 = vbcast.lane.b32.xlu0 %v1785, %s1790
      %v1792 = vpop.permute.xlu0 %1791
      %s1794 = sor.u32 256, 16
      %1795 = vbcast.lane.b32.xlu0 %v1785, %s1794
      %v1796 = vpop.permute.xlu0 %1795
      %s1798 = sor.u32 256, 24
      %1799 = vbcast.lane.b32.xlu0 %v1785, %s1798
      %v1800 = vpop.permute.xlu0 %1799
      %s1802 = sor.u32 256, 32
      %1803 = vbcast.lane.b32.xlu0 %v1785, %s1802
      %v1804 = vpop.permute.xlu0 %1803
      %s1806 = sor.u32 256, 40
      %1807 = vbcast.lane.b32.xlu0 %v1785, %s1806
      %v1808 = vpop.permute.xlu0 %1807
      %s1810 = sor.u32 256, 48
      %1811 = vbcast.lane.b32.xlu0 %v1785, %s1810
      %v1812 = vpop.permute.xlu0 %1811
      %s1814 = sor.u32 256, 56
      %1815 = vbcast.lane.b32.xlu0 %v1785, %s1814
      %v1816 = vpop.permute.xlu0 %1815
      %v1817 = vlaneseq
      %v1818 = vshrl.u32 %v1817, 7
      %v1819 = vsub.s32 1, %v1818
      %v1820 = vrot.slane %v1780, %v1819
      %1822 = vbcast.lane.b32.xlu0 %v1820, 256
      %v1823 = vpop.permute.xlu0 %1822
      %s1825 = sor.u32 256, 8
      %1826 = vbcast.lane.b32.xlu0 %v1820, %s1825
      %v1827 = vpop.permute.xlu0 %1826
      %s1829 = sor.u32 256, 16
      %1830 = vbcast.lane.b32.xlu0 %v1820, %s1829
      %v1831 = vpop.permute.xlu0 %1830
      %s1833 = sor.u32 256, 24
      %1834 = vbcast.lane.b32.xlu0 %v1820, %s1833
      %v1835 = vpop.permute.xlu0 %1834
      %s1837 = sor.u32 256, 32
      %1838 = vbcast.lane.b32.xlu0 %v1820, %s1837
      %v1839 = vpop.permute.xlu0 %1838
      %s1841 = sor.u32 256, 40
      %1842 = vbcast.lane.b32.xlu0 %v1820, %s1841
      %v1843 = vpop.permute.xlu0 %1842
      %s1845 = sor.u32 256, 48
      %1846 = vbcast.lane.b32.xlu0 %v1820, %s1845
      %v1847 = vpop.permute.xlu0 %1846
      %s1849 = sor.u32 256, 56
      %1850 = vbcast.lane.b32.xlu0 %v1820, %s1849
      %v1851 = vpop.permute.xlu0 %1850
      %v1852 = vlaneseq
      %v1853 = vshrl.u32 %v1852, 7
      %v1854 = vsub.s32 2, %v1853
      %v1855 = vrot.slane %v1780, %v1854
      %1857 = vbcast.lane.b32.xlu0 %v1855, 256
      %v1858 = vpop.permute.xlu0 %1857
      %s1860 = sor.u32 256, 8
      %1861 = vbcast.lane.b32.xlu0 %v1855, %s1860
      %v1862 = vpop.permute.xlu0 %1861
      %s1864 = sor.u32 256, 16
      %1865 = vbcast.lane.b32.xlu0 %v1855, %s1864
      %v1866 = vpop.permute.xlu0 %1865
      %s1868 = sor.u32 256, 24
      %1869 = vbcast.lane.b32.xlu0 %v1855, %s1868
      %v1870 = vpop.permute.xlu0 %1869
      %s1872 = sor.u32 256, 32
      %1873 = vbcast.lane.b32.xlu0 %v1855, %s1872
      %v1874 = vpop.permute.xlu0 %1873
      %s1876 = sor.u32 256, 40
      %1877 = vbcast.lane.b32.xlu0 %v1855, %s1876
      %v1878 = vpop.permute.xlu0 %1877
      %s1880 = sor.u32 256, 48
      %1881 = vbcast.lane.b32.xlu0 %v1855, %s1880
      %v1882 = vpop.permute.xlu0 %1881
      %s1884 = sor.u32 256, 56
      %1885 = vbcast.lane.b32.xlu0 %v1855, %s1884
      %v1886 = vpop.permute.xlu0 %1885
      %v1887 = vlaneseq
      %v1888 = vshrl.u32 %v1887, 7
      %v1889 = vsub.s32 3, %v1888
      %v1890 = vrot.slane %v1780, %v1889
      %1892 = vbcast.lane.b32.xlu0 %v1890, 256
      %v1893 = vpop.permute.xlu0 %1892
      %s1895 = sor.u32 256, 8
      %1896 = vbcast.lane.b32.xlu0 %v1890, %s1895
      %v1897 = vpop.permute.xlu0 %1896
      %s1899 = sor.u32 256, 16
      %1900 = vbcast.lane.b32.xlu0 %v1890, %s1899
      %v1901 = vpop.permute.xlu0 %1900
      %s1903 = sor.u32 256, 24
      %1904 = vbcast.lane.b32.xlu0 %v1890, %s1903
      %v1905 = vpop.permute.xlu0 %1904
      %s1907 = sor.u32 256, 32
      %1908 = vbcast.lane.b32.xlu0 %v1890, %s1907
      %v1909 = vpop.permute.xlu0 %1908
      %s1911 = sor.u32 256, 40
      %1912 = vbcast.lane.b32.xlu0 %v1890, %s1911
      %v1913 = vpop.permute.xlu0 %1912
      %s1915 = sor.u32 256, 48
      %1916 = vbcast.lane.b32.xlu0 %v1890, %s1915
      %v1917 = vpop.permute.xlu0 %1916
      %s1919 = sor.u32 256, 56
      %1920 = vbcast.lane.b32.xlu0 %v1890, %s1919
      %v1921 = vpop.permute.xlu0 %1920
      %v1922 = vlaneseq
      %v1923 = vshrl.u32 %v1922, 7
      %v1924 = vsub.s32 4, %v1923
      %v1925 = vrot.slane %v1780, %v1924
      %1927 = vbcast.lane.b32.xlu0 %v1925, 256
      %v1928 = vpop.permute.xlu0 %1927
      %s1930 = sor.u32 256, 8
      %1931 = vbcast.lane.b32.xlu0 %v1925, %s1930
      %v1932 = vpop.permute.xlu0 %1931
      %s1934 = sor.u32 256, 16
      %1935 = vbcast.lane.b32.xlu0 %v1925, %s1934
      %v1936 = vpop.permute.xlu0 %1935
      %s1938 = sor.u32 256, 24
      %1939 = vbcast.lane.b32.xlu0 %v1925, %s1938
      %v1940 = vpop.permute.xlu0 %1939
      %s1942 = sor.u32 256, 32
      %1943 = vbcast.lane.b32.xlu0 %v1925, %s1942
      %v1944 = vpop.permute.xlu0 %1943
      %s1946 = sor.u32 256, 40
      %1947 = vbcast.lane.b32.xlu0 %v1925, %s1946
      %v1948 = vpop.permute.xlu0 %1947
      %s1950 = sor.u32 256, 48
      %1951 = vbcast.lane.b32.xlu0 %v1925, %s1950
      %v1952 = vpop.permute.xlu0 %1951
      %s1954 = sor.u32 256, 56
      %1955 = vbcast.lane.b32.xlu0 %v1925, %s1954
      %v1956 = vpop.permute.xlu0 %1955
      %v1957 = vlaneseq
      %v1958 = vshrl.u32 %v1957, 7
      %v1959 = vsub.s32 5, %v1958
      %v1960 = vrot.slane %v1780, %v1959
      %1962 = vbcast.lane.b32.xlu0 %v1960, 256
      %v1963 = vpop.permute.xlu0 %1962
      %s1965 = sor.u32 256, 8
      %1966 = vbcast.lane.b32.xlu0 %v1960, %s1965
      %v1967 = vpop.permute.xlu0 %1966
      %s1969 = sor.u32 256, 16
      %1970 = vbcast.lane.b32.xlu0 %v1960, %s1969
      %v1971 = vpop.permute.xlu0 %1970
      %s1973 = sor.u32 256, 24
      %1974 = vbcast.lane.b32.xlu0 %v1960, %s1973
      %v1975 = vpop.permute.xlu0 %1974
      %s1977 = sor.u32 256, 32
      %1978 = vbcast.lane.b32.xlu0 %v1960, %s1977
      %v1979 = vpop.permute.xlu0 %1978
      %s1981 = sor.u32 256, 40
      %1982 = vbcast.lane.b32.xlu0 %v1960, %s1981
      %v1983 = vpop.permute.xlu0 %1982
      %s1985 = sor.u32 256, 48
      %1986 = vbcast.lane.b32.xlu0 %v1960, %s1985
      %v1987 = vpop.permute.xlu0 %1986
      %s1989 = sor.u32 256, 56
      %1990 = vbcast.lane.b32.xlu0 %v1960, %s1989
      %v1991 = vpop.permute.xlu0 %1990
      %v1992 = vlaneseq
      %v1993 = vshrl.u32 %v1992, 7
      %v1994 = vsub.s32 6, %v1993
      %v1995 = vrot.slane %v1780, %v1994
      %1997 = vbcast.lane.b32.xlu0 %v1995, 256
      %v1998 = vpop.permute.xlu0 %1997
      %s2000 = sor.u32 256, 8
      %2001 = vbcast.lane.b32.xlu0 %v1995, %s2000
      %v2002 = vpop.permute.xlu0 %2001
      %s2004 = sor.u32 256, 16
      %2005 = vbcast.lane.b32.xlu0 %v1995, %s2004
      %v2006 = vpop.permute.xlu0 %2005
      %s2008 = sor.u32 256, 24
      %2009 = vbcast.lane.b32.xlu0 %v1995, %s2008
      %v2010 = vpop.permute.xlu0 %2009
      %s2012 = sor.u32 256, 32
      %2013 = vbcast.lane.b32.xlu0 %v1995, %s2012
      %v2014 = vpop.permute.xlu0 %2013
      %s2016 = sor.u32 256, 40
      %2017 = vbcast.lane.b32.xlu0 %v1995, %s2016
      %v2018 = vpop.permute.xlu0 %2017
      %s2020 = sor.u32 256, 48
      %2021 = vbcast.lane.b32.xlu0 %v1995, %s2020
      %v2022 = vpop.permute.xlu0 %2021
      %s2024 = sor.u32 256, 56
      %2025 = vbcast.lane.b32.xlu0 %v1995, %s2024
      %v2026 = vpop.permute.xlu0 %2025
      %v2027 = vlaneseq
      %v2028 = vshrl.u32 %v2027, 7
      %v2029 = vsub.s32 7, %v2028
      %v2030 = vrot.slane %v1780, %v2029
      %2032 = vbcast.lane.b32.xlu0 %v2030, 256
      %v2033 = vpop.permute.xlu0 %2032
      %s2035 = sor.u32 256, 8
      %2036 = vbcast.lane.b32.xlu0 %v2030, %s2035
      %v2037 = vpop.permute.xlu0 %2036
      %s2039 = sor.u32 256, 16
      %2040 = vbcast.lane.b32.xlu0 %v2030, %s2039
      %v2041 = vpop.permute.xlu0 %2040
      %s2043 = sor.u32 256, 24
      %2044 = vbcast.lane.b32.xlu0 %v2030, %s2043
      %v2045 = vpop.permute.xlu0 %2044
      %s2047 = sor.u32 256, 32
      %2048 = vbcast.lane.b32.xlu0 %v2030, %s2047
      %v2049 = vpop.permute.xlu0 %2048
      %s2051 = sor.u32 256, 40
      %2052 = vbcast.lane.b32.xlu0 %v2030, %s2051
      %v2053 = vpop.permute.xlu0 %2052
      %s2055 = sor.u32 256, 48
      %2056 = vbcast.lane.b32.xlu0 %v2030, %s2055
      %v2057 = vpop.permute.xlu0 %2056
      %s2059 = sor.u32 256, 56
      %2060 = vbcast.lane.b32.xlu0 %v2030, %s2059
      %v2061 = vpop.permute.xlu0 %2060
      %v2062 = vlaneseq
      %v2063 = vshrl.u32 %v2062, 7
      %v2064 = vsub.s32 0, %v2063
      %v2065 = vrot.slane %v1781, %v2064
      %2067 = vbcast.lane.b32.xlu0 %v2065, 256
      %v2068 = vpop.permute.xlu0 %2067
      %s2070 = sor.u32 256, 8
      %2071 = vbcast.lane.b32.xlu0 %v2065, %s2070
      %v2072 = vpop.permute.xlu0 %2071
      %s2074 = sor.u32 256, 16
      %2075 = vbcast.lane.b32.xlu0 %v2065, %s2074
      %v2076 = vpop.permute.xlu0 %2075
      %s2078 = sor.u32 256, 24
      %2079 = vbcast.lane.b32.xlu0 %v2065, %s2078
      %v2080 = vpop.permute.xlu0 %2079
      %s2082 = sor.u32 256, 32
      %2083 = vbcast.lane.b32.xlu0 %v2065, %s2082
      %v2084 = vpop.permute.xlu0 %2083
      %s2086 = sor.u32 256, 40
      %2087 = vbcast.lane.b32.xlu0 %v2065, %s2086
      %v2088 = vpop.permute.xlu0 %2087
      %s2090 = sor.u32 256, 48
      %2091 = vbcast.lane.b32.xlu0 %v2065, %s2090
      %v2092 = vpop.permute.xlu0 %2091
      %s2094 = sor.u32 256, 56
      %2095 = vbcast.lane.b32.xlu0 %v2065, %s2094
      %v2096 = vpop.permute.xlu0 %2095
      %v2097 = vlaneseq
      %v2098 = vshrl.u32 %v2097, 7
      %v2099 = vsub.s32 1, %v2098
      %v2100 = vrot.slane %v1781, %v2099
      %2102 = vbcast.lane.b32.xlu0 %v2100, 256
      %v2103 = vpop.permute.xlu0 %2102
      %s2105 = sor.u32 256, 8
      %2106 = vbcast.lane.b32.xlu0 %v2100, %s2105
      %v2107 = vpop.permute.xlu0 %2106
      %s2109 = sor.u32 256, 16
      %2110 = vbcast.lane.b32.xlu0 %v2100, %s2109
      %v2111 = vpop.permute.xlu0 %2110
      %s2113 = sor.u32 256, 24
      %2114 = vbcast.lane.b32.xlu0 %v2100, %s2113
      %v2115 = vpop.permute.xlu0 %2114
      %s2117 = sor.u32 256, 32
      %2118 = vbcast.lane.b32.xlu0 %v2100, %s2117
      %v2119 = vpop.permute.xlu0 %2118
      %s2121 = sor.u32 256, 40
      %2122 = vbcast.lane.b32.xlu0 %v2100, %s2121
      %v2123 = vpop.permute.xlu0 %2122
      %s2125 = sor.u32 256, 48
      %2126 = vbcast.lane.b32.xlu0 %v2100, %s2125
      %v2127 = vpop.permute.xlu0 %2126
      %s2129 = sor.u32 256, 56
      %2130 = vbcast.lane.b32.xlu0 %v2100, %s2129
      %v2131 = vpop.permute.xlu0 %2130
      %v2132 = vlaneseq
      %v2133 = vshrl.u32 %v2132, 7
      %v2134 = vsub.s32 2, %v2133
      %v2135 = vrot.slane %v1781, %v2134
      %2137 = vbcast.lane.b32.xlu0 %v2135, 256
      %v2138 = vpop.permute.xlu0 %2137
      %s2140 = sor.u32 256, 8
      %2141 = vbcast.lane.b32.xlu0 %v2135, %s2140
      %v2142 = vpop.permute.xlu0 %2141
      %s2144 = sor.u32 256, 16
      %2145 = vbcast.lane.b32.xlu0 %v2135, %s2144
      %v2146 = vpop.permute.xlu0 %2145
      %s2148 = sor.u32 256, 24
      %2149 = vbcast.lane.b32.xlu0 %v2135, %s2148
      %v2150 = vpop.permute.xlu0 %2149
      %s2152 = sor.u32 256, 32
      %2153 = vbcast.lane.b32.xlu0 %v2135, %s2152
      %v2154 = vpop.permute.xlu0 %2153
      %s2156 = sor.u32 256, 40
      %2157 = vbcast.lane.b32.xlu0 %v2135, %s2156
      %v2158 = vpop.permute.xlu0 %2157
      %s2160 = sor.u32 256, 48
      %2161 = vbcast.lane.b32.xlu0 %v2135, %s2160
      %v2162 = vpop.permute.xlu0 %2161
      %s2164 = sor.u32 256, 56
      %2165 = vbcast.lane.b32.xlu0 %v2135, %s2164
      %v2166 = vpop.permute.xlu0 %2165
      %v2167 = vlaneseq
      %v2168 = vshrl.u32 %v2167, 7
      %v2169 = vsub.s32 3, %v2168
      %v2170 = vrot.slane %v1781, %v2169
      %2172 = vbcast.lane.b32.xlu0 %v2170, 256
      %v2173 = vpop.permute.xlu0 %2172
      %s2175 = sor.u32 256, 8
      %2176 = vbcast.lane.b32.xlu0 %v2170, %s2175
      %v2177 = vpop.permute.xlu0 %2176
      %s2179 = sor.u32 256, 16
      %2180 = vbcast.lane.b32.xlu0 %v2170, %s2179
      %v2181 = vpop.permute.xlu0 %2180
      %s2183 = sor.u32 256, 24
      %2184 = vbcast.lane.b32.xlu0 %v2170, %s2183
      %v2185 = vpop.permute.xlu0 %2184
      %s2187 = sor.u32 256, 32
      %2188 = vbcast.lane.b32.xlu0 %v2170, %s2187
      %v2189 = vpop.permute.xlu0 %2188
      %s2191 = sor.u32 256, 40
      %2192 = vbcast.lane.b32.xlu0 %v2170, %s2191
      %v2193 = vpop.permute.xlu0 %2192
      %s2195 = sor.u32 256, 48
      %2196 = vbcast.lane.b32.xlu0 %v2170, %s2195
      %v2197 = vpop.permute.xlu0 %2196
      %s2199 = sor.u32 256, 56
      %2200 = vbcast.lane.b32.xlu0 %v2170, %s2199
      %v2201 = vpop.permute.xlu0 %2200
      %v2202 = vlaneseq
      %v2203 = vshrl.u32 %v2202, 7
      %v2204 = vsub.s32 4, %v2203
      %v2205 = vrot.slane %v1781, %v2204
      %2207 = vbcast.lane.b32.xlu0 %v2205, 256
      %v2208 = vpop.permute.xlu0 %2207
      %s2210 = sor.u32 256, 8
      %2211 = vbcast.lane.b32.xlu0 %v2205, %s2210
      %v2212 = vpop.permute.xlu0 %2211
      %s2214 = sor.u32 256, 16
      %2215 = vbcast.lane.b32.xlu0 %v2205, %s2214
      %v2216 = vpop.permute.xlu0 %2215
      %s2218 = sor.u32 256, 24
      %2219 = vbcast.lane.b32.xlu0 %v2205, %s2218
      %v2220 = vpop.permute.xlu0 %2219
      %s2222 = sor.u32 256, 32
      %2223 = vbcast.lane.b32.xlu0 %v2205, %s2222
      %v2224 = vpop.permute.xlu0 %2223
      %s2226 = sor.u32 256, 40
      %2227 = vbcast.lane.b32.xlu0 %v2205, %s2226
      %v2228 = vpop.permute.xlu0 %2227
      %s2230 = sor.u32 256, 48
      %2231 = vbcast.lane.b32.xlu0 %v2205, %s2230
      %v2232 = vpop.permute.xlu0 %2231
      %s2234 = sor.u32 256, 56
      %2235 = vbcast.lane.b32.xlu0 %v2205, %s2234
      %v2236 = vpop.permute.xlu0 %2235
      %v2237 = vlaneseq
      %v2238 = vshrl.u32 %v2237, 7
      %v2239 = vsub.s32 5, %v2238
      %v2240 = vrot.slane %v1781, %v2239
      %2242 = vbcast.lane.b32.xlu0 %v2240, 256
      %v2243 = vpop.permute.xlu0 %2242
      %s2245 = sor.u32 256, 8
      %2246 = vbcast.lane.b32.xlu0 %v2240, %s2245
      %v2247 = vpop.permute.xlu0 %2246
      %s2249 = sor.u32 256, 16
      %2250 = vbcast.lane.b32.xlu0 %v2240, %s2249
      %v2251 = vpop.permute.xlu0 %2250
      %s2253 = sor.u32 256, 24
      %2254 = vbcast.lane.b32.xlu0 %v2240, %s2253
      %v2255 = vpop.permute.xlu0 %2254
      %s2257 = sor.u32 256, 32
      %2258 = vbcast.lane.b32.xlu0 %v2240, %s2257
      %v2259 = vpop.permute.xlu0 %2258
      %s2261 = sor.u32 256, 40
      %2262 = vbcast.lane.b32.xlu0 %v2240, %s2261
      %v2263 = vpop.permute.xlu0 %2262
      %s2265 = sor.u32 256, 48
      %2266 = vbcast.lane.b32.xlu0 %v2240, %s2265
      %v2267 = vpop.permute.xlu0 %2266
      %s2269 = sor.u32 256, 56
      %2270 = vbcast.lane.b32.xlu0 %v2240, %s2269
      %v2271 = vpop.permute.xlu0 %2270
      %v2272 = vlaneseq
      %v2273 = vshrl.u32 %v2272, 7
      %v2274 = vsub.s32 6, %v2273
      %v2275 = vrot.slane %v1781, %v2274
      %2277 = vbcast.lane.b32.xlu0 %v2275, 256
      %v2278 = vpop.permute.xlu0 %2277
      %s2280 = sor.u32 256, 8
      %2281 = vbcast.lane.b32.xlu0 %v2275, %s2280
      %v2282 = vpop.permute.xlu0 %2281
      %s2284 = sor.u32 256, 16
      %2285 = vbcast.lane.b32.xlu0 %v2275, %s2284
      %v2286 = vpop.permute.xlu0 %2285
      %s2288 = sor.u32 256, 24
      %2289 = vbcast.lane.b32.xlu0 %v2275, %s2288
      %v2290 = vpop.permute.xlu0 %2289
      %s2292 = sor.u32 256, 32
      %2293 = vbcast.lane.b32.xlu0 %v2275, %s2292
      %v2294 = vpop.permute.xlu0 %2293
      %s2296 = sor.u32 256, 40
      %2297 = vbcast.lane.b32.xlu0 %v2275, %s2296
      %v2298 = vpop.permute.xlu0 %2297
      %s2300 = sor.u32 256, 48
      %2301 = vbcast.lane.b32.xlu0 %v2275, %s2300
      %v2302 = vpop.permute.xlu0 %2301
      %s2304 = sor.u32 256, 56
      %2305 = vbcast.lane.b32.xlu0 %v2275, %s2304
      %v2306 = vpop.permute.xlu0 %2305
      %v2307 = vlaneseq
      %v2308 = vshrl.u32 %v2307, 7
      %v2309 = vsub.s32 7, %v2308
      %v2310 = vrot.slane %v1781, %v2309
      %2312 = vbcast.lane.b32.xlu0 %v2310, 256
      %v2313 = vpop.permute.xlu0 %2312
      %s2315 = sor.u32 256, 8
      %2316 = vbcast.lane.b32.xlu0 %v2310, %s2315
      %v2317 = vpop.permute.xlu0 %2316
      %s2319 = sor.u32 256, 16
      %2320 = vbcast.lane.b32.xlu0 %v2310, %s2319
      %v2321 = vpop.permute.xlu0 %2320
      %s2323 = sor.u32 256, 24
      %2324 = vbcast.lane.b32.xlu0 %v2310, %s2323
      %v2325 = vpop.permute.xlu0 %2324
      %s2327 = sor.u32 256, 32
      %2328 = vbcast.lane.b32.xlu0 %v2310, %s2327
      %v2329 = vpop.permute.xlu0 %2328
      %s2331 = sor.u32 256, 40
      %2332 = vbcast.lane.b32.xlu0 %v2310, %s2331
      %v2333 = vpop.permute.xlu0 %2332
      %s2335 = sor.u32 256, 48
      %2336 = vbcast.lane.b32.xlu0 %v2310, %s2335
      %v2337 = vpop.permute.xlu0 %2336
      %s2339 = sor.u32 256, 56
      %2340 = vbcast.lane.b32.xlu0 %v2310, %s2339
      %v2341 = vpop.permute.xlu0 %2340
      %vm2342 = vcmp.ne.s32.totalorder %v1788, 0
      %vm2343 = vcmp.ne.s32.totalorder %v1792, 0
      %vm2344 = vcmp.ne.s32.totalorder %v1796, 0
      %vm2345 = vcmp.ne.s32.totalorder %v1800, 0
      %vm2346 = vcmp.ne.s32.totalorder %v1804, 0
      %vm2347 = vcmp.ne.s32.totalorder %v1808, 0
      %vm2348 = vcmp.ne.s32.totalorder %v1812, 0
      %vm2349 = vcmp.ne.s32.totalorder %v1816, 0
      %vm2350 = vcmp.ne.s32.totalorder %v1823, 0
      %vm2351 = vcmp.ne.s32.totalorder %v1827, 0
      %vm2352 = vcmp.ne.s32.totalorder %v1831, 0
      %vm2353 = vcmp.ne.s32.totalorder %v1835, 0
      %vm2354 = vcmp.ne.s32.totalorder %v1839, 0
      %vm2355 = vcmp.ne.s32.totalorder %v1843, 0
      %vm2356 = vcmp.ne.s32.totalorder %v1847, 0
      %vm2357 = vcmp.ne.s32.totalorder %v1851, 0
      %vm2358 = vcmp.ne.s32.totalorder %v1858, 0
      %vm2359 = vcmp.ne.s32.totalorder %v1862, 0
      %vm2360 = vcmp.ne.s32.totalorder %v1866, 0
      %vm2361 = vcmp.ne.s32.totalorder %v1870, 0
      %vm2362 = vcmp.ne.s32.totalorder %v1874, 0
      %vm2363 = vcmp.ne.s32.totalorder %v1878, 0
      %vm2364 = vcmp.ne.s32.totalorder %v1882, 0
      %vm2365 = vcmp.ne.s32.totalorder %v1886, 0
      %vm2366 = vcmp.ne.s32.totalorder %v1893, 0
      %vm2367 = vcmp.ne.s32.totalorder %v1897, 0
      %vm2368 = vcmp.ne.s32.totalorder %v1901, 0
      %vm2369 = vcmp.ne.s32.totalorder %v1905, 0
      %vm2370 = vcmp.ne.s32.totalorder %v1909, 0
      %vm2371 = vcmp.ne.s32.totalorder %v1913, 0
      %vm2372 = vcmp.ne.s32.totalorder %v1917, 0
      %vm2373 = vcmp.ne.s32.totalorder %v1921, 0
      %vm2374 = vcmp.ne.s32.totalorder %v1928, 0
      %vm2375 = vcmp.ne.s32.totalorder %v1932, 0
      %vm2376 = vcmp.ne.s32.totalorder %v1936, 0
      %vm2377 = vcmp.ne.s32.totalorder %v1940, 0
      %vm2378 = vcmp.ne.s32.totalorder %v1944, 0
      %vm2379 = vcmp.ne.s32.totalorder %v1948, 0
      %vm2380 = vcmp.ne.s32.totalorder %v1952, 0
      %vm2381 = vcmp.ne.s32.totalorder %v1956, 0
      %vm2382 = vcmp.ne.s32.totalorder %v1963, 0
      %vm2383 = vcmp.ne.s32.totalorder %v1967, 0
      %vm2384 = vcmp.ne.s32.totalorder %v1971, 0
      %vm2385 = vcmp.ne.s32.totalorder %v1975, 0
      %vm2386 = vcmp.ne.s32.totalorder %v1979, 0
      %vm2387 = vcmp.ne.s32.totalorder %v1983, 0
      %vm2388 = vcmp.ne.s32.totalorder %v1987, 0
      %vm2389 = vcmp.ne.s32.totalorder %v1991, 0
      %vm2390 = vcmp.ne.s32.totalorder %v1998, 0
      %vm2391 = vcmp.ne.s32.totalorder %v2002, 0
      %vm2392 = vcmp.ne.s32.totalorder %v2006, 0
      %vm2393 = vcmp.ne.s32.totalorder %v2010, 0
      %vm2394 = vcmp.ne.s32.totalorder %v2014, 0
      %vm2395 = vcmp.ne.s32.totalorder %v2018, 0
      %vm2396 = vcmp.ne.s32.totalorder %v2022, 0
      %vm2397 = vcmp.ne.s32.totalorder %v2026, 0
      %vm2398 = vcmp.ne.s32.totalorder %v2033, 0
      %vm2399 = vcmp.ne.s32.totalorder %v2037, 0
      %vm2400 = vcmp.ne.s32.totalorder %v2041, 0
      %vm2401 = vcmp.ne.s32.totalorder %v2045, 0
      %vm2402 = vcmp.ne.s32.totalorder %v2049, 0
      %vm2403 = vcmp.ne.s32.totalorder %v2053, 0
      %vm2404 = vcmp.ne.s32.totalorder %v2057, 0
      %vm2405 = vcmp.ne.s32.totalorder %v2061, 0
      %vm2406 = vcmp.ne.s32.totalorder %v2068, 0
      %vm2407 = vcmp.ne.s32.totalorder %v2072, 0
      %vm2408 = vcmp.ne.s32.totalorder %v2076, 0
      %vm2409 = vcmp.ne.s32.totalorder %v2080, 0
      %vm2410 = vcmp.ne.s32.totalorder %v2084, 0
      %vm2411 = vcmp.ne.s32.totalorder %v2088, 0
      %vm2412 = vcmp.ne.s32.totalorder %v2092, 0
      %vm2413 = vcmp.ne.s32.totalorder %v2096, 0
      %vm2414 = vcmp.ne.s32.totalorder %v2103, 0
      %vm2415 = vcmp.ne.s32.totalorder %v2107, 0
      %vm2416 = vcmp.ne.s32.totalorder %v2111, 0
      %vm2417 = vcmp.ne.s32.totalorder %v2115, 0
      %vm2418 = vcmp.ne.s32.totalorder %v2119, 0
      %vm2419 = vcmp.ne.s32.totalorder %v2123, 0
      %vm2420 = vcmp.ne.s32.totalorder %v2127, 0
      %vm2421 = vcmp.ne.s32.totalorder %v2131, 0
      %vm2422 = vcmp.ne.s32.totalorder %v2138, 0
      %vm2423 = vcmp.ne.s32.totalorder %v2142, 0
      %vm2424 = vcmp.ne.s32.totalorder %v2146, 0
      %vm2425 = vcmp.ne.s32.totalorder %v2150, 0
      %vm2426 = vcmp.ne.s32.totalorder %v2154, 0
      %vm2427 = vcmp.ne.s32.totalorder %v2158, 0
      %vm2428 = vcmp.ne.s32.totalorder %v2162, 0
      %vm2429 = vcmp.ne.s32.totalorder %v2166, 0
      %vm2430 = vcmp.ne.s32.totalorder %v2173, 0
      %vm2431 = vcmp.ne.s32.totalorder %v2177, 0
      %vm2432 = vcmp.ne.s32.totalorder %v2181, 0
      %vm2433 = vcmp.ne.s32.totalorder %v2185, 0
      %vm2434 = vcmp.ne.s32.totalorder %v2189, 0
      %vm2435 = vcmp.ne.s32.totalorder %v2193, 0
      %vm2436 = vcmp.ne.s32.totalorder %v2197, 0
      %vm2437 = vcmp.ne.s32.totalorder %v2201, 0
      %vm2438 = vcmp.ne.s32.totalorder %v2208, 0
      %vm2439 = vcmp.ne.s32.totalorder %v2212, 0
      %vm2440 = vcmp.ne.s32.totalorder %v2216, 0
      %vm2441 = vcmp.ne.s32.totalorder %v2220, 0
      %vm2442 = vcmp.ne.s32.totalorder %v2224, 0
      %vm2443 = vcmp.ne.s32.totalorder %v2228, 0
      %vm2444 = vcmp.ne.s32.totalorder %v2232, 0
      %vm2445 = vcmp.ne.s32.totalorder %v2236, 0
      %vm2446 = vcmp.ne.s32.totalorder %v2243, 0
      %vm2447 = vcmp.ne.s32.totalorder %v2247, 0
      %vm2448 = vcmp.ne.s32.totalorder %v2251, 0
      %vm2449 = vcmp.ne.s32.totalorder %v2255, 0
      %vm2450 = vcmp.ne.s32.totalorder %v2259, 0
      %vm2451 = vcmp.ne.s32.totalorder %v2263, 0
      %vm2452 = vcmp.ne.s32.totalorder %v2267, 0
      %vm2453 = vcmp.ne.s32.totalorder %v2271, 0
      %vm2454 = vcmp.ne.s32.totalorder %v2278, 0
      %vm2455 = vcmp.ne.s32.totalorder %v2282, 0
      %vm2456 = vcmp.ne.s32.totalorder %v2286, 0
      %vm2457 = vcmp.ne.s32.totalorder %v2290, 0
      %vm2458 = vcmp.ne.s32.totalorder %v2294, 0
      %vm2459 = vcmp.ne.s32.totalorder %v2298, 0
      %vm2460 = vcmp.ne.s32.totalorder %v2302, 0
      %vm2461 = vcmp.ne.s32.totalorder %v2306, 0
      %vm2462 = vcmp.ne.s32.totalorder %v2313, 0
      %vm2463 = vcmp.ne.s32.totalorder %v2317, 0
      %vm2464 = vcmp.ne.s32.totalorder %v2321, 0
      %vm2465 = vcmp.ne.s32.totalorder %v2325, 0
      %vm2466 = vcmp.ne.s32.totalorder %v2329, 0
      %vm2467 = vcmp.ne.s32.totalorder %v2333, 0
      %vm2468 = vcmp.ne.s32.totalorder %v2337, 0
      %vm2469 = vcmp.ne.s32.totalorder %v2341, 0
      %vm2470 = vmand %vm1650, %vm2342
      %vm2471 = vmand %vm1651, %vm2343
      %vm2472 = vmand %vm1652, %vm2344
      %vm2473 = vmand %vm1653, %vm2345
      %vm2474 = vmand %vm1654, %vm2346
      %vm2475 = vmand %vm1655, %vm2347
      %vm2476 = vmand %vm1656, %vm2348
      %vm2477 = vmand %vm1657, %vm2349
      %vm2478 = vmand %vm1658, %vm2350
      %vm2479 = vmand %vm1659, %vm2351
      %vm2480 = vmand %vm1660, %vm2352
      %vm2481 = vmand %vm1661, %vm2353
      %vm2482 = vmand %vm1662, %vm2354
      %vm2483 = vmand %vm1663, %vm2355
      %vm2484 = vmand %vm1664, %vm2356
      %vm2485 = vmand %vm1665, %vm2357
      %vm2486 = vmand %vm1666, %vm2358
      %vm2487 = vmand %vm1667, %vm2359
      %vm2488 = vmand %vm1668, %vm2360
      %vm2489 = vmand %vm1669, %vm2361
      %vm2490 = vmand %vm1670, %vm2362
      %vm2491 = vmand %vm1671, %vm2363
      %vm2492 = vmand %vm1672, %vm2364
      %vm2493 = vmand %vm1673, %vm2365
      %vm2494 = vmand %vm1674, %vm2366
      %vm2495 = vmand %vm1675, %vm2367
      %vm2496 = vmand %vm1676, %vm2368
      %vm2497 = vmand %vm1677, %vm2369
      %vm2498 = vmand %vm1678, %vm2370
      %vm2499 = vmand %vm1679, %vm2371
      %vm2500 = vmand %vm1680, %vm2372
      %vm2501 = vmand %vm1681, %vm2373
      %vm2502 = vmand %vm1682, %vm2374
      %vm2503 = vmand %vm1683, %vm2375
      %vm2504 = vmand %vm1684, %vm2376
      %vm2505 = vmand %vm1685, %vm2377
      %vm2506 = vmand %vm1686, %vm2378
      %vm2507 = vmand %vm1687, %vm2379
      %vm2508 = vmand %vm1688, %vm2380
      %vm2509 = vmand %vm1689, %vm2381
      %vm2510 = vmand %vm1690, %vm2382
      %vm2511 = vmand %vm1691, %vm2383
      %vm2512 = vmand %vm1692, %vm2384
      %vm2513 = vmand %vm1693, %vm2385
      %vm2514 = vmand %vm1694, %vm2386
      %vm2515 = vmand %vm1695, %vm2387
      %vm2516 = vmand %vm1696, %vm2388
      %vm2517 = vmand %vm1697, %vm2389
      %vm2518 = vmand %vm1698, %vm2390
      %vm2519 = vmand %vm1699, %vm2391
      %vm2520 = vmand %vm1700, %vm2392
      %vm2521 = vmand %vm1701, %vm2393
      %vm2522 = vmand %vm1702, %vm2394
      %vm2523 = vmand %vm1703, %vm2395
      %vm2524 = vmand %vm1704, %vm2396
      %vm2525 = vmand %vm1705, %vm2397
      %vm2526 = vmand %vm1706, %vm2398
      %vm2527 = vmand %vm1707, %vm2399
      %vm2528 = vmand %vm1708, %vm2400
      %vm2529 = vmand %vm1709, %vm2401
      %vm2530 = vmand %vm1710, %vm2402
      %vm2531 = vmand %vm1711, %vm2403
      %vm2532 = vmand %vm1712, %vm2404
      %vm2533 = vmand %vm1713, %vm2405
      %vm2534 = vmand %vm1714, %vm2406
      %vm2535 = vmand %vm1715, %vm2407
      %vm2536 = vmand %vm1716, %vm2408
      %vm2537 = vmand %vm1717, %vm2409
      %vm2538 = vmand %vm1718, %vm2410
      %vm2539 = vmand %vm1719, %vm2411
      %vm2540 = vmand %vm1720, %vm2412
      %vm2541 = vmand %vm1721, %vm2413
      %vm2542 = vmand %vm1722, %vm2414
      %vm2543 = vmand %vm1723, %vm2415
      %vm2544 = vmand %vm1724, %vm2416
      %vm2545 = vmand %vm1725, %vm2417
      %vm2546 = vmand %vm1726, %vm2418
      %vm2547 = vmand %vm1727, %vm2419
      %vm2548 = vmand %vm1728, %vm2420
      %vm2549 = vmand %vm1729, %vm2421
      %vm2550 = vmand %vm1730, %vm2422
      %vm2551 = vmand %vm1731, %vm2423
      %vm2552 = vmand %vm1732, %vm2424
      %vm2553 = vmand %vm1733, %vm2425
      %vm2554 = vmand %vm1734, %vm2426
      %vm2555 = vmand %vm1735, %vm2427
      %vm2556 = vmand %vm1736, %vm2428
      %vm2557 = vmand %vm1737, %vm2429
      %vm2558 = vmand %vm1738, %vm2430
      %vm2559 = vmand %vm1739, %vm2431
      %vm2560 = vmand %vm1740, %vm2432
      %vm2561 = vmand %vm1741, %vm2433
      %vm2562 = vmand %vm1742, %vm2434
      %vm2563 = vmand %vm1743, %vm2435
      %vm2564 = vmand %vm1744, %vm2436
      %vm2565 = vmand %vm1745, %vm2437
      %vm2566 = vmand %vm1746, %vm2438
      %vm2567 = vmand %vm1747, %vm2439
      %vm2568 = vmand %vm1748, %vm2440
      %vm2569 = vmand %vm1749, %vm2441
      %vm2570 = vmand %vm1750, %vm2442
      %vm2571 = vmand %vm1751, %vm2443
      %vm2572 = vmand %vm1752, %vm2444
      %vm2573 = vmand %vm1753, %vm2445
      %vm2574 = vmand %vm1754, %vm2446
      %vm2575 = vmand %vm1755, %vm2447
      %vm2576 = vmand %vm1756, %vm2448
      %vm2577 = vmand %vm1757, %vm2449
      %vm2578 = vmand %vm1758, %vm2450
      %vm2579 = vmand %vm1759, %vm2451
      %vm2580 = vmand %vm1760, %vm2452
      %vm2581 = vmand %vm1761, %vm2453
      %vm2582 = vmand %vm1762, %vm2454
      %vm2583 = vmand %vm1763, %vm2455
      %vm2584 = vmand %vm1764, %vm2456
      %vm2585 = vmand %vm1765, %vm2457
      %vm2586 = vmand %vm1766, %vm2458
      %vm2587 = vmand %vm1767, %vm2459
      %vm2588 = vmand %vm1768, %vm2460
      %vm2589 = vmand %vm1769, %vm2461
      %vm2590 = vmand %vm1770, %vm2462
      %vm2591 = vmand %vm1771, %vm2463
      %vm2592 = vmand %vm1772, %vm2464
      %vm2593 = vmand %vm1773, %vm2465
      %vm2594 = vmand %vm1774, %vm2466
      %vm2595 = vmand %vm1775, %vm2467
      %vm2596 = vmand %vm1776, %vm2468
      %vm2597 = vmand %vm1777, %vm2469
      %v2598 = vsel %vm2470, 1, 0
      %v2599 = vsel %vm2471, 1, 0
      %v2600 = vsel %vm2472, 1, 0
      %v2601 = vsel %vm2473, 1, 0
      %v2602 = vsel %vm2474, 1, 0
      %v2603 = vsel %vm2475, 1, 0
      %v2604 = vsel %vm2476, 1, 0
      %v2605 = vsel %vm2477, 1, 0
      %v2606 = vsel %vm2478, 1, 0
      %v2607 = vsel %vm2479, 1, 0
      %v2608 = vsel %vm2480, 1, 0
      %v2609 = vsel %vm2481, 1, 0
      %v2610 = vsel %vm2482, 1, 0
      %v2611 = vsel %vm2483, 1, 0
      %v2612 = vsel %vm2484, 1, 0
      %v2613 = vsel %vm2485, 1, 0
      %v2614 = vsel %vm2486, 1, 0
      %v2615 = vsel %vm2487, 1, 0
      %v2616 = vsel %vm2488, 1, 0
      %v2617 = vsel %vm2489, 1, 0
      %v2618 = vsel %vm2490, 1, 0
      %v2619 = vsel %vm2491, 1, 0
      %v2620 = vsel %vm2492, 1, 0
      %v2621 = vsel %vm2493, 1, 0
      %v2622 = vsel %vm2494, 1, 0
      %v2623 = vsel %vm2495, 1, 0
      %v2624 = vsel %vm2496, 1, 0
      %v2625 = vsel %vm2497, 1, 0
      %v2626 = vsel %vm2498, 1, 0
      %v2627 = vsel %vm2499, 1, 0
      %v2628 = vsel %vm2500, 1, 0
      %v2629 = vsel %vm2501, 1, 0
      %v2630 = vsel %vm2502, 1, 0
      %v2631 = vsel %vm2503, 1, 0
      %v2632 = vsel %vm2504, 1, 0
      %v2633 = vsel %vm2505, 1, 0
      %v2634 = vsel %vm2506, 1, 0
      %v2635 = vsel %vm2507, 1, 0
      %v2636 = vsel %vm2508, 1, 0
      %v2637 = vsel %vm2509, 1, 0
      %v2638 = vsel %vm2510, 1, 0
      %v2639 = vsel %vm2511, 1, 0
      %v2640 = vsel %vm2512, 1, 0
      %v2641 = vsel %vm2513, 1, 0
      %v2642 = vsel %vm2514, 1, 0
      %v2643 = vsel %vm2515, 1, 0
      %v2644 = vsel %vm2516, 1, 0
      %v2645 = vsel %vm2517, 1, 0
      %v2646 = vsel %vm2518, 1, 0
      %v2647 = vsel %vm2519, 1, 0
      %v2648 = vsel %vm2520, 1, 0
      %v2649 = vsel %vm2521, 1, 0
      %v2650 = vsel %vm2522, 1, 0
      %v2651 = vsel %vm2523, 1, 0
      %v2652 = vsel %vm2524, 1, 0
      %v2653 = vsel %vm2525, 1, 0
      %v2654 = vsel %vm2526, 1, 0
      %v2655 = vsel %vm2527, 1, 0
      %v2656 = vsel %vm2528, 1, 0
      %v2657 = vsel %vm2529, 1, 0
      %v2658 = vsel %vm2530, 1, 0
      %v2659 = vsel %vm2531, 1, 0
      %v2660 = vsel %vm2532, 1, 0
      %v2661 = vsel %vm2533, 1, 0
      %v2662 = vsel %vm2534, 1, 0
      %v2663 = vsel %vm2535, 1, 0
      %v2664 = vsel %vm2536, 1, 0
      %v2665 = vsel %vm2537, 1, 0
      %v2666 = vsel %vm2538, 1, 0
      %v2667 = vsel %vm2539, 1, 0
      %v2668 = vsel %vm2540, 1, 0
      %v2669 = vsel %vm2541, 1, 0
      %v2670 = vsel %vm2542, 1, 0
      %v2671 = vsel %vm2543, 1, 0
      %v2672 = vsel %vm2544, 1, 0
      %v2673 = vsel %vm2545, 1, 0
      %v2674 = vsel %vm2546, 1, 0
      %v2675 = vsel %vm2547, 1, 0
      %v2676 = vsel %vm2548, 1, 0
      %v2677 = vsel %vm2549, 1, 0
      %v2678 = vsel %vm2550, 1, 0
      %v2679 = vsel %vm2551, 1, 0
      %v2680 = vsel %vm2552, 1, 0
      %v2681 = vsel %vm2553, 1, 0
      %v2682 = vsel %vm2554, 1, 0
      %v2683 = vsel %vm2555, 1, 0
      %v2684 = vsel %vm2556, 1, 0
      %v2685 = vsel %vm2557, 1, 0
      %v2686 = vsel %vm2558, 1, 0
      %v2687 = vsel %vm2559, 1, 0
      %v2688 = vsel %vm2560, 1, 0
      %v2689 = vsel %vm2561, 1, 0
      %v2690 = vsel %vm2562, 1, 0
      %v2691 = vsel %vm2563, 1, 0
      %v2692 = vsel %vm2564, 1, 0
      %v2693 = vsel %vm2565, 1, 0
      %v2694 = vsel %vm2566, 1, 0
      %v2695 = vsel %vm2567, 1, 0
      %v2696 = vsel %vm2568, 1, 0
      %v2697 = vsel %vm2569, 1, 0
      %v2698 = vsel %vm2570, 1, 0
      %v2699 = vsel %vm2571, 1, 0
      %v2700 = vsel %vm2572, 1, 0
      %v2701 = vsel %vm2573, 1, 0
      %v2702 = vsel %vm2574, 1, 0
      %v2703 = vsel %vm2575, 1, 0
      %v2704 = vsel %vm2576, 1, 0
      %v2705 = vsel %vm2577, 1, 0
      %v2706 = vsel %vm2578, 1, 0
      %v2707 = vsel %vm2579, 1, 0
      %v2708 = vsel %vm2580, 1, 0
      %v2709 = vsel %vm2581, 1, 0
      %v2710 = vsel %vm2582, 1, 0
      %v2711 = vsel %vm2583, 1, 0
      %v2712 = vsel %vm2584, 1, 0
      %v2713 = vsel %vm2585, 1, 0
      %v2714 = vsel %vm2586, 1, 0
      %v2715 = vsel %vm2587, 1, 0
      %v2716 = vsel %vm2588, 1, 0
      %v2717 = vsel %vm2589, 1, 0
      %v2718 = vsel %vm2590, 1, 0
      %v2719 = vsel %vm2591, 1, 0
      %v2720 = vsel %vm2592, 1, 0
      %v2721 = vsel %vm2593, 1, 0
      %v2722 = vsel %vm2594, 1, 0
      %v2723 = vsel %vm2595, 1, 0
      %v2724 = vsel %vm2596, 1, 0
      %v2725 = vsel %vm2597, 1, 0
      %v2726 = vcvt.s32.f32 %v2598
      %v2727 = vcvt.s32.f32 %v2599
      %v2728 = vcvt.s32.f32 %v2600
      %v2729 = vcvt.s32.f32 %v2601
      %v2730 = vcvt.s32.f32 %v2602
      %v2731 = vcvt.s32.f32 %v2603
      %v2732 = vcvt.s32.f32 %v2604
      %v2733 = vcvt.s32.f32 %v2605
      %v2734 = vcvt.s32.f32 %v2606
      %v2735 = vcvt.s32.f32 %v2607
      %v2736 = vcvt.s32.f32 %v2608
      %v2737 = vcvt.s32.f32 %v2609
      %v2738 = vcvt.s32.f32 %v2610
      %v2739 = vcvt.s32.f32 %v2611
      %v2740 = vcvt.s32.f32 %v2612
      %v2741 = vcvt.s32.f32 %v2613
      %v2742 = vcvt.s32.f32 %v2614
      %v2743 = vcvt.s32.f32 %v2615
      %v2744 = vcvt.s32.f32 %v2616
      %v2745 = vcvt.s32.f32 %v2617
      %v2746 = vcvt.s32.f32 %v2618
      %v2747 = vcvt.s32.f32 %v2619
      %v2748 = vcvt.s32.f32 %v2620
      %v2749 = vcvt.s32.f32 %v2621
      %v2750 = vcvt.s32.f32 %v2622
      %v2751 = vcvt.s32.f32 %v2623
      %v2752 = vcvt.s32.f32 %v2624
      %v2753 = vcvt.s32.f32 %v2625
      %v2754 = vcvt.s32.f32 %v2626
      %v2755 = vcvt.s32.f32 %v2627
      %v2756 = vcvt.s32.f32 %v2628
      %v2757 = vcvt.s32.f32 %v2629
      %v2758 = vcvt.s32.f32 %v2630
      %v2759 = vcvt.s32.f32 %v2631
      %v2760 = vcvt.s32.f32 %v2632
      %v2761 = vcvt.s32.f32 %v2633
      %v2762 = vcvt.s32.f32 %v2634
      %v2763 = vcvt.s32.f32 %v2635
      %v2764 = vcvt.s32.f32 %v2636
      %v2765 = vcvt.s32.f32 %v2637
      %v2766 = vcvt.s32.f32 %v2638
      %v2767 = vcvt.s32.f32 %v2639
      %v2768 = vcvt.s32.f32 %v2640
      %v2769 = vcvt.s32.f32 %v2641
      %v2770 = vcvt.s32.f32 %v2642
      %v2771 = vcvt.s32.f32 %v2643
      %v2772 = vcvt.s32.f32 %v2644
      %v2773 = vcvt.s32.f32 %v2645
      %v2774 = vcvt.s32.f32 %v2646
      %v2775 = vcvt.s32.f32 %v2647
      %v2776 = vcvt.s32.f32 %v2648
      %v2777 = vcvt.s32.f32 %v2649
      %v2778 = vcvt.s32.f32 %v2650
      %v2779 = vcvt.s32.f32 %v2651
      %v2780 = vcvt.s32.f32 %v2652
      %v2781 = vcvt.s32.f32 %v2653
      %v2782 = vcvt.s32.f32 %v2654
      %v2783 = vcvt.s32.f32 %v2655
      %v2784 = vcvt.s32.f32 %v2656
      %v2785 = vcvt.s32.f32 %v2657
      %v2786 = vcvt.s32.f32 %v2658
      %v2787 = vcvt.s32.f32 %v2659
      %v2788 = vcvt.s32.f32 %v2660
      %v2789 = vcvt.s32.f32 %v2661
      %v2790 = vcvt.s32.f32 %v2662
      %v2791 = vcvt.s32.f32 %v2663
      %v2792 = vcvt.s32.f32 %v2664
      %v2793 = vcvt.s32.f32 %v2665
      %v2794 = vcvt.s32.f32 %v2666
      %v2795 = vcvt.s32.f32 %v2667
      %v2796 = vcvt.s32.f32 %v2668
      %v2797 = vcvt.s32.f32 %v2669
      %v2798 = vcvt.s32.f32 %v2670
      %v2799 = vcvt.s32.f32 %v2671
      %v2800 = vcvt.s32.f32 %v2672
      %v2801 = vcvt.s32.f32 %v2673
      %v2802 = vcvt.s32.f32 %v2674
      %v2803 = vcvt.s32.f32 %v2675
      %v2804 = vcvt.s32.f32 %v2676
      %v2805 = vcvt.s32.f32 %v2677
      %v2806 = vcvt.s32.f32 %v2678
      %v2807 = vcvt.s32.f32 %v2679
      %v2808 = vcvt.s32.f32 %v2680
      %v2809 = vcvt.s32.f32 %v2681
      %v2810 = vcvt.s32.f32 %v2682
      %v2811 = vcvt.s32.f32 %v2683
      %v2812 = vcvt.s32.f32 %v2684
      %v2813 = vcvt.s32.f32 %v2685
      %v2814 = vcvt.s32.f32 %v2686
      %v2815 = vcvt.s32.f32 %v2687
      %v2816 = vcvt.s32.f32 %v2688
      %v2817 = vcvt.s32.f32 %v2689
      %v2818 = vcvt.s32.f32 %v2690
      %v2819 = vcvt.s32.f32 %v2691
      %v2820 = vcvt.s32.f32 %v2692
      %v2821 = vcvt.s32.f32 %v2693
      %v2822 = vcvt.s32.f32 %v2694
      %v2823 = vcvt.s32.f32 %v2695
      %v2824 = vcvt.s32.f32 %v2696
      %v2825 = vcvt.s32.f32 %v2697
      %v2826 = vcvt.s32.f32 %v2698
      %v2827 = vcvt.s32.f32 %v2699
      %v2828 = vcvt.s32.f32 %v2700
      %v2829 = vcvt.s32.f32 %v2701
      %v2830 = vcvt.s32.f32 %v2702
      %v2831 = vcvt.s32.f32 %v2703
      %v2832 = vcvt.s32.f32 %v2704
      %v2833 = vcvt.s32.f32 %v2705
      %v2834 = vcvt.s32.f32 %v2706
      %v2835 = vcvt.s32.f32 %v2707
      %v2836 = vcvt.s32.f32 %v2708
      %v2837 = vcvt.s32.f32 %v2709
      %v2838 = vcvt.s32.f32 %v2710
      %v2839 = vcvt.s32.f32 %v2711
      %v2840 = vcvt.s32.f32 %v2712
      %v2841 = vcvt.s32.f32 %v2713
      %v2842 = vcvt.s32.f32 %v2714
      %v2843 = vcvt.s32.f32 %v2715
      %v2844 = vcvt.s32.f32 %v2716
      %v2845 = vcvt.s32.f32 %v2717
      %v2846 = vcvt.s32.f32 %v2718
      %v2847 = vcvt.s32.f32 %v2719
      %v2848 = vcvt.s32.f32 %v2720
      %v2849 = vcvt.s32.f32 %v2721
      %v2850 = vcvt.s32.f32 %v2722
      %v2851 = vcvt.s32.f32 %v2723
      %v2852 = vcvt.s32.f32 %v2724
      %v2853 = vcvt.s32.f32 %v2725
      %v2854 = vadd.f32 %v1260, 1e-12
      %v2855 = vadd.f32 %v1263, 1e-12
      %v2856 = vadd.f32 %v1266, 1e-12
      %v2857 = vadd.f32 %v1269, 1e-12
      %v2858 = vadd.f32 %v1272, 1e-12
      %v2859 = vadd.f32 %v1275, 1e-12
      %v2860 = vadd.f32 %v1278, 1e-12
      %v2861 = vadd.f32 %v1281, 1e-12
      %v2862 = vadd.f32 %v1284, 1e-12
      %v2863 = vadd.f32 %v1287, 1e-12
      %v2864 = vadd.f32 %v1290, 1e-12
      %v2865 = vadd.f32 %v1293, 1e-12
      %v2866 = vadd.f32 %v1296, 1e-12
      %v2867 = vadd.f32 %v1299, 1e-12
      %v2868 = vadd.f32 %v1302, 1e-12
      %v2869 = vadd.f32 %v1305, 1e-12
      %v2870 = vadd.f32 %v1308, 1e-12
      %v2871 = vadd.f32 %v1311, 1e-12
      %v2872 = vadd.f32 %v1314, 1e-12
      %v2873 = vadd.f32 %v1317, 1e-12
      %v2874 = vadd.f32 %v1320, 1e-12
      %v2875 = vadd.f32 %v1323, 1e-12
      %v2876 = vadd.f32 %v1326, 1e-12
      %v2877 = vadd.f32 %v1329, 1e-12
      %v2878 = vadd.f32 %v1332, 1e-12
      %v2879 = vadd.f32 %v1335, 1e-12
      %v2880 = vadd.f32 %v1338, 1e-12
      %v2881 = vadd.f32 %v1341, 1e-12
      %v2882 = vadd.f32 %v1344, 1e-12
      %v2883 = vadd.f32 %v1347, 1e-12
      %v2884 = vadd.f32 %v1350, 1e-12
      %v2885 = vadd.f32 %v1353, 1e-12
      %v2886 = vadd.f32 %v1356, 1e-12
      %v2887 = vadd.f32 %v1359, 1e-12
      %v2888 = vadd.f32 %v1362, 1e-12
      %v2889 = vadd.f32 %v1365, 1e-12
      %v2890 = vadd.f32 %v1368, 1e-12
      %v2891 = vadd.f32 %v1371, 1e-12
      %v2892 = vadd.f32 %v1374, 1e-12
      %v2893 = vadd.f32 %v1377, 1e-12
      %v2894 = vadd.f32 %v1380, 1e-12
      %v2895 = vadd.f32 %v1383, 1e-12
      %v2896 = vadd.f32 %v1386, 1e-12
      %v2897 = vadd.f32 %v1389, 1e-12
      %v2898 = vadd.f32 %v1392, 1e-12
      %v2899 = vadd.f32 %v1395, 1e-12
      %v2900 = vadd.f32 %v1398, 1e-12
      %v2901 = vadd.f32 %v1401, 1e-12
      %v2902 = vadd.f32 %v1404, 1e-12
      %v2903 = vadd.f32 %v1407, 1e-12
      %v2904 = vadd.f32 %v1410, 1e-12
      %v2905 = vadd.f32 %v1413, 1e-12
      %v2906 = vadd.f32 %v1416, 1e-12
      %v2907 = vadd.f32 %v1419, 1e-12
      %v2908 = vadd.f32 %v1422, 1e-12
      %v2909 = vadd.f32 %v1425, 1e-12
      %v2910 = vadd.f32 %v1428, 1e-12
      %v2911 = vadd.f32 %v1431, 1e-12
      %v2912 = vadd.f32 %v1434, 1e-12
      %v2913 = vadd.f32 %v1437, 1e-12
      %v2914 = vadd.f32 %v1440, 1e-12
      %v2915 = vadd.f32 %v1443, 1e-12
      %v2916 = vadd.f32 %v1446, 1e-12
      %v2917 = vadd.f32 %v1449, 1e-12
      %v2918 = vadd.f32 %v1452, 1e-12
      %v2919 = vadd.f32 %v1455, 1e-12
      %v2920 = vadd.f32 %v1458, 1e-12
      %v2921 = vadd.f32 %v1461, 1e-12
      %v2922 = vadd.f32 %v1464, 1e-12
      %v2923 = vadd.f32 %v1467, 1e-12
      %v2924 = vadd.f32 %v1470, 1e-12
      %v2925 = vadd.f32 %v1473, 1e-12
      %v2926 = vadd.f32 %v1476, 1e-12
      %v2927 = vadd.f32 %v1479, 1e-12
      %v2928 = vadd.f32 %v1482, 1e-12
      %v2929 = vadd.f32 %v1485, 1e-12
      %v2930 = vadd.f32 %v1488, 1e-12
      %v2931 = vadd.f32 %v1491, 1e-12
      %v2932 = vadd.f32 %v1494, 1e-12
      %v2933 = vadd.f32 %v1497, 1e-12
      %v2934 = vadd.f32 %v1500, 1e-12
      %v2935 = vadd.f32 %v1503, 1e-12
      %v2936 = vadd.f32 %v1506, 1e-12
      %v2937 = vadd.f32 %v1509, 1e-12
      %v2938 = vadd.f32 %v1512, 1e-12
      %v2939 = vadd.f32 %v1515, 1e-12
      %v2940 = vadd.f32 %v1518, 1e-12
      %v2941 = vadd.f32 %v1521, 1e-12
      %v2942 = vadd.f32 %v1524, 1e-12
      %v2943 = vadd.f32 %v1527, 1e-12
      %v2944 = vadd.f32 %v1530, 1e-12
      %v2945 = vadd.f32 %v1533, 1e-12
      %v2946 = vadd.f32 %v1536, 1e-12
      %v2947 = vadd.f32 %v1539, 1e-12
      %v2948 = vadd.f32 %v1542, 1e-12
      %v2949 = vadd.f32 %v1545, 1e-12
      %v2950 = vadd.f32 %v1548, 1e-12
      %v2951 = vadd.f32 %v1551, 1e-12
      %v2952 = vadd.f32 %v1554, 1e-12
      %v2953 = vadd.f32 %v1557, 1e-12
      %v2954 = vadd.f32 %v1560, 1e-12
      %v2955 = vadd.f32 %v1563, 1e-12
      %v2956 = vadd.f32 %v1566, 1e-12
      %v2957 = vadd.f32 %v1569, 1e-12
      %v2958 = vadd.f32 %v1572, 1e-12
      %v2959 = vadd.f32 %v1575, 1e-12
      %v2960 = vadd.f32 %v1578, 1e-12
      %v2961 = vadd.f32 %v1581, 1e-12
      %v2962 = vadd.f32 %v1584, 1e-12
      %v2963 = vadd.f32 %v1587, 1e-12
      %v2964 = vadd.f32 %v1590, 1e-12
      %v2965 = vadd.f32 %v1593, 1e-12
      %v2966 = vadd.f32 %v1596, 1e-12
      %v2967 = vadd.f32 %v1599, 1e-12
      %v2968 = vadd.f32 %v1602, 1e-12
      %v2969 = vadd.f32 %v1605, 1e-12
      %v2970 = vadd.f32 %v1608, 1e-12
      %v2971 = vadd.f32 %v1611, 1e-12
      %v2972 = vadd.f32 %v1614, 1e-12
      %v2973 = vadd.f32 %v1617, 1e-12
      %v2974 = vadd.f32 %v1620, 1e-12
      %v2975 = vadd.f32 %v1623, 1e-12
      %v2976 = vadd.f32 %v1626, 1e-12
      %v2977 = vadd.f32 %v1629, 1e-12
      %v2978 = vadd.f32 %v1632, 1e-12
      %v2979 = vadd.f32 %v1635, 1e-12
      %v2980 = vadd.f32 %v1638, 1e-12
      %v2981 = vadd.f32 %v1641, 1e-12
      %v2982 = vrsqrt.pop %v2854
      %v2983 = vmul.f32 %v2854, %v2982
      %vm2984 = vcmp.eq.f32.partialorder %v2854, inf
      %v2985 = vsel %vm2984, %v2854, %v2983
      %vm2986 = vcmp.eq.f32.partialorder %v2854, 0.0
      %v2987 = vand.u32 %v2854, 2147483648
      %v2988 = vsel %vm2986, %v2987, %v2985
      %v2989 = vrsqrt.pop %v2855
      %v2990 = vmul.f32 %v2855, %v2989
      %vm2991 = vcmp.eq.f32.partialorder %v2855, inf
      %v2992 = vsel %vm2991, %v2855, %v2990
      %vm2993 = vcmp.eq.f32.partialorder %v2855, 0.0
      %v2994 = vand.u32 %v2855, 2147483648
      %v2995 = vsel %vm2993, %v2994, %v2992
      %v2996 = vrsqrt.pop %v2856
      %v2997 = vmul.f32 %v2856, %v2996
      %vm2998 = vcmp.eq.f32.partialorder %v2856, inf
      %v2999 = vsel %vm2998, %v2856, %v2997
      %vm3000 = vcmp.eq.f32.partialorder %v2856, 0.0
      %v3001 = vand.u32 %v2856, 2147483648
      %v3002 = vsel %vm3000, %v3001, %v2999
      %v3003 = vrsqrt.pop %v2857
      %v3004 = vmul.f32 %v2857, %v3003
      %vm3005 = vcmp.eq.f32.partialorder %v2857, inf
      %v3006 = vsel %vm3005, %v2857, %v3004
      %vm3007 = vcmp.eq.f32.partialorder %v2857, 0.0
      %v3008 = vand.u32 %v2857, 2147483648
      %v3009 = vsel %vm3007, %v3008, %v3006
      %v3010 = vrsqrt.pop %v2858
      %v3011 = vmul.f32 %v2858, %v3010
      %vm3012 = vcmp.eq.f32.partialorder %v2858, inf
      %v3013 = vsel %vm3012, %v2858, %v3011
      %vm3014 = vcmp.eq.f32.partialorder %v2858, 0.0
      %v3015 = vand.u32 %v2858, 2147483648
      %v3016 = vsel %vm3014, %v3015, %v3013
      %v3017 = vrsqrt.pop %v2859
      %v3018 = vmul.f32 %v2859, %v3017
      %vm3019 = vcmp.eq.f32.partialorder %v2859, inf
      %v3020 = vsel %vm3019, %v2859, %v3018
      %vm3021 = vcmp.eq.f32.partialorder %v2859, 0.0
      %v3022 = vand.u32 %v2859, 2147483648
      %v3023 = vsel %vm3021, %v3022, %v3020
      %v3024 = vrsqrt.pop %v2860
      %v3025 = vmul.f32 %v2860, %v3024
      %vm3026 = vcmp.eq.f32.partialorder %v2860, inf
      %v3027 = vsel %vm3026, %v2860, %v3025
      %vm3028 = vcmp.eq.f32.partialorder %v2860, 0.0
      %v3029 = vand.u32 %v2860, 2147483648
      %v3030 = vsel %vm3028, %v3029, %v3027
      %v3031 = vrsqrt.pop %v2861
      %v3032 = vmul.f32 %v2861, %v3031
      %vm3033 = vcmp.eq.f32.partialorder %v2861, inf
      %v3034 = vsel %vm3033, %v2861, %v3032
      %vm3035 = vcmp.eq.f32.partialorder %v2861, 0.0
      %v3036 = vand.u32 %v2861, 2147483648
      %v3037 = vsel %vm3035, %v3036, %v3034
      %v3038 = vrsqrt.pop %v2862
      %v3039 = vmul.f32 %v2862, %v3038
      %vm3040 = vcmp.eq.f32.partialorder %v2862, inf
      %v3041 = vsel %vm3040, %v2862, %v3039
      %vm3042 = vcmp.eq.f32.partialorder %v2862, 0.0
      %v3043 = vand.u32 %v2862, 2147483648
      %v3044 = vsel %vm3042, %v3043, %v3041
      %v3045 = vrsqrt.pop %v2863
      %v3046 = vmul.f32 %v2863, %v3045
      %vm3047 = vcmp.eq.f32.partialorder %v2863, inf
      %v3048 = vsel %vm3047, %v2863, %v3046
      %vm3049 = vcmp.eq.f32.partialorder %v2863, 0.0
      %v3050 = vand.u32 %v2863, 2147483648
      %v3051 = vsel %vm3049, %v3050, %v3048
      %v3052 = vrsqrt.pop %v2864
      %v3053 = vmul.f32 %v2864, %v3052
      %vm3054 = vcmp.eq.f32.partialorder %v2864, inf
      %v3055 = vsel %vm3054, %v2864, %v3053
      %vm3056 = vcmp.eq.f32.partialorder %v2864, 0.0
      %v3057 = vand.u32 %v2864, 2147483648
      %v3058 = vsel %vm3056, %v3057, %v3055
      %v3059 = vrsqrt.pop %v2865
      %v3060 = vmul.f32 %v2865, %v3059
      %vm3061 = vcmp.eq.f32.partialorder %v2865, inf
      %v3062 = vsel %vm3061, %v2865, %v3060
      %vm3063 = vcmp.eq.f32.partialorder %v2865, 0.0
      %v3064 = vand.u32 %v2865, 2147483648
      %v3065 = vsel %vm3063, %v3064, %v3062
      %v3066 = vrsqrt.pop %v2866
      %v3067 = vmul.f32 %v2866, %v3066
      %vm3068 = vcmp.eq.f32.partialorder %v2866, inf
      %v3069 = vsel %vm3068, %v2866, %v3067
      %vm3070 = vcmp.eq.f32.partialorder %v2866, 0.0
      %v3071 = vand.u32 %v2866, 2147483648
      %v3072 = vsel %vm3070, %v3071, %v3069
      %v3073 = vrsqrt.pop %v2867
      %v3074 = vmul.f32 %v2867, %v3073
      %vm3075 = vcmp.eq.f32.partialorder %v2867, inf
      %v3076 = vsel %vm3075, %v2867, %v3074
      %vm3077 = vcmp.eq.f32.partialorder %v2867, 0.0
      %v3078 = vand.u32 %v2867, 2147483648
      %v3079 = vsel %vm3077, %v3078, %v3076
      %v3080 = vrsqrt.pop %v2868
      %v3081 = vmul.f32 %v2868, %v3080
      %vm3082 = vcmp.eq.f32.partialorder %v2868, inf
      %v3083 = vsel %vm3082, %v2868, %v3081
      %vm3084 = vcmp.eq.f32.partialorder %v2868, 0.0
      %v3085 = vand.u32 %v2868, 2147483648
      %v3086 = vsel %vm3084, %v3085, %v3083
      %v3087 = vrsqrt.pop %v2869
      %v3088 = vmul.f32 %v2869, %v3087
      %vm3089 = vcmp.eq.f32.partialorder %v2869, inf
      %v3090 = vsel %vm3089, %v2869, %v3088
      %vm3091 = vcmp.eq.f32.partialorder %v2869, 0.0
      %v3092 = vand.u32 %v2869, 2147483648
      %v3093 = vsel %vm3091, %v3092, %v3090
      %v3094 = vrsqrt.pop %v2870
      %v3095 = vmul.f32 %v2870, %v3094
      %vm3096 = vcmp.eq.f32.partialorder %v2870, inf
      %v3097 = vsel %vm3096, %v2870, %v3095
      %vm3098 = vcmp.eq.f32.partialorder %v2870, 0.0
      %v3099 = vand.u32 %v2870, 2147483648
      %v3100 = vsel %vm3098, %v3099, %v3097
      %v3101 = vrsqrt.pop %v2871
      %v3102 = vmul.f32 %v2871, %v3101
      %vm3103 = vcmp.eq.f32.partialorder %v2871, inf
      %v3104 = vsel %vm3103, %v2871, %v3102
      %vm3105 = vcmp.eq.f32.partialorder %v2871, 0.0
      %v3106 = vand.u32 %v2871, 2147483648
      %v3107 = vsel %vm3105, %v3106, %v3104
      %v3108 = vrsqrt.pop %v2872
      %v3109 = vmul.f32 %v2872, %v3108
      %vm3110 = vcmp.eq.f32.partialorder %v2872, inf
      %v3111 = vsel %vm3110, %v2872, %v3109
      %vm3112 = vcmp.eq.f32.partialorder %v2872, 0.0
      %v3113 = vand.u32 %v2872, 2147483648
      %v3114 = vsel %vm3112, %v3113, %v3111
      %v3115 = vrsqrt.pop %v2873
      %v3116 = vmul.f32 %v2873, %v3115
      %vm3117 = vcmp.eq.f32.partialorder %v2873, inf
      %v3118 = vsel %vm3117, %v2873, %v3116
      %vm3119 = vcmp.eq.f32.partialorder %v2873, 0.0
      %v3120 = vand.u32 %v2873, 2147483648
      %v3121 = vsel %vm3119, %v3120, %v3118
      %v3122 = vrsqrt.pop %v2874
      %v3123 = vmul.f32 %v2874, %v3122
      %vm3124 = vcmp.eq.f32.partialorder %v2874, inf
      %v3125 = vsel %vm3124, %v2874, %v3123
      %vm3126 = vcmp.eq.f32.partialorder %v2874, 0.0
      %v3127 = vand.u32 %v2874, 2147483648
      %v3128 = vsel %vm3126, %v3127, %v3125
      %v3129 = vrsqrt.pop %v2875
      %v3130 = vmul.f32 %v2875, %v3129
      %vm3131 = vcmp.eq.f32.partialorder %v2875, inf
      %v3132 = vsel %vm3131, %v2875, %v3130
      %vm3133 = vcmp.eq.f32.partialorder %v2875, 0.0
      %v3134 = vand.u32 %v2875, 2147483648
      %v3135 = vsel %vm3133, %v3134, %v3132
      %v3136 = vrsqrt.pop %v2876
      %v3137 = vmul.f32 %v2876, %v3136
      %vm3138 = vcmp.eq.f32.partialorder %v2876, inf
      %v3139 = vsel %vm3138, %v2876, %v3137
      %vm3140 = vcmp.eq.f32.partialorder %v2876, 0.0
      %v3141 = vand.u32 %v2876, 2147483648
      %v3142 = vsel %vm3140, %v3141, %v3139
      %v3143 = vrsqrt.pop %v2877
      %v3144 = vmul.f32 %v2877, %v3143
      %vm3145 = vcmp.eq.f32.partialorder %v2877, inf
      %v3146 = vsel %vm3145, %v2877, %v3144
      %vm3147 = vcmp.eq.f32.partialorder %v2877, 0.0
      %v3148 = vand.u32 %v2877, 2147483648
      %v3149 = vsel %vm3147, %v3148, %v3146
      %v3150 = vrsqrt.pop %v2878
      %v3151 = vmul.f32 %v2878, %v3150
      %vm3152 = vcmp.eq.f32.partialorder %v2878, inf
      %v3153 = vsel %vm3152, %v2878, %v3151
      %vm3154 = vcmp.eq.f32.partialorder %v2878, 0.0
      %v3155 = vand.u32 %v2878, 2147483648
      %v3156 = vsel %vm3154, %v3155, %v3153
      %v3157 = vrsqrt.pop %v2879
      %v3158 = vmul.f32 %v2879, %v3157
      %vm3159 = vcmp.eq.f32.partialorder %v2879, inf
      %v3160 = vsel %vm3159, %v2879, %v3158
      %vm3161 = vcmp.eq.f32.partialorder %v2879, 0.0
      %v3162 = vand.u32 %v2879, 2147483648
      %v3163 = vsel %vm3161, %v3162, %v3160
      %v3164 = vrsqrt.pop %v2880
      %v3165 = vmul.f32 %v2880, %v3164
      %vm3166 = vcmp.eq.f32.partialorder %v2880, inf
      %v3167 = vsel %vm3166, %v2880, %v3165
      %vm3168 = vcmp.eq.f32.partialorder %v2880, 0.0
      %v3169 = vand.u32 %v2880, 2147483648
      %v3170 = vsel %vm3168, %v3169, %v3167
      %v3171 = vrsqrt.pop %v2881
      %v3172 = vmul.f32 %v2881, %v3171
      %vm3173 = vcmp.eq.f32.partialorder %v2881, inf
      %v3174 = vsel %vm3173, %v2881, %v3172
      %vm3175 = vcmp.eq.f32.partialorder %v2881, 0.0
      %v3176 = vand.u32 %v2881, 2147483648
      %v3177 = vsel %vm3175, %v3176, %v3174
      %v3178 = vrsqrt.pop %v2882
      %v3179 = vmul.f32 %v2882, %v3178
      %vm3180 = vcmp.eq.f32.partialorder %v2882, inf
      %v3181 = vsel %vm3180, %v2882, %v3179
      %vm3182 = vcmp.eq.f32.partialorder %v2882, 0.0
      %v3183 = vand.u32 %v2882, 2147483648
      %v3184 = vsel %vm3182, %v3183, %v3181
      %v3185 = vrsqrt.pop %v2883
      %v3186 = vmul.f32 %v2883, %v3185
      %vm3187 = vcmp.eq.f32.partialorder %v2883, inf
      %v3188 = vsel %vm3187, %v2883, %v3186
      %vm3189 = vcmp.eq.f32.partialorder %v2883, 0.0
      %v3190 = vand.u32 %v2883, 2147483648
      %v3191 = vsel %vm3189, %v3190, %v3188
      %v3192 = vrsqrt.pop %v2884
      %v3193 = vmul.f32 %v2884, %v3192
      %vm3194 = vcmp.eq.f32.partialorder %v2884, inf
      %v3195 = vsel %vm3194, %v2884, %v3193
      %vm3196 = vcmp.eq.f32.partialorder %v2884, 0.0
      %v3197 = vand.u32 %v2884, 2147483648
      %v3198 = vsel %vm3196, %v3197, %v3195
      %v3199 = vrsqrt.pop %v2885
      %v3200 = vmul.f32 %v2885, %v3199
      %vm3201 = vcmp.eq.f32.partialorder %v2885, inf
      %v3202 = vsel %vm3201, %v2885, %v3200
      %vm3203 = vcmp.eq.f32.partialorder %v2885, 0.0
      %v3204 = vand.u32 %v2885, 2147483648
      %v3205 = vsel %vm3203, %v3204, %v3202
      %v3206 = vrsqrt.pop %v2886
      %v3207 = vmul.f32 %v2886, %v3206
      %vm3208 = vcmp.eq.f32.partialorder %v2886, inf
      %v3209 = vsel %vm3208, %v2886, %v3207
      %vm3210 = vcmp.eq.f32.partialorder %v2886, 0.0
      %v3211 = vand.u32 %v2886, 2147483648
      %v3212 = vsel %vm3210, %v3211, %v3209
      %v3213 = vrsqrt.pop %v2887
      %v3214 = vmul.f32 %v2887, %v3213
      %vm3215 = vcmp.eq.f32.partialorder %v2887, inf
      %v3216 = vsel %vm3215, %v2887, %v3214
      %vm3217 = vcmp.eq.f32.partialorder %v2887, 0.0
      %v3218 = vand.u32 %v2887, 2147483648
      %v3219 = vsel %vm3217, %v3218, %v3216
      %v3220 = vrsqrt.pop %v2888
      %v3221 = vmul.f32 %v2888, %v3220
      %vm3222 = vcmp.eq.f32.partialorder %v2888, inf
      %v3223 = vsel %vm3222, %v2888, %v3221
      %vm3224 = vcmp.eq.f32.partialorder %v2888, 0.0
      %v3225 = vand.u32 %v2888, 2147483648
      %v3226 = vsel %vm3224, %v3225, %v3223
      %v3227 = vrsqrt.pop %v2889
      %v3228 = vmul.f32 %v2889, %v3227
      %vm3229 = vcmp.eq.f32.partialorder %v2889, inf
      %v3230 = vsel %vm3229, %v2889, %v3228
      %vm3231 = vcmp.eq.f32.partialorder %v2889, 0.0
      %v3232 = vand.u32 %v2889, 2147483648
      %v3233 = vsel %vm3231, %v3232, %v3230
      %v3234 = vrsqrt.pop %v2890
      %v3235 = vmul.f32 %v2890, %v3234
      %vm3236 = vcmp.eq.f32.partialorder %v2890, inf
      %v3237 = vsel %vm3236, %v2890, %v3235
      %vm3238 = vcmp.eq.f32.partialorder %v2890, 0.0
      %v3239 = vand.u32 %v2890, 2147483648
      %v3240 = vsel %vm3238, %v3239, %v3237
      %v3241 = vrsqrt.pop %v2891
      %v3242 = vmul.f32 %v2891, %v3241
      %vm3243 = vcmp.eq.f32.partialorder %v2891, inf
      %v3244 = vsel %vm3243, %v2891, %v3242
      %vm3245 = vcmp.eq.f32.partialorder %v2891, 0.0
      %v3246 = vand.u32 %v2891, 2147483648
      %v3247 = vsel %vm3245, %v3246, %v3244
      %v3248 = vrsqrt.pop %v2892
      %v3249 = vmul.f32 %v2892, %v3248
      %vm3250 = vcmp.eq.f32.partialorder %v2892, inf
      %v3251 = vsel %vm3250, %v2892, %v3249
      %vm3252 = vcmp.eq.f32.partialorder %v2892, 0.0
      %v3253 = vand.u32 %v2892, 2147483648
      %v3254 = vsel %vm3252, %v3253, %v3251
      %v3255 = vrsqrt.pop %v2893
      %v3256 = vmul.f32 %v2893, %v3255
      %vm3257 = vcmp.eq.f32.partialorder %v2893, inf
      %v3258 = vsel %vm3257, %v2893, %v3256
      %vm3259 = vcmp.eq.f32.partialorder %v2893, 0.0
      %v3260 = vand.u32 %v2893, 2147483648
      %v3261 = vsel %vm3259, %v3260, %v3258
      %v3262 = vrsqrt.pop %v2894
      %v3263 = vmul.f32 %v2894, %v3262
      %vm3264 = vcmp.eq.f32.partialorder %v2894, inf
      %v3265 = vsel %vm3264, %v2894, %v3263
      %vm3266 = vcmp.eq.f32.partialorder %v2894, 0.0
      %v3267 = vand.u32 %v2894, 2147483648
      %v3268 = vsel %vm3266, %v3267, %v3265
      %v3269 = vrsqrt.pop %v2895
      %v3270 = vmul.f32 %v2895, %v3269
      %vm3271 = vcmp.eq.f32.partialorder %v2895, inf
      %v3272 = vsel %vm3271, %v2895, %v3270
      %vm3273 = vcmp.eq.f32.partialorder %v2895, 0.0
      %v3274 = vand.u32 %v2895, 2147483648
      %v3275 = vsel %vm3273, %v3274, %v3272
      %v3276 = vrsqrt.pop %v2896
      %v3277 = vmul.f32 %v2896, %v3276
      %vm3278 = vcmp.eq.f32.partialorder %v2896, inf
      %v3279 = vsel %vm3278, %v2896, %v3277
      %vm3280 = vcmp.eq.f32.partialorder %v2896, 0.0
      %v3281 = vand.u32 %v2896, 2147483648
      %v3282 = vsel %vm3280, %v3281, %v3279
      %v3283 = vrsqrt.pop %v2897
      %v3284 = vmul.f32 %v2897, %v3283
      %vm3285 = vcmp.eq.f32.partialorder %v2897, inf
      %v3286 = vsel %vm3285, %v2897, %v3284
      %vm3287 = vcmp.eq.f32.partialorder %v2897, 0.0
      %v3288 = vand.u32 %v2897, 2147483648
      %v3289 = vsel %vm3287, %v3288, %v3286
      %v3290 = vrsqrt.pop %v2898
      %v3291 = vmul.f32 %v2898, %v3290
      %vm3292 = vcmp.eq.f32.partialorder %v2898, inf
      %v3293 = vsel %vm3292, %v2898, %v3291
      %vm3294 = vcmp.eq.f32.partialorder %v2898, 0.0
      %v3295 = vand.u32 %v2898, 2147483648
      %v3296 = vsel %vm3294, %v3295, %v3293
      %v3297 = vrsqrt.pop %v2899
      %v3298 = vmul.f32 %v2899, %v3297
      %vm3299 = vcmp.eq.f32.partialorder %v2899, inf
      %v3300 = vsel %vm3299, %v2899, %v3298
      %vm3301 = vcmp.eq.f32.partialorder %v2899, 0.0
      %v3302 = vand.u32 %v2899, 2147483648
      %v3303 = vsel %vm3301, %v3302, %v3300
      %v3304 = vrsqrt.pop %v2900
      %v3305 = vmul.f32 %v2900, %v3304
      %vm3306 = vcmp.eq.f32.partialorder %v2900, inf
      %v3307 = vsel %vm3306, %v2900, %v3305
      %vm3308 = vcmp.eq.f32.partialorder %v2900, 0.0
      %v3309 = vand.u32 %v2900, 2147483648
      %v3310 = vsel %vm3308, %v3309, %v3307
      %v3311 = vrsqrt.pop %v2901
      %v3312 = vmul.f32 %v2901, %v3311
      %vm3313 = vcmp.eq.f32.partialorder %v2901, inf
      %v3314 = vsel %vm3313, %v2901, %v3312
      %vm3315 = vcmp.eq.f32.partialorder %v2901, 0.0
      %v3316 = vand.u32 %v2901, 2147483648
      %v3317 = vsel %vm3315, %v3316, %v3314
      %v3318 = vrsqrt.pop %v2902
      %v3319 = vmul.f32 %v2902, %v3318
      %vm3320 = vcmp.eq.f32.partialorder %v2902, inf
      %v3321 = vsel %vm3320, %v2902, %v3319
      %vm3322 = vcmp.eq.f32.partialorder %v2902, 0.0
      %v3323 = vand.u32 %v2902, 2147483648
      %v3324 = vsel %vm3322, %v3323, %v3321
      %v3325 = vrsqrt.pop %v2903
      %v3326 = vmul.f32 %v2903, %v3325
      %vm3327 = vcmp.eq.f32.partialorder %v2903, inf
      %v3328 = vsel %vm3327, %v2903, %v3326
      %vm3329 = vcmp.eq.f32.partialorder %v2903, 0.0
      %v3330 = vand.u32 %v2903, 2147483648
      %v3331 = vsel %vm3329, %v3330, %v3328
      %v3332 = vrsqrt.pop %v2904
      %v3333 = vmul.f32 %v2904, %v3332
      %vm3334 = vcmp.eq.f32.partialorder %v2904, inf
      %v3335 = vsel %vm3334, %v2904, %v3333
      %vm3336 = vcmp.eq.f32.partialorder %v2904, 0.0
      %v3337 = vand.u32 %v2904, 2147483648
      %v3338 = vsel %vm3336, %v3337, %v3335
      %v3339 = vrsqrt.pop %v2905
      %v3340 = vmul.f32 %v2905, %v3339
      %vm3341 = vcmp.eq.f32.partialorder %v2905, inf
      %v3342 = vsel %vm3341, %v2905, %v3340
      %vm3343 = vcmp.eq.f32.partialorder %v2905, 0.0
      %v3344 = vand.u32 %v2905, 2147483648
      %v3345 = vsel %vm3343, %v3344, %v3342
      %v3346 = vrsqrt.pop %v2906
      %v3347 = vmul.f32 %v2906, %v3346
      %vm3348 = vcmp.eq.f32.partialorder %v2906, inf
      %v3349 = vsel %vm3348, %v2906, %v3347
      %vm3350 = vcmp.eq.f32.partialorder %v2906, 0.0
      %v3351 = vand.u32 %v2906, 2147483648
      %v3352 = vsel %vm3350, %v3351, %v3349
      %v3353 = vrsqrt.pop %v2907
      %v3354 = vmul.f32 %v2907, %v3353
      %vm3355 = vcmp.eq.f32.partialorder %v2907, inf
      %v3356 = vsel %vm3355, %v2907, %v3354
      %vm3357 = vcmp.eq.f32.partialorder %v2907, 0.0
      %v3358 = vand.u32 %v2907, 2147483648
      %v3359 = vsel %vm3357, %v3358, %v3356
      %v3360 = vrsqrt.pop %v2908
      %v3361 = vmul.f32 %v2908, %v3360
      %vm3362 = vcmp.eq.f32.partialorder %v2908, inf
      %v3363 = vsel %vm3362, %v2908, %v3361
      %vm3364 = vcmp.eq.f32.partialorder %v2908, 0.0
      %v3365 = vand.u32 %v2908, 2147483648
      %v3366 = vsel %vm3364, %v3365, %v3363
      %v3367 = vrsqrt.pop %v2909
      %v3368 = vmul.f32 %v2909, %v3367
      %vm3369 = vcmp.eq.f32.partialorder %v2909, inf
      %v3370 = vsel %vm3369, %v2909, %v3368
      %vm3371 = vcmp.eq.f32.partialorder %v2909, 0.0
      %v3372 = vand.u32 %v2909, 2147483648
      %v3373 = vsel %vm3371, %v3372, %v3370
      %v3374 = vrsqrt.pop %v2910
      %v3375 = vmul.f32 %v2910, %v3374
      %vm3376 = vcmp.eq.f32.partialorder %v2910, inf
      %v3377 = vsel %vm3376, %v2910, %v3375
      %vm3378 = vcmp.eq.f32.partialorder %v2910, 0.0
      %v3379 = vand.u32 %v2910, 2147483648
      %v3380 = vsel %vm3378, %v3379, %v3377
      %v3381 = vrsqrt.pop %v2911
      %v3382 = vmul.f32 %v2911, %v3381
      %vm3383 = vcmp.eq.f32.partialorder %v2911, inf
      %v3384 = vsel %vm3383, %v2911, %v3382
      %vm3385 = vcmp.eq.f32.partialorder %v2911, 0.0
      %v3386 = vand.u32 %v2911, 2147483648
      %v3387 = vsel %vm3385, %v3386, %v3384
      %v3388 = vrsqrt.pop %v2912
      %v3389 = vmul.f32 %v2912, %v3388
      %vm3390 = vcmp.eq.f32.partialorder %v2912, inf
      %v3391 = vsel %vm3390, %v2912, %v3389
      %vm3392 = vcmp.eq.f32.partialorder %v2912, 0.0
      %v3393 = vand.u32 %v2912, 2147483648
      %v3394 = vsel %vm3392, %v3393, %v3391
      %v3395 = vrsqrt.pop %v2913
      %v3396 = vmul.f32 %v2913, %v3395
      %vm3397 = vcmp.eq.f32.partialorder %v2913, inf
      %v3398 = vsel %vm3397, %v2913, %v3396
      %vm3399 = vcmp.eq.f32.partialorder %v2913, 0.0
      %v3400 = vand.u32 %v2913, 2147483648
      %v3401 = vsel %vm3399, %v3400, %v3398
      %v3402 = vrsqrt.pop %v2914
      %v3403 = vmul.f32 %v2914, %v3402
      %vm3404 = vcmp.eq.f32.partialorder %v2914, inf
      %v3405 = vsel %vm3404, %v2914, %v3403
      %vm3406 = vcmp.eq.f32.partialorder %v2914, 0.0
      %v3407 = vand.u32 %v2914, 2147483648
      %v3408 = vsel %vm3406, %v3407, %v3405
      %v3409 = vrsqrt.pop %v2915
      %v3410 = vmul.f32 %v2915, %v3409
      %vm3411 = vcmp.eq.f32.partialorder %v2915, inf
      %v3412 = vsel %vm3411, %v2915, %v3410
      %vm3413 = vcmp.eq.f32.partialorder %v2915, 0.0
      %v3414 = vand.u32 %v2915, 2147483648
      %v3415 = vsel %vm3413, %v3414, %v3412
      %v3416 = vrsqrt.pop %v2916
      %v3417 = vmul.f32 %v2916, %v3416
      %vm3418 = vcmp.eq.f32.partialorder %v2916, inf
      %v3419 = vsel %vm3418, %v2916, %v3417
      %vm3420 = vcmp.eq.f32.partialorder %v2916, 0.0
      %v3421 = vand.u32 %v2916, 2147483648
      %v3422 = vsel %vm3420, %v3421, %v3419
      %v3423 = vrsqrt.pop %v2917
      %v3424 = vmul.f32 %v2917, %v3423
      %vm3425 = vcmp.eq.f32.partialorder %v2917, inf
      %v3426 = vsel %vm3425, %v2917, %v3424
      %vm3427 = vcmp.eq.f32.partialorder %v2917, 0.0
      %v3428 = vand.u32 %v2917, 2147483648
      %v3429 = vsel %vm3427, %v3428, %v3426
      %v3430 = vrsqrt.pop %v2918
      %v3431 = vmul.f32 %v2918, %v3430
      %vm3432 = vcmp.eq.f32.partialorder %v2918, inf
      %v3433 = vsel %vm3432, %v2918, %v3431
      %vm3434 = vcmp.eq.f32.partialorder %v2918, 0.0
      %v3435 = vand.u32 %v2918, 2147483648
      %v3436 = vsel %vm3434, %v3435, %v3433
      %v3437 = vrsqrt.pop %v2919
      %v3438 = vmul.f32 %v2919, %v3437
      %vm3439 = vcmp.eq.f32.partialorder %v2919, inf
      %v3440 = vsel %vm3439, %v2919, %v3438
      %vm3441 = vcmp.eq.f32.partialorder %v2919, 0.0
      %v3442 = vand.u32 %v2919, 2147483648
      %v3443 = vsel %vm3441, %v3442, %v3440
      %v3444 = vrsqrt.pop %v2920
      %v3445 = vmul.f32 %v2920, %v3444
      %vm3446 = vcmp.eq.f32.partialorder %v2920, inf
      %v3447 = vsel %vm3446, %v2920, %v3445
      %vm3448 = vcmp.eq.f32.partialorder %v2920, 0.0
      %v3449 = vand.u32 %v2920, 2147483648
      %v3450 = vsel %vm3448, %v3449, %v3447
      %v3451 = vrsqrt.pop %v2921
      %v3452 = vmul.f32 %v2921, %v3451
      %vm3453 = vcmp.eq.f32.partialorder %v2921, inf
      %v3454 = vsel %vm3453, %v2921, %v3452
      %vm3455 = vcmp.eq.f32.partialorder %v2921, 0.0
      %v3456 = vand.u32 %v2921, 2147483648
      %v3457 = vsel %vm3455, %v3456, %v3454
      %v3458 = vrsqrt.pop %v2922
      %v3459 = vmul.f32 %v2922, %v3458
      %vm3460 = vcmp.eq.f32.partialorder %v2922, inf
      %v3461 = vsel %vm3460, %v2922, %v3459
      %vm3462 = vcmp.eq.f32.partialorder %v2922, 0.0
      %v3463 = vand.u32 %v2922, 2147483648
      %v3464 = vsel %vm3462, %v3463, %v3461
      %v3465 = vrsqrt.pop %v2923
      %v3466 = vmul.f32 %v2923, %v3465
      %vm3467 = vcmp.eq.f32.partialorder %v2923, inf
      %v3468 = vsel %vm3467, %v2923, %v3466
      %vm3469 = vcmp.eq.f32.partialorder %v2923, 0.0
      %v3470 = vand.u32 %v2923, 2147483648
      %v3471 = vsel %vm3469, %v3470, %v3468
      %v3472 = vrsqrt.pop %v2924
      %v3473 = vmul.f32 %v2924, %v3472
      %vm3474 = vcmp.eq.f32.partialorder %v2924, inf
      %v3475 = vsel %vm3474, %v2924, %v3473
      %vm3476 = vcmp.eq.f32.partialorder %v2924, 0.0
      %v3477 = vand.u32 %v2924, 2147483648
      %v3478 = vsel %vm3476, %v3477, %v3475
      %v3479 = vrsqrt.pop %v2925
      %v3480 = vmul.f32 %v2925, %v3479
      %vm3481 = vcmp.eq.f32.partialorder %v2925, inf
      %v3482 = vsel %vm3481, %v2925, %v3480
      %vm3483 = vcmp.eq.f32.partialorder %v2925, 0.0
      %v3484 = vand.u32 %v2925, 2147483648
      %v3485 = vsel %vm3483, %v3484, %v3482
      %v3486 = vrsqrt.pop %v2926
      %v3487 = vmul.f32 %v2926, %v3486
      %vm3488 = vcmp.eq.f32.partialorder %v2926, inf
      %v3489 = vsel %vm3488, %v2926, %v3487
      %vm3490 = vcmp.eq.f32.partialorder %v2926, 0.0
      %v3491 = vand.u32 %v2926, 2147483648
      %v3492 = vsel %vm3490, %v3491, %v3489
      %v3493 = vrsqrt.pop %v2927
      %v3494 = vmul.f32 %v2927, %v3493
      %vm3495 = vcmp.eq.f32.partialorder %v2927, inf
      %v3496 = vsel %vm3495, %v2927, %v3494
      %vm3497 = vcmp.eq.f32.partialorder %v2927, 0.0
      %v3498 = vand.u32 %v2927, 2147483648
      %v3499 = vsel %vm3497, %v3498, %v3496
      %v3500 = vrsqrt.pop %v2928
      %v3501 = vmul.f32 %v2928, %v3500
      %vm3502 = vcmp.eq.f32.partialorder %v2928, inf
      %v3503 = vsel %vm3502, %v2928, %v3501
      %vm3504 = vcmp.eq.f32.partialorder %v2928, 0.0
      %v3505 = vand.u32 %v2928, 2147483648
      %v3506 = vsel %vm3504, %v3505, %v3503
      %v3507 = vrsqrt.pop %v2929
      %v3508 = vmul.f32 %v2929, %v3507
      %vm3509 = vcmp.eq.f32.partialorder %v2929, inf
      %v3510 = vsel %vm3509, %v2929, %v3508
      %vm3511 = vcmp.eq.f32.partialorder %v2929, 0.0
      %v3512 = vand.u32 %v2929, 2147483648
      %v3513 = vsel %vm3511, %v3512, %v3510
      %v3514 = vrsqrt.pop %v2930
      %v3515 = vmul.f32 %v2930, %v3514
      %vm3516 = vcmp.eq.f32.partialorder %v2930, inf
      %v3517 = vsel %vm3516, %v2930, %v3515
      %vm3518 = vcmp.eq.f32.partialorder %v2930, 0.0
      %v3519 = vand.u32 %v2930, 2147483648
      %v3520 = vsel %vm3518, %v3519, %v3517
      %v3521 = vrsqrt.pop %v2931
      %v3522 = vmul.f32 %v2931, %v3521
      %vm3523 = vcmp.eq.f32.partialorder %v2931, inf
      %v3524 = vsel %vm3523, %v2931, %v3522
      %vm3525 = vcmp.eq.f32.partialorder %v2931, 0.0
      %v3526 = vand.u32 %v2931, 2147483648
      %v3527 = vsel %vm3525, %v3526, %v3524
      %v3528 = vrsqrt.pop %v2932
      %v3529 = vmul.f32 %v2932, %v3528
      %vm3530 = vcmp.eq.f32.partialorder %v2932, inf
      %v3531 = vsel %vm3530, %v2932, %v3529
      %vm3532 = vcmp.eq.f32.partialorder %v2932, 0.0
      %v3533 = vand.u32 %v2932, 2147483648
      %v3534 = vsel %vm3532, %v3533, %v3531
      %v3535 = vrsqrt.pop %v2933
      %v3536 = vmul.f32 %v2933, %v3535
      %vm3537 = vcmp.eq.f32.partialorder %v2933, inf
      %v3538 = vsel %vm3537, %v2933, %v3536
      %vm3539 = vcmp.eq.f32.partialorder %v2933, 0.0
      %v3540 = vand.u32 %v2933, 2147483648
      %v3541 = vsel %vm3539, %v3540, %v3538
      %v3542 = vrsqrt.pop %v2934
      %v3543 = vmul.f32 %v2934, %v3542
      %vm3544 = vcmp.eq.f32.partialorder %v2934, inf
      %v3545 = vsel %vm3544, %v2934, %v3543
      %vm3546 = vcmp.eq.f32.partialorder %v2934, 0.0
      %v3547 = vand.u32 %v2934, 2147483648
      %v3548 = vsel %vm3546, %v3547, %v3545
      %v3549 = vrsqrt.pop %v2935
      %v3550 = vmul.f32 %v2935, %v3549
      %vm3551 = vcmp.eq.f32.partialorder %v2935, inf
      %v3552 = vsel %vm3551, %v2935, %v3550
      %vm3553 = vcmp.eq.f32.partialorder %v2935, 0.0
      %v3554 = vand.u32 %v2935, 2147483648
      %v3555 = vsel %vm3553, %v3554, %v3552
      %v3556 = vrsqrt.pop %v2936
      %v3557 = vmul.f32 %v2936, %v3556
      %vm3558 = vcmp.eq.f32.partialorder %v2936, inf
      %v3559 = vsel %vm3558, %v2936, %v3557
      %vm3560 = vcmp.eq.f32.partialorder %v2936, 0.0
      %v3561 = vand.u32 %v2936, 2147483648
      %v3562 = vsel %vm3560, %v3561, %v3559
      %v3563 = vrsqrt.pop %v2937
      %v3564 = vmul.f32 %v2937, %v3563
      %vm3565 = vcmp.eq.f32.partialorder %v2937, inf
      %v3566 = vsel %vm3565, %v2937, %v3564
      %vm3567 = vcmp.eq.f32.partialorder %v2937, 0.0
      %v3568 = vand.u32 %v2937, 2147483648
      %v3569 = vsel %vm3567, %v3568, %v3566
      %v3570 = vrsqrt.pop %v2938
      %v3571 = vmul.f32 %v2938, %v3570
      %vm3572 = vcmp.eq.f32.partialorder %v2938, inf
      %v3573 = vsel %vm3572, %v2938, %v3571
      %vm3574 = vcmp.eq.f32.partialorder %v2938, 0.0
      %v3575 = vand.u32 %v2938, 2147483648
      %v3576 = vsel %vm3574, %v3575, %v3573
      %v3577 = vrsqrt.pop %v2939
      %v3578 = vmul.f32 %v2939, %v3577
      %vm3579 = vcmp.eq.f32.partialorder %v2939, inf
      %v3580 = vsel %vm3579, %v2939, %v3578
      %vm3581 = vcmp.eq.f32.partialorder %v2939, 0.0
      %v3582 = vand.u32 %v2939, 2147483648
      %v3583 = vsel %vm3581, %v3582, %v3580
      %v3584 = vrsqrt.pop %v2940
      %v3585 = vmul.f32 %v2940, %v3584
      %vm3586 = vcmp.eq.f32.partialorder %v2940, inf
      %v3587 = vsel %vm3586, %v2940, %v3585
      %vm3588 = vcmp.eq.f32.partialorder %v2940, 0.0
      %v3589 = vand.u32 %v2940, 2147483648
      %v3590 = vsel %vm3588, %v3589, %v3587
      %v3591 = vrsqrt.pop %v2941
      %v3592 = vmul.f32 %v2941, %v3591
      %vm3593 = vcmp.eq.f32.partialorder %v2941, inf
      %v3594 = vsel %vm3593, %v2941, %v3592
      %vm3595 = vcmp.eq.f32.partialorder %v2941, 0.0
      %v3596 = vand.u32 %v2941, 2147483648
      %v3597 = vsel %vm3595, %v3596, %v3594
      %v3598 = vrsqrt.pop %v2942
      %v3599 = vmul.f32 %v2942, %v3598
      %vm3600 = vcmp.eq.f32.partialorder %v2942, inf
      %v3601 = vsel %vm3600, %v2942, %v3599
      %vm3602 = vcmp.eq.f32.partialorder %v2942, 0.0
      %v3603 = vand.u32 %v2942, 2147483648
      %v3604 = vsel %vm3602, %v3603, %v3601
      %v3605 = vrsqrt.pop %v2943
      %v3606 = vmul.f32 %v2943, %v3605
      %vm3607 = vcmp.eq.f32.partialorder %v2943, inf
      %v3608 = vsel %vm3607, %v2943, %v3606
      %vm3609 = vcmp.eq.f32.partialorder %v2943, 0.0
      %v3610 = vand.u32 %v2943, 2147483648
      %v3611 = vsel %vm3609, %v3610, %v3608
      %v3612 = vrsqrt.pop %v2944
      %v3613 = vmul.f32 %v2944, %v3612
      %vm3614 = vcmp.eq.f32.partialorder %v2944, inf
      %v3615 = vsel %vm3614, %v2944, %v3613
      %vm3616 = vcmp.eq.f32.partialorder %v2944, 0.0
      %v3617 = vand.u32 %v2944, 2147483648
      %v3618 = vsel %vm3616, %v3617, %v3615
      %v3619 = vrsqrt.pop %v2945
      %v3620 = vmul.f32 %v2945, %v3619
      %vm3621 = vcmp.eq.f32.partialorder %v2945, inf
      %v3622 = vsel %vm3621, %v2945, %v3620
      %vm3623 = vcmp.eq.f32.partialorder %v2945, 0.0
      %v3624 = vand.u32 %v2945, 2147483648
      %v3625 = vsel %vm3623, %v3624, %v3622
      %v3626 = vrsqrt.pop %v2946
      %v3627 = vmul.f32 %v2946, %v3626
      %vm3628 = vcmp.eq.f32.partialorder %v2946, inf
      %v3629 = vsel %vm3628, %v2946, %v3627
      %vm3630 = vcmp.eq.f32.partialorder %v2946, 0.0
      %v3631 = vand.u32 %v2946, 2147483648
      %v3632 = vsel %vm3630, %v3631, %v3629
      %v3633 = vrsqrt.pop %v2947
      %v3634 = vmul.f32 %v2947, %v3633
      %vm3635 = vcmp.eq.f32.partialorder %v2947, inf
      %v3636 = vsel %vm3635, %v2947, %v3634
      %vm3637 = vcmp.eq.f32.partialorder %v2947, 0.0
      %v3638 = vand.u32 %v2947, 2147483648
      %v3639 = vsel %vm3637, %v3638, %v3636
      %v3640 = vrsqrt.pop %v2948
      %v3641 = vmul.f32 %v2948, %v3640
      %vm3642 = vcmp.eq.f32.partialorder %v2948, inf
      %v3643 = vsel %vm3642, %v2948, %v3641
      %vm3644 = vcmp.eq.f32.partialorder %v2948, 0.0
      %v3645 = vand.u32 %v2948, 2147483648
      %v3646 = vsel %vm3644, %v3645, %v3643
      %v3647 = vrsqrt.pop %v2949
      %v3648 = vmul.f32 %v2949, %v3647
      %vm3649 = vcmp.eq.f32.partialorder %v2949, inf
      %v3650 = vsel %vm3649, %v2949, %v3648
      %vm3651 = vcmp.eq.f32.partialorder %v2949, 0.0
      %v3652 = vand.u32 %v2949, 2147483648
      %v3653 = vsel %vm3651, %v3652, %v3650
      %v3654 = vrsqrt.pop %v2950
      %v3655 = vmul.f32 %v2950, %v3654
      %vm3656 = vcmp.eq.f32.partialorder %v2950, inf
      %v3657 = vsel %vm3656, %v2950, %v3655
      %vm3658 = vcmp.eq.f32.partialorder %v2950, 0.0
      %v3659 = vand.u32 %v2950, 2147483648
      %v3660 = vsel %vm3658, %v3659, %v3657
      %v3661 = vrsqrt.pop %v2951
      %v3662 = vmul.f32 %v2951, %v3661
      %vm3663 = vcmp.eq.f32.partialorder %v2951, inf
      %v3664 = vsel %vm3663, %v2951, %v3662
      %vm3665 = vcmp.eq.f32.partialorder %v2951, 0.0
      %v3666 = vand.u32 %v2951, 2147483648
      %v3667 = vsel %vm3665, %v3666, %v3664
      %v3668 = vrsqrt.pop %v2952
      %v3669 = vmul.f32 %v2952, %v3668
      %vm3670 = vcmp.eq.f32.partialorder %v2952, inf
      %v3671 = vsel %vm3670, %v2952, %v3669
      %vm3672 = vcmp.eq.f32.partialorder %v2952, 0.0
      %v3673 = vand.u32 %v2952, 2147483648
      %v3674 = vsel %vm3672, %v3673, %v3671
      %v3675 = vrsqrt.pop %v2953
      %v3676 = vmul.f32 %v2953, %v3675
      %vm3677 = vcmp.eq.f32.partialorder %v2953, inf
      %v3678 = vsel %vm3677, %v2953, %v3676
      %vm3679 = vcmp.eq.f32.partialorder %v2953, 0.0
      %v3680 = vand.u32 %v2953, 2147483648
      %v3681 = vsel %vm3679, %v3680, %v3678
      %v3682 = vrsqrt.pop %v2954
      %v3683 = vmul.f32 %v2954, %v3682
      %vm3684 = vcmp.eq.f32.partialorder %v2954, inf
      %v3685 = vsel %vm3684, %v2954, %v3683
      %vm3686 = vcmp.eq.f32.partialorder %v2954, 0.0
      %v3687 = vand.u32 %v2954, 2147483648
      %v3688 = vsel %vm3686, %v3687, %v3685
      %v3689 = vrsqrt.pop %v2955
      %v3690 = vmul.f32 %v2955, %v3689
      %vm3691 = vcmp.eq.f32.partialorder %v2955, inf
      %v3692 = vsel %vm3691, %v2955, %v3690
      %vm3693 = vcmp.eq.f32.partialorder %v2955, 0.0
      %v3694 = vand.u32 %v2955, 2147483648
      %v3695 = vsel %vm3693, %v3694, %v3692
      %v3696 = vrsqrt.pop %v2956
      %v3697 = vmul.f32 %v2956, %v3696
      %vm3698 = vcmp.eq.f32.partialorder %v2956, inf
      %v3699 = vsel %vm3698, %v2956, %v3697
      %vm3700 = vcmp.eq.f32.partialorder %v2956, 0.0
      %v3701 = vand.u32 %v2956, 2147483648
      %v3702 = vsel %vm3700, %v3701, %v3699
      %v3703 = vrsqrt.pop %v2957
      %v3704 = vmul.f32 %v2957, %v3703
      %vm3705 = vcmp.eq.f32.partialorder %v2957, inf
      %v3706 = vsel %vm3705, %v2957, %v3704
      %vm3707 = vcmp.eq.f32.partialorder %v2957, 0.0
      %v3708 = vand.u32 %v2957, 2147483648
      %v3709 = vsel %vm3707, %v3708, %v3706
      %v3710 = vrsqrt.pop %v2958
      %v3711 = vmul.f32 %v2958, %v3710
      %vm3712 = vcmp.eq.f32.partialorder %v2958, inf
      %v3713 = vsel %vm3712, %v2958, %v3711
      %vm3714 = vcmp.eq.f32.partialorder %v2958, 0.0
      %v3715 = vand.u32 %v2958, 2147483648
      %v3716 = vsel %vm3714, %v3715, %v3713
      %v3717 = vrsqrt.pop %v2959
      %v3718 = vmul.f32 %v2959, %v3717
      %vm3719 = vcmp.eq.f32.partialorder %v2959, inf
      %v3720 = vsel %vm3719, %v2959, %v3718
      %vm3721 = vcmp.eq.f32.partialorder %v2959, 0.0
      %v3722 = vand.u32 %v2959, 2147483648
      %v3723 = vsel %vm3721, %v3722, %v3720
      %v3724 = vrsqrt.pop %v2960
      %v3725 = vmul.f32 %v2960, %v3724
      %vm3726 = vcmp.eq.f32.partialorder %v2960, inf
      %v3727 = vsel %vm3726, %v2960, %v3725
      %vm3728 = vcmp.eq.f32.partialorder %v2960, 0.0
      %v3729 = vand.u32 %v2960, 2147483648
      %v3730 = vsel %vm3728, %v3729, %v3727
      %v3731 = vrsqrt.pop %v2961
      %v3732 = vmul.f32 %v2961, %v3731
      %vm3733 = vcmp.eq.f32.partialorder %v2961, inf
      %v3734 = vsel %vm3733, %v2961, %v3732
      %vm3735 = vcmp.eq.f32.partialorder %v2961, 0.0
      %v3736 = vand.u32 %v2961, 2147483648
      %v3737 = vsel %vm3735, %v3736, %v3734
      %v3738 = vrsqrt.pop %v2962
      %v3739 = vmul.f32 %v2962, %v3738
      %vm3740 = vcmp.eq.f32.partialorder %v2962, inf
      %v3741 = vsel %vm3740, %v2962, %v3739
      %vm3742 = vcmp.eq.f32.partialorder %v2962, 0.0
      %v3743 = vand.u32 %v2962, 2147483648
      %v3744 = vsel %vm3742, %v3743, %v3741
      %v3745 = vrsqrt.pop %v2963
      %v3746 = vmul.f32 %v2963, %v3745
      %vm3747 = vcmp.eq.f32.partialorder %v2963, inf
      %v3748 = vsel %vm3747, %v2963, %v3746
      %vm3749 = vcmp.eq.f32.partialorder %v2963, 0.0
      %v3750 = vand.u32 %v2963, 2147483648
      %v3751 = vsel %vm3749, %v3750, %v3748
      %v3752 = vrsqrt.pop %v2964
      %v3753 = vmul.f32 %v2964, %v3752
      %vm3754 = vcmp.eq.f32.partialorder %v2964, inf
      %v3755 = vsel %vm3754, %v2964, %v3753
      %vm3756 = vcmp.eq.f32.partialorder %v2964, 0.0
      %v3757 = vand.u32 %v2964, 2147483648
      %v3758 = vsel %vm3756, %v3757, %v3755
      %v3759 = vrsqrt.pop %v2965
      %v3760 = vmul.f32 %v2965, %v3759
      %vm3761 = vcmp.eq.f32.partialorder %v2965, inf
      %v3762 = vsel %vm3761, %v2965, %v3760
      %vm3763 = vcmp.eq.f32.partialorder %v2965, 0.0
      %v3764 = vand.u32 %v2965, 2147483648
      %v3765 = vsel %vm3763, %v3764, %v3762
      %v3766 = vrsqrt.pop %v2966
      %v3767 = vmul.f32 %v2966, %v3766
      %vm3768 = vcmp.eq.f32.partialorder %v2966, inf
      %v3769 = vsel %vm3768, %v2966, %v3767
      %vm3770 = vcmp.eq.f32.partialorder %v2966, 0.0
      %v3771 = vand.u32 %v2966, 2147483648
      %v3772 = vsel %vm3770, %v3771, %v3769
      %v3773 = vrsqrt.pop %v2967
      %v3774 = vmul.f32 %v2967, %v3773
      %vm3775 = vcmp.eq.f32.partialorder %v2967, inf
      %v3776 = vsel %vm3775, %v2967, %v3774
      %vm3777 = vcmp.eq.f32.partialorder %v2967, 0.0
      %v3778 = vand.u32 %v2967, 2147483648
      %v3779 = vsel %vm3777, %v3778, %v3776
      %v3780 = vrsqrt.pop %v2968
      %v3781 = vmul.f32 %v2968, %v3780
      %vm3782 = vcmp.eq.f32.partialorder %v2968, inf
      %v3783 = vsel %vm3782, %v2968, %v3781
      %vm3784 = vcmp.eq.f32.partialorder %v2968, 0.0
      %v3785 = vand.u32 %v2968, 2147483648
      %v3786 = vsel %vm3784, %v3785, %v3783
      %v3787 = vrsqrt.pop %v2969
      %v3788 = vmul.f32 %v2969, %v3787
      %vm3789 = vcmp.eq.f32.partialorder %v2969, inf
      %v3790 = vsel %vm3789, %v2969, %v3788
      %vm3791 = vcmp.eq.f32.partialorder %v2969, 0.0
      %v3792 = vand.u32 %v2969, 2147483648
      %v3793 = vsel %vm3791, %v3792, %v3790
      %v3794 = vrsqrt.pop %v2970
      %v3795 = vmul.f32 %v2970, %v3794
      %vm3796 = vcmp.eq.f32.partialorder %v2970, inf
      %v3797 = vsel %vm3796, %v2970, %v3795
      %vm3798 = vcmp.eq.f32.partialorder %v2970, 0.0
      %v3799 = vand.u32 %v2970, 2147483648
      %v3800 = vsel %vm3798, %v3799, %v3797
      %v3801 = vrsqrt.pop %v2971
      %v3802 = vmul.f32 %v2971, %v3801
      %vm3803 = vcmp.eq.f32.partialorder %v2971, inf
      %v3804 = vsel %vm3803, %v2971, %v3802
      %vm3805 = vcmp.eq.f32.partialorder %v2971, 0.0
      %v3806 = vand.u32 %v2971, 2147483648
      %v3807 = vsel %vm3805, %v3806, %v3804
      %v3808 = vrsqrt.pop %v2972
      %v3809 = vmul.f32 %v2972, %v3808
      %vm3810 = vcmp.eq.f32.partialorder %v2972, inf
      %v3811 = vsel %vm3810, %v2972, %v3809
      %vm3812 = vcmp.eq.f32.partialorder %v2972, 0.0
      %v3813 = vand.u32 %v2972, 2147483648
      %v3814 = vsel %vm3812, %v3813, %v3811
      %v3815 = vrsqrt.pop %v2973
      %v3816 = vmul.f32 %v2973, %v3815
      %vm3817 = vcmp.eq.f32.partialorder %v2973, inf
      %v3818 = vsel %vm3817, %v2973, %v3816
      %vm3819 = vcmp.eq.f32.partialorder %v2973, 0.0
      %v3820 = vand.u32 %v2973, 2147483648
      %v3821 = vsel %vm3819, %v3820, %v3818
      %v3822 = vrsqrt.pop %v2974
      %v3823 = vmul.f32 %v2974, %v3822
      %vm3824 = vcmp.eq.f32.partialorder %v2974, inf
      %v3825 = vsel %vm3824, %v2974, %v3823
      %vm3826 = vcmp.eq.f32.partialorder %v2974, 0.0
      %v3827 = vand.u32 %v2974, 2147483648
      %v3828 = vsel %vm3826, %v3827, %v3825
      %v3829 = vrsqrt.pop %v2975
      %v3830 = vmul.f32 %v2975, %v3829
      %vm3831 = vcmp.eq.f32.partialorder %v2975, inf
      %v3832 = vsel %vm3831, %v2975, %v3830
      %vm3833 = vcmp.eq.f32.partialorder %v2975, 0.0
      %v3834 = vand.u32 %v2975, 2147483648
      %v3835 = vsel %vm3833, %v3834, %v3832
      %v3836 = vrsqrt.pop %v2976
      %v3837 = vmul.f32 %v2976, %v3836
      %vm3838 = vcmp.eq.f32.partialorder %v2976, inf
      %v3839 = vsel %vm3838, %v2976, %v3837
      %vm3840 = vcmp.eq.f32.partialorder %v2976, 0.0
      %v3841 = vand.u32 %v2976, 2147483648
      %v3842 = vsel %vm3840, %v3841, %v3839
      %v3843 = vrsqrt.pop %v2977
      %v3844 = vmul.f32 %v2977, %v3843
      %vm3845 = vcmp.eq.f32.partialorder %v2977, inf
      %v3846 = vsel %vm3845, %v2977, %v3844
      %vm3847 = vcmp.eq.f32.partialorder %v2977, 0.0
      %v3848 = vand.u32 %v2977, 2147483648
      %v3849 = vsel %vm3847, %v3848, %v3846
      %v3850 = vrsqrt.pop %v2978
      %v3851 = vmul.f32 %v2978, %v3850
      %vm3852 = vcmp.eq.f32.partialorder %v2978, inf
      %v3853 = vsel %vm3852, %v2978, %v3851
      %vm3854 = vcmp.eq.f32.partialorder %v2978, 0.0
      %v3855 = vand.u32 %v2978, 2147483648
      %v3856 = vsel %vm3854, %v3855, %v3853
      %v3857 = vrsqrt.pop %v2979
      %v3858 = vmul.f32 %v2979, %v3857
      %vm3859 = vcmp.eq.f32.partialorder %v2979, inf
      %v3860 = vsel %vm3859, %v2979, %v3858
      %vm3861 = vcmp.eq.f32.partialorder %v2979, 0.0
      %v3862 = vand.u32 %v2979, 2147483648
      %v3863 = vsel %vm3861, %v3862, %v3860
      %v3864 = vrsqrt.pop %v2980
      %v3865 = vmul.f32 %v2980, %v3864
      %vm3866 = vcmp.eq.f32.partialorder %v2980, inf
      %v3867 = vsel %vm3866, %v2980, %v3865
      %vm3868 = vcmp.eq.f32.partialorder %v2980, 0.0
      %v3869 = vand.u32 %v2980, 2147483648
      %v3870 = vsel %vm3868, %v3869, %v3867
      %v3871 = vrsqrt.pop %v2981
      %v3872 = vmul.f32 %v2981, %v3871
      %vm3873 = vcmp.eq.f32.partialorder %v2981, inf
      %v3874 = vsel %vm3873, %v2981, %v3872
      %vm3875 = vcmp.eq.f32.partialorder %v2981, 0.0
      %v3876 = vand.u32 %v2981, 2147483648
      %v3877 = vsel %vm3875, %v3876, %v3874
      %vm3878 = vcmp.eq.s32.totalorder %v1643, 3
      %v3879 = vsel %vm3878, 1, 0
      %v3880 = vcvt.s32.f32 %v3879
      %vm3881 = vcmp.eq.s32.totalorder %v1643, 4
      %v3882 = vsel %vm3881, 1, 0
      %v3883 = vcvt.s32.f32 %v3882
      %v3884 = vmul.f32 %v2988, %v3880
      %v3885 = vmul.f32 %v2995, %v3880
      %v3886 = vmul.f32 %v3002, %v3880
      %v3887 = vmul.f32 %v3009, %v3880
      %v3888 = vmul.f32 %v3016, %v3880
      %v3889 = vmul.f32 %v3023, %v3880
      %v3890 = vmul.f32 %v3030, %v3880
      %v3891 = vmul.f32 %v3037, %v3880
      %v3892 = vmul.f32 %v3044, %v3880
      %v3893 = vmul.f32 %v3051, %v3880
      %v3894 = vmul.f32 %v3058, %v3880
      %v3895 = vmul.f32 %v3065, %v3880
      %v3896 = vmul.f32 %v3072, %v3880
      %v3897 = vmul.f32 %v3079, %v3880
      %v3898 = vmul.f32 %v3086, %v3880
      %v3899 = vmul.f32 %v3093, %v3880
      %v3900 = vmul.f32 %v3100, %v3880
      %v3901 = vmul.f32 %v3107, %v3880
      %v3902 = vmul.f32 %v3114, %v3880
      %v3903 = vmul.f32 %v3121, %v3880
      %v3904 = vmul.f32 %v3128, %v3880
      %v3905 = vmul.f32 %v3135, %v3880
      %v3906 = vmul.f32 %v3142, %v3880
      %v3907 = vmul.f32 %v3149, %v3880
      %v3908 = vmul.f32 %v3156, %v3880
      %v3909 = vmul.f32 %v3163, %v3880
      %v3910 = vmul.f32 %v3170, %v3880
      %v3911 = vmul.f32 %v3177, %v3880
      %v3912 = vmul.f32 %v3184, %v3880
      %v3913 = vmul.f32 %v3191, %v3880
      %v3914 = vmul.f32 %v3198, %v3880
      %v3915 = vmul.f32 %v3205, %v3880
      %v3916 = vmul.f32 %v3212, %v3880
      %v3917 = vmul.f32 %v3219, %v3880
      %v3918 = vmul.f32 %v3226, %v3880
      %v3919 = vmul.f32 %v3233, %v3880
      %v3920 = vmul.f32 %v3240, %v3880
      %v3921 = vmul.f32 %v3247, %v3880
      %v3922 = vmul.f32 %v3254, %v3880
      %v3923 = vmul.f32 %v3261, %v3880
      %v3924 = vmul.f32 %v3268, %v3880
      %v3925 = vmul.f32 %v3275, %v3880
      %v3926 = vmul.f32 %v3282, %v3880
      %v3927 = vmul.f32 %v3289, %v3880
      %v3928 = vmul.f32 %v3296, %v3880
      %v3929 = vmul.f32 %v3303, %v3880
      %v3930 = vmul.f32 %v3310, %v3880
      %v3931 = vmul.f32 %v3317, %v3880
      %v3932 = vmul.f32 %v3324, %v3880
      %v3933 = vmul.f32 %v3331, %v3880
      %v3934 = vmul.f32 %v3338, %v3880
      %v3935 = vmul.f32 %v3345, %v3880
      %v3936 = vmul.f32 %v3352, %v3880
      %v3937 = vmul.f32 %v3359, %v3880
      %v3938 = vmul.f32 %v3366, %v3880
      %v3939 = vmul.f32 %v3373, %v3880
      %v3940 = vmul.f32 %v3380, %v3880
      %v3941 = vmul.f32 %v3387, %v3880
      %v3942 = vmul.f32 %v3394, %v3880
      %v3943 = vmul.f32 %v3401, %v3880
      %v3944 = vmul.f32 %v3408, %v3880
      %v3945 = vmul.f32 %v3415, %v3880
      %v3946 = vmul.f32 %v3422, %v3880
      %v3947 = vmul.f32 %v3429, %v3880
      %v3948 = vmul.f32 %v3436, %v3880
      %v3949 = vmul.f32 %v3443, %v3880
      %v3950 = vmul.f32 %v3450, %v3880
      %v3951 = vmul.f32 %v3457, %v3880
      %v3952 = vmul.f32 %v3464, %v3880
      %v3953 = vmul.f32 %v3471, %v3880
      %v3954 = vmul.f32 %v3478, %v3880
      %v3955 = vmul.f32 %v3485, %v3880
      %v3956 = vmul.f32 %v3492, %v3880
      %v3957 = vmul.f32 %v3499, %v3880
      %v3958 = vmul.f32 %v3506, %v3880
      %v3959 = vmul.f32 %v3513, %v3880
      %v3960 = vmul.f32 %v3520, %v3880
      %v3961 = vmul.f32 %v3527, %v3880
      %v3962 = vmul.f32 %v3534, %v3880
      %v3963 = vmul.f32 %v3541, %v3880
      %v3964 = vmul.f32 %v3548, %v3880
      %v3965 = vmul.f32 %v3555, %v3880
      %v3966 = vmul.f32 %v3562, %v3880
      %v3967 = vmul.f32 %v3569, %v3880
      %v3968 = vmul.f32 %v3576, %v3880
      %v3969 = vmul.f32 %v3583, %v3880
      %v3970 = vmul.f32 %v3590, %v3880
      %v3971 = vmul.f32 %v3597, %v3880
      %v3972 = vmul.f32 %v3604, %v3880
      %v3973 = vmul.f32 %v3611, %v3880
      %v3974 = vmul.f32 %v3618, %v3880
      %v3975 = vmul.f32 %v3625, %v3880
      %v3976 = vmul.f32 %v3632, %v3880
      %v3977 = vmul.f32 %v3639, %v3880
      %v3978 = vmul.f32 %v3646, %v3880
      %v3979 = vmul.f32 %v3653, %v3880
      %v3980 = vmul.f32 %v3660, %v3880
      %v3981 = vmul.f32 %v3667, %v3880
      %v3982 = vmul.f32 %v3674, %v3880
      %v3983 = vmul.f32 %v3681, %v3880
      %v3984 = vmul.f32 %v3688, %v3880
      %v3985 = vmul.f32 %v3695, %v3880
      %v3986 = vmul.f32 %v3702, %v3880
      %v3987 = vmul.f32 %v3709, %v3880
      %v3988 = vmul.f32 %v3716, %v3880
      %v3989 = vmul.f32 %v3723, %v3880
      %v3990 = vmul.f32 %v3730, %v3880
      %v3991 = vmul.f32 %v3737, %v3880
      %v3992 = vmul.f32 %v3744, %v3880
      %v3993 = vmul.f32 %v3751, %v3880
      %v3994 = vmul.f32 %v3758, %v3880
      %v3995 = vmul.f32 %v3765, %v3880
      %v3996 = vmul.f32 %v3772, %v3880
      %v3997 = vmul.f32 %v3779, %v3880
      %v3998 = vmul.f32 %v3786, %v3880
      %v3999 = vmul.f32 %v3793, %v3880
      %v4000 = vmul.f32 %v3800, %v3880
      %v4001 = vmul.f32 %v3807, %v3880
      %v4002 = vmul.f32 %v3814, %v3880
      %v4003 = vmul.f32 %v3821, %v3880
      %v4004 = vmul.f32 %v3828, %v3880
      %v4005 = vmul.f32 %v3835, %v3880
      %v4006 = vmul.f32 %v3842, %v3880
      %v4007 = vmul.f32 %v3849, %v3880
      %v4008 = vmul.f32 %v3856, %v3880
      %v4009 = vmul.f32 %v3863, %v3880
      %v4010 = vmul.f32 %v3870, %v3880
      %v4011 = vmul.f32 %v3877, %v3880
      %v4012 = vadd.f32 %v1002, %v3884
      %v4013 = vadd.f32 %v1003, %v3885
      %v4014 = vadd.f32 %v1004, %v3886
      %v4015 = vadd.f32 %v1005, %v3887
      %v4016 = vadd.f32 %v1006, %v3888
      %v4017 = vadd.f32 %v1007, %v3889
      %v4018 = vadd.f32 %v1008, %v3890
      %v4019 = vadd.f32 %v1009, %v3891
      %v4020 = vadd.f32 %v1010, %v3892
      %v4021 = vadd.f32 %v1011, %v3893
      %v4022 = vadd.f32 %v1012, %v3894
      %v4023 = vadd.f32 %v1013, %v3895
      %v4024 = vadd.f32 %v1014, %v3896
      %v4025 = vadd.f32 %v1015, %v3897
      %v4026 = vadd.f32 %v1016, %v3898
      %v4027 = vadd.f32 %v1017, %v3899
      %v4028 = vadd.f32 %v1018, %v3900
      %v4029 = vadd.f32 %v1019, %v3901
      %v4030 = vadd.f32 %v1020, %v3902
      %v4031 = vadd.f32 %v1021, %v3903
      %v4032 = vadd.f32 %v1022, %v3904
      %v4033 = vadd.f32 %v1023, %v3905
      %v4034 = vadd.f32 %v1024, %v3906
      %v4035 = vadd.f32 %v1025, %v3907
      %v4036 = vadd.f32 %v1026, %v3908
      %v4037 = vadd.f32 %v1027, %v3909
      %v4038 = vadd.f32 %v1028, %v3910
      %v4039 = vadd.f32 %v1029, %v3911
      %v4040 = vadd.f32 %v1030, %v3912
      %v4041 = vadd.f32 %v1031, %v3913
      %v4042 = vadd.f32 %v1032, %v3914
      %v4043 = vadd.f32 %v1033, %v3915
      %v4044 = vadd.f32 %v1034, %v3916
      %v4045 = vadd.f32 %v1035, %v3917
      %v4046 = vadd.f32 %v1036, %v3918
      %v4047 = vadd.f32 %v1037, %v3919
      %v4048 = vadd.f32 %v1038, %v3920
      %v4049 = vadd.f32 %v1039, %v3921
      %v4050 = vadd.f32 %v1040, %v3922
      %v4051 = vadd.f32 %v1041, %v3923
      %v4052 = vadd.f32 %v1042, %v3924
      %v4053 = vadd.f32 %v1043, %v3925
      %v4054 = vadd.f32 %v1044, %v3926
      %v4055 = vadd.f32 %v1045, %v3927
      %v4056 = vadd.f32 %v1046, %v3928
      %v4057 = vadd.f32 %v1047, %v3929
      %v4058 = vadd.f32 %v1048, %v3930
      %v4059 = vadd.f32 %v1049, %v3931
      %v4060 = vadd.f32 %v1050, %v3932
      %v4061 = vadd.f32 %v1051, %v3933
      %v4062 = vadd.f32 %v1052, %v3934
      %v4063 = vadd.f32 %v1053, %v3935
      %v4064 = vadd.f32 %v1054, %v3936
      %v4065 = vadd.f32 %v1055, %v3937
      %v4066 = vadd.f32 %v1056, %v3938
      %v4067 = vadd.f32 %v1057, %v3939
      %v4068 = vadd.f32 %v1058, %v3940
      %v4069 = vadd.f32 %v1059, %v3941
      %v4070 = vadd.f32 %v1060, %v3942
      %v4071 = vadd.f32 %v1061, %v3943
      %v4072 = vadd.f32 %v1062, %v3944
      %v4073 = vadd.f32 %v1063, %v3945
      %v4074 = vadd.f32 %v1064, %v3946
      %v4075 = vadd.f32 %v1065, %v3947
      %v4076 = vadd.f32 %v1066, %v3948
      %v4077 = vadd.f32 %v1067, %v3949
      %v4078 = vadd.f32 %v1068, %v3950
      %v4079 = vadd.f32 %v1069, %v3951
      %v4080 = vadd.f32 %v1070, %v3952
      %v4081 = vadd.f32 %v1071, %v3953
      %v4082 = vadd.f32 %v1072, %v3954
      %v4083 = vadd.f32 %v1073, %v3955
      %v4084 = vadd.f32 %v1074, %v3956
      %v4085 = vadd.f32 %v1075, %v3957
      %v4086 = vadd.f32 %v1076, %v3958
      %v4087 = vadd.f32 %v1077, %v3959
      %v4088 = vadd.f32 %v1078, %v3960
      %v4089 = vadd.f32 %v1079, %v3961
      %v4090 = vadd.f32 %v1080, %v3962
      %v4091 = vadd.f32 %v1081, %v3963
      %v4092 = vadd.f32 %v1082, %v3964
      %v4093 = vadd.f32 %v1083, %v3965
      %v4094 = vadd.f32 %v1084, %v3966
      %v4095 = vadd.f32 %v1085, %v3967
      %v4096 = vadd.f32 %v1086, %v3968
      %v4097 = vadd.f32 %v1087, %v3969
      %v4098 = vadd.f32 %v1088, %v3970
      %v4099 = vadd.f32 %v1089, %v3971
      %v4100 = vadd.f32 %v1090, %v3972
      %v4101 = vadd.f32 %v1091, %v3973
      %v4102 = vadd.f32 %v1092, %v3974
      %v4103 = vadd.f32 %v1093, %v3975
      %v4104 = vadd.f32 %v1094, %v3976
      %v4105 = vadd.f32 %v1095, %v3977
      %v4106 = vadd.f32 %v1096, %v3978
      %v4107 = vadd.f32 %v1097, %v3979
      %v4108 = vadd.f32 %v1098, %v3980
      %v4109 = vadd.f32 %v1099, %v3981
      %v4110 = vadd.f32 %v1100, %v3982
      %v4111 = vadd.f32 %v1101, %v3983
      %v4112 = vadd.f32 %v1102, %v3984
      %v4113 = vadd.f32 %v1103, %v3985
      %v4114 = vadd.f32 %v1104, %v3986
      %v4115 = vadd.f32 %v1105, %v3987
      %v4116 = vadd.f32 %v1106, %v3988
      %v4117 = vadd.f32 %v1107, %v3989
      %v4118 = vadd.f32 %v1108, %v3990
      %v4119 = vadd.f32 %v1109, %v3991
      %v4120 = vadd.f32 %v1110, %v3992
      %v4121 = vadd.f32 %v1111, %v3993
      %v4122 = vadd.f32 %v1112, %v3994
      %v4123 = vadd.f32 %v1113, %v3995
      %v4124 = vadd.f32 %v1114, %v3996
      %v4125 = vadd.f32 %v1115, %v3997
      %v4126 = vadd.f32 %v1116, %v3998
      %v4127 = vadd.f32 %v1117, %v3999
      %v4128 = vadd.f32 %v1118, %v4000
      %v4129 = vadd.f32 %v1119, %v4001
      %v4130 = vadd.f32 %v1120, %v4002
      %v4131 = vadd.f32 %v1121, %v4003
      %v4132 = vadd.f32 %v1122, %v4004
      %v4133 = vadd.f32 %v1123, %v4005
      %v4134 = vadd.f32 %v1124, %v4006
      %v4135 = vadd.f32 %v1125, %v4007
      %v4136 = vadd.f32 %v1126, %v4008
      %v4137 = vadd.f32 %v1127, %v4009
      %v4138 = vadd.f32 %v1128, %v4010
      %v4139 = vadd.f32 %v1129, %v4011
      %v4140 = vadd.f32 %v4012, %v3883
      %v4141 = vadd.f32 %v4013, %v3883
      %v4142 = vadd.f32 %v4014, %v3883
      %v4143 = vadd.f32 %v4015, %v3883
      %v4144 = vadd.f32 %v4016, %v3883
      %v4145 = vadd.f32 %v4017, %v3883
      %v4146 = vadd.f32 %v4018, %v3883
      %v4147 = vadd.f32 %v4019, %v3883
      %v4148 = vadd.f32 %v4020, %v3883
      %v4149 = vadd.f32 %v4021, %v3883
      %v4150 = vadd.f32 %v4022, %v3883
      %v4151 = vadd.f32 %v4023, %v3883
      %v4152 = vadd.f32 %v4024, %v3883
      %v4153 = vadd.f32 %v4025, %v3883
      %v4154 = vadd.f32 %v4026, %v3883
      %v4155 = vadd.f32 %v4027, %v3883
      %v4156 = vadd.f32 %v4028, %v3883
      %v4157 = vadd.f32 %v4029, %v3883
      %v4158 = vadd.f32 %v4030, %v3883
      %v4159 = vadd.f32 %v4031, %v3883
      %v4160 = vadd.f32 %v4032, %v3883
      %v4161 = vadd.f32 %v4033, %v3883
      %v4162 = vadd.f32 %v4034, %v3883
      %v4163 = vadd.f32 %v4035, %v3883
      %v4164 = vadd.f32 %v4036, %v3883
      %v4165 = vadd.f32 %v4037, %v3883
      %v4166 = vadd.f32 %v4038, %v3883
      %v4167 = vadd.f32 %v4039, %v3883
      %v4168 = vadd.f32 %v4040, %v3883
      %v4169 = vadd.f32 %v4041, %v3883
      %v4170 = vadd.f32 %v4042, %v3883
      %v4171 = vadd.f32 %v4043, %v3883
      %v4172 = vadd.f32 %v4044, %v3883
      %v4173 = vadd.f32 %v4045, %v3883
      %v4174 = vadd.f32 %v4046, %v3883
      %v4175 = vadd.f32 %v4047, %v3883
      %v4176 = vadd.f32 %v4048, %v3883
      %v4177 = vadd.f32 %v4049, %v3883
      %v4178 = vadd.f32 %v4050, %v3883
      %v4179 = vadd.f32 %v4051, %v3883
      %v4180 = vadd.f32 %v4052, %v3883
      %v4181 = vadd.f32 %v4053, %v3883
      %v4182 = vadd.f32 %v4054, %v3883
      %v4183 = vadd.f32 %v4055, %v3883
      %v4184 = vadd.f32 %v4056, %v3883
      %v4185 = vadd.f32 %v4057, %v3883
      %v4186 = vadd.f32 %v4058, %v3883
      %v4187 = vadd.f32 %v4059, %v3883
      %v4188 = vadd.f32 %v4060, %v3883
      %v4189 = vadd.f32 %v4061, %v3883
      %v4190 = vadd.f32 %v4062, %v3883
      %v4191 = vadd.f32 %v4063, %v3883
      %v4192 = vadd.f32 %v4064, %v3883
      %v4193 = vadd.f32 %v4065, %v3883
      %v4194 = vadd.f32 %v4066, %v3883
      %v4195 = vadd.f32 %v4067, %v3883
      %v4196 = vadd.f32 %v4068, %v3883
      %v4197 = vadd.f32 %v4069, %v3883
      %v4198 = vadd.f32 %v4070, %v3883
      %v4199 = vadd.f32 %v4071, %v3883
      %v4200 = vadd.f32 %v4072, %v3883
      %v4201 = vadd.f32 %v4073, %v3883
      %v4202 = vadd.f32 %v4074, %v3883
      %v4203 = vadd.f32 %v4075, %v3883
      %v4204 = vadd.f32 %v4076, %v3883
      %v4205 = vadd.f32 %v4077, %v3883
      %v4206 = vadd.f32 %v4078, %v3883
      %v4207 = vadd.f32 %v4079, %v3883
      %v4208 = vadd.f32 %v4080, %v3883
      %v4209 = vadd.f32 %v4081, %v3883
      %v4210 = vadd.f32 %v4082, %v3883
      %v4211 = vadd.f32 %v4083, %v3883
      %v4212 = vadd.f32 %v4084, %v3883
      %v4213 = vadd.f32 %v4085, %v3883
      %v4214 = vadd.f32 %v4086, %v3883
      %v4215 = vadd.f32 %v4087, %v3883
      %v4216 = vadd.f32 %v4088, %v3883
      %v4217 = vadd.f32 %v4089, %v3883
      %v4218 = vadd.f32 %v4090, %v3883
      %v4219 = vadd.f32 %v4091, %v3883
      %v4220 = vadd.f32 %v4092, %v3883
      %v4221 = vadd.f32 %v4093, %v3883
      %v4222 = vadd.f32 %v4094, %v3883
      %v4223 = vadd.f32 %v4095, %v3883
      %v4224 = vadd.f32 %v4096, %v3883
      %v4225 = vadd.f32 %v4097, %v3883
      %v4226 = vadd.f32 %v4098, %v3883
      %v4227 = vadd.f32 %v4099, %v3883
      %v4228 = vadd.f32 %v4100, %v3883
      %v4229 = vadd.f32 %v4101, %v3883
      %v4230 = vadd.f32 %v4102, %v3883
      %v4231 = vadd.f32 %v4103, %v3883
      %v4232 = vadd.f32 %v4104, %v3883
      %v4233 = vadd.f32 %v4105, %v3883
      %v4234 = vadd.f32 %v4106, %v3883
      %v4235 = vadd.f32 %v4107, %v3883
      %v4236 = vadd.f32 %v4108, %v3883
      %v4237 = vadd.f32 %v4109, %v3883
      %v4238 = vadd.f32 %v4110, %v3883
      %v4239 = vadd.f32 %v4111, %v3883
      %v4240 = vadd.f32 %v4112, %v3883
      %v4241 = vadd.f32 %v4113, %v3883
      %v4242 = vadd.f32 %v4114, %v3883
      %v4243 = vadd.f32 %v4115, %v3883
      %v4244 = vadd.f32 %v4116, %v3883
      %v4245 = vadd.f32 %v4117, %v3883
      %v4246 = vadd.f32 %v4118, %v3883
      %v4247 = vadd.f32 %v4119, %v3883
      %v4248 = vadd.f32 %v4120, %v3883
      %v4249 = vadd.f32 %v4121, %v3883
      %v4250 = vadd.f32 %v4122, %v3883
      %v4251 = vadd.f32 %v4123, %v3883
      %v4252 = vadd.f32 %v4124, %v3883
      %v4253 = vadd.f32 %v4125, %v3883
      %v4254 = vadd.f32 %v4126, %v3883
      %v4255 = vadd.f32 %v4127, %v3883
      %v4256 = vadd.f32 %v4128, %v3883
      %v4257 = vadd.f32 %v4129, %v3883
      %v4258 = vadd.f32 %v4130, %v3883
      %v4259 = vadd.f32 %v4131, %v3883
      %v4260 = vadd.f32 %v4132, %v3883
      %v4261 = vadd.f32 %v4133, %v3883
      %v4262 = vadd.f32 %v4134, %v3883
      %v4263 = vadd.f32 %v4135, %v3883
      %v4264 = vadd.f32 %v4136, %v3883
      %v4265 = vadd.f32 %v4137, %v3883
      %v4266 = vadd.f32 %v4138, %v3883
      %v4267 = vadd.f32 %v4139, %v3883
      %v4268 = vld [vmem:[%s3] sm:$0xff]
      %v4270 = vsel %vm454, %v4140, 0
      %v4273 = vsel %vm454, %v4141, 0
      %v4276 = vsel %vm454, %v4142, 0
      %v4279 = vsel %vm454, %v4143, 0
      %v4282 = vsel %vm454, %v4144, 0
      %v4285 = vsel %vm454, %v4145, 0
      %v4288 = vsel %vm454, %v4146, 0
      %v4291 = vsel %vm454, %v4147, 0
      %v4294 = vsel %vm454, %v4148, 0
      %v4297 = vsel %vm454, %v4149, 0
      %v4300 = vsel %vm454, %v4150, 0
      %v4303 = vsel %vm454, %v4151, 0
      %v4306 = vsel %vm454, %v4152, 0
      %v4309 = vsel %vm454, %v4153, 0
      %v4312 = vsel %vm454, %v4154, 0
      %v4315 = vsel %vm454, %v4155, 0
      %v4318 = vsel %vm454, %v4156, 0
      %v4321 = vsel %vm454, %v4157, 0
      %v4324 = vsel %vm454, %v4158, 0
      %v4327 = vsel %vm454, %v4159, 0
      %v4330 = vsel %vm454, %v4160, 0
      %v4333 = vsel %vm454, %v4161, 0
      %v4336 = vsel %vm454, %v4162, 0
      %v4339 = vsel %vm454, %v4163, 0
      %v4342 = vsel %vm454, %v4164, 0
      %v4345 = vsel %vm454, %v4165, 0
      %v4348 = vsel %vm454, %v4166, 0
      %v4351 = vsel %vm454, %v4167, 0
      %v4354 = vsel %vm454, %v4168, 0
      %v4357 = vsel %vm454, %v4169, 0
      %v4360 = vsel %vm454, %v4170, 0
      %v4363 = vsel %vm454, %v4171, 0
      %v4366 = vsel %vm454, %v4172, 0
      %v4369 = vsel %vm454, %v4173, 0
      %v4372 = vsel %vm454, %v4174, 0
      %v4375 = vsel %vm454, %v4175, 0
      %v4378 = vsel %vm454, %v4176, 0
      %v4381 = vsel %vm454, %v4177, 0
      %v4384 = vsel %vm454, %v4178, 0
      %v4387 = vsel %vm454, %v4179, 0
      %v4390 = vsel %vm454, %v4180, 0
      %v4393 = vsel %vm454, %v4181, 0
      %v4396 = vsel %vm454, %v4182, 0
      %v4399 = vsel %vm454, %v4183, 0
      %v4402 = vsel %vm454, %v4184, 0
      %v4405 = vsel %vm454, %v4185, 0
      %v4408 = vsel %vm454, %v4186, 0
      %v4411 = vsel %vm454, %v4187, 0
      %v4414 = vsel %vm454, %v4188, 0
      %v4417 = vsel %vm454, %v4189, 0
      %v4420 = vsel %vm454, %v4190, 0
      %v4423 = vsel %vm454, %v4191, 0
      %v4426 = vsel %vm454, %v4192, 0
      %v4429 = vsel %vm454, %v4193, 0
      %v4432 = vsel %vm454, %v4194, 0
      %v4435 = vsel %vm454, %v4195, 0
      %v4438 = vsel %vm454, %v4196, 0
      %v4441 = vsel %vm454, %v4197, 0
      %v4444 = vsel %vm454, %v4198, 0
      %v4447 = vsel %vm454, %v4199, 0
      %v4450 = vsel %vm454, %v4200, 0
      %v4453 = vsel %vm454, %v4201, 0
      %v4456 = vsel %vm454, %v4202, 0
      %v4459 = vsel %vm454, %v4203, 0
      %v4462 = vsel %vm454, %v4204, 0
      %v4465 = vsel %vm454, %v4205, 0
      %v4468 = vsel %vm454, %v4206, 0
      %v4471 = vsel %vm454, %v4207, 0
      %v4474 = vsel %vm454, %v4208, 0
      %v4477 = vsel %vm454, %v4209, 0
      %v4480 = vsel %vm454, %v4210, 0
      %v4483 = vsel %vm454, %v4211, 0
      %v4486 = vsel %vm454, %v4212, 0
      %v4489 = vsel %vm454, %v4213, 0
      %v4492 = vsel %vm454, %v4214, 0
      %v4495 = vsel %vm454, %v4215, 0
      %v4498 = vsel %vm454, %v4216, 0
      %v4501 = vsel %vm454, %v4217, 0
      %v4504 = vsel %vm454, %v4218, 0
      %v4507 = vsel %vm454, %v4219, 0
      %v4510 = vsel %vm454, %v4220, 0
      %v4513 = vsel %vm454, %v4221, 0
      %v4516 = vsel %vm454, %v4222, 0
      %v4519 = vsel %vm454, %v4223, 0
      %v4522 = vsel %vm454, %v4224, 0
      %v4525 = vsel %vm454, %v4225, 0
      %v4528 = vsel %vm454, %v4226, 0
      %v4531 = vsel %vm454, %v4227, 0
      %v4534 = vsel %vm454, %v4228, 0
      %v4537 = vsel %vm454, %v4229, 0
      %v4540 = vsel %vm454, %v4230, 0
      %v4543 = vsel %vm454, %v4231, 0
      %v4546 = vsel %vm454, %v4232, 0
      %v4549 = vsel %vm454, %v4233, 0
      %v4552 = vsel %vm454, %v4234, 0
      %v4555 = vsel %vm454, %v4235, 0
      %v4558 = vsel %vm454, %v4236, 0
      %v4561 = vsel %vm454, %v4237, 0
      %v4564 = vsel %vm454, %v4238, 0
      %v4567 = vsel %vm454, %v4239, 0
      %v4570 = vsel %vm454, %v4240, 0
      %v4573 = vsel %vm454, %v4241, 0
      %v4576 = vsel %vm454, %v4242, 0
      %v4579 = vsel %vm454, %v4243, 0
      %v4582 = vsel %vm454, %v4244, 0
      %v4585 = vsel %vm454, %v4245, 0
      %v4588 = vsel %vm454, %v4246, 0
      %v4591 = vsel %vm454, %v4247, 0
      %v4594 = vsel %vm454, %v4248, 0
      %v4597 = vsel %vm454, %v4249, 0
      %v4600 = vsel %vm454, %v4250, 0
      %v4603 = vsel %vm454, %v4251, 0
      %v4606 = vsel %vm454, %v4252, 0
      %v4609 = vsel %vm454, %v4253, 0
      %v4612 = vsel %vm454, %v4254, 0
      %v4615 = vsel %vm454, %v4255, 0
      %v4618 = vsel %vm454, %v4256, 0
      %v4621 = vsel %vm454, %v4257, 0
      %v4624 = vsel %vm454, %v4258, 0
      %v4627 = vsel %vm454, %v4259, 0
      %v4630 = vsel %vm454, %v4260, 0
      %v4633 = vsel %vm454, %v4261, 0
      %v4636 = vsel %vm454, %v4262, 0
      %v4639 = vsel %vm454, %v4263, 0
      %v4642 = vsel %vm454, %v4264, 0
      %v4645 = vsel %vm454, %v4265, 0
      %v4648 = vsel %vm454, %v4266, 0
      %v4651 = vsel %vm454, %v4267, 0
      %4653 = vmatprep.subr.mxu0 0.0
      %4654 = vmatpush1.msra.mxu0 %v4268
      %4655 = vmatprep.subr.mxu0 0.0
      %4656 = vmatpush1.msra.mxu0 0.0
      %4657 = vmatprep.subr.mxu0 0.0
      %4658 = vmatpush1.msra.mxu0 0.0
      %4659 = vmatprep.subr.mxu0 0.0
      %4660 = vmatpush1.msra.mxu0 0.0
      %4661 = vmatprep.subr.mxu0 0.0
      %4662 = vmatpush1.msra.mxu0 0.0
      %4663 = vmatprep.subr.mxu0 0.0
      %4664 = vmatpush1.msra.mxu0 0.0
      %4665 = vmatprep.subr.mxu0 0.0
      %4666 = vmatpush1.msra.mxu0 0.0
      %4667 = vmatprep.subr.mxu0 0.0
      %4668 = vmatpush1.msra.mxu0 0.0
      %4669 = vmatprep.subr.mxu0 0.0
      %4670 = vmatpush1.msra.mxu0 0.0
      %4671 = vmatprep.subr.mxu0 0.0
      %4672 = vmatpush1.msra.mxu0 0.0
      %4673 = vmatprep.subr.mxu0 0.0
      %4674 = vmatpush1.msra.mxu0 0.0
      %4675 = vmatprep.subr.mxu0 0.0
      %4676 = vmatpush1.msra.mxu0 0.0
      %4677 = vmatprep.subr.mxu0 0.0
      %4678 = vmatpush1.msra.mxu0 0.0
      %4679 = vmatprep.subr.mxu0 0.0
      %4680 = vmatpush1.msra.mxu0 0.0
      %4681 = vmatprep.subr.mxu0 0.0
      %4682 = vmatpush1.msra.mxu0 0.0
      %4683 = vmatprep.subr.mxu0 0.0
      %4684 = vmatpush1.msra.mxu0 0.0
      %4685 = vmatprep.subr.mxu0 0.0
      %4686 = vmatpush1.msra.mxu0 0.0
      %4687 = vmatprep.subr.mxu0 0.0
      %4688 = vmatpush1.msra.mxu0 0.0
      %4689 = vmatprep.subr.mxu0 0.0
      %4690 = vmatpush1.msra.mxu0 0.0
      %4691 = vmatprep.subr.mxu0 0.0
      %4692 = vmatpush1.msra.mxu0 0.0
      %4693 = vmatprep.subr.mxu0 0.0
      %4694 = vmatpush1.msra.mxu0 0.0
      %4695 = vmatprep.subr.mxu0 0.0
      %4696 = vmatpush1.msra.mxu0 0.0
      %4697 = vmatprep.subr.mxu0 0.0
      %4698 = vmatpush1.msra.mxu0 0.0
      %4699 = vmatprep.subr.mxu0 0.0
      %4700 = vmatpush1.msra.mxu0 0.0
      %4701 = vmatprep.subr.mxu0 0.0
      %4702 = vmatpush1.msra.mxu0 0.0
      %4703 = vmatprep.subr.mxu0 0.0
      %4704 = vmatpush1.msra.mxu0 0.0
      %4705 = vmatprep.subr.mxu0 0.0
      %4706 = vmatpush1.msra.mxu0 0.0
      %4707 = vmatprep.subr.mxu0 0.0
      %4708 = vmatpush1.msra.mxu0 0.0
      %4709 = vmatprep.subr.mxu0 0.0
      %4710 = vmatpush1.msra.mxu0 0.0
      %4711 = vmatprep.subr.mxu0 0.0
      %4712 = vmatpush1.msra.mxu0 0.0
      %4713 = vmatprep.subr.mxu0 0.0
      %4714 = vmatpush1.msra.mxu0 0.0
      %4715 = vmatprep.subr.mxu0 0.0
      %4716 = vmatpush1.msra.mxu0 0.0
      %4717 = vmatprep.mubr.f32.mxu0 0.0
      %4718 = vmatmul.mubr.f32.gmra.mrb[0].mxu0 %v4270
      %v4719 = vpop.f32.mrb[0].mxu0
      %v4720 = vadd.f32 0.0, %v4719
      %v4721 = vpop.f32.mrb[0].mxu0
      %4722 = vmatprep.mubr.f32.mxu0 0.0
      %4723 = vmatmul.mubr.f32.gmra.mrb[0].mxu0 %v4273
      %v4724 = vpop.f32.mrb[0].mxu0
      %v4725 = vadd.f32 0.0, %v4724
      %v4726 = vpop.f32.mrb[0].mxu0
      %4727 = vmatprep.mubr.f32.mxu0 0.0
      %4728 = vmatmul.mubr.f32.gmra.mrb[0].mxu0 %v4276
      %v4729 = vpop.f32.mrb[0].mxu0
      %v4730 = vadd.f32 0.0, %v4729
      %v4731 = vpop.f32.mrb[0].mxu0
      %4732 = vmatprep.mubr.f32.mxu0 0.0
      %4733 = vmatmul.mubr.f32.gmra.mrb[0].mxu0 %v4279
      %v4734 = vpop.f32.mrb[0].mxu0
      %v4735 = vadd.f32 0.0, %v4734
      %v4736 = vpop.f32.mrb[0].mxu0
      %4737 = vmatprep.mubr.f32.mxu0 0.0
      %4738 = vmatmul.mubr.f32.gmra.mrb[0].mxu0 %v4282
      %v4739 = vpop.f32.mrb[0].mxu0
      %v4740 = vadd.f32 0.0, %v4739
      %v4741 = vpop.f32.mrb[0].mxu0
      %4742 = vmatprep.mubr.f32.mxu0 0.0
      %4743 = vmatmul.mubr.f32.gmra.mrb[0].mxu0 %v4285
      %v4744 = vpop.f32.mrb[0].mxu0
      %v4745 = vadd.f32 0.0, %v4744
      %v4746 = vpop.f32.mrb[0].mxu0
      %4747 = vmatprep.mubr.f32.mxu0 0.0
      %4748 = vmatmul.mubr.f32.gmra.mrb[0].mxu0 %v4288
      %v4749 = vpop.f32.mrb[0].mxu0
      %v4750 = vadd.f32 0.0, %v4749
      %v4751 = vpop.f32.mrb[0].mxu0
      %4752 = vmatprep.mubr.f32.mxu0 0.0
      %4753 = vmatmul.mubr.f32.gmra.mrb[0].mxu0 %v4291
      %v4754 = vpop.f32.mrb[0].mxu0
      %v4755 = vadd.f32 0.0, %v4754
      %v4756 = vpop.f32.mrb[0].mxu0
      %4757 = vmatprep.mubr.f32.mxu0 0.0
      %4758 = vmatmul.mubr.f32.gmra.mrb[0].mxu0 %v4294
      %v4759 = vpop.f32.mrb[0].mxu0
      %v4760 = vadd.f32 0.0, %v4759
      %v4761 = vpop.f32.mrb[0].mxu0
      %4762 = vmatprep.mubr.f32.mxu0 0.0
      %4763 = vmatmul.mubr.f32.gmra.mrb[0].mxu0 %v4297
      %v4764 = vpop.f32.mrb[0].mxu0
      %v4765 = vadd.f32 0.0, %v4764
      %v4766 = vpop.f32.mrb[0].mxu0
      %4767 = vmatprep.mubr.f32.mxu0 0.0
      %4768 = vmatmul.mubr.f32.gmra.mrb[0].mxu0 %v4300
      %v4769 = vpop.f32.mrb[0].mxu0
      %v4770 = vadd.f32 0.0, %v4769
      %v4771 = vpop.f32.mrb[0].mxu0
      %4772 = vmatprep.mubr.f32.mxu0 0.0
      %4773 = vmatmul.mubr.f32.gmra.mrb[0].mxu0 %v4303
      %v4774 = vpop.f32.mrb[0].mxu0
      %v4775 = vadd.f32 0.0, %v4774
      %v4776 = vpop.f32.mrb[0].mxu0
      %4777 = vmatprep.mubr.f32.mxu0 0.0
      %4778 = vmatmul.mubr.f32.gmra.mrb[0].mxu0 %v4306
      %v4779 = vpop.f32.mrb[0].mxu0
      %v4780 = vadd.f32 0.0, %v4779
      %v4781 = vpop.f32.mrb[0].mxu0
      %4782 = vmatprep.mubr.f32.mxu0 0.0
      %4783 = vmatmul.mubr.f32.gmra.mrb[0].mxu0 %v4309
      %v4784 = vpop.f32.mrb[0].mxu0
      %v4785 = vadd.f32 0.0, %v4784
      %v4786 = vpop.f32.mrb[0].mxu0
      %4787 = vmatprep.mubr.f32.mxu0 0.0
      %4788 = vmatmul.mubr.f32.gmra.mrb[0].mxu0 %v4312
      %v4789 = vpop.f32.mrb[0].mxu0
      %v4790 = vadd.f32 0.0, %v4789
      %v4791 = vpop.f32.mrb[0].mxu0
      %4792 = vmatprep.mubr.f32.mxu0 0.0
      %4793 = vmatmul.mubr.f32.gmra.mrb[0].mxu0 %v4315
      %v4794 = vpop.f32.mrb[0].mxu0
      %v4795 = vadd.f32 0.0, %v4794
      %v4796 = vpop.f32.mrb[0].mxu0
      %4797 = vmatprep.mubr.f32.mxu0 0.0
      %4798 = vmatmul.mubr.f32.gmra.mrb[0].mxu0 %v4318
      %v4799 = vpop.f32.mrb[0].mxu0
      %v4800 = vadd.f32 0.0, %v4799
      %v4801 = vpop.f32.mrb[0].mxu0
      %4802 = vmatprep.mubr.f32.mxu0 0.0
      %4803 = vmatmul.mubr.f32.gmra.mrb[0].mxu0 %v4321
      %v4804 = vpop.f32.mrb[0].mxu0
      %v4805 = vadd.f32 0.0, %v4804
      %v4806 = vpop.f32.mrb[0].mxu0
      %4807 = vmatprep.mubr.f32.mxu0 0.0
      %4808 = vmatmul.mubr.f32.gmra.mrb[0].mxu0 %v4324
      %v4809 = vpop.f32.mrb[0].mxu0
      %v4810 = vadd.f32 0.0, %v4809
      %v4811 = vpop.f32.mrb[0].mxu0
      %4812 = vmatprep.mubr.f32.mxu0 0.0
      %4813 = vmatmul.mubr.f32.gmra.mrb[0].mxu0 %v4327
      %v4814 = vpop.f32.mrb[0].mxu0
      %v4815 = vadd.f32 0.0, %v4814
      %v4816 = vpop.f32.mrb[0].mxu0
      %4817 = vmatprep.mubr.f32.mxu0 0.0
      %4818 = vmatmul.mubr.f32.gmra.mrb[0].mxu0 %v4330
      %v4819 = vpop.f32.mrb[0].mxu0
      %v4820 = vadd.f32 0.0, %v4819
      %v4821 = vpop.f32.mrb[0].mxu0
      %4822 = vmatprep.mubr.f32.mxu0 0.0
      %4823 = vmatmul.mubr.f32.gmra.mrb[0].mxu0 %v4333
      %v4824 = vpop.f32.mrb[0].mxu0
      %v4825 = vadd.f32 0.0, %v4824
      %v4826 = vpop.f32.mrb[0].mxu0
      %4827 = vmatprep.mubr.f32.mxu0 0.0
      %4828 = vmatmul.mubr.f32.gmra.mrb[0].mxu0 %v4336
      %v4829 = vpop.f32.mrb[0].mxu0
      %v4830 = vadd.f32 0.0, %v4829
      %v4831 = vpop.f32.mrb[0].mxu0
      %4832 = vmatprep.mubr.f32.mxu0 0.0
      %4833 = vmatmul.mubr.f32.gmra.mrb[0].mxu0 %v4339
      %v4834 = vpop.f32.mrb[0].mxu0
      %v4835 = vadd.f32 0.0, %v4834
      %v4836 = vpop.f32.mrb[0].mxu0
      %4837 = vmatprep.mubr.f32.mxu0 0.0
      %4838 = vmatmul.mubr.f32.gmra.mrb[0].mxu0 %v4342
      %v4839 = vpop.f32.mrb[0].mxu0
      %v4840 = vadd.f32 0.0, %v4839
      %v4841 = vpop.f32.mrb[0].mxu0
      %4842 = vmatprep.mubr.f32.mxu0 0.0
      %4843 = vmatmul.mubr.f32.gmra.mrb[0].mxu0 %v4345
      %v4844 = vpop.f32.mrb[0].mxu0
      %v4845 = vadd.f32 0.0, %v4844
      %v4846 = vpop.f32.mrb[0].mxu0
      %4847 = vmatprep.mubr.f32.mxu0 0.0
      %4848 = vmatmul.mubr.f32.gmra.mrb[0].mxu0 %v4348
      %v4849 = vpop.f32.mrb[0].mxu0
      %v4850 = vadd.f32 0.0, %v4849
      %v4851 = vpop.f32.mrb[0].mxu0
      %4852 = vmatprep.mubr.f32.mxu0 0.0
      %4853 = vmatmul.mubr.f32.gmra.mrb[0].mxu0 %v4351
      %v4854 = vpop.f32.mrb[0].mxu0
      %v4855 = vadd.f32 0.0, %v4854
      %v4856 = vpop.f32.mrb[0].mxu0
      %4857 = vmatprep.mubr.f32.mxu0 0.0
      %4858 = vmatmul.mubr.f32.gmra.mrb[0].mxu0 %v4354
      %v4859 = vpop.f32.mrb[0].mxu0
      %v4860 = vadd.f32 0.0, %v4859
      %v4861 = vpop.f32.mrb[0].mxu0
      %4862 = vmatprep.mubr.f32.mxu0 0.0
      %4863 = vmatmul.mubr.f32.gmra.mrb[0].mxu0 %v4357
      %v4864 = vpop.f32.mrb[0].mxu0
      %v4865 = vadd.f32 0.0, %v4864
      %v4866 = vpop.f32.mrb[0].mxu0
      %4867 = vmatprep.mubr.f32.mxu0 0.0
      %4868 = vmatmul.mubr.f32.gmra.mrb[0].mxu0 %v4360
      %v4869 = vpop.f32.mrb[0].mxu0
      %v4870 = vadd.f32 0.0, %v4869
      %v4871 = vpop.f32.mrb[0].mxu0
      %4872 = vmatprep.mubr.f32.mxu0 0.0
      %4873 = vmatmul.mubr.f32.gmra.mrb[0].mxu0 %v4363
      %v4874 = vpop.f32.mrb[0].mxu0
      %v4875 = vadd.f32 0.0, %v4874
      %v4876 = vpop.f32.mrb[0].mxu0
      %4877 = vmatprep.mubr.f32.mxu0 0.0
      %4878 = vmatmul.mubr.f32.gmra.mrb[0].mxu0 %v4366
      %v4879 = vpop.f32.mrb[0].mxu0
      %v4880 = vadd.f32 0.0, %v4879
      %v4881 = vpop.f32.mrb[0].mxu0
      %4882 = vmatprep.mubr.f32.mxu0 0.0
      %4883 = vmatmul.mubr.f32.gmra.mrb[0].mxu0 %v4369
      %v4884 = vpop.f32.mrb[0].mxu0
      %v4885 = vadd.f32 0.0, %v4884
      %v4886 = vpop.f32.mrb[0].mxu0
      %4887 = vmatprep.mubr.f32.mxu0 0.0
      %4888 = vmatmul.mubr.f32.gmra.mrb[0].mxu0 %v4372
      %v4889 = vpop.f32.mrb[0].mxu0
      %v4890 = vadd.f32 0.0, %v4889
      %v4891 = vpop.f32.mrb[0].mxu0
      %4892 = vmatprep.mubr.f32.mxu0 0.0
      %4893 = vmatmul.mubr.f32.gmra.mrb[0].mxu0 %v4375
      %v4894 = vpop.f32.mrb[0].mxu0
      %v4895 = vadd.f32 0.0, %v4894
      %v4896 = vpop.f32.mrb[0].mxu0
      %4897 = vmatprep.mubr.f32.mxu0 0.0
      %4898 = vmatmul.mubr.f32.gmra.mrb[0].mxu0 %v4378
      %v4899 = vpop.f32.mrb[0].mxu0
      %v4900 = vadd.f32 0.0, %v4899
      %v4901 = vpop.f32.mrb[0].mxu0
      %4902 = vmatprep.mubr.f32.mxu0 0.0
      %4903 = vmatmul.mubr.f32.gmra.mrb[0].mxu0 %v4381
      %v4904 = vpop.f32.mrb[0].mxu0
      %v4905 = vadd.f32 0.0, %v4904
      %v4906 = vpop.f32.mrb[0].mxu0
      %4907 = vmatprep.mubr.f32.mxu0 0.0
      %4908 = vmatmul.mubr.f32.gmra.mrb[0].mxu0 %v4384
      %v4909 = vpop.f32.mrb[0].mxu0
      %v4910 = vadd.f32 0.0, %v4909
      %v4911 = vpop.f32.mrb[0].mxu0
      %4912 = vmatprep.mubr.f32.mxu0 0.0
      %4913 = vmatmul.mubr.f32.gmra.mrb[0].mxu0 %v4387
      %v4914 = vpop.f32.mrb[0].mxu0
      %v4915 = vadd.f32 0.0, %v4914
      %v4916 = vpop.f32.mrb[0].mxu0
      %4917 = vmatprep.mubr.f32.mxu0 0.0
      %4918 = vmatmul.mubr.f32.gmra.mrb[0].mxu0 %v4390
      %v4919 = vpop.f32.mrb[0].mxu0
      %v4920 = vadd.f32 0.0, %v4919
      %v4921 = vpop.f32.mrb[0].mxu0
      %4922 = vmatprep.mubr.f32.mxu0 0.0
      %4923 = vmatmul.mubr.f32.gmra.mrb[0].mxu0 %v4393
      %v4924 = vpop.f32.mrb[0].mxu0
      %v4925 = vadd.f32 0.0, %v4924
      %v4926 = vpop.f32.mrb[0].mxu0
      %4927 = vmatprep.mubr.f32.mxu0 0.0
      %4928 = vmatmul.mubr.f32.gmra.mrb[0].mxu0 %v4396
      %v4929 = vpop.f32.mrb[0].mxu0
      %v4930 = vadd.f32 0.0, %v4929
      %v4931 = vpop.f32.mrb[0].mxu0
      %4932 = vmatprep.mubr.f32.mxu0 0.0
      %4933 = vmatmul.mubr.f32.gmra.mrb[0].mxu0 %v4399
      %v4934 = vpop.f32.mrb[0].mxu0
      %v4935 = vadd.f32 0.0, %v4934
      %v4936 = vpop.f32.mrb[0].mxu0
      %4937 = vmatprep.mubr.f32.mxu0 0.0
      %4938 = vmatmul.mubr.f32.gmra.mrb[0].mxu0 %v4402
      %v4939 = vpop.f32.mrb[0].mxu0
      %v4940 = vadd.f32 0.0, %v4939
      %v4941 = vpop.f32.mrb[0].mxu0
      %4942 = vmatprep.mubr.f32.mxu0 0.0
      %4943 = vmatmul.mubr.f32.gmra.mrb[0].mxu0 %v4405
      %v4944 = vpop.f32.mrb[0].mxu0
      %v4945 = vadd.f32 0.0, %v4944
      %v4946 = vpop.f32.mrb[0].mxu0
      %4947 = vmatprep.mubr.f32.mxu0 0.0
      %4948 = vmatmul.mubr.f32.gmra.mrb[0].mxu0 %v4408
      %v4949 = vpop.f32.mrb[0].mxu0
      %v4950 = vadd.f32 0.0, %v4949
      %v4951 = vpop.f32.mrb[0].mxu0
      %4952 = vmatprep.mubr.f32.mxu0 0.0
      %4953 = vmatmul.mubr.f32.gmra.mrb[0].mxu0 %v4411
      %v4954 = vpop.f32.mrb[0].mxu0
      %v4955 = vadd.f32 0.0, %v4954
      %v4956 = vpop.f32.mrb[0].mxu0
      %4957 = vmatprep.mubr.f32.mxu0 0.0
      %4958 = vmatmul.mubr.f32.gmra.mrb[0].mxu0 %v4414
      %v4959 = vpop.f32.mrb[0].mxu0
      %v4960 = vadd.f32 0.0, %v4959
      %v4961 = vpop.f32.mrb[0].mxu0
      %4962 = vmatprep.mubr.f32.mxu0 0.0
      %4963 = vmatmul.mubr.f32.gmra.mrb[0].mxu0 %v4417
      %v4964 = vpop.f32.mrb[0].mxu0
      %v4965 = vadd.f32 0.0, %v4964
      %v4966 = vpop.f32.mrb[0].mxu0
      %4967 = vmatprep.mubr.f32.mxu0 0.0
      %4968 = vmatmul.mubr.f32.gmra.mrb[0].mxu0 %v4420
      %v4969 = vpop.f32.mrb[0].mxu0
      %v4970 = vadd.f32 0.0, %v4969
      %v4971 = vpop.f32.mrb[0].mxu0
      %4972 = vmatprep.mubr.f32.mxu0 0.0
      %4973 = vmatmul.mubr.f32.gmra.mrb[0].mxu0 %v4423
      %v4974 = vpop.f32.mrb[0].mxu0
      %v4975 = vadd.f32 0.0, %v4974
      %v4976 = vpop.f32.mrb[0].mxu0
      %4977 = vmatprep.mubr.f32.mxu0 0.0
      %4978 = vmatmul.mubr.f32.gmra.mrb[0].mxu0 %v4426
      %v4979 = vpop.f32.mrb[0].mxu0
      %v4980 = vadd.f32 0.0, %v4979
      %v4981 = vpop.f32.mrb[0].mxu0
      %4982 = vmatprep.mubr.f32.mxu0 0.0
      %4983 = vmatmul.mubr.f32.gmra.mrb[0].mxu0 %v4429
      %v4984 = vpop.f32.mrb[0].mxu0
      %v4985 = vadd.f32 0.0, %v4984
      %v4986 = vpop.f32.mrb[0].mxu0
      %4987 = vmatprep.mubr.f32.mxu0 0.0
      %4988 = vmatmul.mubr.f32.gmra.mrb[0].mxu0 %v4432
      %v4989 = vpop.f32.mrb[0].mxu0
      %v4990 = vadd.f32 0.0, %v4989
      %v4991 = vpop.f32.mrb[0].mxu0
      %4992 = vmatprep.mubr.f32.mxu0 0.0
      %4993 = vmatmul.mubr.f32.gmra.mrb[0].mxu0 %v4435
      %v4994 = vpop.f32.mrb[0].mxu0
      %v4995 = vadd.f32 0.0, %v4994
      %v4996 = vpop.f32.mrb[0].mxu0
      %4997 = vmatprep.mubr.f32.mxu0 0.0
      %4998 = vmatmul.mubr.f32.gmra.mrb[0].mxu0 %v4438
      %v4999 = vpop.f32.mrb[0].mxu0
      %v5000 = vadd.f32 0.0, %v4999
      %v5001 = vpop.f32.mrb[0].mxu0
      %5002 = vmatprep.mubr.f32.mxu0 0.0
      %5003 = vmatmul.mubr.f32.gmra.mrb[0].mxu0 %v4441
      %v5004 = vpop.f32.mrb[0].mxu0
      %v5005 = vadd.f32 0.0, %v5004
      %v5006 = vpop.f32.mrb[0].mxu0
      %5007 = vmatprep.mubr.f32.mxu0 0.0
      %5008 = vmatmul.mubr.f32.gmra.mrb[0].mxu0 %v4444
      %v5009 = vpop.f32.mrb[0].mxu0
      %v5010 = vadd.f32 0.0, %v5009
      %v5011 = vpop.f32.mrb[0].mxu0
      %5012 = vmatprep.mubr.f32.mxu0 0.0
      %5013 = vmatmul.mubr.f32.gmra.mrb[0].mxu0 %v4447
      %v5014 = vpop.f32.mrb[0].mxu0
      %v5015 = vadd.f32 0.0, %v5014
      %v5016 = vpop.f32.mrb[0].mxu0
      %5017 = vmatprep.mubr.f32.mxu0 0.0
      %5018 = vmatmul.mubr.f32.gmra.mrb[0].mxu0 %v4450
      %v5019 = vpop.f32.mrb[0].mxu0
      %v5020 = vadd.f32 0.0, %v5019
      %v5021 = vpop.f32.mrb[0].mxu0
      %5022 = vmatprep.mubr.f32.mxu0 0.0
      %5023 = vmatmul.mubr.f32.gmra.mrb[0].mxu0 %v4453
      %v5024 = vpop.f32.mrb[0].mxu0
      %v5025 = vadd.f32 0.0, %v5024
      %v5026 = vpop.f32.mrb[0].mxu0
      %5027 = vmatprep.mubr.f32.mxu0 0.0
      %5028 = vmatmul.mubr.f32.gmra.mrb[0].mxu0 %v4456
      %v5029 = vpop.f32.mrb[0].mxu0
      %v5030 = vadd.f32 0.0, %v5029
      %v5031 = vpop.f32.mrb[0].mxu0
      %5032 = vmatprep.mubr.f32.mxu0 0.0
      %5033 = vmatmul.mubr.f32.gmra.mrb[0].mxu0 %v4459
      %v5034 = vpop.f32.mrb[0].mxu0
      %v5035 = vadd.f32 0.0, %v5034
      %v5036 = vpop.f32.mrb[0].mxu0
      %5037 = vmatprep.mubr.f32.mxu0 0.0
      %5038 = vmatmul.mubr.f32.gmra.mrb[0].mxu0 %v4462
      %v5039 = vpop.f32.mrb[0].mxu0
      %v5040 = vadd.f32 0.0, %v5039
      %v5041 = vpop.f32.mrb[0].mxu0
      %5042 = vmatprep.mubr.f32.mxu0 0.0
      %5043 = vmatmul.mubr.f32.gmra.mrb[0].mxu0 %v4465
      %v5044 = vpop.f32.mrb[0].mxu0
      %v5045 = vadd.f32 0.0, %v5044
      %v5046 = vpop.f32.mrb[0].mxu0
      %5047 = vmatprep.mubr.f32.mxu0 0.0
      %5048 = vmatmul.mubr.f32.gmra.mrb[0].mxu0 %v4468
      %v5049 = vpop.f32.mrb[0].mxu0
      %v5050 = vadd.f32 0.0, %v5049
      %v5051 = vpop.f32.mrb[0].mxu0
      %5052 = vmatprep.mubr.f32.mxu0 0.0
      %5053 = vmatmul.mubr.f32.gmra.mrb[0].mxu0 %v4471
      %v5054 = vpop.f32.mrb[0].mxu0
      %v5055 = vadd.f32 0.0, %v5054
      %v5056 = vpop.f32.mrb[0].mxu0
      %5057 = vmatprep.mubr.f32.mxu0 0.0
      %5058 = vmatmul.mubr.f32.gmra.mrb[0].mxu0 %v4474
      %v5059 = vpop.f32.mrb[0].mxu0
      %v5060 = vadd.f32 0.0, %v5059
      %v5061 = vpop.f32.mrb[0].mxu0
      %5062 = vmatprep.mubr.f32.mxu0 0.0
      %5063 = vmatmul.mubr.f32.gmra.mrb[0].mxu0 %v4477
      %v5064 = vpop.f32.mrb[0].mxu0
      %v5065 = vadd.f32 0.0, %v5064
      %v5066 = vpop.f32.mrb[0].mxu0
      %5067 = vmatprep.mubr.f32.mxu0 0.0
      %5068 = vmatmul.mubr.f32.gmra.mrb[0].mxu0 %v4480
      %v5069 = vpop.f32.mrb[0].mxu0
      %v5070 = vadd.f32 0.0, %v5069
      %v5071 = vpop.f32.mrb[0].mxu0
      %5072 = vmatprep.mubr.f32.mxu0 0.0
      %5073 = vmatmul.mubr.f32.gmra.mrb[0].mxu0 %v4483
      %v5074 = vpop.f32.mrb[0].mxu0
      %v5075 = vadd.f32 0.0, %v5074
      %v5076 = vpop.f32.mrb[0].mxu0
      %5077 = vmatprep.mubr.f32.mxu0 0.0
      %5078 = vmatmul.mubr.f32.gmra.mrb[0].mxu0 %v4486
      %v5079 = vpop.f32.mrb[0].mxu0
      %v5080 = vadd.f32 0.0, %v5079
      %v5081 = vpop.f32.mrb[0].mxu0
      %5082 = vmatprep.mubr.f32.mxu0 0.0
      %5083 = vmatmul.mubr.f32.gmra.mrb[0].mxu0 %v4489
      %v5084 = vpop.f32.mrb[0].mxu0
      %v5085 = vadd.f32 0.0, %v5084
      %v5086 = vpop.f32.mrb[0].mxu0
      %5087 = vmatprep.mubr.f32.mxu0 0.0
      %5088 = vmatmul.mubr.f32.gmra.mrb[0].mxu0 %v4492
      %v5089 = vpop.f32.mrb[0].mxu0
      %v5090 = vadd.f32 0.0, %v5089
      %v5091 = vpop.f32.mrb[0].mxu0
      %5092 = vmatprep.mubr.f32.mxu0 0.0
      %5093 = vmatmul.mubr.f32.gmra.mrb[0].mxu0 %v4495
      %v5094 = vpop.f32.mrb[0].mxu0
      %v5095 = vadd.f32 0.0, %v5094
      %v5096 = vpop.f32.mrb[0].mxu0
      %5097 = vmatprep.mubr.f32.mxu0 0.0
      %5098 = vmatmul.mubr.f32.gmra.mrb[0].mxu0 %v4498
      %v5099 = vpop.f32.mrb[0].mxu0
      %v5100 = vadd.f32 0.0, %v5099
      %v5101 = vpop.f32.mrb[0].mxu0
      %5102 = vmatprep.mubr.f32.mxu0 0.0
      %5103 = vmatmul.mubr.f32.gmra.mrb[0].mxu0 %v4501
      %v5104 = vpop.f32.mrb[0].mxu0
      %v5105 = vadd.f32 0.0, %v5104
      %v5106 = vpop.f32.mrb[0].mxu0
      %5107 = vmatprep.mubr.f32.mxu0 0.0
      %5108 = vmatmul.mubr.f32.gmra.mrb[0].mxu0 %v4504
      %v5109 = vpop.f32.mrb[0].mxu0
      %v5110 = vadd.f32 0.0, %v5109
      %v5111 = vpop.f32.mrb[0].mxu0
      %5112 = vmatprep.mubr.f32.mxu0 0.0
      %5113 = vmatmul.mubr.f32.gmra.mrb[0].mxu0 %v4507
      %v5114 = vpop.f32.mrb[0].mxu0
      %v5115 = vadd.f32 0.0, %v5114
      %v5116 = vpop.f32.mrb[0].mxu0
      %5117 = vmatprep.mubr.f32.mxu0 0.0
      %5118 = vmatmul.mubr.f32.gmra.mrb[0].mxu0 %v4510
      %v5119 = vpop.f32.mrb[0].mxu0
      %v5120 = vadd.f32 0.0, %v5119
      %v5121 = vpop.f32.mrb[0].mxu0
      %5122 = vmatprep.mubr.f32.mxu0 0.0
      %5123 = vmatmul.mubr.f32.gmra.mrb[0].mxu0 %v4513
      %v5124 = vpop.f32.mrb[0].mxu0
      %v5125 = vadd.f32 0.0, %v5124
      %v5126 = vpop.f32.mrb[0].mxu0
      %5127 = vmatprep.mubr.f32.mxu0 0.0
      %5128 = vmatmul.mubr.f32.gmra.mrb[0].mxu0 %v4516
      %v5129 = vpop.f32.mrb[0].mxu0
      %v5130 = vadd.f32 0.0, %v5129
      %v5131 = vpop.f32.mrb[0].mxu0
      %5132 = vmatprep.mubr.f32.mxu0 0.0
      %5133 = vmatmul.mubr.f32.gmra.mrb[0].mxu0 %v4519
      %v5134 = vpop.f32.mrb[0].mxu0
      %v5135 = vadd.f32 0.0, %v5134
      %v5136 = vpop.f32.mrb[0].mxu0
      %5137 = vmatprep.mubr.f32.mxu0 0.0
      %5138 = vmatmul.mubr.f32.gmra.mrb[0].mxu0 %v4522
      %v5139 = vpop.f32.mrb[0].mxu0
      %v5140 = vadd.f32 0.0, %v5139
      %v5141 = vpop.f32.mrb[0].mxu0
      %5142 = vmatprep.mubr.f32.mxu0 0.0
      %5143 = vmatmul.mubr.f32.gmra.mrb[0].mxu0 %v4525
      %v5144 = vpop.f32.mrb[0].mxu0
      %v5145 = vadd.f32 0.0, %v5144
      %v5146 = vpop.f32.mrb[0].mxu0
      %5147 = vmatprep.mubr.f32.mxu0 0.0
      %5148 = vmatmul.mubr.f32.gmra.mrb[0].mxu0 %v4528
      %v5149 = vpop.f32.mrb[0].mxu0
      %v5150 = vadd.f32 0.0, %v5149
      %v5151 = vpop.f32.mrb[0].mxu0
      %5152 = vmatprep.mubr.f32.mxu0 0.0
      %5153 = vmatmul.mubr.f32.gmra.mrb[0].mxu0 %v4531
      %v5154 = vpop.f32.mrb[0].mxu0
      %v5155 = vadd.f32 0.0, %v5154
      %v5156 = vpop.f32.mrb[0].mxu0
      %5157 = vmatprep.mubr.f32.mxu0 0.0
      %5158 = vmatmul.mubr.f32.gmra.mrb[0].mxu0 %v4534
      %v5159 = vpop.f32.mrb[0].mxu0
      %v5160 = vadd.f32 0.0, %v5159
      %v5161 = vpop.f32.mrb[0].mxu0
      %5162 = vmatprep.mubr.f32.mxu0 0.0
      %5163 = vmatmul.mubr.f32.gmra.mrb[0].mxu0 %v4537
      %v5164 = vpop.f32.mrb[0].mxu0
      %v5165 = vadd.f32 0.0, %v5164
      %v5166 = vpop.f32.mrb[0].mxu0
      %5167 = vmatprep.mubr.f32.mxu0 0.0
      %5168 = vmatmul.mubr.f32.gmra.mrb[0].mxu0 %v4540
      %v5169 = vpop.f32.mrb[0].mxu0
      %v5170 = vadd.f32 0.0, %v5169
      %v5171 = vpop.f32.mrb[0].mxu0
      %5172 = vmatprep.mubr.f32.mxu0 0.0
      %5173 = vmatmul.mubr.f32.gmra.mrb[0].mxu0 %v4543
      %v5174 = vpop.f32.mrb[0].mxu0
      %v5175 = vadd.f32 0.0, %v5174
      %v5176 = vpop.f32.mrb[0].mxu0
      %5177 = vmatprep.mubr.f32.mxu0 0.0
      %5178 = vmatmul.mubr.f32.gmra.mrb[0].mxu0 %v4546
      %v5179 = vpop.f32.mrb[0].mxu0
      %v5180 = vadd.f32 0.0, %v5179
      %v5181 = vpop.f32.mrb[0].mxu0
      %5182 = vmatprep.mubr.f32.mxu0 0.0
      %5183 = vmatmul.mubr.f32.gmra.mrb[0].mxu0 %v4549
      %v5184 = vpop.f32.mrb[0].mxu0
      %v5185 = vadd.f32 0.0, %v5184
      %v5186 = vpop.f32.mrb[0].mxu0
      %5187 = vmatprep.mubr.f32.mxu0 0.0
      %5188 = vmatmul.mubr.f32.gmra.mrb[0].mxu0 %v4552
      %v5189 = vpop.f32.mrb[0].mxu0
      %v5190 = vadd.f32 0.0, %v5189
      %v5191 = vpop.f32.mrb[0].mxu0
      %5192 = vmatprep.mubr.f32.mxu0 0.0
      %5193 = vmatmul.mubr.f32.gmra.mrb[0].mxu0 %v4555
      %v5194 = vpop.f32.mrb[0].mxu0
      %v5195 = vadd.f32 0.0, %v5194
      %v5196 = vpop.f32.mrb[0].mxu0
      %5197 = vmatprep.mubr.f32.mxu0 0.0
      %5198 = vmatmul.mubr.f32.gmra.mrb[0].mxu0 %v4558
      %v5199 = vpop.f32.mrb[0].mxu0
      %v5200 = vadd.f32 0.0, %v5199
      %v5201 = vpop.f32.mrb[0].mxu0
      %5202 = vmatprep.mubr.f32.mxu0 0.0
      %5203 = vmatmul.mubr.f32.gmra.mrb[0].mxu0 %v4561
      %v5204 = vpop.f32.mrb[0].mxu0
      %v5205 = vadd.f32 0.0, %v5204
      %v5206 = vpop.f32.mrb[0].mxu0
      %5207 = vmatprep.mubr.f32.mxu0 0.0
      %5208 = vmatmul.mubr.f32.gmra.mrb[0].mxu0 %v4564
      %v5209 = vpop.f32.mrb[0].mxu0
      %v5210 = vadd.f32 0.0, %v5209
      %v5211 = vpop.f32.mrb[0].mxu0
      %5212 = vmatprep.mubr.f32.mxu0 0.0
      %5213 = vmatmul.mubr.f32.gmra.mrb[0].mxu0 %v4567
      %v5214 = vpop.f32.mrb[0].mxu0
      %v5215 = vadd.f32 0.0, %v5214
      %v5216 = vpop.f32.mrb[0].mxu0
      %5217 = vmatprep.mubr.f32.mxu0 0.0
      %5218 = vmatmul.mubr.f32.gmra.mrb[0].mxu0 %v4570
      %v5219 = vpop.f32.mrb[0].mxu0
      %v5220 = vadd.f32 0.0, %v5219
      %v5221 = vpop.f32.mrb[0].mxu0
      %5222 = vmatprep.mubr.f32.mxu0 0.0
      %5223 = vmatmul.mubr.f32.gmra.mrb[0].mxu0 %v4573
      %v5224 = vpop.f32.mrb[0].mxu0
      %v5225 = vadd.f32 0.0, %v5224
      %v5226 = vpop.f32.mrb[0].mxu0
      %5227 = vmatprep.mubr.f32.mxu0 0.0
      %5228 = vmatmul.mubr.f32.gmra.mrb[0].mxu0 %v4576
      %v5229 = vpop.f32.mrb[0].mxu0
      %v5230 = vadd.f32 0.0, %v5229
      %v5231 = vpop.f32.mrb[0].mxu0
      %5232 = vmatprep.mubr.f32.mxu0 0.0
      %5233 = vmatmul.mubr.f32.gmra.mrb[0].mxu0 %v4579
      %v5234 = vpop.f32.mrb[0].mxu0
      %v5235 = vadd.f32 0.0, %v5234
      %v5236 = vpop.f32.mrb[0].mxu0
      %5237 = vmatprep.mubr.f32.mxu0 0.0
      %5238 = vmatmul.mubr.f32.gmra.mrb[0].mxu0 %v4582
      %v5239 = vpop.f32.mrb[0].mxu0
      %v5240 = vadd.f32 0.0, %v5239
      %v5241 = vpop.f32.mrb[0].mxu0
      %5242 = vmatprep.mubr.f32.mxu0 0.0
      %5243 = vmatmul.mubr.f32.gmra.mrb[0].mxu0 %v4585
      %v5244 = vpop.f32.mrb[0].mxu0
      %v5245 = vadd.f32 0.0, %v5244
      %v5246 = vpop.f32.mrb[0].mxu0
      %5247 = vmatprep.mubr.f32.mxu0 0.0
      %5248 = vmatmul.mubr.f32.gmra.mrb[0].mxu0 %v4588
      %v5249 = vpop.f32.mrb[0].mxu0
      %v5250 = vadd.f32 0.0, %v5249
      %v5251 = vpop.f32.mrb[0].mxu0
      %5252 = vmatprep.mubr.f32.mxu0 0.0
      %5253 = vmatmul.mubr.f32.gmra.mrb[0].mxu0 %v4591
      %v5254 = vpop.f32.mrb[0].mxu0
      %v5255 = vadd.f32 0.0, %v5254
      %v5256 = vpop.f32.mrb[0].mxu0
      %5257 = vmatprep.mubr.f32.mxu0 0.0
      %5258 = vmatmul.mubr.f32.gmra.mrb[0].mxu0 %v4594
      %v5259 = vpop.f32.mrb[0].mxu0
      %v5260 = vadd.f32 0.0, %v5259
      %v5261 = vpop.f32.mrb[0].mxu0
      %5262 = vmatprep.mubr.f32.mxu0 0.0
      %5263 = vmatmul.mubr.f32.gmra.mrb[0].mxu0 %v4597
      %v5264 = vpop.f32.mrb[0].mxu0
      %v5265 = vadd.f32 0.0, %v5264
      %v5266 = vpop.f32.mrb[0].mxu0
      %5267 = vmatprep.mubr.f32.mxu0 0.0
      %5268 = vmatmul.mubr.f32.gmra.mrb[0].mxu0 %v4600
      %v5269 = vpop.f32.mrb[0].mxu0
      %v5270 = vadd.f32 0.0, %v5269
      %v5271 = vpop.f32.mrb[0].mxu0
      %5272 = vmatprep.mubr.f32.mxu0 0.0
      %5273 = vmatmul.mubr.f32.gmra.mrb[0].mxu0 %v4603
      %v5274 = vpop.f32.mrb[0].mxu0
      %v5275 = vadd.f32 0.0, %v5274
      %v5276 = vpop.f32.mrb[0].mxu0
      %5277 = vmatprep.mubr.f32.mxu0 0.0
      %5278 = vmatmul.mubr.f32.gmra.mrb[0].mxu0 %v4606
      %v5279 = vpop.f32.mrb[0].mxu0
      %v5280 = vadd.f32 0.0, %v5279
      %v5281 = vpop.f32.mrb[0].mxu0
      %5282 = vmatprep.mubr.f32.mxu0 0.0
      %5283 = vmatmul.mubr.f32.gmra.mrb[0].mxu0 %v4609
      %v5284 = vpop.f32.mrb[0].mxu0
      %v5285 = vadd.f32 0.0, %v5284
      %v5286 = vpop.f32.mrb[0].mxu0
      %5287 = vmatprep.mubr.f32.mxu0 0.0
      %5288 = vmatmul.mubr.f32.gmra.mrb[0].mxu0 %v4612
      %v5289 = vpop.f32.mrb[0].mxu0
      %v5290 = vadd.f32 0.0, %v5289
      %v5291 = vpop.f32.mrb[0].mxu0
      %5292 = vmatprep.mubr.f32.mxu0 0.0
      %5293 = vmatmul.mubr.f32.gmra.mrb[0].mxu0 %v4615
      %v5294 = vpop.f32.mrb[0].mxu0
      %v5295 = vadd.f32 0.0, %v5294
      %v5296 = vpop.f32.mrb[0].mxu0
      %5297 = vmatprep.mubr.f32.mxu0 0.0
      %5298 = vmatmul.mubr.f32.gmra.mrb[0].mxu0 %v4618
      %v5299 = vpop.f32.mrb[0].mxu0
      %v5300 = vadd.f32 0.0, %v5299
      %v5301 = vpop.f32.mrb[0].mxu0
      %5302 = vmatprep.mubr.f32.mxu0 0.0
      %5303 = vmatmul.mubr.f32.gmra.mrb[0].mxu0 %v4621
      %v5304 = vpop.f32.mrb[0].mxu0
      %v5305 = vadd.f32 0.0, %v5304
      %v5306 = vpop.f32.mrb[0].mxu0
      %5307 = vmatprep.mubr.f32.mxu0 0.0
      %5308 = vmatmul.mubr.f32.gmra.mrb[0].mxu0 %v4624
      %v5309 = vpop.f32.mrb[0].mxu0
      %v5310 = vadd.f32 0.0, %v5309
      %v5311 = vpop.f32.mrb[0].mxu0
      %5312 = vmatprep.mubr.f32.mxu0 0.0
      %5313 = vmatmul.mubr.f32.gmra.mrb[0].mxu0 %v4627
      %v5314 = vpop.f32.mrb[0].mxu0
      %v5315 = vadd.f32 0.0, %v5314
      %v5316 = vpop.f32.mrb[0].mxu0
      %5317 = vmatprep.mubr.f32.mxu0 0.0
      %5318 = vmatmul.mubr.f32.gmra.mrb[0].mxu0 %v4630
      %v5319 = vpop.f32.mrb[0].mxu0
      %v5320 = vadd.f32 0.0, %v5319
      %v5321 = vpop.f32.mrb[0].mxu0
      %5322 = vmatprep.mubr.f32.mxu0 0.0
      %5323 = vmatmul.mubr.f32.gmra.mrb[0].mxu0 %v4633
      %v5324 = vpop.f32.mrb[0].mxu0
      %v5325 = vadd.f32 0.0, %v5324
      %v5326 = vpop.f32.mrb[0].mxu0
      %5327 = vmatprep.mubr.f32.mxu0 0.0
      %5328 = vmatmul.mubr.f32.gmra.mrb[0].mxu0 %v4636
      %v5329 = vpop.f32.mrb[0].mxu0
      %v5330 = vadd.f32 0.0, %v5329
      %v5331 = vpop.f32.mrb[0].mxu0
      %5332 = vmatprep.mubr.f32.mxu0 0.0
      %5333 = vmatmul.mubr.f32.gmra.mrb[0].mxu0 %v4639
      %v5334 = vpop.f32.mrb[0].mxu0
      %v5335 = vadd.f32 0.0, %v5334
      %v5336 = vpop.f32.mrb[0].mxu0
      %5337 = vmatprep.mubr.f32.mxu0 0.0
      %5338 = vmatmul.mubr.f32.gmra.mrb[0].mxu0 %v4642
      %v5339 = vpop.f32.mrb[0].mxu0
      %v5340 = vadd.f32 0.0, %v5339
      %v5341 = vpop.f32.mrb[0].mxu0
      %5342 = vmatprep.mubr.f32.mxu0 0.0
      %5343 = vmatmul.mubr.f32.gmra.mrb[0].mxu0 %v4645
      %v5344 = vpop.f32.mrb[0].mxu0
      %v5345 = vadd.f32 0.0, %v5344
      %v5346 = vpop.f32.mrb[0].mxu0
      %5347 = vmatprep.mubr.f32.mxu0 0.0
      %5348 = vmatmul.mubr.f32.gmra.mrb[0].mxu0 %v4648
      %v5349 = vpop.f32.mrb[0].mxu0
      %v5350 = vadd.f32 0.0, %v5349
      %v5351 = vpop.f32.mrb[0].mxu0
      %5352 = vmatprep.mubr.f32.mxu0 0.0
      %5353 = vmatmul.mubr.f32.gmra.mrb[0].mxu0 %v4651
      %v5354 = vpop.f32.mrb[0].mxu0
      %v5355 = vadd.f32 0.0, %v5354
      %v5356 = vpop.f32.mrb[0].mxu0
      %5357 = vdwg.mxu0
      %v5358 = vmax.f32 %v4720, 0.0
      %v5359 = vmax.f32 %v4725, 0.0
      %v5360 = vmax.f32 %v4730, 0.0
      %v5361 = vmax.f32 %v4735, 0.0
      %v5362 = vmax.f32 %v4740, 0.0
      %v5363 = vmax.f32 %v4745, 0.0
      %v5364 = vmax.f32 %v4750, 0.0
      %v5365 = vmax.f32 %v4755, 0.0
      %v5366 = vmax.f32 %v4760, 0.0
      %v5367 = vmax.f32 %v4765, 0.0
      %v5368 = vmax.f32 %v4770, 0.0
      %v5369 = vmax.f32 %v4775, 0.0
      %v5370 = vmax.f32 %v4780, 0.0
      %v5371 = vmax.f32 %v4785, 0.0
      %v5372 = vmax.f32 %v4790, 0.0
      %v5373 = vmax.f32 %v4795, 0.0
      %v5374 = vmax.f32 %v4800, 0.0
      %v5375 = vmax.f32 %v4805, 0.0
      %v5376 = vmax.f32 %v4810, 0.0
      %v5377 = vmax.f32 %v4815, 0.0
      %v5378 = vmax.f32 %v4820, 0.0
      %v5379 = vmax.f32 %v4825, 0.0
      %v5380 = vmax.f32 %v4830, 0.0
      %v5381 = vmax.f32 %v4835, 0.0
      %v5382 = vmax.f32 %v4840, 0.0
      %v5383 = vmax.f32 %v4845, 0.0
      %v5384 = vmax.f32 %v4850, 0.0
      %v5385 = vmax.f32 %v4855, 0.0
      %v5386 = vmax.f32 %v4860, 0.0
      %v5387 = vmax.f32 %v4865, 0.0
      %v5388 = vmax.f32 %v4870, 0.0
      %v5389 = vmax.f32 %v4875, 0.0
      %v5390 = vmax.f32 %v4880, 0.0
      %v5391 = vmax.f32 %v4885, 0.0
      %v5392 = vmax.f32 %v4890, 0.0
      %v5393 = vmax.f32 %v4895, 0.0
      %v5394 = vmax.f32 %v4900, 0.0
      %v5395 = vmax.f32 %v4905, 0.0
      %v5396 = vmax.f32 %v4910, 0.0
      %v5397 = vmax.f32 %v4915, 0.0
      %v5398 = vmax.f32 %v4920, 0.0
      %v5399 = vmax.f32 %v4925, 0.0
      %v5400 = vmax.f32 %v4930, 0.0
      %v5401 = vmax.f32 %v4935, 0.0
      %v5402 = vmax.f32 %v4940, 0.0
      %v5403 = vmax.f32 %v4945, 0.0
      %v5404 = vmax.f32 %v4950, 0.0
      %v5405 = vmax.f32 %v4955, 0.0
      %v5406 = vmax.f32 %v4960, 0.0
      %v5407 = vmax.f32 %v4965, 0.0
      %v5408 = vmax.f32 %v4970, 0.0
      %v5409 = vmax.f32 %v4975, 0.0
      %v5410 = vmax.f32 %v4980, 0.0
      %v5411 = vmax.f32 %v4985, 0.0
      %v5412 = vmax.f32 %v4990, 0.0
      %v5413 = vmax.f32 %v4995, 0.0
      %v5414 = vmax.f32 %v5000, 0.0
      %v5415 = vmax.f32 %v5005, 0.0
      %v5416 = vmax.f32 %v5010, 0.0
      %v5417 = vmax.f32 %v5015, 0.0
      %v5418 = vmax.f32 %v5020, 0.0
      %v5419 = vmax.f32 %v5025, 0.0
      %v5420 = vmax.f32 %v5030, 0.0
      %v5421 = vmax.f32 %v5035, 0.0
      %v5422 = vmax.f32 %v5040, 0.0
      %v5423 = vmax.f32 %v5045, 0.0
      %v5424 = vmax.f32 %v5050, 0.0
      %v5425 = vmax.f32 %v5055, 0.0
      %v5426 = vmax.f32 %v5060, 0.0
      %v5427 = vmax.f32 %v5065, 0.0
      %v5428 = vmax.f32 %v5070, 0.0
      %v5429 = vmax.f32 %v5075, 0.0
      %v5430 = vmax.f32 %v5080, 0.0
      %v5431 = vmax.f32 %v5085, 0.0
      %v5432 = vmax.f32 %v5090, 0.0
      %v5433 = vmax.f32 %v5095, 0.0
      %v5434 = vmax.f32 %v5100, 0.0
      %v5435 = vmax.f32 %v5105, 0.0
      %v5436 = vmax.f32 %v5110, 0.0
      %v5437 = vmax.f32 %v5115, 0.0
      %v5438 = vmax.f32 %v5120, 0.0
      %v5439 = vmax.f32 %v5125, 0.0
      %v5440 = vmax.f32 %v5130, 0.0
      %v5441 = vmax.f32 %v5135, 0.0
      %v5442 = vmax.f32 %v5140, 0.0
      %v5443 = vmax.f32 %v5145, 0.0
      %v5444 = vmax.f32 %v5150, 0.0
      %v5445 = vmax.f32 %v5155, 0.0
      %v5446 = vmax.f32 %v5160, 0.0
      %v5447 = vmax.f32 %v5165, 0.0
      %v5448 = vmax.f32 %v5170, 0.0
      %v5449 = vmax.f32 %v5175, 0.0
      %v5450 = vmax.f32 %v5180, 0.0
      %v5451 = vmax.f32 %v5185, 0.0
      %v5452 = vmax.f32 %v5190, 0.0
      %v5453 = vmax.f32 %v5195, 0.0
      %v5454 = vmax.f32 %v5200, 0.0
      %v5455 = vmax.f32 %v5205, 0.0
      %v5456 = vmax.f32 %v5210, 0.0
      %v5457 = vmax.f32 %v5215, 0.0
      %v5458 = vmax.f32 %v5220, 0.0
      %v5459 = vmax.f32 %v5225, 0.0
      %v5460 = vmax.f32 %v5230, 0.0
      %v5461 = vmax.f32 %v5235, 0.0
      %v5462 = vmax.f32 %v5240, 0.0
      %v5463 = vmax.f32 %v5245, 0.0
      %v5464 = vmax.f32 %v5250, 0.0
      %v5465 = vmax.f32 %v5255, 0.0
      %v5466 = vmax.f32 %v5260, 0.0
      %v5467 = vmax.f32 %v5265, 0.0
      %v5468 = vmax.f32 %v5270, 0.0
      %v5469 = vmax.f32 %v5275, 0.0
      %v5470 = vmax.f32 %v5280, 0.0
      %v5471 = vmax.f32 %v5285, 0.0
      %v5472 = vmax.f32 %v5290, 0.0
      %v5473 = vmax.f32 %v5295, 0.0
      %v5474 = vmax.f32 %v5300, 0.0
      %v5475 = vmax.f32 %v5305, 0.0
      %v5476 = vmax.f32 %v5310, 0.0
      %v5477 = vmax.f32 %v5315, 0.0
      %v5478 = vmax.f32 %v5320, 0.0
      %v5479 = vmax.f32 %v5325, 0.0
      %v5480 = vmax.f32 %v5330, 0.0
      %v5481 = vmax.f32 %v5335, 0.0
      %v5482 = vmax.f32 %v5340, 0.0
      %v5483 = vmax.f32 %v5345, 0.0
      %v5484 = vmax.f32 %v5350, 0.0
      %v5485 = vmax.f32 %v5355, 0.0
      %v5486 = vld [vmem:[%s6] sm:$0xff]
      %v5487 = vld [vmem:[%s6 + $0x8] sm:$0xff]
      %v5488 = vld [vmem:[%s6 + $0x10] sm:$0xff]
      %v5489 = vld [vmem:[%s6 + $0x18] sm:$0xff]
      %v5491 = vsel %vm603, %v5358, 0
      %v5494 = vsel %vm603, %v5359, 0
      %v5497 = vsel %vm603, %v5360, 0
      %v5500 = vsel %vm603, %v5361, 0
      %v5503 = vsel %vm603, %v5362, 0
      %v5506 = vsel %vm603, %v5363, 0
      %v5509 = vsel %vm603, %v5364, 0
      %v5512 = vsel %vm603, %v5365, 0
      %v5515 = vsel %vm603, %v5366, 0
      %v5518 = vsel %vm603, %v5367, 0
      %v5521 = vsel %vm603, %v5368, 0
      %v5524 = vsel %vm603, %v5369, 0
      %v5527 = vsel %vm603, %v5370, 0
      %v5530 = vsel %vm603, %v5371, 0
      %v5533 = vsel %vm603, %v5372, 0
      %v5536 = vsel %vm603, %v5373, 0
      %v5539 = vsel %vm603, %v5374, 0
      %v5542 = vsel %vm603, %v5375, 0
      %v5545 = vsel %vm603, %v5376, 0
      %v5548 = vsel %vm603, %v5377, 0
      %v5551 = vsel %vm603, %v5378, 0
      %v5554 = vsel %vm603, %v5379, 0
      %v5557 = vsel %vm603, %v5380, 0
      %v5560 = vsel %vm603, %v5381, 0
      %v5563 = vsel %vm603, %v5382, 0
      %v5566 = vsel %vm603, %v5383, 0
      %v5569 = vsel %vm603, %v5384, 0
      %v5572 = vsel %vm603, %v5385, 0
      %v5575 = vsel %vm603, %v5386, 0
      %v5578 = vsel %vm603, %v5387, 0
      %v5581 = vsel %vm603, %v5388, 0
      %v5584 = vsel %vm603, %v5389, 0
      %v5587 = vsel %vm603, %v5390, 0
      %v5590 = vsel %vm603, %v5391, 0
      %v5593 = vsel %vm603, %v5392, 0
      %v5596 = vsel %vm603, %v5393, 0
      %v5599 = vsel %vm603, %v5394, 0
      %v5602 = vsel %vm603, %v5395, 0
      %v5605 = vsel %vm603, %v5396, 0
      %v5608 = vsel %vm603, %v5397, 0
      %v5611 = vsel %vm603, %v5398, 0
      %v5614 = vsel %vm603, %v5399, 0
      %v5617 = vsel %vm603, %v5400, 0
      %v5620 = vsel %vm603, %v5401, 0
      %v5623 = vsel %vm603, %v5402, 0
      %v5626 = vsel %vm603, %v5403, 0
      %v5629 = vsel %vm603, %v5404, 0
      %v5632 = vsel %vm603, %v5405, 0
      %v5635 = vsel %vm603, %v5406, 0
      %v5638 = vsel %vm603, %v5407, 0
      %v5641 = vsel %vm603, %v5408, 0
      %v5644 = vsel %vm603, %v5409, 0
      %v5647 = vsel %vm603, %v5410, 0
      %v5650 = vsel %vm603, %v5411, 0
      %v5653 = vsel %vm603, %v5412, 0
      %v5656 = vsel %vm603, %v5413, 0
      %v5659 = vsel %vm603, %v5414, 0
      %v5662 = vsel %vm603, %v5415, 0
      %v5665 = vsel %vm603, %v5416, 0
      %v5668 = vsel %vm603, %v5417, 0
      %v5671 = vsel %vm603, %v5418, 0
      %v5674 = vsel %vm603, %v5419, 0
      %v5677 = vsel %vm603, %v5420, 0
      %v5680 = vsel %vm603, %v5421, 0
      %v5683 = vsel %vm603, %v5422, 0
      %v5686 = vsel %vm603, %v5423, 0
      %v5689 = vsel %vm603, %v5424, 0
      %v5692 = vsel %vm603, %v5425, 0
      %v5695 = vsel %vm603, %v5426, 0
      %v5698 = vsel %vm603, %v5427, 0
      %v5701 = vsel %vm603, %v5428, 0
      %v5704 = vsel %vm603, %v5429, 0
      %v5707 = vsel %vm603, %v5430, 0
      %v5710 = vsel %vm603, %v5431, 0
      %v5713 = vsel %vm603, %v5432, 0
      %v5716 = vsel %vm603, %v5433, 0
      %v5719 = vsel %vm603, %v5434, 0
      %v5722 = vsel %vm603, %v5435, 0
      %v5725 = vsel %vm603, %v5436, 0
      %v5728 = vsel %vm603, %v5437, 0
      %v5731 = vsel %vm603, %v5438, 0
      %v5734 = vsel %vm603, %v5439, 0
      %v5737 = vsel %vm603, %v5440, 0
      %v5740 = vsel %vm603, %v5441, 0
      %v5743 = vsel %vm603, %v5442, 0
      %v5746 = vsel %vm603, %v5443, 0
      %v5749 = vsel %vm603, %v5444, 0
      %v5752 = vsel %vm603, %v5445, 0
      %v5755 = vsel %vm603, %v5446, 0
      %v5758 = vsel %vm603, %v5447, 0
      %v5761 = vsel %vm603, %v5448, 0
      %v5764 = vsel %vm603, %v5449, 0
      %v5767 = vsel %vm603, %v5450, 0
      %v5770 = vsel %vm603, %v5451, 0
      %v5773 = vsel %vm603, %v5452, 0
      %v5776 = vsel %vm603, %v5453, 0
      %v5779 = vsel %vm603, %v5454, 0
      %v5782 = vsel %vm603, %v5455, 0
      %v5785 = vsel %vm603, %v5456, 0
      %v5788 = vsel %vm603, %v5457, 0
      %v5791 = vsel %vm603, %v5458, 0
      %v5794 = vsel %vm603, %v5459, 0
      %v5797 = vsel %vm603, %v5460, 0
      %v5800 = vsel %vm603, %v5461, 0
      %v5803 = vsel %vm603, %v5462, 0
      %v5806 = vsel %vm603, %v5463, 0
      %v5809 = vsel %vm603, %v5464, 0
      %v5812 = vsel %vm603, %v5465, 0
      %v5815 = vsel %vm603, %v5466, 0
      %v5818 = vsel %vm603, %v5467, 0
      %v5821 = vsel %vm603, %v5468, 0
      %v5824 = vsel %vm603, %v5469, 0
      %v5827 = vsel %vm603, %v5470, 0
      %v5830 = vsel %vm603, %v5471, 0
      %v5833 = vsel %vm603, %v5472, 0
      %v5836 = vsel %vm603, %v5473, 0
      %v5839 = vsel %vm603, %v5474, 0
      %v5842 = vsel %vm603, %v5475, 0
      %v5845 = vsel %vm603, %v5476, 0
      %v5848 = vsel %vm603, %v5477, 0
      %v5851 = vsel %vm603, %v5478, 0
      %v5854 = vsel %vm603, %v5479, 0
      %v5857 = vsel %vm603, %v5480, 0
      %v5860 = vsel %vm603, %v5481, 0
      %v5863 = vsel %vm603, %v5482, 0
      %v5866 = vsel %vm603, %v5483, 0
      %v5869 = vsel %vm603, %v5484, 0
      %v5872 = vsel %vm603, %v5485, 0
      %5874 = vmatprep.subr.mxu0 0.0
      %5875 = vmatpush1.msra.mxu0 %v5486
      %5876 = vmatprep.subr.mxu0 0.0
      %5877 = vmatpush1.msra.mxu0 %v5487
      %5878 = vmatprep.subr.mxu0 0.0
      %5879 = vmatpush1.msra.mxu0 %v5488
      %5880 = vmatprep.subr.mxu0 0.0
      %5881 = vmatpush1.msra.mxu0 %v5489
      %5882 = vmatprep.subr.mxu0 0.0
      %5883 = vmatpush1.msra.mxu0 0.0
      %5884 = vmatprep.subr.mxu0 0.0
      %5885 = vmatpush1.msra.mxu0 0.0
      %5886 = vmatprep.subr.mxu0 0.0
      %5887 = vmatpush1.msra.mxu0 0.0
      %5888 = vmatprep.subr.mxu0 0.0
      %5889 = vmatpush1.msra.mxu0 0.0
      %5890 = vmatprep.subr.mxu0 0.0
      %5891 = vmatpush1.msra.mxu0 0.0
      %5892 = vmatprep.subr.mxu0 0.0
      %5893 = vmatpush1.msra.mxu0 0.0
      %5894 = vmatprep.subr.mxu0 0.0
      %5895 = vmatpush1.msra.mxu0 0.0
      %5896 = vmatprep.subr.mxu0 0.0
      %5897 = vmatpush1.msra.mxu0 0.0
      %5898 = vmatprep.subr.mxu0 0.0
      %5899 = vmatpush1.msra.mxu0 0.0
      %5900 = vmatprep.subr.mxu0 0.0
      %5901 = vmatpush1.msra.mxu0 0.0
      %5902 = vmatprep.subr.mxu0 0.0
      %5903 = vmatpush1.msra.mxu0 0.0
      %5904 = vmatprep.subr.mxu0 0.0
      %5905 = vmatpush1.msra.mxu0 0.0
      %5906 = vmatprep.subr.mxu0 0.0
      %5907 = vmatpush1.msra.mxu0 0.0
      %5908 = vmatprep.subr.mxu0 0.0
      %5909 = vmatpush1.msra.mxu0 0.0
      %5910 = vmatprep.subr.mxu0 0.0
      %5911 = vmatpush1.msra.mxu0 0.0
      %5912 = vmatprep.subr.mxu0 0.0
      %5913 = vmatpush1.msra.mxu0 0.0
      %5914 = vmatprep.subr.mxu0 0.0
      %5915 = vmatpush1.msra.mxu0 0.0
      %5916 = vmatprep.subr.mxu0 0.0
      %5917 = vmatpush1.msra.mxu0 0.0
      %5918 = vmatprep.subr.mxu0 0.0
      %5919 = vmatpush1.msra.mxu0 0.0
      %5920 = vmatprep.subr.mxu0 0.0
      %5921 = vmatpush1.msra.mxu0 0.0
      %5922 = vmatprep.subr.mxu0 0.0
      %5923 = vmatpush1.msra.mxu0 0.0
      %5924 = vmatprep.subr.mxu0 0.0
      %5925 = vmatpush1.msra.mxu0 0.0
      %5926 = vmatprep.subr.mxu0 0.0
      %5927 = vmatpush1.msra.mxu0 0.0
      %5928 = vmatprep.subr.mxu0 0.0
      %5929 = vmatpush1.msra.mxu0 0.0
      %5930 = vmatprep.subr.mxu0 0.0
      %5931 = vmatpush1.msra.mxu0 0.0
      %5932 = vmatprep.subr.mxu0 0.0
      %5933 = vmatpush1.msra.mxu0 0.0
      %5934 = vmatprep.subr.mxu0 0.0
      %5935 = vmatpush1.msra.mxu0 0.0
      %5936 = vmatprep.subr.mxu0 0.0
      %5937 = vmatpush1.msra.mxu0 0.0
      %5938 = vmatprep.mubr.f32.mxu0 0.0
      %5939 = vmatmul.mubr.f32.gmra.mrb[0].mxu0 %v5491
      %v5940 = vpop.f32.mrb[0].mxu0
      %v5941 = vadd.f32 0.0, %v5940
      %v5942 = vpop.f32.mrb[0].mxu0
      %5943 = vmatprep.mubr.f32.mxu0 0.0
      %5944 = vmatmul.mubr.f32.gmra.mrb[0].mxu0 %v5494
      %v5945 = vpop.f32.mrb[0].mxu0
      %v5946 = vadd.f32 0.0, %v5945
      %v5947 = vpop.f32.mrb[0].mxu0
      %5948 = vmatprep.mubr.f32.mxu0 0.0
      %5949 = vmatmul.mubr.f32.gmra.mrb[0].mxu0 %v5497
      %v5950 = vpop.f32.mrb[0].mxu0
      %v5951 = vadd.f32 0.0, %v5950
      %v5952 = vpop.f32.mrb[0].mxu0
      %5953 = vmatprep.mubr.f32.mxu0 0.0
      %5954 = vmatmul.mubr.f32.gmra.mrb[0].mxu0 %v5500
      %v5955 = vpop.f32.mrb[0].mxu0
      %v5956 = vadd.f32 0.0, %v5955
      %v5957 = vpop.f32.mrb[0].mxu0
      %5958 = vmatprep.mubr.f32.mxu0 0.0
      %5959 = vmatmul.mubr.f32.gmra.mrb[0].mxu0 %v5503
      %v5960 = vpop.f32.mrb[0].mxu0
      %v5961 = vadd.f32 0.0, %v5960
      %v5962 = vpop.f32.mrb[0].mxu0
      %5963 = vmatprep.mubr.f32.mxu0 0.0
      %5964 = vmatmul.mubr.f32.gmra.mrb[0].mxu0 %v5506
      %v5965 = vpop.f32.mrb[0].mxu0
      %v5966 = vadd.f32 0.0, %v5965
      %v5967 = vpop.f32.mrb[0].mxu0
      %5968 = vmatprep.mubr.f32.mxu0 0.0
      %5969 = vmatmul.mubr.f32.gmra.mrb[0].mxu0 %v5509
      %v5970 = vpop.f32.mrb[0].mxu0
      %v5971 = vadd.f32 0.0, %v5970
      %v5972 = vpop.f32.mrb[0].mxu0
      %5973 = vmatprep.mubr.f32.mxu0 0.0
      %5974 = vmatmul.mubr.f32.gmra.mrb[0].mxu0 %v5512
      %v5975 = vpop.f32.mrb[0].mxu0
      %v5976 = vadd.f32 0.0, %v5975
      %v5977 = vpop.f32.mrb[0].mxu0
      %5978 = vmatprep.mubr.f32.mxu0 0.0
      %5979 = vmatmul.mubr.f32.gmra.mrb[0].mxu0 %v5515
      %v5980 = vpop.f32.mrb[0].mxu0
      %v5981 = vadd.f32 0.0, %v5980
      %v5982 = vpop.f32.mrb[0].mxu0
      %5983 = vmatprep.mubr.f32.mxu0 0.0
      %5984 = vmatmul.mubr.f32.gmra.mrb[0].mxu0 %v5518
      %v5985 = vpop.f32.mrb[0].mxu0
      %v5986 = vadd.f32 0.0, %v5985
      %v5987 = vpop.f32.mrb[0].mxu0
      %5988 = vmatprep.mubr.f32.mxu0 0.0
      %5989 = vmatmul.mubr.f32.gmra.mrb[0].mxu0 %v5521
      %v5990 = vpop.f32.mrb[0].mxu0
      %v5991 = vadd.f32 0.0, %v5990
      %v5992 = vpop.f32.mrb[0].mxu0
      %5993 = vmatprep.mubr.f32.mxu0 0.0
      %5994 = vmatmul.mubr.f32.gmra.mrb[0].mxu0 %v5524
      %v5995 = vpop.f32.mrb[0].mxu0
      %v5996 = vadd.f32 0.0, %v5995
      %v5997 = vpop.f32.mrb[0].mxu0
      %5998 = vmatprep.mubr.f32.mxu0 0.0
      %5999 = vmatmul.mubr.f32.gmra.mrb[0].mxu0 %v5527
      %v6000 = vpop.f32.mrb[0].mxu0
      %v6001 = vadd.f32 0.0, %v6000
      %v6002 = vpop.f32.mrb[0].mxu0
      %6003 = vmatprep.mubr.f32.mxu0 0.0
      %6004 = vmatmul.mubr.f32.gmra.mrb[0].mxu0 %v5530
      %v6005 = vpop.f32.mrb[0].mxu0
      %v6006 = vadd.f32 0.0, %v6005
      %v6007 = vpop.f32.mrb[0].mxu0
      %6008 = vmatprep.mubr.f32.mxu0 0.0
      %6009 = vmatmul.mubr.f32.gmra.mrb[0].mxu0 %v5533
      %v6010 = vpop.f32.mrb[0].mxu0
      %v6011 = vadd.f32 0.0, %v6010
      %v6012 = vpop.f32.mrb[0].mxu0
      %6013 = vmatprep.mubr.f32.mxu0 0.0
      %6014 = vmatmul.mubr.f32.gmra.mrb[0].mxu0 %v5536
      %v6015 = vpop.f32.mrb[0].mxu0
      %v6016 = vadd.f32 0.0, %v6015
      %v6017 = vpop.f32.mrb[0].mxu0
      %6018 = vmatprep.mubr.f32.mxu0 0.0
      %6019 = vmatmul.mubr.f32.gmra.mrb[0].mxu0 %v5539
      %v6020 = vpop.f32.mrb[0].mxu0
      %v6021 = vadd.f32 0.0, %v6020
      %v6022 = vpop.f32.mrb[0].mxu0
      %6023 = vmatprep.mubr.f32.mxu0 0.0
      %6024 = vmatmul.mubr.f32.gmra.mrb[0].mxu0 %v5542
      %v6025 = vpop.f32.mrb[0].mxu0
      %v6026 = vadd.f32 0.0, %v6025
      %v6027 = vpop.f32.mrb[0].mxu0
      %6028 = vmatprep.mubr.f32.mxu0 0.0
      %6029 = vmatmul.mubr.f32.gmra.mrb[0].mxu0 %v5545
      %v6030 = vpop.f32.mrb[0].mxu0
      %v6031 = vadd.f32 0.0, %v6030
      %v6032 = vpop.f32.mrb[0].mxu0
      %6033 = vmatprep.mubr.f32.mxu0 0.0
      %6034 = vmatmul.mubr.f32.gmra.mrb[0].mxu0 %v5548
      %v6035 = vpop.f32.mrb[0].mxu0
      %v6036 = vadd.f32 0.0, %v6035
      %v6037 = vpop.f32.mrb[0].mxu0
      %6038 = vmatprep.mubr.f32.mxu0 0.0
      %6039 = vmatmul.mubr.f32.gmra.mrb[0].mxu0 %v5551
      %v6040 = vpop.f32.mrb[0].mxu0
      %v6041 = vadd.f32 0.0, %v6040
      %v6042 = vpop.f32.mrb[0].mxu0
      %6043 = vmatprep.mubr.f32.mxu0 0.0
      %6044 = vmatmul.mubr.f32.gmra.mrb[0].mxu0 %v5554
      %v6045 = vpop.f32.mrb[0].mxu0
      %v6046 = vadd.f32 0.0, %v6045
      %v6047 = vpop.f32.mrb[0].mxu0
      %6048 = vmatprep.mubr.f32.mxu0 0.0
      %6049 = vmatmul.mubr.f32.gmra.mrb[0].mxu0 %v5557
      %v6050 = vpop.f32.mrb[0].mxu0
      %v6051 = vadd.f32 0.0, %v6050
      %v6052 = vpop.f32.mrb[0].mxu0
      %6053 = vmatprep.mubr.f32.mxu0 0.0
      %6054 = vmatmul.mubr.f32.gmra.mrb[0].mxu0 %v5560
      %v6055 = vpop.f32.mrb[0].mxu0
      %v6056 = vadd.f32 0.0, %v6055
      %v6057 = vpop.f32.mrb[0].mxu0
      %6058 = vmatprep.mubr.f32.mxu0 0.0
      %6059 = vmatmul.mubr.f32.gmra.mrb[0].mxu0 %v5563
      %v6060 = vpop.f32.mrb[0].mxu0
      %v6061 = vadd.f32 0.0, %v6060
      %v6062 = vpop.f32.mrb[0].mxu0
      %6063 = vmatprep.mubr.f32.mxu0 0.0
      %6064 = vmatmul.mubr.f32.gmra.mrb[0].mxu0 %v5566
      %v6065 = vpop.f32.mrb[0].mxu0
      %v6066 = vadd.f32 0.0, %v6065
      %v6067 = vpop.f32.mrb[0].mxu0
      %6068 = vmatprep.mubr.f32.mxu0 0.0
      %6069 = vmatmul.mubr.f32.gmra.mrb[0].mxu0 %v5569
      %v6070 = vpop.f32.mrb[0].mxu0
      %v6071 = vadd.f32 0.0, %v6070
      %v6072 = vpop.f32.mrb[0].mxu0
      %6073 = vmatprep.mubr.f32.mxu0 0.0
      %6074 = vmatmul.mubr.f32.gmra.mrb[0].mxu0 %v5572
      %v6075 = vpop.f32.mrb[0].mxu0
      %v6076 = vadd.f32 0.0, %v6075
      %v6077 = vpop.f32.mrb[0].mxu0
      %6078 = vmatprep.mubr.f32.mxu0 0.0
      %6079 = vmatmul.mubr.f32.gmra.mrb[0].mxu0 %v5575
      %v6080 = vpop.f32.mrb[0].mxu0
      %v6081 = vadd.f32 0.0, %v6080
      %v6082 = vpop.f32.mrb[0].mxu0
      %6083 = vmatprep.mubr.f32.mxu0 0.0
      %6084 = vmatmul.mubr.f32.gmra.mrb[0].mxu0 %v5578
      %v6085 = vpop.f32.mrb[0].mxu0
      %v6086 = vadd.f32 0.0, %v6085
      %v6087 = vpop.f32.mrb[0].mxu0
      %6088 = vmatprep.mubr.f32.mxu0 0.0
      %6089 = vmatmul.mubr.f32.gmra.mrb[0].mxu0 %v5581
      %v6090 = vpop.f32.mrb[0].mxu0
      %v6091 = vadd.f32 0.0, %v6090
      %v6092 = vpop.f32.mrb[0].mxu0
      %6093 = vmatprep.mubr.f32.mxu0 0.0
      %6094 = vmatmul.mubr.f32.gmra.mrb[0].mxu0 %v5584
      %v6095 = vpop.f32.mrb[0].mxu0
      %v6096 = vadd.f32 0.0, %v6095
      %v6097 = vpop.f32.mrb[0].mxu0
      %6098 = vmatprep.mubr.f32.mxu0 0.0
      %6099 = vmatmul.mubr.f32.gmra.mrb[0].mxu0 %v5587
      %v6100 = vpop.f32.mrb[0].mxu0
      %v6101 = vadd.f32 0.0, %v6100
      %v6102 = vpop.f32.mrb[0].mxu0
      %6103 = vmatprep.mubr.f32.mxu0 0.0
      %6104 = vmatmul.mubr.f32.gmra.mrb[0].mxu0 %v5590
      %v6105 = vpop.f32.mrb[0].mxu0
      %v6106 = vadd.f32 0.0, %v6105
      %v6107 = vpop.f32.mrb[0].mxu0
      %6108 = vmatprep.mubr.f32.mxu0 0.0
      %6109 = vmatmul.mubr.f32.gmra.mrb[0].mxu0 %v5593
      %v6110 = vpop.f32.mrb[0].mxu0
      %v6111 = vadd.f32 0.0, %v6110
      %v6112 = vpop.f32.mrb[0].mxu0
      %6113 = vmatprep.mubr.f32.mxu0 0.0
      %6114 = vmatmul.mubr.f32.gmra.mrb[0].mxu0 %v5596
      %v6115 = vpop.f32.mrb[0].mxu0
      %v6116 = vadd.f32 0.0, %v6115
      %v6117 = vpop.f32.mrb[0].mxu0
      %6118 = vmatprep.mubr.f32.mxu0 0.0
      %6119 = vmatmul.mubr.f32.gmra.mrb[0].mxu0 %v5599
      %v6120 = vpop.f32.mrb[0].mxu0
      %v6121 = vadd.f32 0.0, %v6120
      %v6122 = vpop.f32.mrb[0].mxu0
      %6123 = vmatprep.mubr.f32.mxu0 0.0
      %6124 = vmatmul.mubr.f32.gmra.mrb[0].mxu0 %v5602
      %v6125 = vpop.f32.mrb[0].mxu0
      %v6126 = vadd.f32 0.0, %v6125
      %v6127 = vpop.f32.mrb[0].mxu0
      %6128 = vmatprep.mubr.f32.mxu0 0.0
      %6129 = vmatmul.mubr.f32.gmra.mrb[0].mxu0 %v5605
      %v6130 = vpop.f32.mrb[0].mxu0
      %v6131 = vadd.f32 0.0, %v6130
      %v6132 = vpop.f32.mrb[0].mxu0
      %6133 = vmatprep.mubr.f32.mxu0 0.0
      %6134 = vmatmul.mubr.f32.gmra.mrb[0].mxu0 %v5608
      %v6135 = vpop.f32.mrb[0].mxu0
      %v6136 = vadd.f32 0.0, %v6135
      %v6137 = vpop.f32.mrb[0].mxu0
      %6138 = vmatprep.mubr.f32.mxu0 0.0
      %6139 = vmatmul.mubr.f32.gmra.mrb[0].mxu0 %v5611
      %v6140 = vpop.f32.mrb[0].mxu0
      %v6141 = vadd.f32 0.0, %v6140
      %v6142 = vpop.f32.mrb[0].mxu0
      %6143 = vmatprep.mubr.f32.mxu0 0.0
      %6144 = vmatmul.mubr.f32.gmra.mrb[0].mxu0 %v5614
      %v6145 = vpop.f32.mrb[0].mxu0
      %v6146 = vadd.f32 0.0, %v6145
      %v6147 = vpop.f32.mrb[0].mxu0
      %6148 = vmatprep.mubr.f32.mxu0 0.0
      %6149 = vmatmul.mubr.f32.gmra.mrb[0].mxu0 %v5617
      %v6150 = vpop.f32.mrb[0].mxu0
      %v6151 = vadd.f32 0.0, %v6150
      %v6152 = vpop.f32.mrb[0].mxu0
      %6153 = vmatprep.mubr.f32.mxu0 0.0
      %6154 = vmatmul.mubr.f32.gmra.mrb[0].mxu0 %v5620
      %v6155 = vpop.f32.mrb[0].mxu0
      %v6156 = vadd.f32 0.0, %v6155
      %v6157 = vpop.f32.mrb[0].mxu0
      %6158 = vmatprep.mubr.f32.mxu0 0.0
      %6159 = vmatmul.mubr.f32.gmra.mrb[0].mxu0 %v5623
      %v6160 = vpop.f32.mrb[0].mxu0
      %v6161 = vadd.f32 0.0, %v6160
      %v6162 = vpop.f32.mrb[0].mxu0
      %6163 = vmatprep.mubr.f32.mxu0 0.0
      %6164 = vmatmul.mubr.f32.gmra.mrb[0].mxu0 %v5626
      %v6165 = vpop.f32.mrb[0].mxu0
      %v6166 = vadd.f32 0.0, %v6165
      %v6167 = vpop.f32.mrb[0].mxu0
      %6168 = vmatprep.mubr.f32.mxu0 0.0
      %6169 = vmatmul.mubr.f32.gmra.mrb[0].mxu0 %v5629
      %v6170 = vpop.f32.mrb[0].mxu0
      %v6171 = vadd.f32 0.0, %v6170
      %v6172 = vpop.f32.mrb[0].mxu0
      %6173 = vmatprep.mubr.f32.mxu0 0.0
      %6174 = vmatmul.mubr.f32.gmra.mrb[0].mxu0 %v5632
      %v6175 = vpop.f32.mrb[0].mxu0
      %v6176 = vadd.f32 0.0, %v6175
      %v6177 = vpop.f32.mrb[0].mxu0
      %6178 = vmatprep.mubr.f32.mxu0 0.0
      %6179 = vmatmul.mubr.f32.gmra.mrb[0].mxu0 %v5635
      %v6180 = vpop.f32.mrb[0].mxu0
      %v6181 = vadd.f32 0.0, %v6180
      %v6182 = vpop.f32.mrb[0].mxu0
      %6183 = vmatprep.mubr.f32.mxu0 0.0
      %6184 = vmatmul.mubr.f32.gmra.mrb[0].mxu0 %v5638
      %v6185 = vpop.f32.mrb[0].mxu0
      %v6186 = vadd.f32 0.0, %v6185
      %v6187 = vpop.f32.mrb[0].mxu0
      %6188 = vmatprep.mubr.f32.mxu0 0.0
      %6189 = vmatmul.mubr.f32.gmra.mrb[0].mxu0 %v5641
      %v6190 = vpop.f32.mrb[0].mxu0
      %v6191 = vadd.f32 0.0, %v6190
      %v6192 = vpop.f32.mrb[0].mxu0
      %6193 = vmatprep.mubr.f32.mxu0 0.0
      %6194 = vmatmul.mubr.f32.gmra.mrb[0].mxu0 %v5644
      %v6195 = vpop.f32.mrb[0].mxu0
      %v6196 = vadd.f32 0.0, %v6195
      %v6197 = vpop.f32.mrb[0].mxu0
      %6198 = vmatprep.mubr.f32.mxu0 0.0
      %6199 = vmatmul.mubr.f32.gmra.mrb[0].mxu0 %v5647
      %v6200 = vpop.f32.mrb[0].mxu0
      %v6201 = vadd.f32 0.0, %v6200
      %v6202 = vpop.f32.mrb[0].mxu0
      %6203 = vmatprep.mubr.f32.mxu0 0.0
      %6204 = vmatmul.mubr.f32.gmra.mrb[0].mxu0 %v5650
      %v6205 = vpop.f32.mrb[0].mxu0
      %v6206 = vadd.f32 0.0, %v6205
      %v6207 = vpop.f32.mrb[0].mxu0
      %6208 = vmatprep.mubr.f32.mxu0 0.0
      %6209 = vmatmul.mubr.f32.gmra.mrb[0].mxu0 %v5653
      %v6210 = vpop.f32.mrb[0].mxu0
      %v6211 = vadd.f32 0.0, %v6210
      %v6212 = vpop.f32.mrb[0].mxu0
      %6213 = vmatprep.mubr.f32.mxu0 0.0
      %6214 = vmatmul.mubr.f32.gmra.mrb[0].mxu0 %v5656
      %v6215 = vpop.f32.mrb[0].mxu0
      %v6216 = vadd.f32 0.0, %v6215
      %v6217 = vpop.f32.mrb[0].mxu0
      %6218 = vmatprep.mubr.f32.mxu0 0.0
      %6219 = vmatmul.mubr.f32.gmra.mrb[0].mxu0 %v5659
      %v6220 = vpop.f32.mrb[0].mxu0
      %v6221 = vadd.f32 0.0, %v6220
      %v6222 = vpop.f32.mrb[0].mxu0
      %6223 = vmatprep.mubr.f32.mxu0 0.0
      %6224 = vmatmul.mubr.f32.gmra.mrb[0].mxu0 %v5662
      %v6225 = vpop.f32.mrb[0].mxu0
      %v6226 = vadd.f32 0.0, %v6225
      %v6227 = vpop.f32.mrb[0].mxu0
      %6228 = vmatprep.mubr.f32.mxu0 0.0
      %6229 = vmatmul.mubr.f32.gmra.mrb[0].mxu0 %v5665
      %v6230 = vpop.f32.mrb[0].mxu0
      %v6231 = vadd.f32 0.0, %v6230
      %v6232 = vpop.f32.mrb[0].mxu0
      %6233 = vmatprep.mubr.f32.mxu0 0.0
      %6234 = vmatmul.mubr.f32.gmra.mrb[0].mxu0 %v5668
      %v6235 = vpop.f32.mrb[0].mxu0
      %v6236 = vadd.f32 0.0, %v6235
      %v6237 = vpop.f32.mrb[0].mxu0
      %6238 = vmatprep.mubr.f32.mxu0 0.0
      %6239 = vmatmul.mubr.f32.gmra.mrb[0].mxu0 %v5671
      %v6240 = vpop.f32.mrb[0].mxu0
      %v6241 = vadd.f32 0.0, %v6240
      %v6242 = vpop.f32.mrb[0].mxu0
      %6243 = vmatprep.mubr.f32.mxu0 0.0
      %6244 = vmatmul.mubr.f32.gmra.mrb[0].mxu0 %v5674
      %v6245 = vpop.f32.mrb[0].mxu0
      %v6246 = vadd.f32 0.0, %v6245
      %v6247 = vpop.f32.mrb[0].mxu0
      %6248 = vmatprep.mubr.f32.mxu0 0.0
      %6249 = vmatmul.mubr.f32.gmra.mrb[0].mxu0 %v5677
      %v6250 = vpop.f32.mrb[0].mxu0
      %v6251 = vadd.f32 0.0, %v6250
      %v6252 = vpop.f32.mrb[0].mxu0
      %6253 = vmatprep.mubr.f32.mxu0 0.0
      %6254 = vmatmul.mubr.f32.gmra.mrb[0].mxu0 %v5680
      %v6255 = vpop.f32.mrb[0].mxu0
      %v6256 = vadd.f32 0.0, %v6255
      %v6257 = vpop.f32.mrb[0].mxu0
      %6258 = vmatprep.mubr.f32.mxu0 0.0
      %6259 = vmatmul.mubr.f32.gmra.mrb[0].mxu0 %v5683
      %v6260 = vpop.f32.mrb[0].mxu0
      %v6261 = vadd.f32 0.0, %v6260
      %v6262 = vpop.f32.mrb[0].mxu0
      %6263 = vmatprep.mubr.f32.mxu0 0.0
      %6264 = vmatmul.mubr.f32.gmra.mrb[0].mxu0 %v5686
      %v6265 = vpop.f32.mrb[0].mxu0
      %v6266 = vadd.f32 0.0, %v6265
      %v6267 = vpop.f32.mrb[0].mxu0
      %6268 = vmatprep.mubr.f32.mxu0 0.0
      %6269 = vmatmul.mubr.f32.gmra.mrb[0].mxu0 %v5689
      %v6270 = vpop.f32.mrb[0].mxu0
      %v6271 = vadd.f32 0.0, %v6270
      %v6272 = vpop.f32.mrb[0].mxu0
      %6273 = vmatprep.mubr.f32.mxu0 0.0
      %6274 = vmatmul.mubr.f32.gmra.mrb[0].mxu0 %v5692
      %v6275 = vpop.f32.mrb[0].mxu0
      %v6276 = vadd.f32 0.0, %v6275
      %v6277 = vpop.f32.mrb[0].mxu0
      %6278 = vmatprep.mubr.f32.mxu0 0.0
      %6279 = vmatmul.mubr.f32.gmra.mrb[0].mxu0 %v5695
      %v6280 = vpop.f32.mrb[0].mxu0
      %v6281 = vadd.f32 0.0, %v6280
      %v6282 = vpop.f32.mrb[0].mxu0
      %6283 = vmatprep.mubr.f32.mxu0 0.0
      %6284 = vmatmul.mubr.f32.gmra.mrb[0].mxu0 %v5698
      %v6285 = vpop.f32.mrb[0].mxu0
      %v6286 = vadd.f32 0.0, %v6285
      %v6287 = vpop.f32.mrb[0].mxu0
      %6288 = vmatprep.mubr.f32.mxu0 0.0
      %6289 = vmatmul.mubr.f32.gmra.mrb[0].mxu0 %v5701
      %v6290 = vpop.f32.mrb[0].mxu0
      %v6291 = vadd.f32 0.0, %v6290
      %v6292 = vpop.f32.mrb[0].mxu0
      %6293 = vmatprep.mubr.f32.mxu0 0.0
      %6294 = vmatmul.mubr.f32.gmra.mrb[0].mxu0 %v5704
      %v6295 = vpop.f32.mrb[0].mxu0
      %v6296 = vadd.f32 0.0, %v6295
      %v6297 = vpop.f32.mrb[0].mxu0
      %6298 = vmatprep.mubr.f32.mxu0 0.0
      %6299 = vmatmul.mubr.f32.gmra.mrb[0].mxu0 %v5707
      %v6300 = vpop.f32.mrb[0].mxu0
      %v6301 = vadd.f32 0.0, %v6300
      %v6302 = vpop.f32.mrb[0].mxu0
      %6303 = vmatprep.mubr.f32.mxu0 0.0
      %6304 = vmatmul.mubr.f32.gmra.mrb[0].mxu0 %v5710
      %v6305 = vpop.f32.mrb[0].mxu0
      %v6306 = vadd.f32 0.0, %v6305
      %v6307 = vpop.f32.mrb[0].mxu0
      %6308 = vmatprep.mubr.f32.mxu0 0.0
      %6309 = vmatmul.mubr.f32.gmra.mrb[0].mxu0 %v5713
      %v6310 = vpop.f32.mrb[0].mxu0
      %v6311 = vadd.f32 0.0, %v6310
      %v6312 = vpop.f32.mrb[0].mxu0
      %6313 = vmatprep.mubr.f32.mxu0 0.0
      %6314 = vmatmul.mubr.f32.gmra.mrb[0].mxu0 %v5716
      %v6315 = vpop.f32.mrb[0].mxu0
      %v6316 = vadd.f32 0.0, %v6315
      %v6317 = vpop.f32.mrb[0].mxu0
      %6318 = vmatprep.mubr.f32.mxu0 0.0
      %6319 = vmatmul.mubr.f32.gmra.mrb[0].mxu0 %v5719
      %v6320 = vpop.f32.mrb[0].mxu0
      %v6321 = vadd.f32 0.0, %v6320
      %v6322 = vpop.f32.mrb[0].mxu0
      %6323 = vmatprep.mubr.f32.mxu0 0.0
      %6324 = vmatmul.mubr.f32.gmra.mrb[0].mxu0 %v5722
      %v6325 = vpop.f32.mrb[0].mxu0
      %v6326 = vadd.f32 0.0, %v6325
      %v6327 = vpop.f32.mrb[0].mxu0
      %6328 = vmatprep.mubr.f32.mxu0 0.0
      %6329 = vmatmul.mubr.f32.gmra.mrb[0].mxu0 %v5725
      %v6330 = vpop.f32.mrb[0].mxu0
      %v6331 = vadd.f32 0.0, %v6330
      %v6332 = vpop.f32.mrb[0].mxu0
      %6333 = vmatprep.mubr.f32.mxu0 0.0
      %6334 = vmatmul.mubr.f32.gmra.mrb[0].mxu0 %v5728
      %v6335 = vpop.f32.mrb[0].mxu0
      %v6336 = vadd.f32 0.0, %v6335
      %v6337 = vpop.f32.mrb[0].mxu0
      %6338 = vmatprep.mubr.f32.mxu0 0.0
      %6339 = vmatmul.mubr.f32.gmra.mrb[0].mxu0 %v5731
      %v6340 = vpop.f32.mrb[0].mxu0
      %v6341 = vadd.f32 0.0, %v6340
      %v6342 = vpop.f32.mrb[0].mxu0
      %6343 = vmatprep.mubr.f32.mxu0 0.0
      %6344 = vmatmul.mubr.f32.gmra.mrb[0].mxu0 %v5734
      %v6345 = vpop.f32.mrb[0].mxu0
      %v6346 = vadd.f32 0.0, %v6345
      %v6347 = vpop.f32.mrb[0].mxu0
      %6348 = vmatprep.mubr.f32.mxu0 0.0
      %6349 = vmatmul.mubr.f32.gmra.mrb[0].mxu0 %v5737
      %v6350 = vpop.f32.mrb[0].mxu0
      %v6351 = vadd.f32 0.0, %v6350
      %v6352 = vpop.f32.mrb[0].mxu0
      %6353 = vmatprep.mubr.f32.mxu0 0.0
      %6354 = vmatmul.mubr.f32.gmra.mrb[0].mxu0 %v5740
      %v6355 = vpop.f32.mrb[0].mxu0
      %v6356 = vadd.f32 0.0, %v6355
      %v6357 = vpop.f32.mrb[0].mxu0
      %6358 = vmatprep.mubr.f32.mxu0 0.0
      %6359 = vmatmul.mubr.f32.gmra.mrb[0].mxu0 %v5743
      %v6360 = vpop.f32.mrb[0].mxu0
      %v6361 = vadd.f32 0.0, %v6360
      %v6362 = vpop.f32.mrb[0].mxu0
      %6363 = vmatprep.mubr.f32.mxu0 0.0
      %6364 = vmatmul.mubr.f32.gmra.mrb[0].mxu0 %v5746
      %v6365 = vpop.f32.mrb[0].mxu0
      %v6366 = vadd.f32 0.0, %v6365
      %v6367 = vpop.f32.mrb[0].mxu0
      %6368 = vmatprep.mubr.f32.mxu0 0.0
      %6369 = vmatmul.mubr.f32.gmra.mrb[0].mxu0 %v5749
      %v6370 = vpop.f32.mrb[0].mxu0
      %v6371 = vadd.f32 0.0, %v6370
      %v6372 = vpop.f32.mrb[0].mxu0
      %6373 = vmatprep.mubr.f32.mxu0 0.0
      %6374 = vmatmul.mubr.f32.gmra.mrb[0].mxu0 %v5752
      %v6375 = vpop.f32.mrb[0].mxu0
      %v6376 = vadd.f32 0.0, %v6375
      %v6377 = vpop.f32.mrb[0].mxu0
      %6378 = vmatprep.mubr.f32.mxu0 0.0
      %6379 = vmatmul.mubr.f32.gmra.mrb[0].mxu0 %v5755
      %v6380 = vpop.f32.mrb[0].mxu0
      %v6381 = vadd.f32 0.0, %v6380
      %v6382 = vpop.f32.mrb[0].mxu0
      %6383 = vmatprep.mubr.f32.mxu0 0.0
      %6384 = vmatmul.mubr.f32.gmra.mrb[0].mxu0 %v5758
      %v6385 = vpop.f32.mrb[0].mxu0
      %v6386 = vadd.f32 0.0, %v6385
      %v6387 = vpop.f32.mrb[0].mxu0
      %6388 = vmatprep.mubr.f32.mxu0 0.0
      %6389 = vmatmul.mubr.f32.gmra.mrb[0].mxu0 %v5761
      %v6390 = vpop.f32.mrb[0].mxu0
      %v6391 = vadd.f32 0.0, %v6390
      %v6392 = vpop.f32.mrb[0].mxu0
      %6393 = vmatprep.mubr.f32.mxu0 0.0
      %6394 = vmatmul.mubr.f32.gmra.mrb[0].mxu0 %v5764
      %v6395 = vpop.f32.mrb[0].mxu0
      %v6396 = vadd.f32 0.0, %v6395
      %v6397 = vpop.f32.mrb[0].mxu0
      %6398 = vmatprep.mubr.f32.mxu0 0.0
      %6399 = vmatmul.mubr.f32.gmra.mrb[0].mxu0 %v5767
      %v6400 = vpop.f32.mrb[0].mxu0
      %v6401 = vadd.f32 0.0, %v6400
      %v6402 = vpop.f32.mrb[0].mxu0
      %6403 = vmatprep.mubr.f32.mxu0 0.0
      %6404 = vmatmul.mubr.f32.gmra.mrb[0].mxu0 %v5770
      %v6405 = vpop.f32.mrb[0].mxu0
      %v6406 = vadd.f32 0.0, %v6405
      %v6407 = vpop.f32.mrb[0].mxu0
      %6408 = vmatprep.mubr.f32.mxu0 0.0
      %6409 = vmatmul.mubr.f32.gmra.mrb[0].mxu0 %v5773
      %v6410 = vpop.f32.mrb[0].mxu0
      %v6411 = vadd.f32 0.0, %v6410
      %v6412 = vpop.f32.mrb[0].mxu0
      %6413 = vmatprep.mubr.f32.mxu0 0.0
      %6414 = vmatmul.mubr.f32.gmra.mrb[0].mxu0 %v5776
      %v6415 = vpop.f32.mrb[0].mxu0
      %v6416 = vadd.f32 0.0, %v6415
      %v6417 = vpop.f32.mrb[0].mxu0
      %6418 = vmatprep.mubr.f32.mxu0 0.0
      %6419 = vmatmul.mubr.f32.gmra.mrb[0].mxu0 %v5779
      %v6420 = vpop.f32.mrb[0].mxu0
      %v6421 = vadd.f32 0.0, %v6420
      %v6422 = vpop.f32.mrb[0].mxu0
      %6423 = vmatprep.mubr.f32.mxu0 0.0
      %6424 = vmatmul.mubr.f32.gmra.mrb[0].mxu0 %v5782
      %v6425 = vpop.f32.mrb[0].mxu0
      %v6426 = vadd.f32 0.0, %v6425
      %v6427 = vpop.f32.mrb[0].mxu0
      %6428 = vmatprep.mubr.f32.mxu0 0.0
      %6429 = vmatmul.mubr.f32.gmra.mrb[0].mxu0 %v5785
      %v6430 = vpop.f32.mrb[0].mxu0
      %v6431 = vadd.f32 0.0, %v6430
      %v6432 = vpop.f32.mrb[0].mxu0
      %6433 = vmatprep.mubr.f32.mxu0 0.0
      %6434 = vmatmul.mubr.f32.gmra.mrb[0].mxu0 %v5788
      %v6435 = vpop.f32.mrb[0].mxu0
      %v6436 = vadd.f32 0.0, %v6435
      %v6437 = vpop.f32.mrb[0].mxu0
      %6438 = vmatprep.mubr.f32.mxu0 0.0
      %6439 = vmatmul.mubr.f32.gmra.mrb[0].mxu0 %v5791
      %v6440 = vpop.f32.mrb[0].mxu0
      %v6441 = vadd.f32 0.0, %v6440
      %v6442 = vpop.f32.mrb[0].mxu0
      %6443 = vmatprep.mubr.f32.mxu0 0.0
      %6444 = vmatmul.mubr.f32.gmra.mrb[0].mxu0 %v5794
      %v6445 = vpop.f32.mrb[0].mxu0
      %v6446 = vadd.f32 0.0, %v6445
      %v6447 = vpop.f32.mrb[0].mxu0
      %6448 = vmatprep.mubr.f32.mxu0 0.0
      %6449 = vmatmul.mubr.f32.gmra.mrb[0].mxu0 %v5797
      %v6450 = vpop.f32.mrb[0].mxu0
      %v6451 = vadd.f32 0.0, %v6450
      %v6452 = vpop.f32.mrb[0].mxu0
      %6453 = vmatprep.mubr.f32.mxu0 0.0
      %6454 = vmatmul.mubr.f32.gmra.mrb[0].mxu0 %v5800
      %v6455 = vpop.f32.mrb[0].mxu0
      %v6456 = vadd.f32 0.0, %v6455
      %v6457 = vpop.f32.mrb[0].mxu0
      %6458 = vmatprep.mubr.f32.mxu0 0.0
      %6459 = vmatmul.mubr.f32.gmra.mrb[0].mxu0 %v5803
      %v6460 = vpop.f32.mrb[0].mxu0
      %v6461 = vadd.f32 0.0, %v6460
      %v6462 = vpop.f32.mrb[0].mxu0
      %6463 = vmatprep.mubr.f32.mxu0 0.0
      %6464 = vmatmul.mubr.f32.gmra.mrb[0].mxu0 %v5806
      %v6465 = vpop.f32.mrb[0].mxu0
      %v6466 = vadd.f32 0.0, %v6465
      %v6467 = vpop.f32.mrb[0].mxu0
      %6468 = vmatprep.mubr.f32.mxu0 0.0
      %6469 = vmatmul.mubr.f32.gmra.mrb[0].mxu0 %v5809
      %v6470 = vpop.f32.mrb[0].mxu0
      %v6471 = vadd.f32 0.0, %v6470
      %v6472 = vpop.f32.mrb[0].mxu0
      %6473 = vmatprep.mubr.f32.mxu0 0.0
      %6474 = vmatmul.mubr.f32.gmra.mrb[0].mxu0 %v5812
      %v6475 = vpop.f32.mrb[0].mxu0
      %v6476 = vadd.f32 0.0, %v6475
      %v6477 = vpop.f32.mrb[0].mxu0
      %6478 = vmatprep.mubr.f32.mxu0 0.0
      %6479 = vmatmul.mubr.f32.gmra.mrb[0].mxu0 %v5815
      %v6480 = vpop.f32.mrb[0].mxu0
      %v6481 = vadd.f32 0.0, %v6480
      %v6482 = vpop.f32.mrb[0].mxu0
      %6483 = vmatprep.mubr.f32.mxu0 0.0
      %6484 = vmatmul.mubr.f32.gmra.mrb[0].mxu0 %v5818
      %v6485 = vpop.f32.mrb[0].mxu0
      %v6486 = vadd.f32 0.0, %v6485
      %v6487 = vpop.f32.mrb[0].mxu0
      %6488 = vmatprep.mubr.f32.mxu0 0.0
      %6489 = vmatmul.mubr.f32.gmra.mrb[0].mxu0 %v5821
      %v6490 = vpop.f32.mrb[0].mxu0
      %v6491 = vadd.f32 0.0, %v6490
      %v6492 = vpop.f32.mrb[0].mxu0
      %6493 = vmatprep.mubr.f32.mxu0 0.0
      %6494 = vmatmul.mubr.f32.gmra.mrb[0].mxu0 %v5824
      %v6495 = vpop.f32.mrb[0].mxu0
      %v6496 = vadd.f32 0.0, %v6495
      %v6497 = vpop.f32.mrb[0].mxu0
      %6498 = vmatprep.mubr.f32.mxu0 0.0
      %6499 = vmatmul.mubr.f32.gmra.mrb[0].mxu0 %v5827
      %v6500 = vpop.f32.mrb[0].mxu0
      %v6501 = vadd.f32 0.0, %v6500
      %v6502 = vpop.f32.mrb[0].mxu0
      %6503 = vmatprep.mubr.f32.mxu0 0.0
      %6504 = vmatmul.mubr.f32.gmra.mrb[0].mxu0 %v5830
      %v6505 = vpop.f32.mrb[0].mxu0
      %v6506 = vadd.f32 0.0, %v6505
      %v6507 = vpop.f32.mrb[0].mxu0
      %6508 = vmatprep.mubr.f32.mxu0 0.0
      %6509 = vmatmul.mubr.f32.gmra.mrb[0].mxu0 %v5833
      %v6510 = vpop.f32.mrb[0].mxu0
      %v6511 = vadd.f32 0.0, %v6510
      %v6512 = vpop.f32.mrb[0].mxu0
      %6513 = vmatprep.mubr.f32.mxu0 0.0
      %6514 = vmatmul.mubr.f32.gmra.mrb[0].mxu0 %v5836
      %v6515 = vpop.f32.mrb[0].mxu0
      %v6516 = vadd.f32 0.0, %v6515
      %v6517 = vpop.f32.mrb[0].mxu0
      %6518 = vmatprep.mubr.f32.mxu0 0.0
      %6519 = vmatmul.mubr.f32.gmra.mrb[0].mxu0 %v5839
      %v6520 = vpop.f32.mrb[0].mxu0
      %v6521 = vadd.f32 0.0, %v6520
      %v6522 = vpop.f32.mrb[0].mxu0
      %6523 = vmatprep.mubr.f32.mxu0 0.0
      %6524 = vmatmul.mubr.f32.gmra.mrb[0].mxu0 %v5842
      %v6525 = vpop.f32.mrb[0].mxu0
      %v6526 = vadd.f32 0.0, %v6525
      %v6527 = vpop.f32.mrb[0].mxu0
      %6528 = vmatprep.mubr.f32.mxu0 0.0
      %6529 = vmatmul.mubr.f32.gmra.mrb[0].mxu0 %v5845
      %v6530 = vpop.f32.mrb[0].mxu0
      %v6531 = vadd.f32 0.0, %v6530
      %v6532 = vpop.f32.mrb[0].mxu0
      %6533 = vmatprep.mubr.f32.mxu0 0.0
      %6534 = vmatmul.mubr.f32.gmra.mrb[0].mxu0 %v5848
      %v6535 = vpop.f32.mrb[0].mxu0
      %v6536 = vadd.f32 0.0, %v6535
      %v6537 = vpop.f32.mrb[0].mxu0
      %6538 = vmatprep.mubr.f32.mxu0 0.0
      %6539 = vmatmul.mubr.f32.gmra.mrb[0].mxu0 %v5851
      %v6540 = vpop.f32.mrb[0].mxu0
      %v6541 = vadd.f32 0.0, %v6540
      %v6542 = vpop.f32.mrb[0].mxu0
      %6543 = vmatprep.mubr.f32.mxu0 0.0
      %6544 = vmatmul.mubr.f32.gmra.mrb[0].mxu0 %v5854
      %v6545 = vpop.f32.mrb[0].mxu0
      %v6546 = vadd.f32 0.0, %v6545
      %v6547 = vpop.f32.mrb[0].mxu0
      %6548 = vmatprep.mubr.f32.mxu0 0.0
      %6549 = vmatmul.mubr.f32.gmra.mrb[0].mxu0 %v5857
      %v6550 = vpop.f32.mrb[0].mxu0
      %v6551 = vadd.f32 0.0, %v6550
      %v6552 = vpop.f32.mrb[0].mxu0
      %6553 = vmatprep.mubr.f32.mxu0 0.0
      %6554 = vmatmul.mubr.f32.gmra.mrb[0].mxu0 %v5860
      %v6555 = vpop.f32.mrb[0].mxu0
      %v6556 = vadd.f32 0.0, %v6555
      %v6557 = vpop.f32.mrb[0].mxu0
      %6558 = vmatprep.mubr.f32.mxu0 0.0
      %6559 = vmatmul.mubr.f32.gmra.mrb[0].mxu0 %v5863
      %v6560 = vpop.f32.mrb[0].mxu0
      %v6561 = vadd.f32 0.0, %v6560
      %v6562 = vpop.f32.mrb[0].mxu0
      %6563 = vmatprep.mubr.f32.mxu0 0.0
      %6564 = vmatmul.mubr.f32.gmra.mrb[0].mxu0 %v5866
      %v6565 = vpop.f32.mrb[0].mxu0
      %v6566 = vadd.f32 0.0, %v6565
      %v6567 = vpop.f32.mrb[0].mxu0
      %6568 = vmatprep.mubr.f32.mxu0 0.0
      %6569 = vmatmul.mubr.f32.gmra.mrb[0].mxu0 %v5869
      %v6570 = vpop.f32.mrb[0].mxu0
      %v6571 = vadd.f32 0.0, %v6570
      %v6572 = vpop.f32.mrb[0].mxu0
      %6573 = vmatprep.mubr.f32.mxu0 0.0
      %6574 = vmatmul.mubr.f32.gmra.mrb[0].mxu0 %v5872
      %v6575 = vpop.f32.mrb[0].mxu0
      %v6576 = vadd.f32 0.0, %v6575
      %v6577 = vpop.f32.mrb[0].mxu0
      %6578 = vdwg.mxu0
      %v6579 = vadd.f32 %v5941, %v695
      %v6580 = vadd.f32 %v5946, %v700
      %v6581 = vadd.f32 %v5951, %v705
      %v6582 = vadd.f32 %v5956, %v710
      %v6583 = vadd.f32 %v5961, %v715
      %v6584 = vadd.f32 %v5966, %v720
      %v6585 = vadd.f32 %v5971, %v725
      %v6586 = vadd.f32 %v5976, %v730
      %v6587 = vadd.f32 %v5981, %v695
      %v6588 = vadd.f32 %v5986, %v700
      %v6589 = vadd.f32 %v5991, %v705
      %v6590 = vadd.f32 %v5996, %v710
      %v6591 = vadd.f32 %v6001, %v715
      %v6592 = vadd.f32 %v6006, %v720
      %v6593 = vadd.f32 %v6011, %v725
      %v6594 = vadd.f32 %v6016, %v730
      %v6595 = vadd.f32 %v6021, %v695
      %v6596 = vadd.f32 %v6026, %v700
      %v6597 = vadd.f32 %v6031, %v705
      %v6598 = vadd.f32 %v6036, %v710
      %v6599 = vadd.f32 %v6041, %v715
      %v6600 = vadd.f32 %v6046, %v720
      %v6601 = vadd.f32 %v6051, %v725
      %v6602 = vadd.f32 %v6056, %v730
      %v6603 = vadd.f32 %v6061, %v695
      %v6604 = vadd.f32 %v6066, %v700
      %v6605 = vadd.f32 %v6071, %v705
      %v6606 = vadd.f32 %v6076, %v710
      %v6607 = vadd.f32 %v6081, %v715
      %v6608 = vadd.f32 %v6086, %v720
      %v6609 = vadd.f32 %v6091, %v725
      %v6610 = vadd.f32 %v6096, %v730
      %v6611 = vadd.f32 %v6101, %v695
      %v6612 = vadd.f32 %v6106, %v700
      %v6613 = vadd.f32 %v6111, %v705
      %v6614 = vadd.f32 %v6116, %v710
      %v6615 = vadd.f32 %v6121, %v715
      %v6616 = vadd.f32 %v6126, %v720
      %v6617 = vadd.f32 %v6131, %v725
      %v6618 = vadd.f32 %v6136, %v730
      %v6619 = vadd.f32 %v6141, %v695
      %v6620 = vadd.f32 %v6146, %v700
      %v6621 = vadd.f32 %v6151, %v705
      %v6622 = vadd.f32 %v6156, %v710
      %v6623 = vadd.f32 %v6161, %v715
      %v6624 = vadd.f32 %v6166, %v720
      %v6625 = vadd.f32 %v6171, %v725
      %v6626 = vadd.f32 %v6176, %v730
      %v6627 = vadd.f32 %v6181, %v695
      %v6628 = vadd.f32 %v6186, %v700
      %v6629 = vadd.f32 %v6191, %v705
      %v6630 = vadd.f32 %v6196, %v710
      %v6631 = vadd.f32 %v6201, %v715
      %v6632 = vadd.f32 %v6206, %v720
      %v6633 = vadd.f32 %v6211, %v725
      %v6634 = vadd.f32 %v6216, %v730
      %v6635 = vadd.f32 %v6221, %v695
      %v6636 = vadd.f32 %v6226, %v700
      %v6637 = vadd.f32 %v6231, %v705
      %v6638 = vadd.f32 %v6236, %v710
      %v6639 = vadd.f32 %v6241, %v715
      %v6640 = vadd.f32 %v6246, %v720
      %v6641 = vadd.f32 %v6251, %v725
      %v6642 = vadd.f32 %v6256, %v730
      %v6643 = vadd.f32 %v6261, %v695
      %v6644 = vadd.f32 %v6266, %v700
      %v6645 = vadd.f32 %v6271, %v705
      %v6646 = vadd.f32 %v6276, %v710
      %v6647 = vadd.f32 %v6281, %v715
      %v6648 = vadd.f32 %v6286, %v720
      %v6649 = vadd.f32 %v6291, %v725
      %v6650 = vadd.f32 %v6296, %v730
      %v6651 = vadd.f32 %v6301, %v695
      %v6652 = vadd.f32 %v6306, %v700
      %v6653 = vadd.f32 %v6311, %v705
      %v6654 = vadd.f32 %v6316, %v710
      %v6655 = vadd.f32 %v6321, %v715
      %v6656 = vadd.f32 %v6326, %v720
      %v6657 = vadd.f32 %v6331, %v725
      %v6658 = vadd.f32 %v6336, %v730
      %v6659 = vadd.f32 %v6341, %v695
      %v6660 = vadd.f32 %v6346, %v700
      %v6661 = vadd.f32 %v6351, %v705
      %v6662 = vadd.f32 %v6356, %v710
      %v6663 = vadd.f32 %v6361, %v715
      %v6664 = vadd.f32 %v6366, %v720
      %v6665 = vadd.f32 %v6371, %v725
      %v6666 = vadd.f32 %v6376, %v730
      %v6667 = vadd.f32 %v6381, %v695
      %v6668 = vadd.f32 %v6386, %v700
      %v6669 = vadd.f32 %v6391, %v705
      %v6670 = vadd.f32 %v6396, %v710
      %v6671 = vadd.f32 %v6401, %v715
      %v6672 = vadd.f32 %v6406, %v720
      %v6673 = vadd.f32 %v6411, %v725
      %v6674 = vadd.f32 %v6416, %v730
      %v6675 = vadd.f32 %v6421, %v695
      %v6676 = vadd.f32 %v6426, %v700
      %v6677 = vadd.f32 %v6431, %v705
      %v6678 = vadd.f32 %v6436, %v710
      %v6679 = vadd.f32 %v6441, %v715
      %v6680 = vadd.f32 %v6446, %v720
      %v6681 = vadd.f32 %v6451, %v725
      %v6682 = vadd.f32 %v6456, %v730
      %v6683 = vadd.f32 %v6461, %v695
      %v6684 = vadd.f32 %v6466, %v700
      %v6685 = vadd.f32 %v6471, %v705
      %v6686 = vadd.f32 %v6476, %v710
      %v6687 = vadd.f32 %v6481, %v715
      %v6688 = vadd.f32 %v6486, %v720
      %v6689 = vadd.f32 %v6491, %v725
      %v6690 = vadd.f32 %v6496, %v730
      %v6691 = vadd.f32 %v6501, %v695
      %v6692 = vadd.f32 %v6506, %v700
      %v6693 = vadd.f32 %v6511, %v705
      %v6694 = vadd.f32 %v6516, %v710
      %v6695 = vadd.f32 %v6521, %v715
      %v6696 = vadd.f32 %v6526, %v720
      %v6697 = vadd.f32 %v6531, %v725
      %v6698 = vadd.f32 %v6536, %v730
      %v6699 = vadd.f32 %v6541, %v695
      %v6700 = vadd.f32 %v6546, %v700
      %v6701 = vadd.f32 %v6551, %v705
      %v6702 = vadd.f32 %v6556, %v710
      %v6703 = vadd.f32 %v6561, %v715
      %v6704 = vadd.f32 %v6566, %v720
      %v6705 = vadd.f32 %v6571, %v725
      %v6706 = vadd.f32 %v6576, %v730
      %v6707 = vmax.f32 %v6579, 0.0
      %v6708 = vmax.f32 %v6580, 0.0
      %v6709 = vmax.f32 %v6581, 0.0
      %v6710 = vmax.f32 %v6582, 0.0
      %v6711 = vmax.f32 %v6583, 0.0
      %v6712 = vmax.f32 %v6584, 0.0
      %v6713 = vmax.f32 %v6585, 0.0
      %v6714 = vmax.f32 %v6586, 0.0
      %v6715 = vmax.f32 %v6587, 0.0
      %v6716 = vmax.f32 %v6588, 0.0
      %v6717 = vmax.f32 %v6589, 0.0
      %v6718 = vmax.f32 %v6590, 0.0
      %v6719 = vmax.f32 %v6591, 0.0
      %v6720 = vmax.f32 %v6592, 0.0
      %v6721 = vmax.f32 %v6593, 0.0
      %v6722 = vmax.f32 %v6594, 0.0
      %v6723 = vmax.f32 %v6595, 0.0
      %v6724 = vmax.f32 %v6596, 0.0
      %v6725 = vmax.f32 %v6597, 0.0
      %v6726 = vmax.f32 %v6598, 0.0
      %v6727 = vmax.f32 %v6599, 0.0
      %v6728 = vmax.f32 %v6600, 0.0
      %v6729 = vmax.f32 %v6601, 0.0
      %v6730 = vmax.f32 %v6602, 0.0
      %v6731 = vmax.f32 %v6603, 0.0
      %v6732 = vmax.f32 %v6604, 0.0
      %v6733 = vmax.f32 %v6605, 0.0
      %v6734 = vmax.f32 %v6606, 0.0
      %v6735 = vmax.f32 %v6607, 0.0
      %v6736 = vmax.f32 %v6608, 0.0
      %v6737 = vmax.f32 %v6609, 0.0
      %v6738 = vmax.f32 %v6610, 0.0
      %v6739 = vmax.f32 %v6611, 0.0
      %v6740 = vmax.f32 %v6612, 0.0
      %v6741 = vmax.f32 %v6613, 0.0
      %v6742 = vmax.f32 %v6614, 0.0
      %v6743 = vmax.f32 %v6615, 0.0
      %v6744 = vmax.f32 %v6616, 0.0
      %v6745 = vmax.f32 %v6617, 0.0
      %v6746 = vmax.f32 %v6618, 0.0
      %v6747 = vmax.f32 %v6619, 0.0
      %v6748 = vmax.f32 %v6620, 0.0
      %v6749 = vmax.f32 %v6621, 0.0
      %v6750 = vmax.f32 %v6622, 0.0
      %v6751 = vmax.f32 %v6623, 0.0
      %v6752 = vmax.f32 %v6624, 0.0
      %v6753 = vmax.f32 %v6625, 0.0
      %v6754 = vmax.f32 %v6626, 0.0
      %v6755 = vmax.f32 %v6627, 0.0
      %v6756 = vmax.f32 %v6628, 0.0
      %v6757 = vmax.f32 %v6629, 0.0
      %v6758 = vmax.f32 %v6630, 0.0
      %v6759 = vmax.f32 %v6631, 0.0
      %v6760 = vmax.f32 %v6632, 0.0
      %v6761 = vmax.f32 %v6633, 0.0
      %v6762 = vmax.f32 %v6634, 0.0
      %v6763 = vmax.f32 %v6635, 0.0
      %v6764 = vmax.f32 %v6636, 0.0
      %v6765 = vmax.f32 %v6637, 0.0
      %v6766 = vmax.f32 %v6638, 0.0
      %v6767 = vmax.f32 %v6639, 0.0
      %v6768 = vmax.f32 %v6640, 0.0
      %v6769 = vmax.f32 %v6641, 0.0
      %v6770 = vmax.f32 %v6642, 0.0
      %v6771 = vmax.f32 %v6643, 0.0
      %v6772 = vmax.f32 %v6644, 0.0
      %v6773 = vmax.f32 %v6645, 0.0
      %v6774 = vmax.f32 %v6646, 0.0
      %v6775 = vmax.f32 %v6647, 0.0
      %v6776 = vmax.f32 %v6648, 0.0
      %v6777 = vmax.f32 %v6649, 0.0
      %v6778 = vmax.f32 %v6650, 0.0
      %v6779 = vmax.f32 %v6651, 0.0
      %v6780 = vmax.f32 %v6652, 0.0
      %v6781 = vmax.f32 %v6653, 0.0
      %v6782 = vmax.f32 %v6654, 0.0
      %v6783 = vmax.f32 %v6655, 0.0
      %v6784 = vmax.f32 %v6656, 0.0
      %v6785 = vmax.f32 %v6657, 0.0
      %v6786 = vmax.f32 %v6658, 0.0
      %v6787 = vmax.f32 %v6659, 0.0
      %v6788 = vmax.f32 %v6660, 0.0
      %v6789 = vmax.f32 %v6661, 0.0
      %v6790 = vmax.f32 %v6662, 0.0
      %v6791 = vmax.f32 %v6663, 0.0
      %v6792 = vmax.f32 %v6664, 0.0
      %v6793 = vmax.f32 %v6665, 0.0
      %v6794 = vmax.f32 %v6666, 0.0
      %v6795 = vmax.f32 %v6667, 0.0
      %v6796 = vmax.f32 %v6668, 0.0
      %v6797 = vmax.f32 %v6669, 0.0
      %v6798 = vmax.f32 %v6670, 0.0
      %v6799 = vmax.f32 %v6671, 0.0
      %v6800 = vmax.f32 %v6672, 0.0
      %v6801 = vmax.f32 %v6673, 0.0
      %v6802 = vmax.f32 %v6674, 0.0
      %v6803 = vmax.f32 %v6675, 0.0
      %v6804 = vmax.f32 %v6676, 0.0
      %v6805 = vmax.f32 %v6677, 0.0
      %v6806 = vmax.f32 %v6678, 0.0
      %v6807 = vmax.f32 %v6679, 0.0
      %v6808 = vmax.f32 %v6680, 0.0
      %v6809 = vmax.f32 %v6681, 0.0
      %v6810 = vmax.f32 %v6682, 0.0
      %v6811 = vmax.f32 %v6683, 0.0
      %v6812 = vmax.f32 %v6684, 0.0
      %v6813 = vmax.f32 %v6685, 0.0
      %v6814 = vmax.f32 %v6686, 0.0
      %v6815 = vmax.f32 %v6687, 0.0
      %v6816 = vmax.f32 %v6688, 0.0
      %v6817 = vmax.f32 %v6689, 0.0
      %v6818 = vmax.f32 %v6690, 0.0
      %v6819 = vmax.f32 %v6691, 0.0
      %v6820 = vmax.f32 %v6692, 0.0
      %v6821 = vmax.f32 %v6693, 0.0
      %v6822 = vmax.f32 %v6694, 0.0
      %v6823 = vmax.f32 %v6695, 0.0
      %v6824 = vmax.f32 %v6696, 0.0
      %v6825 = vmax.f32 %v6697, 0.0
      %v6826 = vmax.f32 %v6698, 0.0
      %v6827 = vmax.f32 %v6699, 0.0
      %v6828 = vmax.f32 %v6700, 0.0
      %v6829 = vmax.f32 %v6701, 0.0
      %v6830 = vmax.f32 %v6702, 0.0
      %v6831 = vmax.f32 %v6703, 0.0
      %v6832 = vmax.f32 %v6704, 0.0
      %v6833 = vmax.f32 %v6705, 0.0
      %v6834 = vmax.f32 %v6706, 0.0
      %6836 = vset.pattern.permute.xlu0 0
      %6837 = vperm.xlu0 %6836, %v2726
      %v6838 = vpop.permute.xlu0 %6837
      %6841 = vset.pattern.permute.xlu0 0
      %6842 = vperm.xlu0 %6841, %v2727
      %v6843 = vpop.permute.xlu0 %6842
      %6846 = vset.pattern.permute.xlu0 0
      %6847 = vperm.xlu0 %6846, %v2728
      %v6848 = vpop.permute.xlu0 %6847
      %6851 = vset.pattern.permute.xlu0 0
      %6852 = vperm.xlu0 %6851, %v2729
      %v6853 = vpop.permute.xlu0 %6852
      %6856 = vset.pattern.permute.xlu0 0
      %6857 = vperm.xlu0 %6856, %v2730
      %v6858 = vpop.permute.xlu0 %6857
      %6861 = vset.pattern.permute.xlu0 0
      %6862 = vperm.xlu0 %6861, %v2731
      %v6863 = vpop.permute.xlu0 %6862
      %6866 = vset.pattern.permute.xlu0 0
      %6867 = vperm.xlu0 %6866, %v2732
      %v6868 = vpop.permute.xlu0 %6867
      %6871 = vset.pattern.permute.xlu0 0
      %6872 = vperm.xlu0 %6871, %v2733
      %v6873 = vpop.permute.xlu0 %6872
      %6876 = vset.pattern.permute.xlu0 0
      %6877 = vperm.xlu0 %6876, %v2734
      %v6878 = vpop.permute.xlu0 %6877
      %6881 = vset.pattern.permute.xlu0 0
      %6882 = vperm.xlu0 %6881, %v2735
      %v6883 = vpop.permute.xlu0 %6882
      %6886 = vset.pattern.permute.xlu0 0
      %6887 = vperm.xlu0 %6886, %v2736
      %v6888 = vpop.permute.xlu0 %6887
      %6891 = vset.pattern.permute.xlu0 0
      %6892 = vperm.xlu0 %6891, %v2737
      %v6893 = vpop.permute.xlu0 %6892
      %6896 = vset.pattern.permute.xlu0 0
      %6897 = vperm.xlu0 %6896, %v2738
      %v6898 = vpop.permute.xlu0 %6897
      %6901 = vset.pattern.permute.xlu0 0
      %6902 = vperm.xlu0 %6901, %v2739
      %v6903 = vpop.permute.xlu0 %6902
      %6906 = vset.pattern.permute.xlu0 0
      %6907 = vperm.xlu0 %6906, %v2740
      %v6908 = vpop.permute.xlu0 %6907
      %6911 = vset.pattern.permute.xlu0 0
      %6912 = vperm.xlu0 %6911, %v2741
      %v6913 = vpop.permute.xlu0 %6912
      %6916 = vset.pattern.permute.xlu0 0
      %6917 = vperm.xlu0 %6916, %v2742
      %v6918 = vpop.permute.xlu0 %6917
      %6921 = vset.pattern.permute.xlu0 0
      %6922 = vperm.xlu0 %6921, %v2743
      %v6923 = vpop.permute.xlu0 %6922
      %6926 = vset.pattern.permute.xlu0 0
      %6927 = vperm.xlu0 %6926, %v2744
      %v6928 = vpop.permute.xlu0 %6927
      %6931 = vset.pattern.permute.xlu0 0
      %6932 = vperm.xlu0 %6931, %v2745
      %v6933 = vpop.permute.xlu0 %6932
      %6936 = vset.pattern.permute.xlu0 0
      %6937 = vperm.xlu0 %6936, %v2746
      %v6938 = vpop.permute.xlu0 %6937
      %6941 = vset.pattern.permute.xlu0 0
      %6942 = vperm.xlu0 %6941, %v2747
      %v6943 = vpop.permute.xlu0 %6942
      %6946 = vset.pattern.permute.xlu0 0
      %6947 = vperm.xlu0 %6946, %v2748
      %v6948 = vpop.permute.xlu0 %6947
      %6951 = vset.pattern.permute.xlu0 0
      %6952 = vperm.xlu0 %6951, %v2749
      %v6953 = vpop.permute.xlu0 %6952
      %6956 = vset.pattern.permute.xlu0 0
      %6957 = vperm.xlu0 %6956, %v2750
      %v6958 = vpop.permute.xlu0 %6957
      %6961 = vset.pattern.permute.xlu0 0
      %6962 = vperm.xlu0 %6961, %v2751
      %v6963 = vpop.permute.xlu0 %6962
      %6966 = vset.pattern.permute.xlu0 0
      %6967 = vperm.xlu0 %6966, %v2752
      %v6968 = vpop.permute.xlu0 %6967
      %6971 = vset.pattern.permute.xlu0 0
      %6972 = vperm.xlu0 %6971, %v2753
      %v6973 = vpop.permute.xlu0 %6972
      %6976 = vset.pattern.permute.xlu0 0
      %6977 = vperm.xlu0 %6976, %v2754
      %v6978 = vpop.permute.xlu0 %6977
      %6981 = vset.pattern.permute.xlu0 0
      %6982 = vperm.xlu0 %6981, %v2755
      %v6983 = vpop.permute.xlu0 %6982
      %6986 = vset.pattern.permute.xlu0 0
      %6987 = vperm.xlu0 %6986, %v2756
      %v6988 = vpop.permute.xlu0 %6987
      %6991 = vset.pattern.permute.xlu0 0
      %6992 = vperm.xlu0 %6991, %v2757
      %v6993 = vpop.permute.xlu0 %6992
      %6996 = vset.pattern.permute.xlu0 0
      %6997 = vperm.xlu0 %6996, %v2758
      %v6998 = vpop.permute.xlu0 %6997
      %7001 = vset.pattern.permute.xlu0 0
      %7002 = vperm.xlu0 %7001, %v2759
      %v7003 = vpop.permute.xlu0 %7002
      %7006 = vset.pattern.permute.xlu0 0
      %7007 = vperm.xlu0 %7006, %v2760
      %v7008 = vpop.permute.xlu0 %7007
      %7011 = vset.pattern.permute.xlu0 0
      %7012 = vperm.xlu0 %7011, %v2761
      %v7013 = vpop.permute.xlu0 %7012
      %7016 = vset.pattern.permute.xlu0 0
      %7017 = vperm.xlu0 %7016, %v2762
      %v7018 = vpop.permute.xlu0 %7017
      %7021 = vset.pattern.permute.xlu0 0
      %7022 = vperm.xlu0 %7021, %v2763
      %v7023 = vpop.permute.xlu0 %7022
      %7026 = vset.pattern.permute.xlu0 0
      %7027 = vperm.xlu0 %7026, %v2764
      %v7028 = vpop.permute.xlu0 %7027
      %7031 = vset.pattern.permute.xlu0 0
      %7032 = vperm.xlu0 %7031, %v2765
      %v7033 = vpop.permute.xlu0 %7032
      %7036 = vset.pattern.permute.xlu0 0
      %7037 = vperm.xlu0 %7036, %v2766
      %v7038 = vpop.permute.xlu0 %7037
      %7041 = vset.pattern.permute.xlu0 0
      %7042 = vperm.xlu0 %7041, %v2767
      %v7043 = vpop.permute.xlu0 %7042
      %7046 = vset.pattern.permute.xlu0 0
      %7047 = vperm.xlu0 %7046, %v2768
      %v7048 = vpop.permute.xlu0 %7047
      %7051 = vset.pattern.permute.xlu0 0
      %7052 = vperm.xlu0 %7051, %v2769
      %v7053 = vpop.permute.xlu0 %7052
      %7056 = vset.pattern.permute.xlu0 0
      %7057 = vperm.xlu0 %7056, %v2770
      %v7058 = vpop.permute.xlu0 %7057
      %7061 = vset.pattern.permute.xlu0 0
      %7062 = vperm.xlu0 %7061, %v2771
      %v7063 = vpop.permute.xlu0 %7062
      %7066 = vset.pattern.permute.xlu0 0
      %7067 = vperm.xlu0 %7066, %v2772
      %v7068 = vpop.permute.xlu0 %7067
      %7071 = vset.pattern.permute.xlu0 0
      %7072 = vperm.xlu0 %7071, %v2773
      %v7073 = vpop.permute.xlu0 %7072
      %7076 = vset.pattern.permute.xlu0 0
      %7077 = vperm.xlu0 %7076, %v2774
      %v7078 = vpop.permute.xlu0 %7077
      %7081 = vset.pattern.permute.xlu0 0
      %7082 = vperm.xlu0 %7081, %v2775
      %v7083 = vpop.permute.xlu0 %7082
      %7086 = vset.pattern.permute.xlu0 0
      %7087 = vperm.xlu0 %7086, %v2776
      %v7088 = vpop.permute.xlu0 %7087
      %7091 = vset.pattern.permute.xlu0 0
      %7092 = vperm.xlu0 %7091, %v2777
      %v7093 = vpop.permute.xlu0 %7092
      %7096 = vset.pattern.permute.xlu0 0
      %7097 = vperm.xlu0 %7096, %v2778
      %v7098 = vpop.permute.xlu0 %7097
      %7101 = vset.pattern.permute.xlu0 0
      %7102 = vperm.xlu0 %7101, %v2779
      %v7103 = vpop.permute.xlu0 %7102
      %7106 = vset.pattern.permute.xlu0 0
      %7107 = vperm.xlu0 %7106, %v2780
      %v7108 = vpop.permute.xlu0 %7107
      %7111 = vset.pattern.permute.xlu0 0
      %7112 = vperm.xlu0 %7111, %v2781
      %v7113 = vpop.permute.xlu0 %7112
      %7116 = vset.pattern.permute.xlu0 0
      %7117 = vperm.xlu0 %7116, %v2782
      %v7118 = vpop.permute.xlu0 %7117
      %7121 = vset.pattern.permute.xlu0 0
      %7122 = vperm.xlu0 %7121, %v2783
      %v7123 = vpop.permute.xlu0 %7122
      %7126 = vset.pattern.permute.xlu0 0
      %7127 = vperm.xlu0 %7126, %v2784
      %v7128 = vpop.permute.xlu0 %7127
      %7131 = vset.pattern.permute.xlu0 0
      %7132 = vperm.xlu0 %7131, %v2785
      %v7133 = vpop.permute.xlu0 %7132
      %7136 = vset.pattern.permute.xlu0 0
      %7137 = vperm.xlu0 %7136, %v2786
      %v7138 = vpop.permute.xlu0 %7137
      %7141 = vset.pattern.permute.xlu0 0
      %7142 = vperm.xlu0 %7141, %v2787
      %v7143 = vpop.permute.xlu0 %7142
      %7146 = vset.pattern.permute.xlu0 0
      %7147 = vperm.xlu0 %7146, %v2788
      %v7148 = vpop.permute.xlu0 %7147
      %7151 = vset.pattern.permute.xlu0 0
      %7152 = vperm.xlu0 %7151, %v2789
      %v7153 = vpop.permute.xlu0 %7152
      %7156 = vset.pattern.permute.xlu0 0
      %7157 = vperm.xlu0 %7156, %v2790
      %v7158 = vpop.permute.xlu0 %7157
      %7161 = vset.pattern.permute.xlu0 0
      %7162 = vperm.xlu0 %7161, %v2791
      %v7163 = vpop.permute.xlu0 %7162
      %7166 = vset.pattern.permute.xlu0 0
      %7167 = vperm.xlu0 %7166, %v2792
      %v7168 = vpop.permute.xlu0 %7167
      %7171 = vset.pattern.permute.xlu0 0
      %7172 = vperm.xlu0 %7171, %v2793
      %v7173 = vpop.permute.xlu0 %7172
      %7176 = vset.pattern.permute.xlu0 0
      %7177 = vperm.xlu0 %7176, %v2794
      %v7178 = vpop.permute.xlu0 %7177
      %7181 = vset.pattern.permute.xlu0 0
      %7182 = vperm.xlu0 %7181, %v2795
      %v7183 = vpop.permute.xlu0 %7182
      %7186 = vset.pattern.permute.xlu0 0
      %7187 = vperm.xlu0 %7186, %v2796
      %v7188 = vpop.permute.xlu0 %7187
      %7191 = vset.pattern.permute.xlu0 0
      %7192 = vperm.xlu0 %7191, %v2797
      %v7193 = vpop.permute.xlu0 %7192
      %7196 = vset.pattern.permute.xlu0 0
      %7197 = vperm.xlu0 %7196, %v2798
      %v7198 = vpop.permute.xlu0 %7197
      %7201 = vset.pattern.permute.xlu0 0
      %7202 = vperm.xlu0 %7201, %v2799
      %v7203 = vpop.permute.xlu0 %7202
      %7206 = vset.pattern.permute.xlu0 0
      %7207 = vperm.xlu0 %7206, %v2800
      %v7208 = vpop.permute.xlu0 %7207
      %7211 = vset.pattern.permute.xlu0 0
      %7212 = vperm.xlu0 %7211, %v2801
      %v7213 = vpop.permute.xlu0 %7212
      %7216 = vset.pattern.permute.xlu0 0
      %7217 = vperm.xlu0 %7216, %v2802
      %v7218 = vpop.permute.xlu0 %7217
      %7221 = vset.pattern.permute.xlu0 0
      %7222 = vperm.xlu0 %7221, %v2803
      %v7223 = vpop.permute.xlu0 %7222
      %7226 = vset.pattern.permute.xlu0 0
      %7227 = vperm.xlu0 %7226, %v2804
      %v7228 = vpop.permute.xlu0 %7227
      %7231 = vset.pattern.permute.xlu0 0
      %7232 = vperm.xlu0 %7231, %v2805
      %v7233 = vpop.permute.xlu0 %7232
      %7236 = vset.pattern.permute.xlu0 0
      %7237 = vperm.xlu0 %7236, %v2806
      %v7238 = vpop.permute.xlu0 %7237
      %7241 = vset.pattern.permute.xlu0 0
      %7242 = vperm.xlu0 %7241, %v2807
      %v7243 = vpop.permute.xlu0 %7242
      %7246 = vset.pattern.permute.xlu0 0
      %7247 = vperm.xlu0 %7246, %v2808
      %v7248 = vpop.permute.xlu0 %7247
      %7251 = vset.pattern.permute.xlu0 0
      %7252 = vperm.xlu0 %7251, %v2809
      %v7253 = vpop.permute.xlu0 %7252
      %7256 = vset.pattern.permute.xlu0 0
      %7257 = vperm.xlu0 %7256, %v2810
      %v7258 = vpop.permute.xlu0 %7257
      %7261 = vset.pattern.permute.xlu0 0
      %7262 = vperm.xlu0 %7261, %v2811
      %v7263 = vpop.permute.xlu0 %7262
      %7266 = vset.pattern.permute.xlu0 0
      %7267 = vperm.xlu0 %7266, %v2812
      %v7268 = vpop.permute.xlu0 %7267
      %7271 = vset.pattern.permute.xlu0 0
      %7272 = vperm.xlu0 %7271, %v2813
      %v7273 = vpop.permute.xlu0 %7272
      %7276 = vset.pattern.permute.xlu0 0
      %7277 = vperm.xlu0 %7276, %v2814
      %v7278 = vpop.permute.xlu0 %7277
      %7281 = vset.pattern.permute.xlu0 0
      %7282 = vperm.xlu0 %7281, %v2815
      %v7283 = vpop.permute.xlu0 %7282
      %7286 = vset.pattern.permute.xlu0 0
      %7287 = vperm.xlu0 %7286, %v2816
      %v7288 = vpop.permute.xlu0 %7287
      %7291 = vset.pattern.permute.xlu0 0
      %7292 = vperm.xlu0 %7291, %v2817
      %v7293 = vpop.permute.xlu0 %7292
      %7296 = vset.pattern.permute.xlu0 0
      %7297 = vperm.xlu0 %7296, %v2818
      %v7298 = vpop.permute.xlu0 %7297
      %7301 = vset.pattern.permute.xlu0 0
      %7302 = vperm.xlu0 %7301, %v2819
      %v7303 = vpop.permute.xlu0 %7302
      %7306 = vset.pattern.permute.xlu0 0
      %7307 = vperm.xlu0 %7306, %v2820
      %v7308 = vpop.permute.xlu0 %7307
      %7311 = vset.pattern.permute.xlu0 0
      %7312 = vperm.xlu0 %7311, %v2821
      %v7313 = vpop.permute.xlu0 %7312
      %7316 = vset.pattern.permute.xlu0 0
      %7317 = vperm.xlu0 %7316, %v2822
      %v7318 = vpop.permute.xlu0 %7317
      %7321 = vset.pattern.permute.xlu0 0
      %7322 = vperm.xlu0 %7321, %v2823
      %v7323 = vpop.permute.xlu0 %7322
      %7326 = vset.pattern.permute.xlu0 0
      %7327 = vperm.xlu0 %7326, %v2824
      %v7328 = vpop.permute.xlu0 %7327
      %7331 = vset.pattern.permute.xlu0 0
      %7332 = vperm.xlu0 %7331, %v2825
      %v7333 = vpop.permute.xlu0 %7332
      %7336 = vset.pattern.permute.xlu0 0
      %7337 = vperm.xlu0 %7336, %v2826
      %v7338 = vpop.permute.xlu0 %7337
      %7341 = vset.pattern.permute.xlu0 0
      %7342 = vperm.xlu0 %7341, %v2827
      %v7343 = vpop.permute.xlu0 %7342
      %7346 = vset.pattern.permute.xlu0 0
      %7347 = vperm.xlu0 %7346, %v2828
      %v7348 = vpop.permute.xlu0 %7347
      %7351 = vset.pattern.permute.xlu0 0
      %7352 = vperm.xlu0 %7351, %v2829
      %v7353 = vpop.permute.xlu0 %7352
      %7356 = vset.pattern.permute.xlu0 0
      %7357 = vperm.xlu0 %7356, %v2830
      %v7358 = vpop.permute.xlu0 %7357
      %7361 = vset.pattern.permute.xlu0 0
      %7362 = vperm.xlu0 %7361, %v2831
      %v7363 = vpop.permute.xlu0 %7362
      %7366 = vset.pattern.permute.xlu0 0
      %7367 = vperm.xlu0 %7366, %v2832
      %v7368 = vpop.permute.xlu0 %7367
      %7371 = vset.pattern.permute.xlu0 0
      %7372 = vperm.xlu0 %7371, %v2833
      %v7373 = vpop.permute.xlu0 %7372
      %7376 = vset.pattern.permute.xlu0 0
      %7377 = vperm.xlu0 %7376, %v2834
      %v7378 = vpop.permute.xlu0 %7377
      %7381 = vset.pattern.permute.xlu0 0
      %7382 = vperm.xlu0 %7381, %v2835
      %v7383 = vpop.permute.xlu0 %7382
      %7386 = vset.pattern.permute.xlu0 0
      %7387 = vperm.xlu0 %7386, %v2836
      %v7388 = vpop.permute.xlu0 %7387
      %7391 = vset.pattern.permute.xlu0 0
      %7392 = vperm.xlu0 %7391, %v2837
      %v7393 = vpop.permute.xlu0 %7392
      %7396 = vset.pattern.permute.xlu0 0
      %7397 = vperm.xlu0 %7396, %v2838
      %v7398 = vpop.permute.xlu0 %7397
      %7401 = vset.pattern.permute.xlu0 0
      %7402 = vperm.xlu0 %7401, %v2839
      %v7403 = vpop.permute.xlu0 %7402
      %7406 = vset.pattern.permute.xlu0 0
      %7407 = vperm.xlu0 %7406, %v2840
      %v7408 = vpop.permute.xlu0 %7407
      %7411 = vset.pattern.permute.xlu0 0
      %7412 = vperm.xlu0 %7411, %v2841
      %v7413 = vpop.permute.xlu0 %7412
      %7416 = vset.pattern.permute.xlu0 0
      %7417 = vperm.xlu0 %7416, %v2842
      %v7418 = vpop.permute.xlu0 %7417
      %7421 = vset.pattern.permute.xlu0 0
      %7422 = vperm.xlu0 %7421, %v2843
      %v7423 = vpop.permute.xlu0 %7422
      %7426 = vset.pattern.permute.xlu0 0
      %7427 = vperm.xlu0 %7426, %v2844
      %v7428 = vpop.permute.xlu0 %7427
      %7431 = vset.pattern.permute.xlu0 0
      %7432 = vperm.xlu0 %7431, %v2845
      %v7433 = vpop.permute.xlu0 %7432
      %7436 = vset.pattern.permute.xlu0 0
      %7437 = vperm.xlu0 %7436, %v2846
      %v7438 = vpop.permute.xlu0 %7437
      %7441 = vset.pattern.permute.xlu0 0
      %7442 = vperm.xlu0 %7441, %v2847
      %v7443 = vpop.permute.xlu0 %7442
      %7446 = vset.pattern.permute.xlu0 0
      %7447 = vperm.xlu0 %7446, %v2848
      %v7448 = vpop.permute.xlu0 %7447
      %7451 = vset.pattern.permute.xlu0 0
      %7452 = vperm.xlu0 %7451, %v2849
      %v7453 = vpop.permute.xlu0 %7452
      %7456 = vset.pattern.permute.xlu0 0
      %7457 = vperm.xlu0 %7456, %v2850
      %v7458 = vpop.permute.xlu0 %7457
      %7461 = vset.pattern.permute.xlu0 0
      %7462 = vperm.xlu0 %7461, %v2851
      %v7463 = vpop.permute.xlu0 %7462
      %7466 = vset.pattern.permute.xlu0 0
      %7467 = vperm.xlu0 %7466, %v2852
      %v7468 = vpop.permute.xlu0 %7467
      %7471 = vset.pattern.permute.xlu0 0
      %7472 = vperm.xlu0 %7471, %v2853
      %v7473 = vpop.permute.xlu0 %7472
      %v7475 = vmul.f32 %v6838, %v6707
      %v7476 = vmul.f32 %v6843, %v6708
      %v7477 = vmul.f32 %v6848, %v6709
      %v7478 = vmul.f32 %v6853, %v6710
      %v7479 = vmul.f32 %v6858, %v6711
      %v7480 = vmul.f32 %v6863, %v6712
      %v7481 = vmul.f32 %v6868, %v6713
      %v7482 = vmul.f32 %v6873, %v6714
      %v7483 = vmul.f32 %v6878, %v6715
      %v7484 = vmul.f32 %v6883, %v6716
      %v7485 = vmul.f32 %v6888, %v6717
      %v7486 = vmul.f32 %v6893, %v6718
      %v7487 = vmul.f32 %v6898, %v6719
      %v7488 = vmul.f32 %v6903, %v6720
      %v7489 = vmul.f32 %v6908, %v6721
      %v7490 = vmul.f32 %v6913, %v6722
      %v7491 = vmul.f32 %v6918, %v6723
      %v7492 = vmul.f32 %v6923, %v6724
      %v7493 = vmul.f32 %v6928, %v6725
      %v7494 = vmul.f32 %v6933, %v6726
      %v7495 = vmul.f32 %v6938, %v6727
      %v7496 = vmul.f32 %v6943, %v6728
      %v7497 = vmul.f32 %v6948, %v6729
      %v7498 = vmul.f32 %v6953, %v6730
      %v7499 = vmul.f32 %v6958, %v6731
      %v7500 = vmul.f32 %v6963, %v6732
      %v7501 = vmul.f32 %v6968, %v6733
      %v7502 = vmul.f32 %v6973, %v6734
      %v7503 = vmul.f32 %v6978, %v6735
      %v7504 = vmul.f32 %v6983, %v6736
      %v7505 = vmul.f32 %v6988, %v6737
      %v7506 = vmul.f32 %v6993, %v6738
      %v7507 = vmul.f32 %v6998, %v6739
      %v7508 = vmul.f32 %v7003, %v6740
      %v7509 = vmul.f32 %v7008, %v6741
      %v7510 = vmul.f32 %v7013, %v6742
      %v7511 = vmul.f32 %v7018, %v6743
      %v7512 = vmul.f32 %v7023, %v6744
      %v7513 = vmul.f32 %v7028, %v6745
      %v7514 = vmul.f32 %v7033, %v6746
      %v7515 = vmul.f32 %v7038, %v6747
      %v7516 = vmul.f32 %v7043, %v6748
      %v7517 = vmul.f32 %v7048, %v6749
      %v7518 = vmul.f32 %v7053, %v6750
      %v7519 = vmul.f32 %v7058, %v6751
      %v7520 = vmul.f32 %v7063, %v6752
      %v7521 = vmul.f32 %v7068, %v6753
      %v7522 = vmul.f32 %v7073, %v6754
      %v7523 = vmul.f32 %v7078, %v6755
      %v7524 = vmul.f32 %v7083, %v6756
      %v7525 = vmul.f32 %v7088, %v6757
      %v7526 = vmul.f32 %v7093, %v6758
      %v7527 = vmul.f32 %v7098, %v6759
      %v7528 = vmul.f32 %v7103, %v6760
      %v7529 = vmul.f32 %v7108, %v6761
      %v7530 = vmul.f32 %v7113, %v6762
      %v7531 = vmul.f32 %v7118, %v6763
      %v7532 = vmul.f32 %v7123, %v6764
      %v7533 = vmul.f32 %v7128, %v6765
      %v7534 = vmul.f32 %v7133, %v6766
      %v7535 = vmul.f32 %v7138, %v6767
      %v7536 = vmul.f32 %v7143, %v6768
      %v7537 = vmul.f32 %v7148, %v6769
      %v7538 = vmul.f32 %v7153, %v6770
      %v7539 = vmul.f32 %v7158, %v6771
      %v7540 = vmul.f32 %v7163, %v6772
      %v7541 = vmul.f32 %v7168, %v6773
      %v7542 = vmul.f32 %v7173, %v6774
      %v7543 = vmul.f32 %v7178, %v6775
      %v7544 = vmul.f32 %v7183, %v6776
      %v7545 = vmul.f32 %v7188, %v6777
      %v7546 = vmul.f32 %v7193, %v6778
      %v7547 = vmul.f32 %v7198, %v6779
      %v7548 = vmul.f32 %v7203, %v6780
      %v7549 = vmul.f32 %v7208, %v6781
      %v7550 = vmul.f32 %v7213, %v6782
      %v7551 = vmul.f32 %v7218, %v6783
      %v7552 = vmul.f32 %v7223, %v6784
      %v7553 = vmul.f32 %v7228, %v6785
      %v7554 = vmul.f32 %v7233, %v6786
      %v7555 = vmul.f32 %v7238, %v6787
      %v7556 = vmul.f32 %v7243, %v6788
      %v7557 = vmul.f32 %v7248, %v6789
      %v7558 = vmul.f32 %v7253, %v6790
      %v7559 = vmul.f32 %v7258, %v6791
      %v7560 = vmul.f32 %v7263, %v6792
      %v7561 = vmul.f32 %v7268, %v6793
      %v7562 = vmul.f32 %v7273, %v6794
      %v7563 = vmul.f32 %v7278, %v6795
      %v7564 = vmul.f32 %v7283, %v6796
      %v7565 = vmul.f32 %v7288, %v6797
      %v7566 = vmul.f32 %v7293, %v6798
      %v7567 = vmul.f32 %v7298, %v6799
      %v7568 = vmul.f32 %v7303, %v6800
      %v7569 = vmul.f32 %v7308, %v6801
      %v7570 = vmul.f32 %v7313, %v6802
      %v7571 = vmul.f32 %v7318, %v6803
      %v7572 = vmul.f32 %v7323, %v6804
      %v7573 = vmul.f32 %v7328, %v6805
      %v7574 = vmul.f32 %v7333, %v6806
      %v7575 = vmul.f32 %v7338, %v6807
      %v7576 = vmul.f32 %v7343, %v6808
      %v7577 = vmul.f32 %v7348, %v6809
      %v7578 = vmul.f32 %v7353, %v6810
      %v7579 = vmul.f32 %v7358, %v6811
      %v7580 = vmul.f32 %v7363, %v6812
      %v7581 = vmul.f32 %v7368, %v6813
      %v7582 = vmul.f32 %v7373, %v6814
      %v7583 = vmul.f32 %v7378, %v6815
      %v7584 = vmul.f32 %v7383, %v6816
      %v7585 = vmul.f32 %v7388, %v6817
      %v7586 = vmul.f32 %v7393, %v6818
      %v7587 = vmul.f32 %v7398, %v6819
      %v7588 = vmul.f32 %v7403, %v6820
      %v7589 = vmul.f32 %v7408, %v6821
      %v7590 = vmul.f32 %v7413, %v6822
      %v7591 = vmul.f32 %v7418, %v6823
      %v7592 = vmul.f32 %v7423, %v6824
      %v7593 = vmul.f32 %v7428, %v6825
      %v7594 = vmul.f32 %v7433, %v6826
      %v7595 = vmul.f32 %v7438, %v6827
      %v7596 = vmul.f32 %v7443, %v6828
      %v7597 = vmul.f32 %v7448, %v6829
      %v7598 = vmul.f32 %v7453, %v6830
      %v7599 = vmul.f32 %v7458, %v6831
      %v7600 = vmul.f32 %v7463, %v6832
      %v7601 = vmul.f32 %v7468, %v6833
      %v7602 = vmul.f32 %v7473, %v6834
      %v7603 = vsel %vm603, %v7475, 0.0
      %v7604 = vsel %vm603, %v7476, 0.0
      %v7605 = vadd.f32 %v7603, %v7604
      %v7606 = vsel %vm603, %v7477, 0.0
      %v7607 = vadd.f32 %v7605, %v7606
      %v7608 = vsel %vm603, %v7478, 0.0
      %v7609 = vadd.f32 %v7607, %v7608
      %v7610 = vsel %vm603, %v7479, 0.0
      %v7611 = vadd.f32 %v7609, %v7610
      %v7612 = vsel %vm603, %v7480, 0.0
      %v7613 = vadd.f32 %v7611, %v7612
      %v7614 = vsel %vm603, %v7481, 0.0
      %v7615 = vadd.f32 %v7613, %v7614
      %v7616 = vsel %vm603, %v7482, 0.0
      %v7617 = vadd.f32 %v7615, %v7616
      %v7618 = vrot.slane %v7617, 4
      %v7619 = vadd.f32 %v7617, %v7618
      %v7620 = vrot.slane %v7619, 2
      %v7621 = vadd.f32 %v7619, %v7620
      %v7622 = vrot.slane %v7621, 1
      %v7623 = vadd.f32 %v7621, %v7622
      %v7624 = vsel %vm603, %v7483, 0.0
      %v7625 = vsel %vm603, %v7484, 0.0
      %v7626 = vadd.f32 %v7624, %v7625
      %v7627 = vsel %vm603, %v7485, 0.0
      %v7628 = vadd.f32 %v7626, %v7627
      %v7629 = vsel %vm603, %v7486, 0.0
      %v7630 = vadd.f32 %v7628, %v7629
      %v7631 = vsel %vm603, %v7487, 0.0
      %v7632 = vadd.f32 %v7630, %v7631
      %v7633 = vsel %vm603, %v7488, 0.0
      %v7634 = vadd.f32 %v7632, %v7633
      %v7635 = vsel %vm603, %v7489, 0.0
      %v7636 = vadd.f32 %v7634, %v7635
      %v7637 = vsel %vm603, %v7490, 0.0
      %v7638 = vadd.f32 %v7636, %v7637
      %v7639 = vrot.slane %v7638, 4
      %v7640 = vadd.f32 %v7638, %v7639
      %v7641 = vrot.slane %v7640, 2
      %v7642 = vadd.f32 %v7640, %v7641
      %v7643 = vrot.slane %v7642, 1
      %v7644 = vadd.f32 %v7642, %v7643
      %v7645 = vsel %vm603, %v7491, 0.0
      %v7646 = vsel %vm603, %v7492, 0.0
      %v7647 = vadd.f32 %v7645, %v7646
      %v7648 = vsel %vm603, %v7493, 0.0
      %v7649 = vadd.f32 %v7647, %v7648
      %v7650 = vsel %vm603, %v7494, 0.0
      %v7651 = vadd.f32 %v7649, %v7650
      %v7652 = vsel %vm603, %v7495, 0.0
      %v7653 = vadd.f32 %v7651, %v7652
      %v7654 = vsel %vm603, %v7496, 0.0
      %v7655 = vadd.f32 %v7653, %v7654
      %v7656 = vsel %vm603, %v7497, 0.0
      %v7657 = vadd.f32 %v7655, %v7656
      %v7658 = vsel %vm603, %v7498, 0.0
      %v7659 = vadd.f32 %v7657, %v7658
      %v7660 = vrot.slane %v7659, 4
      %v7661 = vadd.f32 %v7659, %v7660
      %v7662 = vrot.slane %v7661, 2
      %v7663 = vadd.f32 %v7661, %v7662
      %v7664 = vrot.slane %v7663, 1
      %v7665 = vadd.f32 %v7663, %v7664
      %v7666 = vsel %vm603, %v7499, 0.0
      %v7667 = vsel %vm603, %v7500, 0.0
      %v7668 = vadd.f32 %v7666, %v7667
      %v7669 = vsel %vm603, %v7501, 0.0
      %v7670 = vadd.f32 %v7668, %v7669
      %v7671 = vsel %vm603, %v7502, 0.0
      %v7672 = vadd.f32 %v7670, %v7671
      %v7673 = vsel %vm603, %v7503, 0.0
      %v7674 = vadd.f32 %v7672, %v7673
      %v7675 = vsel %vm603, %v7504, 0.0
      %v7676 = vadd.f32 %v7674, %v7675
      %v7677 = vsel %vm603, %v7505, 0.0
      %v7678 = vadd.f32 %v7676, %v7677
      %v7679 = vsel %vm603, %v7506, 0.0
      %v7680 = vadd.f32 %v7678, %v7679
      %v7681 = vrot.slane %v7680, 4
      %v7682 = vadd.f32 %v7680, %v7681
      %v7683 = vrot.slane %v7682, 2
      %v7684 = vadd.f32 %v7682, %v7683
      %v7685 = vrot.slane %v7684, 1
      %v7686 = vadd.f32 %v7684, %v7685
      %v7687 = vsel %vm603, %v7507, 0.0
      %v7688 = vsel %vm603, %v7508, 0.0
      %v7689 = vadd.f32 %v7687, %v7688
      %v7690 = vsel %vm603, %v7509, 0.0
      %v7691 = vadd.f32 %v7689, %v7690
      %v7692 = vsel %vm603, %v7510, 0.0
      %v7693 = vadd.f32 %v7691, %v7692
      %v7694 = vsel %vm603, %v7511, 0.0
      %v7695 = vadd.f32 %v7693, %v7694
      %v7696 = vsel %vm603, %v7512, 0.0
      %v7697 = vadd.f32 %v7695, %v7696
      %v7698 = vsel %vm603, %v7513, 0.0
      %v7699 = vadd.f32 %v7697, %v7698
      %v7700 = vsel %vm603, %v7514, 0.0
      %v7701 = vadd.f32 %v7699, %v7700
      %v7702 = vrot.slane %v7701, 4
      %v7703 = vadd.f32 %v7701, %v7702
      %v7704 = vrot.slane %v7703, 2
      %v7705 = vadd.f32 %v7703, %v7704
      %v7706 = vrot.slane %v7705, 1
      %v7707 = vadd.f32 %v7705, %v7706
      %v7708 = vsel %vm603, %v7515, 0.0
      %v7709 = vsel %vm603, %v7516, 0.0
      %v7710 = vadd.f32 %v7708, %v7709
      %v7711 = vsel %vm603, %v7517, 0.0
      %v7712 = vadd.f32 %v7710, %v7711
      %v7713 = vsel %vm603, %v7518, 0.0
      %v7714 = vadd.f32 %v7712, %v7713
      %v7715 = vsel %vm603, %v7519, 0.0
      %v7716 = vadd.f32 %v7714, %v7715
      %v7717 = vsel %vm603, %v7520, 0.0
      %v7718 = vadd.f32 %v7716, %v7717
      %v7719 = vsel %vm603, %v7521, 0.0
      %v7720 = vadd.f32 %v7718, %v7719
      %v7721 = vsel %vm603, %v7522, 0.0
      %v7722 = vadd.f32 %v7720, %v7721
      %v7723 = vrot.slane %v7722, 4
      %v7724 = vadd.f32 %v7722, %v7723
      %v7725 = vrot.slane %v7724, 2
      %v7726 = vadd.f32 %v7724, %v7725
      %v7727 = vrot.slane %v7726, 1
      %v7728 = vadd.f32 %v7726, %v7727
      %v7729 = vsel %vm603, %v7523, 0.0
      %v7730 = vsel %vm603, %v7524, 0.0
      %v7731 = vadd.f32 %v7729, %v7730
      %v7732 = vsel %vm603, %v7525, 0.0
      %v7733 = vadd.f32 %v7731, %v7732
      %v7734 = vsel %vm603, %v7526, 0.0
      %v7735 = vadd.f32 %v7733, %v7734
      %v7736 = vsel %vm603, %v7527, 0.0
      %v7737 = vadd.f32 %v7735, %v7736
      %v7738 = vsel %vm603, %v7528, 0.0
      %v7739 = vadd.f32 %v7737, %v7738
      %v7740 = vsel %vm603, %v7529, 0.0
      %v7741 = vadd.f32 %v7739, %v7740
      %v7742 = vsel %vm603, %v7530, 0.0
      %v7743 = vadd.f32 %v7741, %v7742
      %v7744 = vrot.slane %v7743, 4
      %v7745 = vadd.f32 %v7743, %v7744
      %v7746 = vrot.slane %v7745, 2
      %v7747 = vadd.f32 %v7745, %v7746
      %v7748 = vrot.slane %v7747, 1
      %v7749 = vadd.f32 %v7747, %v7748
      %v7750 = vsel %vm603, %v7531, 0.0
      %v7751 = vsel %vm603, %v7532, 0.0
      %v7752 = vadd.f32 %v7750, %v7751
      %v7753 = vsel %vm603, %v7533, 0.0
      %v7754 = vadd.f32 %v7752, %v7753
      %v7755 = vsel %vm603, %v7534, 0.0
      %v7756 = vadd.f32 %v7754, %v7755
      %v7757 = vsel %vm603, %v7535, 0.0
      %v7758 = vadd.f32 %v7756, %v7757
      %v7759 = vsel %vm603, %v7536, 0.0
      %v7760 = vadd.f32 %v7758, %v7759
      %v7761 = vsel %vm603, %v7537, 0.0
      %v7762 = vadd.f32 %v7760, %v7761
      %v7763 = vsel %vm603, %v7538, 0.0
      %v7764 = vadd.f32 %v7762, %v7763
      %v7765 = vrot.slane %v7764, 4
      %v7766 = vadd.f32 %v7764, %v7765
      %v7767 = vrot.slane %v7766, 2
      %v7768 = vadd.f32 %v7766, %v7767
      %v7769 = vrot.slane %v7768, 1
      %v7770 = vadd.f32 %v7768, %v7769
      %v7771 = vsel %vm603, %v7539, 0.0
      %v7772 = vsel %vm603, %v7540, 0.0
      %v7773 = vadd.f32 %v7771, %v7772
      %v7774 = vsel %vm603, %v7541, 0.0
      %v7775 = vadd.f32 %v7773, %v7774
      %v7776 = vsel %vm603, %v7542, 0.0
      %v7777 = vadd.f32 %v7775, %v7776
      %v7778 = vsel %vm603, %v7543, 0.0
      %v7779 = vadd.f32 %v7777, %v7778
      %v7780 = vsel %vm603, %v7544, 0.0
      %v7781 = vadd.f32 %v7779, %v7780
      %v7782 = vsel %vm603, %v7545, 0.0
      %v7783 = vadd.f32 %v7781, %v7782
      %v7784 = vsel %vm603, %v7546, 0.0
      %v7785 = vadd.f32 %v7783, %v7784
      %v7786 = vrot.slane %v7785, 4
      %v7787 = vadd.f32 %v7785, %v7786
      %v7788 = vrot.slane %v7787, 2
      %v7789 = vadd.f32 %v7787, %v7788
      %v7790 = vrot.slane %v7789, 1
      %v7791 = vadd.f32 %v7789, %v7790
      %v7792 = vsel %vm603, %v7547, 0.0
      %v7793 = vsel %vm603, %v7548, 0.0
      %v7794 = vadd.f32 %v7792, %v7793
      %v7795 = vsel %vm603, %v7549, 0.0
      %v7796 = vadd.f32 %v7794, %v7795
      %v7797 = vsel %vm603, %v7550, 0.0
      %v7798 = vadd.f32 %v7796, %v7797
      %v7799 = vsel %vm603, %v7551, 0.0
      %v7800 = vadd.f32 %v7798, %v7799
      %v7801 = vsel %vm603, %v7552, 0.0
      %v7802 = vadd.f32 %v7800, %v7801
      %v7803 = vsel %vm603, %v7553, 0.0
      %v7804 = vadd.f32 %v7802, %v7803
      %v7805 = vsel %vm603, %v7554, 0.0
      %v7806 = vadd.f32 %v7804, %v7805
      %v7807 = vrot.slane %v7806, 4
      %v7808 = vadd.f32 %v7806, %v7807
      %v7809 = vrot.slane %v7808, 2
      %v7810 = vadd.f32 %v7808, %v7809
      %v7811 = vrot.slane %v7810, 1
      %v7812 = vadd.f32 %v7810, %v7811
      %v7813 = vsel %vm603, %v7555, 0.0
      %v7814 = vsel %vm603, %v7556, 0.0
      %v7815 = vadd.f32 %v7813, %v7814
      %v7816 = vsel %vm603, %v7557, 0.0
      %v7817 = vadd.f32 %v7815, %v7816
      %v7818 = vsel %vm603, %v7558, 0.0
      %v7819 = vadd.f32 %v7817, %v7818
      %v7820 = vsel %vm603, %v7559, 0.0
      %v7821 = vadd.f32 %v7819, %v7820
      %v7822 = vsel %vm603, %v7560, 0.0
      %v7823 = vadd.f32 %v7821, %v7822
      %v7824 = vsel %vm603, %v7561, 0.0
      %v7825 = vadd.f32 %v7823, %v7824
      %v7826 = vsel %vm603, %v7562, 0.0
      %v7827 = vadd.f32 %v7825, %v7826
      %v7828 = vrot.slane %v7827, 4
      %v7829 = vadd.f32 %v7827, %v7828
      %v7830 = vrot.slane %v7829, 2
      %v7831 = vadd.f32 %v7829, %v7830
      %v7832 = vrot.slane %v7831, 1
      %v7833 = vadd.f32 %v7831, %v7832
      %v7834 = vsel %vm603, %v7563, 0.0
      %v7835 = vsel %vm603, %v7564, 0.0
      %v7836 = vadd.f32 %v7834, %v7835
      %v7837 = vsel %vm603, %v7565, 0.0
      %v7838 = vadd.f32 %v7836, %v7837
      %v7839 = vsel %vm603, %v7566, 0.0
      %v7840 = vadd.f32 %v7838, %v7839
      %v7841 = vsel %vm603, %v7567, 0.0
      %v7842 = vadd.f32 %v7840, %v7841
      %v7843 = vsel %vm603, %v7568, 0.0
      %v7844 = vadd.f32 %v7842, %v7843
      %v7845 = vsel %vm603, %v7569, 0.0
      %v7846 = vadd.f32 %v7844, %v7845
      %v7847 = vsel %vm603, %v7570, 0.0
      %v7848 = vadd.f32 %v7846, %v7847
      %v7849 = vrot.slane %v7848, 4
      %v7850 = vadd.f32 %v7848, %v7849
      %v7851 = vrot.slane %v7850, 2
      %v7852 = vadd.f32 %v7850, %v7851
      %v7853 = vrot.slane %v7852, 1
      %v7854 = vadd.f32 %v7852, %v7853
      %v7855 = vsel %vm603, %v7571, 0.0
      %v7856 = vsel %vm603, %v7572, 0.0
      %v7857 = vadd.f32 %v7855, %v7856
      %v7858 = vsel %vm603, %v7573, 0.0
      %v7859 = vadd.f32 %v7857, %v7858
      %v7860 = vsel %vm603, %v7574, 0.0
      %v7861 = vadd.f32 %v7859, %v7860
      %v7862 = vsel %vm603, %v7575, 0.0
      %v7863 = vadd.f32 %v7861, %v7862
      %v7864 = vsel %vm603, %v7576, 0.0
      %v7865 = vadd.f32 %v7863, %v7864
      %v7866 = vsel %vm603, %v7577, 0.0
      %v7867 = vadd.f32 %v7865, %v7866
      %v7868 = vsel %vm603, %v7578, 0.0
      %v7869 = vadd.f32 %v7867, %v7868
      %v7870 = vrot.slane %v7869, 4
      %v7871 = vadd.f32 %v7869, %v7870
      %v7872 = vrot.slane %v7871, 2
      %v7873 = vadd.f32 %v7871, %v7872
      %v7874 = vrot.slane %v7873, 1
      %v7875 = vadd.f32 %v7873, %v7874
      %v7876 = vsel %vm603, %v7579, 0.0
      %v7877 = vsel %vm603, %v7580, 0.0
      %v7878 = vadd.f32 %v7876, %v7877
      %v7879 = vsel %vm603, %v7581, 0.0
      %v7880 = vadd.f32 %v7878, %v7879
      %v7881 = vsel %vm603, %v7582, 0.0
      %v7882 = vadd.f32 %v7880, %v7881
      %v7883 = vsel %vm603, %v7583, 0.0
      %v7884 = vadd.f32 %v7882, %v7883
      %v7885 = vsel %vm603, %v7584, 0.0
      %v7886 = vadd.f32 %v7884, %v7885
      %v7887 = vsel %vm603, %v7585, 0.0
      %v7888 = vadd.f32 %v7886, %v7887
      %v7889 = vsel %vm603, %v7586, 0.0
      %v7890 = vadd.f32 %v7888, %v7889
      %v7891 = vrot.slane %v7890, 4
      %v7892 = vadd.f32 %v7890, %v7891
      %v7893 = vrot.slane %v7892, 2
      %v7894 = vadd.f32 %v7892, %v7893
      %v7895 = vrot.slane %v7894, 1
      %v7896 = vadd.f32 %v7894, %v7895
      %v7897 = vsel %vm603, %v7587, 0.0
      %v7898 = vsel %vm603, %v7588, 0.0
      %v7899 = vadd.f32 %v7897, %v7898
      %v7900 = vsel %vm603, %v7589, 0.0
      %v7901 = vadd.f32 %v7899, %v7900
      %v7902 = vsel %vm603, %v7590, 0.0
      %v7903 = vadd.f32 %v7901, %v7902
      %v7904 = vsel %vm603, %v7591, 0.0
      %v7905 = vadd.f32 %v7903, %v7904
      %v7906 = vsel %vm603, %v7592, 0.0
      %v7907 = vadd.f32 %v7905, %v7906
      %v7908 = vsel %vm603, %v7593, 0.0
      %v7909 = vadd.f32 %v7907, %v7908
      %v7910 = vsel %vm603, %v7594, 0.0
      %v7911 = vadd.f32 %v7909, %v7910
      %v7912 = vrot.slane %v7911, 4
      %v7913 = vadd.f32 %v7911, %v7912
      %v7914 = vrot.slane %v7913, 2
      %v7915 = vadd.f32 %v7913, %v7914
      %v7916 = vrot.slane %v7915, 1
      %v7917 = vadd.f32 %v7915, %v7916
      %v7918 = vsel %vm603, %v7595, 0.0
      %v7919 = vsel %vm603, %v7596, 0.0
      %v7920 = vadd.f32 %v7918, %v7919
      %v7921 = vsel %vm603, %v7597, 0.0
      %v7922 = vadd.f32 %v7920, %v7921
      %v7923 = vsel %vm603, %v7598, 0.0
      %v7924 = vadd.f32 %v7922, %v7923
      %v7925 = vsel %vm603, %v7599, 0.0
      %v7926 = vadd.f32 %v7924, %v7925
      %v7927 = vsel %vm603, %v7600, 0.0
      %v7928 = vadd.f32 %v7926, %v7927
      %v7929 = vsel %vm603, %v7601, 0.0
      %v7930 = vadd.f32 %v7928, %v7929
      %v7931 = vsel %vm603, %v7602, 0.0
      %v7932 = vadd.f32 %v7930, %v7931
      %v7933 = vrot.slane %v7932, 4
      %v7934 = vadd.f32 %v7932, %v7933
      %v7935 = vrot.slane %v7934, 2
      %v7936 = vadd.f32 %v7934, %v7935
      %v7937 = vrot.slane %v7936, 1
      %v7938 = vadd.f32 %v7936, %v7937
      %v7939 = vld [vmem:[%s7] sm:$0xff]
      %v7940 = vld [vmem:[%s7 + $0x8] sm:$0xff]
      %v7941 = vld [vmem:[%s7 + $0x10] sm:$0xff]
      %v7942 = vld [vmem:[%s7 + $0x18] sm:$0xff]
      %v7943 = vld [vmem:[%s8] sm:$0xff]
      %v7944 = vld [vmem:[%s8 + $0x8] sm:$0xff]
      %v7945 = vld [vmem:[%s8 + $0x10] sm:$0xff]
      %v7946 = vld [vmem:[%s8 + $0x18] sm:$0xff]
      %vm7963 = vcmask 1041409
      %v7964 = vsel %vm7963, %v7644, %v7623
      %vm7965 = vcmask 1042434
      %v7966 = vsel %vm7965, %v7665, %v7964
      %vm7967 = vcmask 1043459
      %v7968 = vsel %vm7967, %v7686, %v7966
      %vm7969 = vcmask 1044484
      %v7970 = vsel %vm7969, %v7707, %v7968
      %vm7971 = vcmask 1045509
      %v7972 = vsel %vm7971, %v7728, %v7970
      %vm7973 = vcmask 1046534
      %v7974 = vsel %vm7973, %v7749, %v7972
      %vm7975 = vcmask 1047559
      %v7976 = vsel %vm7975, %v7770, %v7974
      %v7977 = vsel %vm7963, %v7812, %v7791
      %v7978 = vsel %vm7965, %v7833, %v7977
      %v7979 = vsel %vm7967, %v7854, %v7978
      %v7980 = vsel %vm7969, %v7875, %v7979
      %v7981 = vsel %vm7971, %v7896, %v7980
      %v7982 = vsel %vm7973, %v7917, %v7981
      %v7983 = vsel %vm7975, %v7938, %v7982
      %v7984 = vsel %vm603, %v7976, 0
      %v7986 = vsel %vm603, %v7983, 0
      %7988 = vmatprep.subr.mxu0 0.0
      %7989 = vmatpush1.msra.mxu0 %v7943
      %7990 = vmatprep.subr.mxu0 0.0
      %7991 = vmatpush1.msra.mxu0 %v7944
      %7992 = vmatprep.subr.mxu0 0.0
      %7993 = vmatpush1.msra.mxu0 %v7945
      %7994 = vmatprep.subr.mxu0 0.0
      %7995 = vmatpush1.msra.mxu0 %v7946
      %7996 = vmatprep.subr.mxu0 0.0
      %7997 = vmatpush1.msra.mxu0 0.0
      %7998 = vmatprep.subr.mxu0 0.0
      %7999 = vmatpush1.msra.mxu0 0.0
      %8000 = vmatprep.subr.mxu0 0.0
      %8001 = vmatpush1.msra.mxu0 0.0
      %8002 = vmatprep.subr.mxu0 0.0
      %8003 = vmatpush1.msra.mxu0 0.0
      %8004 = vmatprep.subr.mxu0 0.0
      %8005 = vmatpush1.msra.mxu0 0.0
      %8006 = vmatprep.subr.mxu0 0.0
      %8007 = vmatpush1.msra.mxu0 0.0
      %8008 = vmatprep.subr.mxu0 0.0
      %8009 = vmatpush1.msra.mxu0 0.0
      %8010 = vmatprep.subr.mxu0 0.0
      %8011 = vmatpush1.msra.mxu0 0.0
      %8012 = vmatprep.subr.mxu0 0.0
      %8013 = vmatpush1.msra.mxu0 0.0
      %8014 = vmatprep.subr.mxu0 0.0
      %8015 = vmatpush1.msra.mxu0 0.0
      %8016 = vmatprep.subr.mxu0 0.0
      %8017 = vmatpush1.msra.mxu0 0.0
      %8018 = vmatprep.subr.mxu0 0.0
      %8019 = vmatpush1.msra.mxu0 0.0
      %8020 = vmatprep.subr.mxu0 0.0
      %8021 = vmatpush1.msra.mxu0 0.0
      %8022 = vmatprep.subr.mxu0 0.0
      %8023 = vmatpush1.msra.mxu0 0.0
      %8024 = vmatprep.subr.mxu0 0.0
      %8025 = vmatpush1.msra.mxu0 0.0
      %8026 = vmatprep.subr.mxu0 0.0
      %8027 = vmatpush1.msra.mxu0 0.0
      %8028 = vmatprep.subr.mxu0 0.0
      %8029 = vmatpush1.msra.mxu0 0.0
      %8030 = vmatprep.subr.mxu0 0.0
      %8031 = vmatpush1.msra.mxu0 0.0
      %8032 = vmatprep.subr.mxu0 0.0
      %8033 = vmatpush1.msra.mxu0 0.0
      %8034 = vmatprep.subr.mxu0 0.0
      %8035 = vmatpush1.msra.mxu0 0.0
      %8036 = vmatprep.subr.mxu0 0.0
      %8037 = vmatpush1.msra.mxu0 0.0
      %8038 = vmatprep.subr.mxu0 0.0
      %8039 = vmatpush1.msra.mxu0 0.0
      %8040 = vmatprep.subr.mxu0 0.0
      %8041 = vmatpush1.msra.mxu0 0.0
      %8042 = vmatprep.subr.mxu0 0.0
      %8043 = vmatpush1.msra.mxu0 0.0
      %8044 = vmatprep.subr.mxu0 0.0
      %8045 = vmatpush1.msra.mxu0 0.0
      %8046 = vmatprep.subr.mxu0 0.0
      %8047 = vmatpush1.msra.mxu0 0.0
      %8048 = vmatprep.subr.mxu0 0.0
      %8049 = vmatpush1.msra.mxu0 0.0
      %8050 = vmatprep.subr.mxu0 0.0
      %8051 = vmatpush1.msra.mxu0 0.0
      %8052 = vmatprep.mubr.f32.mxu0 0.0
      %8053 = vmatmul.mubr.f32.gmra.mrb[0].mxu0 %v7984
      %v8054 = vpop.f32.mrb[0].mxu0
      %v8055 = vadd.f32 0.0, %v8054
      %v8056 = vpop.f32.mrb[0].mxu0
      %8057 = vmatprep.mubr.f32.mxu0 0.0
      %8058 = vmatmul.mubr.f32.gmra.mrb[0].mxu0 %v7986
      %v8059 = vpop.f32.mrb[0].mxu0
      %v8060 = vadd.f32 0.0, %v8059
      %v8061 = vpop.f32.mrb[0].mxu0
      %8062 = vdwg.mxu0
      %v8064 = vsel %vm603, %v820, 0
      %v8067 = vsel %vm603, %v821, 0
      %8069 = vmatprep.subr.mxu0 0.0
      %8070 = vmatpush1.msra.mxu0 %v7939
      %8071 = vmatprep.subr.mxu0 0.0
      %8072 = vmatpush1.msra.mxu0 %v7940
      %8073 = vmatprep.subr.mxu0 0.0
      %8074 = vmatpush1.msra.mxu0 %v7941
      %8075 = vmatprep.subr.mxu0 0.0
      %8076 = vmatpush1.msra.mxu0 %v7942
      %8077 = vmatprep.subr.mxu0 0.0
      %8078 = vmatpush1.msra.mxu0 0.0
      %8079 = vmatprep.subr.mxu0 0.0
      %8080 = vmatpush1.msra.mxu0 0.0
      %8081 = vmatprep.subr.mxu0 0.0
      %8082 = vmatpush1.msra.mxu0 0.0
      %8083 = vmatprep.subr.mxu0 0.0
      %8084 = vmatpush1.msra.mxu0 0.0
      %8085 = vmatprep.subr.mxu0 0.0
      %8086 = vmatpush1.msra.mxu0 0.0
      %8087 = vmatprep.subr.mxu0 0.0
      %8088 = vmatpush1.msra.mxu0 0.0
      %8089 = vmatprep.subr.mxu0 0.0
      %8090 = vmatpush1.msra.mxu0 0.0
      %8091 = vmatprep.subr.mxu0 0.0
      %8092 = vmatpush1.msra.mxu0 0.0
      %8093 = vmatprep.subr.mxu0 0.0
      %8094 = vmatpush1.msra.mxu0 0.0
      %8095 = vmatprep.subr.mxu0 0.0
      %8096 = vmatpush1.msra.mxu0 0.0
      %8097 = vmatprep.subr.mxu0 0.0
      %8098 = vmatpush1.msra.mxu0 0.0
      %8099 = vmatprep.subr.mxu0 0.0
      %8100 = vmatpush1.msra.mxu0 0.0
      %8101 = vmatprep.subr.mxu0 0.0
      %8102 = vmatpush1.msra.mxu0 0.0
      %8103 = vmatprep.subr.mxu0 0.0
      %8104 = vmatpush1.msra.mxu0 0.0
      %8105 = vmatprep.subr.mxu0 0.0
      %8106 = vmatpush1.msra.mxu0 0.0
      %8107 = vmatprep.subr.mxu0 0.0
      %8108 = vmatpush1.msra.mxu0 0.0
      %8109 = vmatprep.subr.mxu0 0.0
      %8110 = vmatpush1.msra.mxu0 0.0
      %8111 = vmatprep.subr.mxu0 0.0
      %8112 = vmatpush1.msra.mxu0 0.0
      %8113 = vmatprep.subr.mxu0 0.0
      %8114 = vmatpush1.msra.mxu0 0.0
      %8115 = vmatprep.subr.mxu0 0.0
      %8116 = vmatpush1.msra.mxu0 0.0
      %8117 = vmatprep.subr.mxu0 0.0
      %8118 = vmatpush1.msra.mxu0 0.0
      %8119 = vmatprep.subr.mxu0 0.0
      %8120 = vmatpush1.msra.mxu0 0.0
      %8121 = vmatprep.subr.mxu0 0.0
      %8122 = vmatpush1.msra.mxu0 0.0
      %8123 = vmatprep.subr.mxu0 0.0
      %8124 = vmatpush1.msra.mxu0 0.0
      %8125 = vmatprep.subr.mxu0 0.0
      %8126 = vmatpush1.msra.mxu0 0.0
      %8127 = vmatprep.subr.mxu0 0.0
      %8128 = vmatpush1.msra.mxu0 0.0
      %8129 = vmatprep.subr.mxu0 0.0
      %8130 = vmatpush1.msra.mxu0 0.0
      %8131 = vmatprep.subr.mxu0 0.0
      %8132 = vmatpush1.msra.mxu0 0.0
      %8133 = vmatprep.mubr.f32.mxu0 0.0
      %8134 = vmatmul.mubr.f32.gmra.mrb[0].mxu0 %v8064
      %v8135 = vpop.f32.mrb[0].mxu0
      %v8136 = vadd.f32 %v8055, %v8135
      %v8137 = vpop.f32.mrb[0].mxu0
      %8138 = vmatprep.mubr.f32.mxu0 0.0
      %8139 = vmatmul.mubr.f32.gmra.mrb[0].mxu0 %v8067
      %v8140 = vpop.f32.mrb[0].mxu0
      %v8141 = vadd.f32 %v8060, %v8140
      %v8142 = vpop.f32.mrb[0].mxu0
      %8143 = vdwg.mxu0
      %v8144 = vld [vmem:[%s9] sm:$0x1]
      %v8146 = vlaneseq
      %v8147 = vshrl.u32 %v8146, 7
      %v8148 = vsub.s32 0, %v8147
      %v8149 = vrot.slane %v8144, %v8148
      %v8151 = vadd.f32 %v8136, %v8149
      %v8152 = vadd.f32 %v8141, %v8149
      %v8153 = vmax.f32 %v8151, 0.0
      %v8154 = vmax.f32 %v8152, 0.0
      %v8155 = vld [vmem:[%s10] sm:$0xff]
      %v8156 = vld [vmem:[%s10 + $0x8] sm:$0xff]
      %v8157 = vld [vmem:[%s10 + $0x10] sm:$0xff]
      %v8158 = vld [vmem:[%s10 + $0x18] sm:$0xff]
      %v8159 = vld [vmem:[%s11] sm:$0x1]
      %v8161 = vlaneseq
      %v8162 = vshrl.u32 %v8161, 7
      %v8163 = vsub.s32 0, %v8162
      %v8164 = vrot.slane %v8159, %v8163
      %v8167 = vsel %vm603, %v8153, 0
      %v8170 = vsel %vm603, %v8154, 0
      %8172 = vmatprep.subr.mxu0 0.0
      %8173 = vmatpush1.msra.mxu0 %v8155
      %8174 = vmatprep.subr.mxu0 0.0
      %8175 = vmatpush1.msra.mxu0 %v8156
      %8176 = vmatprep.subr.mxu0 0.0
      %8177 = vmatpush1.msra.mxu0 %v8157
      %8178 = vmatprep.subr.mxu0 0.0
      %8179 = vmatpush1.msra.mxu0 %v8158
      %8180 = vmatprep.subr.mxu0 0.0
      %8181 = vmatpush1.msra.mxu0 0.0
      %8182 = vmatprep.subr.mxu0 0.0
      %8183 = vmatpush1.msra.mxu0 0.0
      %8184 = vmatprep.subr.mxu0 0.0
      %8185 = vmatpush1.msra.mxu0 0.0
      %8186 = vmatprep.subr.mxu0 0.0
      %8187 = vmatpush1.msra.mxu0 0.0
      %8188 = vmatprep.subr.mxu0 0.0
      %8189 = vmatpush1.msra.mxu0 0.0
      %8190 = vmatprep.subr.mxu0 0.0
      %8191 = vmatpush1.msra.mxu0 0.0
      %8192 = vmatprep.subr.mxu0 0.0
      %8193 = vmatpush1.msra.mxu0 0.0
      %8194 = vmatprep.subr.mxu0 0.0
      %8195 = vmatpush1.msra.mxu0 0.0
      %8196 = vmatprep.subr.mxu0 0.0
      %8197 = vmatpush1.msra.mxu0 0.0
      %8198 = vmatprep.subr.mxu0 0.0
      %8199 = vmatpush1.msra.mxu0 0.0
      %8200 = vmatprep.subr.mxu0 0.0
      %8201 = vmatpush1.msra.mxu0 0.0
      %8202 = vmatprep.subr.mxu0 0.0
      %8203 = vmatpush1.msra.mxu0 0.0
      %8204 = vmatprep.subr.mxu0 0.0
      %8205 = vmatpush1.msra.mxu0 0.0
      %8206 = vmatprep.subr.mxu0 0.0
      %8207 = vmatpush1.msra.mxu0 0.0
      %8208 = vmatprep.subr.mxu0 0.0
      %8209 = vmatpush1.msra.mxu0 0.0
      %8210 = vmatprep.subr.mxu0 0.0
      %8211 = vmatpush1.msra.mxu0 0.0
      %8212 = vmatprep.subr.mxu0 0.0
      %8213 = vmatpush1.msra.mxu0 0.0
      %8214 = vmatprep.subr.mxu0 0.0
      %8215 = vmatpush1.msra.mxu0 0.0
      %8216 = vmatprep.subr.mxu0 0.0
      %8217 = vmatpush1.msra.mxu0 0.0
      %8218 = vmatprep.subr.mxu0 0.0
      %8219 = vmatpush1.msra.mxu0 0.0
      %8220 = vmatprep.subr.mxu0 0.0
      %8221 = vmatpush1.msra.mxu0 0.0
      %8222 = vmatprep.subr.mxu0 0.0
      %8223 = vmatpush1.msra.mxu0 0.0
      %8224 = vmatprep.subr.mxu0 0.0
      %8225 = vmatpush1.msra.mxu0 0.0
      %8226 = vmatprep.subr.mxu0 0.0
      %8227 = vmatpush1.msra.mxu0 0.0
      %8228 = vmatprep.subr.mxu0 0.0
      %8229 = vmatpush1.msra.mxu0 0.0
      %8230 = vmatprep.subr.mxu0 0.0
      %8231 = vmatpush1.msra.mxu0 0.0
      %8232 = vmatprep.subr.mxu0 0.0
      %8233 = vmatpush1.msra.mxu0 0.0
      %8234 = vmatprep.subr.mxu0 0.0
      %8235 = vmatpush1.msra.mxu0 0.0
      %8236 = vmatprep.mubr.f32.mxu0 0.0
      %8237 = vmatmul.mubr.f32.gmra.mrb[0].mxu0 %v8167
      %v8238 = vpop.f32.mrb[0].mxu0
      %v8239 = vadd.f32 %v8164, %v8238
      %v8240 = vpop.f32.mrb[0].mxu0
      %8241 = vmatprep.mubr.f32.mxu0 0.0
      %8242 = vmatmul.mubr.f32.gmra.mrb[0].mxu0 %v8170
      %v8243 = vpop.f32.mrb[0].mxu0
      %v8244 = vadd.f32 %v8164, %v8243
      %v8245 = vpop.f32.mrb[0].mxu0
      %8246 = vdwg.mxu0
      %vm8247 = vcmask 23552
      %8248 = vst.msk [vmem:[%s428] sm:$0xff] %vm8247, %v8239
      %8249 = vst.msk [vmem:[%s428 + $0x8] sm:$0xff] %vm8247, %v8244
      %v8250 = vmul.f32 %v734, 0.01
      %v8251 = vmul.f32 %v735, 0.01
      %v8252 = vadd.f32 %v737, %v8250
      %v8253 = vadd.f32 %v738, %v8251
      %v8254 = vmul.f32 %v8239, 5e-05
      %v8255 = vmul.f32 %v8244, 5e-05
      %v8256 = vadd.f32 %v8252, %v8254
      %v8257 = vadd.f32 %v8253, %v8255
      %8258 = vst.msk [vmem:[%s434] sm:$0xff] %vm8247, %v8256
      %8259 = vst.msk [vmem:[%s434 + $0x8] sm:$0xff] %vm8247, %v8257
      %s8260 = smul.u32 2, %s25
      %p8261 = scmp.lt.s32.totalorder %s8260, 7
      %s8262 = scalar_select %p8261, %s8260, 7
      %s8263 = smul.addr %s8262, 8
      %s8264 = scalar_lea.vmem %s12, %s8263
      %s8265 = smul.u32 2, %s25
      %p8266 = scmp.lt.s32.totalorder %s8265, 7
      %s8267 = scalar_select %p8266, %s8265, 7
      %s8268 = smul.addr %s8267, 8
      %s8269 = scalar_lea.vmem %s13, %s8268
      // Predicated region
      $region69: #{simulator_forward.1} parent=67 // pred_check
        %p8270 = pneg %p295
      $region70: #{simulator_forward.1} parent=67 // pred_check_branch
        %8272 = sbr.rel (%p8270) target = $region72
      $region71: #{simulator_forward.1} parent=67 // pred_region
        %s8273 = smul.u32 2, %s25
      $region72: #{simulator_forward.1} parent=67 // pred_fallthru
        _
      // Predicated region
      $region73: #{simulator_forward.1} parent=67 // pred_check
        %p8274 = pneg %p321
      $region74: #{simulator_forward.1} parent=67 // pred_check_branch
        %8276 = sbr.rel (%p8274) target = $region76
      $region75: #{simulator_forward.1} parent=67 // pred_region
        %s8277 = smul.u32 2, %s25
      $region76: #{simulator_forward.1} parent=67 // pred_fallthru
        _
    $region68: #{simulator_forward.1} parent=5 // pred_fallthru
      _
    %p8278 = scmp.le.s32.totalorder 2, %s20
    // Predicated region
    $region77: #{simulator_forward.1} parent=5 // pred_check
      %p8279 = pneg %p8278
    $region78: #{simulator_forward.1} parent=5 // pred_check_branch
      %8281 = sbr.rel (%p8279) target = $region80
    $region79: #{simulator_forward.1} parent=5 // pred_region
      %s8282 = ssub.s32 %s20, 2
      // Predicated region
      $region81: #{simulator_forward.1} parent=79 // pred_check
        %p8283 = pneg %p301
      $region82: #{simulator_forward.1} parent=79 // pred_check_branch
        %8285 = sbr.rel (%p8283) target = $region84
      $region83: #{simulator_forward.1} parent=79 // pred_region
        %s8286 = smul.u32 2, %s26
        %p8287 = scmp.lt.s32.totalorder %s8286, 7
        %s8288 = scalar_select %p8287, %s8286, 7
        %s8289 = smul.addr %s8288, 8
        %s8290 = scalar_lea.vmem %s12, %s8289
      $region84: #{simulator_forward.1} parent=79 // pred_fallthru
        _
      // Predicated region
      $region85: #{simulator_forward.1} parent=79 // pred_check
        %p8291 = pneg %p327
      $region86: #{simulator_forward.1} parent=79 // pred_check_branch
        %8293 = sbr.rel (%p8291) target = $region88
      $region87: #{simulator_forward.1} parent=79 // pred_region
        %s8294 = smul.u32 2, %s26
        %p8295 = scmp.lt.s32.totalorder %s8294, 7
        %s8296 = scalar_select %p8295, %s8294, 7
        %s8297 = smul.addr %s8296, 8
        %s8298 = scalar_lea.vmem %s13, %s8297
      $region88: #{simulator_forward.1} parent=79 // pred_fallthru
        _
    $region80: #{simulator_forward.1} parent=5 // pred_fallthru
      _
  $region6: #{simulator_forward.1} parent=0 // loop_footer
    %s24 = sadd.s32 1, %s20
  $region7: #{simulator_forward.1} parent=0 // loop_footer_branch
    %19 = sbr.rel target = $region3
  $region8: #{simulator_forward.1} parent=0 // loop_exit
    _

</llo_original>
